<compile_context>
chip_gen: v7x
topology: tpu7x:2x2x1
jax: 0.10.0
libtpu: 0.0.40
codegen_flags: <defaults>
</compile_context>

<pallas_src>
import jax
import jax.numpy as jnp
from jax import lax
from jax.experimental import pallas as pl
from jax.experimental.pallas import tpu as pltpu

EPS = 1e-5
VMEM_LIMIT = 64 * 1024 * 1024  # <= physical VMEM on v5e / v6e / v7x


def _cparams(n_axes):
    return pltpu.CompilerParams(
        dimension_semantics=("parallel",) * n_axes,
        vmem_limit_bytes=VMEM_LIMIT)


def _pick_row_tile(h, target=8):
    t = min(target, h)
    while h % t:
        t -= 1
    return t


# ----------------- ConvTranspose2d(k=2, s=2) as a per-pixel matmul ------------------
def _convt_kernel(x_ref, w_ref, b_ref, o_ref):
    # x_ref: (1, H, W, Cin) f32 ; w_ref: (Cin, Cout*4) bf16 ; b_ref: (1, Cout*4) f32
    x = x_ref[0].astype(jnp.bfloat16)                        # (H, W, Cin)
    H, W, Cin = x.shape
    y = jnp.dot(x.reshape(H * W, Cin), w_ref[...],
                preferred_element_type=jnp.float32)
    y = y + b_ref[...]                                       # one bias per output pixel
    o_ref[0] = y.reshape(H, W, -1).astype(o_ref.dtype)


def conv_transpose_taps(x, w_bf16, b_f32):
    """x:(N,H,W,Cin), w:(Cin,Cout*4) bf16, b:(1,Cout*4) -> bf16 (N,H,W,Cout*4)."""
    N, H, W, Cin = x.shape
    Cout4 = w_bf16.shape[1]
    cost = pl.CostEstimate(
        flops=2 * N * H * W * Cin * Cout4,
        transcendentals=0,
        bytes_accessed=(4 * N * H * W * Cin + 2 * Cin * Cout4
                        + 2 * N * H * W * Cout4))
    return pl.pallas_call(
        _convt_kernel,
        out_shape=jax.ShapeDtypeStruct((N, H, W, Cout4), jnp.bfloat16),
        grid=(N,),
        in_specs=[
            pl.BlockSpec((1, H, W, Cin), lambda n: (n, 0, 0, 0)),
            pl.BlockSpec((Cin, Cout4), lambda n: (0, 0)),
            pl.BlockSpec((1, Cout4), lambda n: (0, 0)),
        ],
        out_specs=pl.BlockSpec((1, H, W, Cout4), lambda n: (n, 0, 0, 0)),
        compiler_params=_cparams(1),
        cost_estimate=cost,
    )(x, w_bf16, b_f32)


# ------- first DoubleConv conv: split-contraction conv3x3 + fused BN statistics ------
def _conv1_kernel(x2m_ref, x2t_ref, x2b_ref, x1m_ref, x1t_ref, x1b_ref,
                  wa_ref, wb_ref, z_ref, s_ref, q_ref, pada_ref, padb_ref):
    i = pl.program_id(1)
    nt = pl.num_programs(1)
    top_ok = (i > 0).astype(jnp.float32)
    bot_ok = (i + 1 < nt).astype(jnp.float32)
    _, TH, Wo, Cm = z_ref.shape

    def assemble(pad_ref, m_ref, t_ref, b_ref):
        # zero-padded (TH+2, Wo+2, Cg) tile assembled in VMEM (rows + 1-px column ring)
        pad_ref[...] = jnp.zeros_like(pad_ref)
        pad_ref[pl.ds(1, TH), pl.ds(1, Wo), :] = m_ref[0].astype(pad_ref.dtype)
        pad_ref[pl.ds(0, 1), pl.ds(1, Wo), :] = (
            t_ref[0].astype(jnp.float32) * top_ok).astype(pad_ref.dtype)
        pad_ref[pl.ds(TH + 1, 1), pl.ds(1, Wo), :] = (
            b_ref[0].astype(jnp.float32) * bot_ok).astype(pad_ref.dtype)
        return pad_ref[...]

    xa = assemble(pada_ref, x2m_ref, x2t_ref, x2b_ref)       # x2 channel group
    xb = assemble(padb_ref, x1m_ref, x1t_ref, x1b_ref)       # upsampled-x1 group

    def im2col(xp):
        return jnp.concatenate(
            [xp[dy:dy + TH, dx:dx + Wo, :].reshape(TH * Wo, -1)
             for dy in range(3) for dx in range(3)], axis=-1)

    # conv(cat(x2, x1u)) == conv(x2 part) + conv(x1u part): single deep-K dot per group.
    acc = jnp.dot(im2col(xa), wa_ref[...], preferred_element_type=jnp.float32)
    acc = acc + jnp.dot(im2col(xb), wb_ref[...], preferred_element_type=jnp.float32)
    z_ref[0] = acc.reshape(TH, Wo, Cm).astype(z_ref.dtype)
    # fused BatchNorm statistics (per sample, per row-tile) from the f32 accumulator
    s_ref[0, 0] = jnp.sum(acc, axis=0, keepdims=True)
    q_ref[0, 0] = jnp.sum(acc * acc, axis=0, keepdims=True)


def conv1_fused(x2, x1u, wa, wb, th):
    N, Ho, Wo, C2 = x2.shape
    C1 = x1u.shape[-1]
    Cm = wa.shape[-1]
    nt = Ho // th

    def main(c):
        return pl.BlockSpec((1, th, Wo, c), lambda n, i: (n, i, 0, 0))

    def top(c):
        return pl.BlockSpec((1, 1, Wo, c),
                            lambda n, i: (n, jnp.maximum(i * th - 1, 0), 0, 0))

    def bot(c):
        return pl.BlockSpec((1, 1, Wo, c),
                            lambda n, i: (n, jnp.minimum(i * th + th, Ho - 1), 0, 0))

    cost = pl.CostEstimate(
        flops=2 * N * Ho * Wo * 9 * (C1 + C2) * Cm,
        transcendentals=0,
        bytes_accessed=(4 * x2.size + 2 * x1u.size + 2 * (wa.size + wb.size)
                        + 2 * N * Ho * Wo * Cm + 8 * N * nt * Cm))
    return pl.pallas_call(
        _conv1_kernel,
        out_shape=(
            jax.ShapeDtypeStruct((N, Ho, Wo, Cm), jnp.bfloat16),
            jax.ShapeDtypeStruct((N, nt, 1, Cm), jnp.float32),
            jax.ShapeDtypeStruct((N, nt, 1, Cm), jnp.float32),
        ),
        grid=(N, nt),
        in_specs=[
            main(C2), top(C2), bot(C2),
            main(C1), top(C1), bot(C1),
            pl.BlockSpec((9 * C2, Cm), lambda n, i: (0, 0)),
            pl.BlockSpec((9 * C1, Cm), lambda n, i: (0, 0)),
        ],
        out_specs=(
            pl.BlockSpec((1, th, Wo, Cm), lambda n, i: (n, i, 0, 0)),
            pl.BlockSpec((1, 1, 1, Cm), lambda n, i: (n, i, 0, 0)),
            pl.BlockSpec((1, 1, 1, Cm), lambda n, i: (n, i, 0, 0)),
        ),
        scratch_shapes=[
            pltpu.VMEM((th + 2, Wo + 2, C2), jnp.bfloat16),
            pltpu.VMEM((th + 2, Wo + 2, C1), jnp.bfloat16),
        ],
        compiler_params=_cparams(2),
        cost_estimate=cost,
    )(x2, x2, x2, x1u, x1u, x1u, wa, wb)


# ------ second DoubleConv conv: fused BN1+ReLU prologue + conv3x3 + BN2 statistics ----
def _conv2_kernel(zm_ref, zt_ref, zb_ref, sc_ref, sh_ref, w_ref,
                  o_ref, s_ref, q_ref, pad_ref):
    i = pl.program_id(1)
    nt = pl.num_programs(1)
    top_ok = (i > 0).astype(jnp.float32)
    bot_ok = (i + 1 < nt).astype(jnp.float32)
    _, TH, Wo, Co = o_ref.shape
    scale = sc_ref[...]                                     # (1, Cm) f32
    shift = sh_ref[...]

    def bn_relu(v):
        return jnp.maximum(v.astype(jnp.float32) * scale + shift, 0.0)

    # BN+ReLU applied to real data only; padding ring / boundary halos stay exactly zero.
    pad_ref[...] = jnp.zeros_like(pad_ref)
    pad_ref[pl.ds(1, TH), pl.ds(1, Wo), :] = bn_relu(zm_ref[0]).astype(pad_ref.dtype)
    pad_ref[pl.ds(0, 1), pl.ds(1, Wo), :] = (
        bn_relu(zt_ref[0]) * top_ok).astype(pad_ref.dtype)
    pad_ref[pl.ds(TH + 1, 1), pl.ds(1, Wo), :] = (
        bn_relu(zb_ref[0]) * bot_ok).astype(pad_ref.dtype)

    xp = pad_ref[...]
    slab = jnp.concatenate(
        [xp[dy:dy + TH, dx:dx + Wo, :].reshape(TH * Wo, -1)
         for dy in range(3) for dx in range(3)], axis=-1)
    acc = jnp.dot(slab, w_ref[...], preferred_element_type=jnp.float32)
    o_ref[0] = acc.reshape(TH, Wo, Co).astype(o_ref.dtype)
    s_ref[0, 0] = jnp.sum(acc, axis=0, keepdims=True)
    q_ref[0, 0] = jnp.sum(acc * acc, axis=0, keepdims=True)


def conv2_fused(z1, scale, shift, w2, th):
    N, Ho, Wo, Cm = z1.shape
    Co = w2.shape[-1]
    nt = Ho // th
    cost = pl.CostEstimate(
        flops=2 * N * Ho * Wo * 9 * Cm * Co + 3 * N * Ho * Wo * Cm,
        transcendentals=0,
        bytes_accessed=(2 * z1.size + 2 * w2.size + 2 * N * Ho * Wo * Co
                        + 8 * N * nt * Co + 8 * Cm))
    return pl.pallas_call(
        _conv2_kernel,
        out_shape=(
            jax.ShapeDtypeStruct((N, Ho, Wo, Co), jnp.bfloat16),
            jax.ShapeDtypeStruct((N, nt, 1, Co), jnp.float32),
            jax.ShapeDtypeStruct((N, nt, 1, Co), jnp.float32),
        ),
        grid=(N, nt),
        in_specs=[
            pl.BlockSpec((1, th, Wo, Cm), lambda n, i: (n, i, 0, 0)),
            pl.BlockSpec((1, 1, Wo, Cm),
                         lambda n, i: (n, jnp.maximum(i * th - 1, 0), 0, 0)),
            pl.BlockSpec((1, 1, Wo, Cm),
                         lambda n, i: (n, jnp.minimum(i * th + th, Ho - 1), 0, 0)),
            pl.BlockSpec((1, Cm), lambda n, i: (0, 0)),
            pl.BlockSpec((1, Cm), lambda n, i: (0, 0)),
            pl.BlockSpec((9 * Cm, Co), lambda n, i: (0, 0)),
        ],
        out_specs=(
            pl.BlockSpec((1, th, Wo, Co), lambda n, i: (n, i, 0, 0)),
            pl.BlockSpec((1, 1, 1, Co), lambda n, i: (n, i, 0, 0)),
            pl.BlockSpec((1, 1, 1, Co), lambda n, i: (n, i, 0, 0)),
        ),
        scratch_shapes=[pltpu.VMEM((th + 2, Wo + 2, Cm), jnp.bfloat16)],
        compiler_params=_cparams(2),
        cost_estimate=cost,
    )(z1, z1, z1, scale.reshape(1, Cm), shift.reshape(1, Cm), w2)


# ----------------------- final BN + ReLU (lane-dense elementwise) --------------------
def _bnrelu_kernel(x_ref, sc_ref, sh_ref, o_ref):
    o_ref[...] = jnp.maximum(
        x_ref[...].astype(jnp.float32) * sc_ref[...] + sh_ref[...], 0.0
    ).astype(o_ref.dtype)


def bn_relu_final(z2, scale, shift, th):
    N, Ho, Wo, Co = z2.shape
    nt = Ho // th
    L = th * Wo * Co
    zf = z2.reshape(N, nt, 1, L)                            # lane-dense view
    sc = jnp.tile(scale, th * Wo).reshape(1, L)
    sh = jnp.tile(shift, th * Wo).reshape(1, L)
    cost = pl.CostEstimate(flops=3 * N * Ho * Wo * Co, transcendentals=0,
                           bytes_accessed=2 * z2.size + 4 * N * Ho * Wo * Co + 8 * L)
    out = pl.pallas_call(
        _bnrelu_kernel,
        out_shape=jax.ShapeDtypeStruct((N, nt, 1, L), jnp.float32),
        grid=(N, nt),
        in_specs=[
            pl.BlockSpec((1, 1, 1, L), lambda n, i: (n, i, 0, 0)),
            pl.BlockSpec((1, L), lambda n, i: (0, 0)),
            pl.BlockSpec((1, L), lambda n, i: (0, 0)),
        ],
        out_specs=pl.BlockSpec((1, 1, 1, L), lambda n, i: (n, i, 0, 0)),
        compiler_params=_cparams(2),
        cost_estimate=cost,
    )(zf, sc, sh)
    return out.reshape(N, Ho, Wo, Co)


# --------------------------------- glue / forward -----------------------------------
def bn_scale_shift_from_stats(s, q, count, gamma, beta):
    """Finalize training-mode BatchNorm from per-tile partial sums (biased variance)."""
    s = jnp.sum(s, axis=(0, 1, 2))                          # (C,)
    q = jnp.sum(q, axis=(0, 1, 2))                          # (C,)
    mean = s / count
    var = jnp.maximum(q / count - mean * mean, 0.0)
    scale = gamma * lax.rsqrt(var + EPS)
    shift = beta - mean * scale
    return scale, shift


def up_forward(x1, x2, params, *, row_tile=8):
    N, H, W, Cin = x1.shape
    C1 = Cin // 2
    _, Ho, Wo, C2 = x2.shape
    th = _pick_row_tile(Ho, row_tile)

    # kernel-layout / bf16 weights (f32 accumulation happens inside the kernels)
    wt = params["wt"].reshape(Cin, C1 * 4).astype(jnp.bfloat16)
    bt = jnp.repeat(params["bt"], 4).reshape(1, C1 * 4).astype(jnp.float32)
    w1 = params["w1"]
    Cm = w1.shape[-1]
    wa = w1[:, :, :C2, :].reshape(9 * C2, Cm).astype(jnp.bfloat16)   # cat order: x2 first
    wb = w1[:, :, C2:, :].reshape(9 * C1, Cm).astype(jnp.bfloat16)   # then upsampled x1
    w2 = params["w2"].reshape(9 * Cm, -1).astype(jnp.bfloat16)

    # 1) up = ConvTranspose2d(k=2, s=2): in-kernel matmul produces the four 2x2 taps in
    #    bf16; the scatter onto the stride-2 grid is the only remaining full-tensor XLA
    #    layout pass.  TODO(synk): fold into the kernel with strided stores.
    y = conv_transpose_taps(x1, wt, bt)
    x1u = jnp.transpose(y.reshape(N, H, W, C1, 2, 2),
                        (0, 1, 4, 2, 5, 3)).reshape(N, 2 * H, 2 * W, C1)

    # 2) F.pad centering of x1u onto x2's grid (no-op for the common diff==0 case).
    diffY = Ho - 2 * H
    diffX = Wo - 2 * W
    if diffY or diffX:
        x1u = jnp.pad(x1u, ((0, 0),
                            (diffY // 2, diffY - diffY // 2),
                            (diffX // 2, diffX - diffX // 2), (0, 0)))

    # 3) conv1 (split contraction over the never-materialized concat) + per-tile BN1 stats
    z1, s1, q1 = conv1_fused(x2, x1u, wa, wb, th)
    scale1, shift1 = bn_scale_shift_from_stats(s1, q1, N * Ho * Wo,
                                               params["g1"], params["b1"])

    # 4) BN1+ReLU prologue + conv2 + per-tile BN2 stats (no XLA pad of z1: halo in-kernel)
    z2, s2, q2 = conv2_fused(z1, scale1, shift1, w2, th)
    scale2, shift2 = bn_scale_shift_from_stats(s2, q2, N * Ho * Wo,
                                               params["g2"], params["b2"])

    # 5) final BN2 + ReLU (lane-dense blocks)
    return bn_relu_final(z2, scale2, shift2, th)


if __name__ == "__main__":
    key = jax.random.PRNGKey(0)
    in_ch, out_ch = 8, 4
    N, H, W = 2, 8, 8                          # x1 spatial; skip x2 is 2x larger
    ks = jax.random.split(key, 8)

    # NHWC inputs (PyTorch NCHW equivalents: x1=[2,8,8,8], x2=[2,4,16,16])
    x1 = jax.random.normal(ks[0], (N, H, W, in_ch), jnp.float32)
    x2 = jax.random.normal(ks[1], (N, 2 * H, 2 * W, in_ch // 2), jnp.float32)

    params = dict(
        wt=jax.random.normal(ks[2], (in_ch, in_ch // 2, 2, 2), jnp.float32) * 0.1,
        bt=jax.random.normal(ks[3], (in_ch // 2,), jnp.float32) * 0.1,
        w1=jax.random.normal(ks[4], (3, 3, in_ch, out_ch), jnp.float32) * 0.1,  # mid=out
        g1=jnp.ones((out_ch,), jnp.float32),
        b1=jnp.zeros((out_ch,), jnp.float32),
        w2=jax.random.normal(ks[5], (3, 3, out_ch, out_ch), jnp.float32) * 0.1,
        g2=jnp.ones((out_ch,), jnp.float32),
        b2=jnp.zeros((out_ch,), jnp.float32),
    )

    out = jax.jit(up_forward)(x1, x2, params)
    jax.block_until_ready(out)
    assert out.shape == (N, 2 * H, 2 * W, out_ch)
    assert bool(jnp.all(jnp.isfinite(out)))
    print("KERNEL_OK")
</pallas_src>

<mosaic_0001>
module attributes {stable_mosaic.version = 11 : i64} {
  func.func @_convt_kernel(%arg0: i32, %arg1: memref<1x8x8x8xf32, #tpu.memory_space<vmem>>, %arg2: memref<8x16xbf16, #tpu.memory_space<vmem>>, %arg3: memref<1x16xf32, #tpu.memory_space<vmem>>, %arg4: memref<1x8x8x16xbf16, #tpu.memory_space<vmem>>) attributes {dimension_semantics = [#tpu.dimension_semantics<parallel>], iteration_bounds = array<i64: 2>, scalar_prefetch = 0 : i64, scratch_operands = 0 : i64, tpu.core_type = #tpu.core_type<tc>, window_params = [{transform_indices = @transform_0, window_bounds = array<i64: 1, 8, 8, 8>}, {pipeline_mode = #tpu.pipeline_mode<synchronous>, transform_indices = @transform_1, window_bounds = array<i64: 8, 16>}, {pipeline_mode = #tpu.pipeline_mode<synchronous>, transform_indices = @transform_2, window_bounds = array<i64: 1, 16>}, {transform_indices = @transform_3, window_bounds = array<i64: 1, 8, 8, 16>}]} {
    %c0 = arith.constant 0 : index
    %c0_0 = arith.constant 0 : index
    %c0_1 = arith.constant 0 : index
    %c0_2 = arith.constant 0 : index
    %0 = vector.load %arg1[%c0, %c0_0, %c0_1, %c0_2] : memref<1x8x8x8xf32, #tpu.memory_space<vmem>>, vector<1x8x8x8xf32>
    %1 = vector.shape_cast %0 : vector<1x8x8x8xf32> to vector<8x8x8xf32>
    %2 = arith.truncf %1 : vector<8x8x8xf32> to vector<8x8x8xbf16>
    %3 = vector.shape_cast %2 : vector<8x8x8xbf16> to vector<64x8xbf16>
    %c0_3 = arith.constant 0 : index
    %c0_4 = arith.constant 0 : index
    %4 = vector.load %arg2[%c0_3, %c0_4] : memref<8x16xbf16, #tpu.memory_space<vmem>>, vector<8x16xbf16>
    %cst = arith.constant dense<0.000000e+00> : vector<64x16xf32>
    %5 = tpu.matmul %3, %4, %cst {dimension_numbers = #tpu.dot_dimension_numbers<[1], [0], [0], [1], [0, 0, 1, 1], [], []>} : vector<64x8xbf16>, vector<8x16xbf16>, vector<64x16xf32> -> vector<64x16xf32>
    %c0_5 = arith.constant 0 : index
    %c0_6 = arith.constant 0 : index
    %6 = vector.load %arg3[%c0_5, %c0_6] : memref<1x16xf32, #tpu.memory_space<vmem>>, vector<1x16xf32>
    %7 = vector.broadcast %6 : vector<1x16xf32> to vector<64x16xf32>
    %8 = arith.addf %5, %7 : vector<64x16xf32>
    %9 = vector.shape_cast %8 : vector<64x16xf32> to vector<8x8x16xf32>
    %10 = arith.truncf %9 : vector<8x8x16xf32> to vector<8x8x16xbf16>
    %c0_7 = arith.constant 0 : index
    %c0_8 = arith.constant 0 : index
    %c0_9 = arith.constant 0 : index
    %c0_10 = arith.constant 0 : index
    %11 = vector.load %arg4[%c0_7, %c0_8, %c0_9, %c0_10] : memref<1x8x8x16xbf16, #tpu.memory_space<vmem>>, vector<1x8x8x16xbf16>
    %12 = vector.shape_cast %11 : vector<1x8x8x16xbf16> to vector<8x8x16xbf16>
    %13 = vector.shape_cast %10 : vector<8x8x16xbf16> to vector<1x8x8x16xbf16>
    tpu.vector_store %arg4[%c0_7, %c0_8, %c0_9, %c0_10], %13 {strides = array<i32>} : memref<1x8x8x16xbf16, #tpu.memory_space<vmem>>, vector<1x8x8x16xbf16>,
    return
  }
  func.func @transform_0(%arg0: i32) -> (i32, i32, i32, i32) {
    %c0_i32 = arith.constant 0 : i32
    %c0_i32_0 = arith.constant 0 : i32
    %c0_i32_1 = arith.constant 0 : i32
    %c0_i32_2 = arith.constant 0 : i32
    return %arg0, %c0_i32, %c0_i32_0, %c0_i32_1 : i32, i32, i32, i32
  }
  func.func @transform_1(%arg0: i32) -> (i32, i32) {
    %c0_i32 = arith.constant 0 : i32
    %c0_i32_0 = arith.constant 0 : i32
    %c0_i32_1 = arith.constant 0 : i32
    return %c0_i32, %c0_i32_0 : i32, i32
  }
  func.func @transform_2(%arg0: i32) -> (i32, i32) {
    %c0_i32 = arith.constant 0 : i32
    %c0_i32_0 = arith.constant 0 : i32
    %c0_i32_1 = arith.constant 0 : i32
    return %c0_i32, %c0_i32_0 : i32, i32
  }
  func.func @transform_3(%arg0: i32) -> (i32, i32, i32, i32) {
    %c0_i32 = arith.constant 0 : i32
    %c0_i32_0 = arith.constant 0 : i32
    %c0_i32_1 = arith.constant 0 : i32
    %c0_i32_2 = arith.constant 0 : i32
    return %arg0, %c0_i32, %c0_i32_0, %c0_i32_1 : i32, i32, i32, i32
  }
}

module attributes {stable_mosaic.version = 11 : i64} {
  func.func @_conv1_kernel(%arg0: i32, %arg1: i32, %arg2: memref<1x8x16x4xf32, #tpu.memory_space<vmem>>, %arg3: memref<1x1x16x4xf32, #tpu.memory_space<vmem>>, %arg4: memref<1x1x16x4xf32, #tpu.memory_space<vmem>>, %arg5: memref<1x8x16x4xbf16, #tpu.memory_space<vmem>>, %arg6: memref<1x1x16x4xbf16, #tpu.memory_space<vmem>>, %arg7: memref<1x1x16x4xbf16, #tpu.memory_space<vmem>>, %arg8: memref<36x4xbf16, #tpu.memory_space<vmem>>, %arg9: memref<36x4xbf16, #tpu.memory_space<vmem>>, %arg10: memref<1x8x16x4xbf16, #tpu.memory_space<vmem>>, %arg11: memref<1x1x1x4xf32, #tpu.memory_space<vmem>>, %arg12: memref<1x1x1x4xf32, #tpu.memory_space<vmem>>, %arg13: memref<10x18x4xbf16, #tpu.memory_space<vmem>>, %arg14: memref<10x18x4xbf16, #tpu.memory_space<vmem>>) attributes {dimension_semantics = [#tpu.dimension_semantics<parallel>, #tpu.dimension_semantics<parallel>], iteration_bounds = array<i64: 2, 2>, scalar_prefetch = 0 : i64, scratch_operands = 2 : i64, tpu.core_type = #tpu.core_type<tc>, window_params = [{transform_indices = @transform_0, window_bounds = array<i64: 1, 8, 16, 4>}, {transform_indices = @transform_1, window_bounds = array<i64: 1, 1, 16, 4>}, {transform_indices = @transform_2, window_bounds = array<i64: 1, 1, 16, 4>}, {transform_indices = @transform_3, window_bounds = array<i64: 1, 8, 16, 4>}, {transform_indices = @transform_4, window_bounds = array<i64: 1, 1, 16, 4>}, {transform_indices = @transform_5, window_bounds = array<i64: 1, 1, 16, 4>}, {pipeline_mode = #tpu.pipeline_mode<synchronous>, transform_indices = @transform_6, window_bounds = array<i64: 36, 4>}, {pipeline_mode = #tpu.pipeline_mode<synchronous>, transform_indices = @transform_7, window_bounds = array<i64: 36, 4>}, {transform_indices = @transform_8, window_bounds = array<i64: 1, 8, 16, 4>}, {transform_indices = @transform_9, window_bounds = array<i64: 1, 1, 1, 4>}, {transform_indices = @transform_10, window_bounds = array<i64: 1, 1, 1, 4>}]} {
    %c0_i32 = arith.constant 0 : i32
    %0 = arith.cmpi sgt, %arg1, %c0_i32 : i32
    %1 = arith.extui %0 : i1 to i32
    %2 = arith.sitofp %1 : i32 to f32
    %c1_i32 = arith.constant 1 : i32
    %3 = arith.addi %arg1, %c1_i32 : i32
    %c2_i32 = arith.constant 2 : i32
    %4 = arith.cmpi slt, %3, %c2_i32 : i32
    %5 = arith.extui %4 : i1 to i32
    %6 = arith.sitofp %5 : i32 to f32
    %cst = arith.constant 0.000000e+00 : bf16
    %7 = vector.broadcast %cst : bf16 to vector<10x18x4xbf16>
    %c0 = arith.constant 0 : index
    %c0_0 = arith.constant 0 : index
    %c0_1 = arith.constant 0 : index
    %8 = vector.load %arg13[%c0, %c0_0, %c0_1] : memref<10x18x4xbf16, #tpu.memory_space<vmem>>, vector<10x18x4xbf16>
    tpu.vector_store %arg13[%c0, %c0_0, %c0_1], %7 {strides = array<i32>} : memref<10x18x4xbf16, #tpu.memory_space<vmem>>, vector<10x18x4xbf16>,
    %c0_2 = arith.constant 0 : index
    %c0_3 = arith.constant 0 : index
    %c0_4 = arith.constant 0 : index
    %c0_5 = arith.constant 0 : index
    %9 = vector.load %arg2[%c0_2, %c0_3, %c0_4, %c0_5] : memref<1x8x16x4xf32, #tpu.memory_space<vmem>>, vector<1x8x16x4xf32>
    %10 = vector.shape_cast %9 : vector<1x8x16x4xf32> to vector<8x16x4xf32>
    %11 = arith.truncf %10 : vector<8x16x4xf32> to vector<8x16x4xbf16>
    %c1 = arith.constant 1 : index
    %c1_6 = arith.constant 1 : index
    %c0_7 = arith.constant 0 : index
    %12 = vector.load %arg13[%c1, %c1_6, %c0_7] : memref<10x18x4xbf16, #tpu.memory_space<vmem>>, vector<8x16x4xbf16>
    tpu.vector_store %arg13[%c1, %c1_6, %c0_7], %11 {strides = array<i32>} : memref<10x18x4xbf16, #tpu.memory_space<vmem>>, vector<8x16x4xbf16>,
    %c0_8 = arith.constant 0 : index
    %c0_9 = arith.constant 0 : index
    %c0_10 = arith.constant 0 : index
    %c0_11 = arith.constant 0 : index
    %13 = vector.load %arg3[%c0_8, %c0_9, %c0_10, %c0_11] : memref<1x1x16x4xf32, #tpu.memory_space<vmem>>, vector<1x1x16x4xf32>
    %14 = vector.shape_cast %13 : vector<1x1x16x4xf32> to vector<1x16x4xf32>
    %15 = vector.broadcast %2 : f32 to vector<1x16x4xf32>
    %16 = arith.mulf %14, %15 : vector<1x16x4xf32>
    %17 = arith.truncf %16 : vector<1x16x4xf32> to vector<1x16x4xbf16>
    %c0_12 = arith.constant 0 : index
    %c1_13 = arith.constant 1 : index
    %c0_14 = arith.constant 0 : index
    %18 = vector.load %arg13[%c0_12, %c1_13, %c0_14] : memref<10x18x4xbf16, #tpu.memory_space<vmem>>, vector<1x16x4xbf16>
    tpu.vector_store %arg13[%c0_12, %c1_13, %c0_14], %17 {strides = array<i32>} : memref<10x18x4xbf16, #tpu.memory_space<vmem>>, vector<1x16x4xbf16>,
    %c0_15 = arith.constant 0 : index
    %c0_16 = arith.constant 0 : index
    %c0_17 = arith.constant 0 : index
    %c0_18 = arith.constant 0 : index
    %19 = vector.load %arg4[%c0_15, %c0_16, %c0_17, %c0_18] : memref<1x1x16x4xf32, #tpu.memory_space<vmem>>, vector<1x1x16x4xf32>
    %20 = vector.shape_cast %19 : vector<1x1x16x4xf32> to vector<1x16x4xf32>
    %21 = vector.broadcast %6 : f32 to vector<1x16x4xf32>
    %22 = arith.mulf %20, %21 : vector<1x16x4xf32>
    %23 = arith.truncf %22 : vector<1x16x4xf32> to vector<1x16x4xbf16>
    %c9 = arith.constant 9 : index
    %c1_19 = arith.constant 1 : index
    %c0_20 = arith.constant 0 : index
    %24 = vector.load %arg13[%c9, %c1_19, %c0_20] : memref<10x18x4xbf16, #tpu.memory_space<vmem>>, vector<1x16x4xbf16>
    tpu.vector_store %arg13[%c9, %c1_19, %c0_20], %23 {strides = array<i32>} : memref<10x18x4xbf16, #tpu.memory_space<vmem>>, vector<1x16x4xbf16>,
    %c0_21 = arith.constant 0 : index
    %c0_22 = arith.constant 0 : index
    %c0_23 = arith.constant 0 : index
    %25 = vector.load %arg13[%c0_21, %c0_22, %c0_23] : memref<10x18x4xbf16, #tpu.memory_space<vmem>>, vector<10x18x4xbf16>
    %cst_24 = arith.constant 0.000000e+00 : bf16
    %26 = vector.broadcast %cst_24 : bf16 to vector<10x18x4xbf16>
    %c0_25 = arith.constant 0 : index
    %c0_26 = arith.constant 0 : index
    %c0_27 = arith.constant 0 : index
    %27 = vector.load %arg14[%c0_25, %c0_26, %c0_27] : memref<10x18x4xbf16, #tpu.memory_space<vmem>>, vector<10x18x4xbf16>
    tpu.vector_store %arg14[%c0_25, %c0_26, %c0_27], %26 {strides = array<i32>} : memref<10x18x4xbf16, #tpu.memory_space<vmem>>, vector<10x18x4xbf16>,
    %c0_28 = arith.constant 0 : index
    %c0_29 = arith.constant 0 : index
    %c0_30 = arith.constant 0 : index
    %c0_31 = arith.constant 0 : index
    %28 = vector.load %arg5[%c0_28, %c0_29, %c0_30, %c0_31] : memref<1x8x16x4xbf16, #tpu.memory_space<vmem>>, vector<1x8x16x4xbf16>
    %29 = vector.shape_cast %28 : vector<1x8x16x4xbf16> to vector<8x16x4xbf16>
    %c1_32 = arith.constant 1 : index
    %c1_33 = arith.constant 1 : index
    %c0_34 = arith.constant 0 : index
    %30 = vector.load %arg14[%c1_32, %c1_33, %c0_34] : memref<10x18x4xbf16, #tpu.memory_space<vmem>>, vector<8x16x4xbf16>
    tpu.vector_store %arg14[%c1_32, %c1_33, %c0_34], %29 {strides = array<i32>} : memref<10x18x4xbf16, #tpu.memory_space<vmem>>, vector<8x16x4xbf16>,
    %c0_35 = arith.constant 0 : index
    %c0_36 = arith.constant 0 : index
    %c0_37 = arith.constant 0 : index
    %c0_38 = arith.constant 0 : index
    %31 = vector.load %arg6[%c0_35, %c0_36, %c0_37, %c0_38] : memref<1x1x16x4xbf16, #tpu.memory_space<vmem>>, vector<1x1x16x4xbf16>
    %32 = vector.shape_cast %31 : vector<1x1x16x4xbf16> to vector<1x16x4xbf16>
    %33 = arith.extf %32 : vector<1x16x4xbf16> to vector<1x16x4xf32>
    %34 = vector.broadcast %2 : f32 to vector<1x16x4xf32>
    %35 = arith.mulf %33, %34 : vector<1x16x4xf32>
    %36 = arith.truncf %35 : vector<1x16x4xf32> to vector<1x16x4xbf16>
    %c0_39 = arith.constant 0 : index
    %c1_40 = arith.constant 1 : index
    %c0_41 = arith.constant 0 : index
    %37 = vector.load %arg14[%c0_39, %c1_40, %c0_41] : memref<10x18x4xbf16, #tpu.memory_space<vmem>>, vector<1x16x4xbf16>
    tpu.vector_store %arg14[%c0_39, %c1_40, %c0_41], %36 {strides = array<i32>} : memref<10x18x4xbf16, #tpu.memory_space<vmem>>, vector<1x16x4xbf16>,
    %c0_42 = arith.constant 0 : index
    %c0_43 = arith.constant 0 : index
    %c0_44 = arith.constant 0 : index
    %c0_45 = arith.constant 0 : index
    %38 = vector.load %arg7[%c0_42, %c0_43, %c0_44, %c0_45] : memref<1x1x16x4xbf16, #tpu.memory_space<vmem>>, vector<1x1x16x4xbf16>
    %39 = vector.shape_cast %38 : vector<1x1x16x4xbf16> to vector<1x16x4xbf16>
    %40 = arith.extf %39 : vector<1x16x4xbf16> to vector<1x16x4xf32>
    %41 = vector.broadcast %6 : f32 to vector<1x16x4xf32>
    %42 = arith.mulf %40, %41 : vector<1x16x4xf32>
    %43 = arith.truncf %42 : vector<1x16x4xf32> to vector<1x16x4xbf16>
    %c9_46 = arith.constant 9 : index
    %c1_47 = arith.constant 1 : index
    %c0_48 = arith.constant 0 : index
    %44 = vector.load %arg14[%c9_46, %c1_47, %c0_48] : memref<10x18x4xbf16, #tpu.memory_space<vmem>>, vector<1x16x4xbf16>
    tpu.vector_store %arg14[%c9_46, %c1_47, %c0_48], %43 {strides = array<i32>} : memref<10x18x4xbf16, #tpu.memory_space<vmem>>, vector<1x16x4xbf16>,
    %c0_49 = arith.constant 0 : index
    %c0_50 = arith.constant 0 : index
    %c0_51 = arith.constant 0 : index
    %45 = vector.load %arg14[%c0_49, %c0_50, %c0_51] : memref<10x18x4xbf16, #tpu.memory_space<vmem>>, vector<10x18x4xbf16>
    %46 = vector.extract_strided_slice %25 {offsets = [0, 0, 0], sizes = [8, 16, 4], strides = [1, 1, 1]} : vector<10x18x4xbf16> to vector<8x16x4xbf16>
    %47 = vector.shape_cast %46 : vector<8x16x4xbf16> to vector<128x4xbf16>
    %48 = vector.extract_strided_slice %25 {offsets = [0, 1, 0], sizes = [8, 16, 4], strides = [1, 1, 1]} : vector<10x18x4xbf16> to vector<8x16x4xbf16>
    %49 = vector.shape_cast %48 : vector<8x16x4xbf16> to vector<128x4xbf16>
    %50 = vector.extract_strided_slice %25 {offsets = [0, 2, 0], sizes = [8, 16, 4], strides = [1, 1, 1]} : vector<10x18x4xbf16> to vector<8x16x4xbf16>
    %51 = vector.shape_cast %50 : vector<8x16x4xbf16> to vector<128x4xbf16>
    %52 = vector.extract_strided_slice %25 {offsets = [1, 0, 0], sizes = [8, 16, 4], strides = [1, 1, 1]} : vector<10x18x4xbf16> to vector<8x16x4xbf16>
    %53 = vector.shape_cast %52 : vector<8x16x4xbf16> to vector<128x4xbf16>
    %54 = vector.extract_strided_slice %25 {offsets = [1, 1, 0], sizes = [8, 16, 4], strides = [1, 1, 1]} : vector<10x18x4xbf16> to vector<8x16x4xbf16>
    %55 = vector.shape_cast %54 : vector<8x16x4xbf16> to vector<128x4xbf16>
    %56 = vector.extract_strided_slice %25 {offsets = [1, 2, 0], sizes = [8, 16, 4], strides = [1, 1, 1]} : vector<10x18x4xbf16> to vector<8x16x4xbf16>
    %57 = vector.shape_cast %56 : vector<8x16x4xbf16> to vector<128x4xbf16>
    %58 = vector.extract_strided_slice %25 {offsets = [2, 0, 0], sizes = [8, 16, 4], strides = [1, 1, 1]} : vector<10x18x4xbf16> to vector<8x16x4xbf16>
    %59 = vector.shape_cast %58 : vector<8x16x4xbf16> to vector<128x4xbf16>
    %60 = vector.extract_strided_slice %25 {offsets = [2, 1, 0], sizes = [8, 16, 4], strides = [1, 1, 1]} : vector<10x18x4xbf16> to vector<8x16x4xbf16>
    %61 = vector.shape_cast %60 : vector<8x16x4xbf16> to vector<128x4xbf16>
    %62 = vector.extract_strided_slice %25 {offsets = [2, 2, 0], sizes = [8, 16, 4], strides = [1, 1, 1]} : vector<10x18x4xbf16> to vector<8x16x4xbf16>
    %63 = vector.shape_cast %62 : vector<8x16x4xbf16> to vector<128x4xbf16>
    %64 = tpu.concatenate %47, %49, %51, %53, %55, %57, %59, %61, %63 in 1 : vector<128x4xbf16>, vector<128x4xbf16>, vector<128x4xbf16>, vector<128x4xbf16>, vector<128x4xbf16>, vector<128x4xbf16>, vector<128x4xbf16>, vector<128x4xbf16>, vector<128x4xbf16> -> vector<128x36xbf16>
    %c0_52 = arith.constant 0 : index
    %c0_53 = arith.constant 0 : index
    %65 = vector.load %arg8[%c0_52, %c0_53] : memref<36x4xbf16, #tpu.memory_space<vmem>>, vector<36x4xbf16>
    %cst_54 = arith.constant dense<0.000000e+00> : vector<128x4xf32>
    %66 = tpu.matmul %64, %65, %cst_54 {dimension_numbers = #tpu.dot_dimension_numbers<[1], [0], [0], [1], [0, 0, 1, 1], [], []>} : vector<128x36xbf16>, vector<36x4xbf16>, vector<128x4xf32> -> vector<128x4xf32>
    %67 = vector.extract_strided_slice %45 {offsets = [0, 0, 0], sizes = [8, 16, 4], strides = [1, 1, 1]} : vector<10x18x4xbf16> to vector<8x16x4xbf16>
    %68 = vector.shape_cast %67 : vector<8x16x4xbf16> to vector<128x4xbf16>
    %69 = vector.extract_strided_slice %45 {offsets = [0, 1, 0], sizes = [8, 16, 4], strides = [1, 1, 1]} : vector<10x18x4xbf16> to vector<8x16x4xbf16>
    %70 = vector.shape_cast %69 : vector<8x16x4xbf16> to vector<128x4xbf16>
    %71 = vector.extract_strided_slice %45 {offsets = [0, 2, 0], sizes = [8, 16, 4], strides = [1, 1, 1]} : vector<10x18x4xbf16> to vector<8x16x4xbf16>
    %72 = vector.shape_cast %71 : vector<8x16x4xbf16> to vector<128x4xbf16>
    %73 = vector.extract_strided_slice %45 {offsets = [1, 0, 0], sizes = [8, 16, 4], strides = [1, 1, 1]} : vector<10x18x4xbf16> to vector<8x16x4xbf16>
    %74 = vector.shape_cast %73 : vector<8x16x4xbf16> to vector<128x4xbf16>
    %75 = vector.extract_strided_slice %45 {offsets = [1, 1, 0], sizes = [8, 16, 4], strides = [1, 1, 1]} : vector<10x18x4xbf16> to vector<8x16x4xbf16>
    %76 = vector.shape_cast %75 : vector<8x16x4xbf16> to vector<128x4xbf16>
    %77 = vector.extract_strided_slice %45 {offsets = [1, 2, 0], sizes = [8, 16, 4], strides = [1, 1, 1]} : vector<10x18x4xbf16> to vector<8x16x4xbf16>
    %78 = vector.shape_cast %77 : vector<8x16x4xbf16> to vector<128x4xbf16>
    %79 = vector.extract_strided_slice %45 {offsets = [2, 0, 0], sizes = [8, 16, 4], strides = [1, 1, 1]} : vector<10x18x4xbf16> to vector<8x16x4xbf16>
    %80 = vector.shape_cast %79 : vector<8x16x4xbf16> to vector<128x4xbf16>
    %81 = vector.extract_strided_slice %45 {offsets = [2, 1, 0], sizes = [8, 16, 4], strides = [1, 1, 1]} : vector<10x18x4xbf16> to vector<8x16x4xbf16>
    %82 = vector.shape_cast %81 : vector<8x16x4xbf16> to vector<128x4xbf16>
    %83 = vector.extract_strided_slice %45 {offsets = [2, 2, 0], sizes = [8, 16, 4], strides = [1, 1, 1]} : vector<10x18x4xbf16> to vector<8x16x4xbf16>
    %84 = vector.shape_cast %83 : vector<8x16x4xbf16> to vector<128x4xbf16>
    %85 = tpu.concatenate %68, %70, %72, %74, %76, %78, %80, %82, %84 in 1 : vector<128x4xbf16>, vector<128x4xbf16>, vector<128x4xbf16>, vector<128x4xbf16>, vector<128x4xbf16>, vector<128x4xbf16>, vector<128x4xbf16>, vector<128x4xbf16>, vector<128x4xbf16> -> vector<128x36xbf16>
    %c0_55 = arith.constant 0 : index
    %c0_56 = arith.constant 0 : index
    %86 = vector.load %arg9[%c0_55, %c0_56] : memref<36x4xbf16, #tpu.memory_space<vmem>>, vector<36x4xbf16>
    %cst_57 = arith.constant dense<0.000000e+00> : vector<128x4xf32>
    %87 = tpu.matmul %85, %86, %cst_57 {dimension_numbers = #tpu.dot_dimension_numbers<[1], [0], [0], [1], [0, 0, 1, 1], [], []>} : vector<128x36xbf16>, vector<36x4xbf16>, vector<128x4xf32> -> vector<128x4xf32>
    %88 = arith.addf %66, %87 : vector<128x4xf32>
    %89 = vector.shape_cast %88 : vector<128x4xf32> to vector<8x16x4xf32>
    %90 = arith.truncf %89 : vector<8x16x4xf32> to vector<8x16x4xbf16>
    %c0_58 = arith.constant 0 : index
    %c0_59 = arith.constant 0 : index
    %c0_60 = arith.constant 0 : index
    %c0_61 = arith.constant 0 : index
    %91 = vector.load %arg10[%c0_58, %c0_59, %c0_60, %c0_61] : memref<1x8x16x4xbf16, #tpu.memory_space<vmem>>, vector<1x8x16x4xbf16>
    %92 = vector.shape_cast %91 : vector<1x8x16x4xbf16> to vector<8x16x4xbf16>
    %93 = vector.shape_cast %90 : vector<8x16x4xbf16> to vector<1x8x16x4xbf16>
    tpu.vector_store %arg10[%c0_58, %c0_59, %c0_60, %c0_61], %93 {strides = array<i32>} : memref<1x8x16x4xbf16, #tpu.memory_space<vmem>>, vector<1x8x16x4xbf16>,
    %cst_62 = arith.constant dense<0.000000e+00> : vector<4xf32>
    %94 = vector.multi_reduction <add>, %88, %cst_62 [0] : vector<128x4xf32> to vector<4xf32>
    %95 = vector.shape_cast %94 : vector<4xf32> to vector<1x4xf32>
    %c0_63 = arith.constant 0 : index
    %c0_64 = arith.constant 0 : index
    %c0_65 = arith.constant 0 : index
    %c0_66 = arith.constant 0 : index
    %96 = vector.load %arg11[%c0_63, %c0_64, %c0_65, %c0_66] : memref<1x1x1x4xf32, #tpu.memory_space<vmem>>, vector<1x1x1x4xf32>
    %97 = vector.shape_cast %96 : vector<1x1x1x4xf32> to vector<1x4xf32>
    %98 = vector.shape_cast %95 : vector<1x4xf32> to vector<1x1x1x4xf32>
    tpu.vector_store %arg11[%c0_63, %c0_64, %c0_65, %c0_66], %98 {strides = array<i32>} : memref<1x1x1x4xf32, #tpu.memory_space<vmem>>, vector<1x1x1x4xf32>,
    %99 = arith.mulf %88, %88 : vector<128x4xf32>
    %cst_67 = arith.constant dense<0.000000e+00> : vector<4xf32>
    %100 = vector.multi_reduction <add>, %99, %cst_67 [0] : vector<128x4xf32> to vector<4xf32>
    %101 = vector.shape_cast %100 : vector<4xf32> to vector<1x4xf32>
    %c0_68 = arith.constant 0 : index
    %c0_69 = arith.constant 0 : index
    %c0_70 = arith.constant 0 : index
    %c0_71 = arith.constant 0 : index
    %102 = vector.load %arg12[%c0_68, %c0_69, %c0_70, %c0_71] : memref<1x1x1x4xf32, #tpu.memory_space<vmem>>, vector<1x1x1x4xf32>
    %103 = vector.shape_cast %102 : vector<1x1x1x4xf32> to vector<1x4xf32>
    %104 = vector.shape_cast %101 : vector<1x4xf32> to vector<1x1x1x4xf32>
    tpu.vector_store %arg12[%c0_68, %c0_69, %c0_70, %c0_71], %104 {strides = array<i32>} : memref<1x1x1x4xf32, #tpu.memory_space<vmem>>, vector<1x1x1x4xf32>,
    return
  }
  func.func @transform_0(%arg0: i32, %arg1: i32) -> (i32, i32, i32, i32) {
    %c0_i32 = arith.constant 0 : i32
    %c0_i32_0 = arith.constant 0 : i32
    %c0_i32_1 = arith.constant 0 : i32
    return %arg0, %arg1, %c0_i32, %c0_i32_0 : i32, i32, i32, i32
  }
  func.func @transform_1(%arg0: i32, %arg1: i32) -> (i32, i32, i32, i32) {
    %c8_i32 = arith.constant 8 : i32
    %0 = arith.muli %arg1, %c8_i32 : i32
    %c1_i32 = arith.constant 1 : i32
    %1 = arith.subi %0, %c1_i32 : i32
    %c0_i32 = arith.constant 0 : i32
    %2 = arith.maxsi %1, %c0_i32 : i32
    %c0_i32_0 = arith.constant 0 : i32
    %c0_i32_1 = arith.constant 0 : i32
    %c0_i32_2 = arith.constant 0 : i32
    return %arg0, %2, %c0_i32_0, %c0_i32_1 : i32, i32, i32, i32
  }
  func.func @transform_2(%arg0: i32, %arg1: i32) -> (i32, i32, i32, i32) {
    %c8_i32 = arith.constant 8 : i32
    %0 = arith.muli %arg1, %c8_i32 : i32
    %c8_i32_0 = arith.constant 8 : i32
    %1 = arith.addi %0, %c8_i32_0 : i32
    %c15_i32 = arith.constant 15 : i32
    %2 = arith.minsi %1, %c15_i32 : i32
    %c0_i32 = arith.constant 0 : i32
    %c0_i32_1 = arith.constant 0 : i32
    %c0_i32_2 = arith.constant 0 : i32
    return %arg0, %2, %c0_i32, %c0_i32_1 : i32, i32, i32, i32
  }
  func.func @transform_3(%arg0: i32, %arg1: i32) -> (i32, i32, i32, i32) {
    %c0_i32 = arith.constant 0 : i32
    %c0_i32_0 = arith.constant 0 : i32
    %c0_i32_1 = arith.constant 0 : i32
    return %arg0, %arg1, %c0_i32, %c0_i32_0 : i32, i32, i32, i32
  }
  func.func @transform_4(%arg0: i32, %arg1: i32) -> (i32, i32, i32, i32) {
    %c8_i32 = arith.constant 8 : i32
    %0 = arith.muli %arg1, %c8_i32 : i32
    %c1_i32 = arith.constant 1 : i32
    %1 = arith.subi %0, %c1_i32 : i32
    %c0_i32 = arith.constant 0 : i32
    %2 = arith.maxsi %1, %c0_i32 : i32
    %c0_i32_0 = arith.constant 0 : i32
    %c0_i32_1 = arith.constant 0 : i32
    %c0_i32_2 = arith.constant 0 : i32
    return %arg0, %2, %c0_i32_0, %c0_i32_1 : i32, i32, i32, i32
  }
  func.func @transform_5(%arg0: i32, %arg1: i32) -> (i32, i32, i32, i32) {
    %c8_i32 = arith.constant 8 : i32
    %0 = arith.muli %arg1, %c8_i32 : i32
    %c8_i32_0 = arith.constant 8 : i32
    %1 = arith.addi %0, %c8_i32_0 : i32
    %c15_i32 = arith.constant 15 : i32
    %2 = arith.minsi %1, %c15_i32 : i32
    %c0_i32 = arith.constant 0 : i32
    %c0_i32_1 = arith.constant 0 : i32
    %c0_i32_2 = arith.constant 0 : i32
    return %arg0, %2, %c0_i32, %c0_i32_1 : i32, i32, i32, i32
  }
  func.func @transform_6(%arg0: i32, %arg1: i32) -> (i32, i32) {
    %c0_i32 = arith.constant 0 : i32
    %c0_i32_0 = arith.constant 0 : i32
    %c0_i32_1 = arith.constant 0 : i32
    return %c0_i32, %c0_i32_0 : i32, i32
  }
  func.func @transform_7(%arg0: i32, %arg1: i32) -> (i32, i32) {
    %c0_i32 = arith.constant 0 : i32
    %c0_i32_0 = arith.constant 0 : i32
    %c0_i32_1 = arith.constant 0 : i32
    return %c0_i32, %c0_i32_0 : i32, i32
  }
  func.func @transform_8(%arg0: i32, %arg1: i32) -> (i32, i32, i32, i32) {
    %c0_i32 = arith.constant 0 : i32
    %c0_i32_0 = arith.constant 0 : i32
    %c0_i32_1 = arith.constant 0 : i32
    return %arg0, %arg1, %c0_i32, %c0_i32_0 : i32, i32, i32, i32
  }
  func.func @transform_9(%arg0: i32, %arg1: i32) -> (i32, i32, i32, i32) {
    %c0_i32 = arith.constant 0 : i32
    %c0_i32_0 = arith.constant 0 : i32
    %c0_i32_1 = arith.constant 0 : i32
    return %arg0, %arg1, %c0_i32, %c0_i32_0 : i32, i32, i32, i32
  }
  func.func @transform_10(%arg0: i32, %arg1: i32) -> (i32, i32, i32, i32) {
    %c0_i32 = arith.constant 0 : i32
    %c0_i32_0 = arith.constant 0 : i32
    %c0_i32_1 = arith.constant 0 : i32
    return %arg0, %arg1, %c0_i32, %c0_i32_0 : i32, i32, i32, i32
  }
}

module attributes {stable_mosaic.version = 11 : i64} {
  func.func @_conv2_kernel(%arg0: i32, %arg1: i32, %arg2: memref<1x8x16x4xbf16, #tpu.memory_space<vmem>>, %arg3: memref<1x1x16x4xbf16, #tpu.memory_space<vmem>>, %arg4: memref<1x1x16x4xbf16, #tpu.memory_space<vmem>>, %arg5: memref<1x4xf32, #tpu.memory_space<vmem>>, %arg6: memref<1x4xf32, #tpu.memory_space<vmem>>, %arg7: memref<36x4xbf16, #tpu.memory_space<vmem>>, %arg8: memref<1x8x16x4xbf16, #tpu.memory_space<vmem>>, %arg9: memref<1x1x1x4xf32, #tpu.memory_space<vmem>>, %arg10: memref<1x1x1x4xf32, #tpu.memory_space<vmem>>, %arg11: memref<10x18x4xbf16, #tpu.memory_space<vmem>>) attributes {dimension_semantics = [#tpu.dimension_semantics<parallel>, #tpu.dimension_semantics<parallel>], iteration_bounds = array<i64: 2, 2>, scalar_prefetch = 0 : i64, scratch_operands = 1 : i64, tpu.core_type = #tpu.core_type<tc>, window_params = [{transform_indices = @transform_0, window_bounds = array<i64: 1, 8, 16, 4>}, {transform_indices = @transform_1, window_bounds = array<i64: 1, 1, 16, 4>}, {transform_indices = @transform_2, window_bounds = array<i64: 1, 1, 16, 4>}, {pipeline_mode = #tpu.pipeline_mode<synchronous>, transform_indices = @transform_3, window_bounds = array<i64: 1, 4>}, {pipeline_mode = #tpu.pipeline_mode<synchronous>, transform_indices = @transform_4, window_bounds = array<i64: 1, 4>}, {pipeline_mode = #tpu.pipeline_mode<synchronous>, transform_indices = @transform_5, window_bounds = array<i64: 36, 4>}, {transform_indices = @transform_6, window_bounds = array<i64: 1, 8, 16, 4>}, {transform_indices = @transform_7, window_bounds = array<i64: 1, 1, 1, 4>}, {transform_indices = @transform_8, window_bounds = array<i64: 1, 1, 1, 4>}]} {
    %c0_i32 = arith.constant 0 : i32
    %0 = arith.cmpi sgt, %arg1, %c0_i32 : i32
    %1 = arith.extui %0 : i1 to i32
    %2 = arith.sitofp %1 : i32 to f32
    %c1_i32 = arith.constant 1 : i32
    %3 = arith.addi %arg1, %c1_i32 : i32
    %c2_i32 = arith.constant 2 : i32
    %4 = arith.cmpi slt, %3, %c2_i32 : i32
    %5 = arith.extui %4 : i1 to i32
    %6 = arith.sitofp %5 : i32 to f32
    %c0 = arith.constant 0 : index
    %c0_0 = arith.constant 0 : index
    %7 = vector.load %arg5[%c0, %c0_0] : memref<1x4xf32, #tpu.memory_space<vmem>>, vector<1x4xf32>
    %c0_1 = arith.constant 0 : index
    %c0_2 = arith.constant 0 : index
    %8 = vector.load %arg6[%c0_1, %c0_2] : memref<1x4xf32, #tpu.memory_space<vmem>>, vector<1x4xf32>
    %cst = arith.constant 0.000000e+00 : bf16
    %9 = vector.broadcast %cst : bf16 to vector<10x18x4xbf16>
    %c0_3 = arith.constant 0 : index
    %c0_4 = arith.constant 0 : index
    %c0_5 = arith.constant 0 : index
    %10 = vector.load %arg11[%c0_3, %c0_4, %c0_5] : memref<10x18x4xbf16, #tpu.memory_space<vmem>>, vector<10x18x4xbf16>
    tpu.vector_store %arg11[%c0_3, %c0_4, %c0_5], %9 {strides = array<i32>} : memref<10x18x4xbf16, #tpu.memory_space<vmem>>, vector<10x18x4xbf16>,
    %c0_6 = arith.constant 0 : index
    %c0_7 = arith.constant 0 : index
    %c0_8 = arith.constant 0 : index
    %c0_9 = arith.constant 0 : index
    %11 = vector.load %arg2[%c0_6, %c0_7, %c0_8, %c0_9] : memref<1x8x16x4xbf16, #tpu.memory_space<vmem>>, vector<1x8x16x4xbf16>
    %12 = vector.shape_cast %11 : vector<1x8x16x4xbf16> to vector<8x16x4xbf16>
    %13 = arith.extf %12 : vector<8x16x4xbf16> to vector<8x16x4xf32>
    %14 = vector.shape_cast %7 : vector<1x4xf32> to vector<1x1x4xf32>
    %15 = vector.broadcast %14 : vector<1x1x4xf32> to vector<8x16x4xf32>
    %16 = arith.mulf %13, %15 : vector<8x16x4xf32>
    %17 = vector.shape_cast %8 : vector<1x4xf32> to vector<1x1x4xf32>
    %18 = vector.broadcast %17 : vector<1x1x4xf32> to vector<8x16x4xf32>
    %19 = arith.addf %16, %18 : vector<8x16x4xf32>
    %cst_10 = arith.constant 0.000000e+00 : f32
    %20 = vector.broadcast %cst_10 : f32 to vector<8x16x4xf32>
    %21 = arith.maximumf %19, %20 : vector<8x16x4xf32>
    %22 = arith.truncf %21 : vector<8x16x4xf32> to vector<8x16x4xbf16>
    %c1 = arith.constant 1 : index
    %c1_11 = arith.constant 1 : index
    %c0_12 = arith.constant 0 : index
    %23 = vector.load %arg11[%c1, %c1_11, %c0_12] : memref<10x18x4xbf16, #tpu.memory_space<vmem>>, vector<8x16x4xbf16>
    tpu.vector_store %arg11[%c1, %c1_11, %c0_12], %22 {strides = array<i32>} : memref<10x18x4xbf16, #tpu.memory_space<vmem>>, vector<8x16x4xbf16>,
    %c0_13 = arith.constant 0 : index
    %c0_14 = arith.constant 0 : index
    %c0_15 = arith.constant 0 : index
    %c0_16 = arith.constant 0 : index
    %24 = vector.load %arg3[%c0_13, %c0_14, %c0_15, %c0_16] : memref<1x1x16x4xbf16, #tpu.memory_space<vmem>>, vector<1x1x16x4xbf16>
    %25 = vector.shape_cast %24 : vector<1x1x16x4xbf16> to vector<1x16x4xbf16>
    %26 = arith.extf %25 : vector<1x16x4xbf16> to vector<1x16x4xf32>
    %27 = vector.shape_cast %7 : vector<1x4xf32> to vector<1x1x4xf32>
    %28 = vector.broadcast %27 : vector<1x1x4xf32> to vector<1x16x4xf32>
    %29 = arith.mulf %26, %28 : vector<1x16x4xf32>
    %30 = vector.shape_cast %8 : vector<1x4xf32> to vector<1x1x4xf32>
    %31 = vector.broadcast %30 : vector<1x1x4xf32> to vector<1x16x4xf32>
    %32 = arith.addf %29, %31 : vector<1x16x4xf32>
    %cst_17 = arith.constant 0.000000e+00 : f32
    %33 = vector.broadcast %cst_17 : f32 to vector<1x16x4xf32>
    %34 = arith.maximumf %32, %33 : vector<1x16x4xf32>
    %35 = vector.broadcast %2 : f32 to vector<1x16x4xf32>
    %36 = arith.mulf %34, %35 : vector<1x16x4xf32>
    %37 = arith.truncf %36 : vector<1x16x4xf32> to vector<1x16x4xbf16>
    %c0_18 = arith.constant 0 : index
    %c1_19 = arith.constant 1 : index
    %c0_20 = arith.constant 0 : index
    %38 = vector.load %arg11[%c0_18, %c1_19, %c0_20] : memref<10x18x4xbf16, #tpu.memory_space<vmem>>, vector<1x16x4xbf16>
    tpu.vector_store %arg11[%c0_18, %c1_19, %c0_20], %37 {strides = array<i32>} : memref<10x18x4xbf16, #tpu.memory_space<vmem>>, vector<1x16x4xbf16>,
    %c0_21 = arith.constant 0 : index
    %c0_22 = arith.constant 0 : index
    %c0_23 = arith.constant 0 : index
    %c0_24 = arith.constant 0 : index
    %39 = vector.load %arg4[%c0_21, %c0_22, %c0_23, %c0_24] : memref<1x1x16x4xbf16, #tpu.memory_space<vmem>>, vector<1x1x16x4xbf16>
    %40 = vector.shape_cast %39 : vector<1x1x16x4xbf16> to vector<1x16x4xbf16>
    %41 = arith.extf %40 : vector<1x16x4xbf16> to vector<1x16x4xf32>
    %42 = vector.shape_cast %7 : vector<1x4xf32> to vector<1x1x4xf32>
    %43 = vector.broadcast %42 : vector<1x1x4xf32> to vector<1x16x4xf32>
    %44 = arith.mulf %41, %43 : vector<1x16x4xf32>
    %45 = vector.shape_cast %8 : vector<1x4xf32> to vector<1x1x4xf32>
    %46 = vector.broadcast %45 : vector<1x1x4xf32> to vector<1x16x4xf32>
    %47 = arith.addf %44, %46 : vector<1x16x4xf32>
    %cst_25 = arith.constant 0.000000e+00 : f32
    %48 = vector.broadcast %cst_25 : f32 to vector<1x16x4xf32>
    %49 = arith.maximumf %47, %48 : vector<1x16x4xf32>
    %50 = vector.broadcast %6 : f32 to vector<1x16x4xf32>
    %51 = arith.mulf %49, %50 : vector<1x16x4xf32>
    %52 = arith.truncf %51 : vector<1x16x4xf32> to vector<1x16x4xbf16>
    %c9 = arith.constant 9 : index
    %c1_26 = arith.constant 1 : index
    %c0_27 = arith.constant 0 : index
    %53 = vector.load %arg11[%c9, %c1_26, %c0_27] : memref<10x18x4xbf16, #tpu.memory_space<vmem>>, vector<1x16x4xbf16>
    tpu.vector_store %arg11[%c9, %c1_26, %c0_27], %52 {strides = array<i32>} : memref<10x18x4xbf16, #tpu.memory_space<vmem>>, vector<1x16x4xbf16>,
    %c0_28 = arith.constant 0 : index
    %c0_29 = arith.constant 0 : index
    %c0_30 = arith.constant 0 : index
    %54 = vector.load %arg11[%c0_28, %c0_29, %c0_30] : memref<10x18x4xbf16, #tpu.memory_space<vmem>>, vector<10x18x4xbf16>
    %55 = vector.extract_strided_slice %54 {offsets = [0, 0, 0], sizes = [8, 16, 4], strides = [1, 1, 1]} : vector<10x18x4xbf16> to vector<8x16x4xbf16>
    %56 = vector.shape_cast %55 : vector<8x16x4xbf16> to vector<128x4xbf16>
    %57 = vector.extract_strided_slice %54 {offsets = [0, 1, 0], sizes = [8, 16, 4], strides = [1, 1, 1]} : vector<10x18x4xbf16> to vector<8x16x4xbf16>
    %58 = vector.shape_cast %57 : vector<8x16x4xbf16> to vector<128x4xbf16>
    %59 = vector.extract_strided_slice %54 {offsets = [0, 2, 0], sizes = [8, 16, 4], strides = [1, 1, 1]} : vector<10x18x4xbf16> to vector<8x16x4xbf16>
    %60 = vector.shape_cast %59 : vector<8x16x4xbf16> to vector<128x4xbf16>
    %61 = vector.extract_strided_slice %54 {offsets = [1, 0, 0], sizes = [8, 16, 4], strides = [1, 1, 1]} : vector<10x18x4xbf16> to vector<8x16x4xbf16>
    %62 = vector.shape_cast %61 : vector<8x16x4xbf16> to vector<128x4xbf16>
    %63 = vector.extract_strided_slice %54 {offsets = [1, 1, 0], sizes = [8, 16, 4], strides = [1, 1, 1]} : vector<10x18x4xbf16> to vector<8x16x4xbf16>
    %64 = vector.shape_cast %63 : vector<8x16x4xbf16> to vector<128x4xbf16>
    %65 = vector.extract_strided_slice %54 {offsets = [1, 2, 0], sizes = [8, 16, 4], strides = [1, 1, 1]} : vector<10x18x4xbf16> to vector<8x16x4xbf16>
    %66 = vector.shape_cast %65 : vector<8x16x4xbf16> to vector<128x4xbf16>
    %67 = vector.extract_strided_slice %54 {offsets = [2, 0, 0], sizes = [8, 16, 4], strides = [1, 1, 1]} : vector<10x18x4xbf16> to vector<8x16x4xbf16>
    %68 = vector.shape_cast %67 : vector<8x16x4xbf16> to vector<128x4xbf16>
    %69 = vector.extract_strided_slice %54 {offsets = [2, 1, 0], sizes = [8, 16, 4], strides = [1, 1, 1]} : vector<10x18x4xbf16> to vector<8x16x4xbf16>
    %70 = vector.shape_cast %69 : vector<8x16x4xbf16> to vector<128x4xbf16>
    %71 = vector.extract_strided_slice %54 {offsets = [2, 2, 0], sizes = [8, 16, 4], strides = [1, 1, 1]} : vector<10x18x4xbf16> to vector<8x16x4xbf16>
    %72 = vector.shape_cast %71 : vector<8x16x4xbf16> to vector<128x4xbf16>
    %73 = tpu.concatenate %56, %58, %60, %62, %64, %66, %68, %70, %72 in 1 : vector<128x4xbf16>, vector<128x4xbf16>, vector<128x4xbf16>, vector<128x4xbf16>, vector<128x4xbf16>, vector<128x4xbf16>, vector<128x4xbf16>, vector<128x4xbf16>, vector<128x4xbf16> -> vector<128x36xbf16>
    %c0_31 = arith.constant 0 : index
    %c0_32 = arith.constant 0 : index
    %74 = vector.load %arg7[%c0_31, %c0_32] : memref<36x4xbf16, #tpu.memory_space<vmem>>, vector<36x4xbf16>
    %cst_33 = arith.constant dense<0.000000e+00> : vector<128x4xf32>
    %75 = tpu.matmul %73, %74, %cst_33 {dimension_numbers = #tpu.dot_dimension_numbers<[1], [0], [0], [1], [0, 0, 1, 1], [], []>} : vector<128x36xbf16>, vector<36x4xbf16>, vector<128x4xf32> -> vector<128x4xf32>
    %76 = vector.shape_cast %75 : vector<128x4xf32> to vector<8x16x4xf32>
    %77 = arith.truncf %76 : vector<8x16x4xf32> to vector<8x16x4xbf16>
    %c0_34 = arith.constant 0 : index
    %c0_35 = arith.constant 0 : index
    %c0_36 = arith.constant 0 : index
    %c0_37 = arith.constant 0 : index
    %78 = vector.load %arg8[%c0_34, %c0_35, %c0_36, %c0_37] : memref<1x8x16x4xbf16, #tpu.memory_space<vmem>>, vector<1x8x16x4xbf16>
    %79 = vector.shape_cast %78 : vector<1x8x16x4xbf16> to vector<8x16x4xbf16>
    %80 = vector.shape_cast %77 : vector<8x16x4xbf16> to vector<1x8x16x4xbf16>
    tpu.vector_store %arg8[%c0_34, %c0_35, %c0_36, %c0_37], %80 {strides = array<i32>} : memref<1x8x16x4xbf16, #tpu.memory_space<vmem>>, vector<1x8x16x4xbf16>,
    %cst_38 = arith.constant dense<0.000000e+00> : vector<4xf32>
    %81 = vector.multi_reduction <add>, %75, %cst_38 [0] : vector<128x4xf32> to vector<4xf32>
    %82 = vector.shape_cast %81 : vector<4xf32> to vector<1x4xf32>
    %c0_39 = arith.constant 0 : index
    %c0_40 = arith.constant 0 : index
    %c0_41 = arith.constant 0 : index
    %c0_42 = arith.constant 0 : index
    %83 = vector.load %arg9[%c0_39, %c0_40, %c0_41, %c0_42] : memref<1x1x1x4xf32, #tpu.memory_space<vmem>>, vector<1x1x1x4xf32>
    %84 = vector.shape_cast %83 : vector<1x1x1x4xf32> to vector<1x4xf32>
    %85 = vector.shape_cast %82 : vector<1x4xf32> to vector<1x1x1x4xf32>
    tpu.vector_store %arg9[%c0_39, %c0_40, %c0_41, %c0_42], %85 {strides = array<i32>} : memref<1x1x1x4xf32, #tpu.memory_space<vmem>>, vector<1x1x1x4xf32>,
    %86 = arith.mulf %75, %75 : vector<128x4xf32>
    %cst_43 = arith.constant dense<0.000000e+00> : vector<4xf32>
    %87 = vector.multi_reduction <add>, %86, %cst_43 [0] : vector<128x4xf32> to vector<4xf32>
    %88 = vector.shape_cast %87 : vector<4xf32> to vector<1x4xf32>
    %c0_44 = arith.constant 0 : index
    %c0_45 = arith.constant 0 : index
    %c0_46 = arith.constant 0 : index
    %c0_47 = arith.constant 0 : index
    %89 = vector.load %arg10[%c0_44, %c0_45, %c0_46, %c0_47] : memref<1x1x1x4xf32, #tpu.memory_space<vmem>>, vector<1x1x1x4xf32>
    %90 = vector.shape_cast %89 : vector<1x1x1x4xf32> to vector<1x4xf32>
    %91 = vector.shape_cast %88 : vector<1x4xf32> to vector<1x1x1x4xf32>
    tpu.vector_store %arg10[%c0_44, %c0_45, %c0_46, %c0_47], %91 {strides = array<i32>} : memref<1x1x1x4xf32, #tpu.memory_space<vmem>>, vector<1x1x1x4xf32>,
    return
  }
  func.func @transform_0(%arg0: i32, %arg1: i32) -> (i32, i32, i32, i32) {
    %c0_i32 = arith.constant 0 : i32
    %c0_i32_0 = arith.constant 0 : i32
    %c0_i32_1 = arith.constant 0 : i32
    return %arg0, %arg1, %c0_i32, %c0_i32_0 : i32, i32, i32, i32
  }
  func.func @transform_1(%arg0: i32, %arg1: i32) -> (i32, i32, i32, i32) {
    %c8_i32 = arith.constant 8 : i32
    %0 = arith.muli %arg1, %c8_i32 : i32
    %c1_i32 = arith.constant 1 : i32
    %1 = arith.subi %0, %c1_i32 : i32
    %c0_i32 = arith.constant 0 : i32
    %2 = arith.maxsi %1, %c0_i32 : i32
    %c0_i32_0 = arith.constant 0 : i32
    %c0_i32_1 = arith.constant 0 : i32
    %c0_i32_2 = arith.constant 0 : i32
    return %arg0, %2, %c0_i32_0, %c0_i32_1 : i32, i32, i32, i32
  }
  func.func @transform_2(%arg0: i32, %arg1: i32) -> (i32, i32, i32, i32) {
    %c8_i32 = arith.constant 8 : i32
    %0 = arith.muli %arg1, %c8_i32 : i32
    %c8_i32_0 = arith.constant 8 : i32
    %1 = arith.addi %0, %c8_i32_0 : i32
    %c15_i32 = arith.constant 15 : i32
    %2 = arith.minsi %1, %c15_i32 : i32
    %c0_i32 = arith.constant 0 : i32
    %c0_i32_1 = arith.constant 0 : i32
    %c0_i32_2 = arith.constant 0 : i32
    return %arg0, %2, %c0_i32, %c0_i32_1 : i32, i32, i32, i32
  }
  func.func @transform_3(%arg0: i32, %arg1: i32) -> (i32, i32) {
    %c0_i32 = arith.constant 0 : i32
    %c0_i32_0 = arith.constant 0 : i32
    %c0_i32_1 = arith.constant 0 : i32
    return %c0_i32, %c0_i32_0 : i32, i32
  }
  func.func @transform_4(%arg0: i32, %arg1: i32) -> (i32, i32) {
    %c0_i32 = arith.constant 0 : i32
    %c0_i32_0 = arith.constant 0 : i32
    %c0_i32_1 = arith.constant 0 : i32
    return %c0_i32, %c0_i32_0 : i32, i32
  }
  func.func @transform_5(%arg0: i32, %arg1: i32) -> (i32, i32) {
    %c0_i32 = arith.constant 0 : i32
    %c0_i32_0 = arith.constant 0 : i32
    %c0_i32_1 = arith.constant 0 : i32
    return %c0_i32, %c0_i32_0 : i32, i32
  }
  func.func @transform_6(%arg0: i32, %arg1: i32) -> (i32, i32, i32, i32) {
    %c0_i32 = arith.constant 0 : i32
    %c0_i32_0 = arith.constant 0 : i32
    %c0_i32_1 = arith.constant 0 : i32
    return %arg0, %arg1, %c0_i32, %c0_i32_0 : i32, i32, i32, i32
  }
  func.func @transform_7(%arg0: i32, %arg1: i32) -> (i32, i32, i32, i32) {
    %c0_i32 = arith.constant 0 : i32
    %c0_i32_0 = arith.constant 0 : i32
    %c0_i32_1 = arith.constant 0 : i32
    return %arg0, %arg1, %c0_i32, %c0_i32_0 : i32, i32, i32, i32
  }
  func.func @transform_8(%arg0: i32, %arg1: i32) -> (i32, i32, i32, i32) {
    %c0_i32 = arith.constant 0 : i32
    %c0_i32_0 = arith.constant 0 : i32
    %c0_i32_1 = arith.constant 0 : i32
    return %arg0, %arg1, %c0_i32, %c0_i32_0 : i32, i32, i32, i32
  }
}

module attributes {stable_mosaic.version = 11 : i64} {
  func.func @_bnrelu_kernel(%arg0: i32, %arg1: i32, %arg2: memref<1x1x1x512xbf16, #tpu.memory_space<vmem>>, %arg3: memref<1x512xf32, #tpu.memory_space<vmem>>, %arg4: memref<1x512xf32, #tpu.memory_space<vmem>>, %arg5: memref<1x1x1x512xf32, #tpu.memory_space<vmem>>) attributes {dimension_semantics = [#tpu.dimension_semantics<parallel>, #tpu.dimension_semantics<parallel>], iteration_bounds = array<i64: 2, 2>, scalar_prefetch = 0 : i64, scratch_operands = 0 : i64, tpu.core_type = #tpu.core_type<tc>, window_params = [{transform_indices = @transform_0, window_bounds = array<i64: 1, 1, 1, 512>}, {pipeline_mode = #tpu.pipeline_mode<synchronous>, transform_indices = @transform_1, window_bounds = array<i64: 1, 512>}, {pipeline_mode = #tpu.pipeline_mode<synchronous>, transform_indices = @transform_2, window_bounds = array<i64: 1, 512>}, {transform_indices = @transform_3, window_bounds = array<i64: 1, 1, 1, 512>}]} {
    %c0 = arith.constant 0 : index
    %c0_0 = arith.constant 0 : index
    %c0_1 = arith.constant 0 : index
    %c0_2 = arith.constant 0 : index
    %0 = vector.load %arg2[%c0, %c0_0, %c0_1, %c0_2] : memref<1x1x1x512xbf16, #tpu.memory_space<vmem>>, vector<1x1x1x512xbf16>
    %1 = arith.extf %0 : vector<1x1x1x512xbf16> to vector<1x1x1x512xf32>
    %c0_3 = arith.constant 0 : index
    %c0_4 = arith.constant 0 : index
    %2 = vector.load %arg3[%c0_3, %c0_4] : memref<1x512xf32, #tpu.memory_space<vmem>>, vector<1x512xf32>
    %3 = vector.shape_cast %2 : vector<1x512xf32> to vector<1x1x1x512xf32>
    %4 = arith.mulf %1, %3 : vector<1x1x1x512xf32>
    %c0_5 = arith.constant 0 : index
    %c0_6 = arith.constant 0 : index
    %5 = vector.load %arg4[%c0_5, %c0_6] : memref<1x512xf32, #tpu.memory_space<vmem>>, vector<1x512xf32>
    %6 = vector.shape_cast %5 : vector<1x512xf32> to vector<1x1x1x512xf32>
    %7 = arith.addf %4, %6 : vector<1x1x1x512xf32>
    %cst = arith.constant 0.000000e+00 : f32
    %8 = vector.broadcast %cst : f32 to vector<1x1x1x512xf32>
    %9 = arith.maximumf %7, %8 : vector<1x1x1x512xf32>
    %c0_7 = arith.constant 0 : index
    %c0_8 = arith.constant 0 : index
    %c0_9 = arith.constant 0 : index
    %c0_10 = arith.constant 0 : index
    %10 = vector.load %arg5[%c0_7, %c0_8, %c0_9, %c0_10] : memref<1x1x1x512xf32, #tpu.memory_space<vmem>>, vector<1x1x1x512xf32>
    tpu.vector_store %arg5[%c0_7, %c0_8, %c0_9, %c0_10], %9 {strides = array<i32>} : memref<1x1x1x512xf32, #tpu.memory_space<vmem>>, vector<1x1x1x512xf32>,
    return
  }
  func.func @transform_0(%arg0: i32, %arg1: i32) -> (i32, i32, i32, i32) {
    %c0_i32 = arith.constant 0 : i32
    %c0_i32_0 = arith.constant 0 : i32
    %c0_i32_1 = arith.constant 0 : i32
    return %arg0, %arg1, %c0_i32, %c0_i32_0 : i32, i32, i32, i32
  }
  func.func @transform_1(%arg0: i32, %arg1: i32) -> (i32, i32) {
    %c0_i32 = arith.constant 0 : i32
    %c0_i32_0 = arith.constant 0 : i32
    %c0_i32_1 = arith.constant 0 : i32
    return %c0_i32, %c0_i32_0 : i32, i32
  }
  func.func @transform_2(%arg0: i32, %arg1: i32) -> (i32, i32) {
    %c0_i32 = arith.constant 0 : i32
    %c0_i32_0 = arith.constant 0 : i32
    %c0_i32_1 = arith.constant 0 : i32
    return %c0_i32, %c0_i32_0 : i32, i32
  }
  func.func @transform_3(%arg0: i32, %arg1: i32) -> (i32, i32, i32, i32) {
    %c0_i32 = arith.constant 0 : i32
    %c0_i32_0 = arith.constant 0 : i32
    %c0_i32_1 = arith.constant 0 : i32
    return %arg0, %arg1, %c0_i32, %c0_i32_0 : i32, i32, i32, i32
  }
}

</mosaic_0001>

<llo_original>
// kernel: up_forward.4
$region0: #{up_forward.4}
  #allocation0 [shape = 'u32[]', space=smem, size = 0x4, offset = 0x4, fixed_abs, tag = 'smem constant byte address 0x4 - core index']
  #allocation1 [shape = 'u32[144,128]{1,0:T(1,128)}', space=vmem, size = 0x12000, scoped, tag = 'internal scratch']
  %s0 = inlined_call_operand.hbm [shape: f32[2,8,8,8], index: 0, kind: input, shape index: {}]
  %s1 = inlined_call_operand.hbm [shape: bf16[8,16], index: 1, kind: input, shape index: {}]
  %s2 = inlined_call_operand.hbm [shape: f32[1,16], index: 2, kind: input, shape index: {}]
  %s3 = inlined_call_operand.hbm [shape: bf16[2,8,8,16], index: 3, kind: output, shape index: {}]
  %s4 = sld [smem:[#allocation0]]
  $region57: #{up_forward.4} parent=0
    _
  %s6 = ssub.s32 1, %s4
  %s7 = scalar_select 0, %s6, %s4
  $region1: #{up_forward.4} parent=0
    #allocation2 [shape = 'u8[65536]{0}', space=vmem, size = 0x10000, scoped, tag = 'input window, operand 0']
    #allocation3 [shape = 's32[2]{0}', space=sflag, size = 0x8, scoped, tag = 'scoped memory for up_forward.4']
    #allocation4 [shape = 's32[2]{0}', space=sflag, size = 0x8, scoped, tag = 'scoped memory for up_forward.4']
    #allocation5 [shape = 'u8[2048]{0}', space=vmem, size = 0x800, scoped, tag = 'input window, operand 1, single buffered']
    #allocation6 [shape = 's32[1]{0}', space=sflag, size = 0x4, scoped, tag = 'scoped memory for up_forward.4']
    #allocation7 [shape = 'u8[512]{0}', space=vmem, size = 0x400, scoped, tag = 'input window, operand 2, single buffered']
    #allocation8 [shape = 'u8[32768]{0}', space=vmem, size = 0x8000, scoped, tag = 'output window, operand 0']
    %8 = vsyncpa [#allocation3], 0
    %s9 = scalar_lea.sflag [#allocation3], 1
    %10 = vsyncpa %s9, 0
    %11 = vsyncpa [#allocation6], 0
    %12 = vsyncpa [#allocation4], 0
    %s13 = scalar_lea.sflag [#allocation4], 1
    %14 = vsyncpa %s13, 0
    loop: start=0, step=1, limit=4
    $region2: #{up_forward.4} parent=1 // loop_pre_header
      _
    $region3: #{up_forward.4} parent=1 // loop_header
      %s16 = sphi 0, %s20
      %p17 = scmp.ge.s32.totalorder %s16, 4
      %s26 = sphi 0, %s28
      %s29 = sphi 0, %s26
      %s30 = sphi 0, %s29
      %s46 = sphi 0, %s30
      %s50 = sphi 0, %s50
      %s52 = sphi 0, %s50
      %s53 = sphi 0, %s52
      %s67 = sphi 0, %s53
      %s71 = sphi 0, %s71
      %s73 = sphi 0, %s71
      %s74 = sphi 0, %s73
      %s88 = sphi 0, %s74
      %s94 = sphi 0, %s96
      %s97 = sphi 0, %s94
      %s98 = sphi 0, %s97
      %s114 = sphi 0, %s98
    $region4: #{up_forward.4} parent=1 // loop_header_branch
      %19 = sbr.rel (%p17) target = $region8
    $region5: #{up_forward.4} parent=1 // loop_body
      %s21 = ssub.s32 %s16, 1
      %s22 = ssub.s32 %s16, 2
      %s23 = sadd.s32 %s16, 1
      %s24 = ssub.s32 %s16, %s23
      %p25 = scmp.eq.s32.totalorder %s24, 0
      %s27 = sadd.s32 %s26, 1
      %s28 = scalar_select %p25, %s26, %s27
      %p31 = pneg %p25
      %p32 = scmp.eq.s32.totalorder %s16, 1
      %p33 = por %p31, %p32
      %p34 = scmp.ne.s32.totalorder %s26, %s29
      %p35 = scmp.eq.s32.totalorder %s16, 0
      %p36 = por %p34, %p35
      %p37 = scmp.ne.s32.totalorder %s26, %s29
      %p38 = scmp.eq.s32.totalorder %s21, 1
      %p39 = por %p37, %p38
      %p40 = scmp.ne.s32.totalorder %s29, %s30
      %p41 = scmp.eq.s32.totalorder %s21, 0
      %p42 = por %p40, %p41
      %p43 = scmp.ne.s32.totalorder %s29, %s30
      %p44 = scmp.eq.s32.totalorder %s22, 1
      %p45 = por %p43, %p44
      %p47 = scmp.ne.s32.totalorder %s30, %s46
      %p48 = scmp.eq.s32.totalorder %s22, 0
      %p49 = por %p47, %p48
      %s51 = sadd.s32 %s50, 1
      %p54 = scmp.eq.s32.totalorder %s16, 1
      %p55 = scmp.ne.s32.totalorder %s50, %s52
      %p56 = scmp.eq.s32.totalorder %s16, 0
      %p57 = por %p55, %p56
      %p58 = scmp.ne.s32.totalorder %s50, %s52
      %p59 = scmp.eq.s32.totalorder %s21, 1
      %p60 = por %p58, %p59
      %p61 = scmp.ne.s32.totalorder %s52, %s53
      %p62 = scmp.eq.s32.totalorder %s21, 0
      %p63 = por %p61, %p62
      %p64 = scmp.ne.s32.totalorder %s52, %s53
      %p65 = scmp.eq.s32.totalorder %s22, 1
      %p66 = por %p64, %p65
      %p68 = scmp.ne.s32.totalorder %s53, %s67
      %p69 = scmp.eq.s32.totalorder %s22, 0
      %p70 = por %p68, %p69
      %s72 = sadd.s32 %s71, 1
      %p75 = scmp.eq.s32.totalorder %s16, 1
      %p76 = scmp.ne.s32.totalorder %s71, %s73
      %p77 = scmp.eq.s32.totalorder %s16, 0
      %p78 = por %p76, %p77
      %p79 = scmp.ne.s32.totalorder %s71, %s73
      %p80 = scmp.eq.s32.totalorder %s21, 1
      %p81 = por %p79, %p80
      %p82 = scmp.ne.s32.totalorder %s73, %s74
      %p83 = scmp.eq.s32.totalorder %s21, 0
      %p84 = por %p82, %p83
      %p85 = scmp.ne.s32.totalorder %s73, %s74
      %p86 = scmp.eq.s32.totalorder %s22, 1
      %p87 = por %p85, %p86
      %p89 = scmp.ne.s32.totalorder %s74, %s88
      %p90 = scmp.eq.s32.totalorder %s22, 0
      %p91 = por %p89, %p90
      %s92 = ssub.s32 %s16, %s23
      %p93 = scmp.eq.s32.totalorder %s92, 0
      %s95 = sadd.s32 %s94, 1
      %s96 = scalar_select %p93, %s94, %s95
      %p99 = pneg %p93
      %p100 = scmp.eq.s32.totalorder %s16, 1
      %p101 = por %p99, %p100
      %p102 = scmp.ne.s32.totalorder %s94, %s97
      %p103 = scmp.eq.s32.totalorder %s16, 0
      %p104 = por %p102, %p103
      %p105 = scmp.ne.s32.totalorder %s94, %s97
      %p106 = scmp.eq.s32.totalorder %s21, 1
      %p107 = por %p105, %p106
      %p108 = scmp.ne.s32.totalorder %s97, %s98
      %p109 = scmp.eq.s32.totalorder %s21, 0
      %p110 = por %p108, %p109
      %p111 = scmp.ne.s32.totalorder %s97, %s98
      %p112 = scmp.eq.s32.totalorder %s22, 1
      %p113 = por %p111, %p112
      %p115 = scmp.ne.s32.totalorder %s98, %s114
      %p116 = scmp.eq.s32.totalorder %s22, 0
      %p117 = por %p115, %p116
      %p118 = scmp.le.s32.totalorder 1, %s16
      %p119 = scmp.lt.s32.totalorder %s16, 3
      %p120 = pnand %p118, %p119
      %p121 = pneg %p120
      // Predicated region
      $region9: #{up_forward.4} parent=5 // pred_check
        _
      $region10: #{up_forward.4} parent=5 // pred_check_branch
        %123 = sbr.rel (%p120) target = $region12
      $region11: #{up_forward.4} parent=5 // pred_region
        %s124 = ssub.s32 %s16, 1
        // Predicated region
        $region13: #{up_forward.4} parent=11 // pred_check
          %p125 = pneg %p63
        $region14: #{up_forward.4} parent=11 // pred_check_branch
          %127 = sbr.rel (%p125) target = $region16
        $region15: #{up_forward.4} parent=11 // pred_region
          %s129 = ssub.s32 64, 64
          %130 = vsyncadd [#allocation6], %s129
          %s132 = sshll.u32 [#allocation5], 4
          %s133 = int_to_ptr.vmem [resolvable:$true] %s132
          %135 = dma.hbm_to_vmem [thread:$0]  %s1, 64, %s133, [#allocation6]
        $region16: #{up_forward.4} parent=11 // pred_fallthru
          _
        // Predicated region
        $region17: #{up_forward.4} parent=11 // pred_check
          %p136 = pneg %p84
        $region18: #{up_forward.4} parent=11 // pred_check_branch
          %138 = sbr.rel (%p136) target = $region20
        $region19: #{up_forward.4} parent=11 // pred_region
          %s140 = ssub.s32 16, 16
          %141 = vsyncadd [#allocation6], %s140
          %s143 = sshll.u32 [#allocation7], 4
          %s144 = int_to_ptr.vmem [resolvable:$true] %s143
          %146 = dma.hbm_to_vmem [thread:$0]  %s2, 16, %s144, [#allocation6]
        $region20: #{up_forward.4} parent=11 // pred_fallthru
          _
      $region12: #{up_forward.4} parent=5 // pred_fallthru
        _
      %p147 = scmp.lt.s32.totalorder %s16, 2
      // Predicated region
      $region21: #{up_forward.4} parent=5 // pred_check
        %p148 = pneg %p147
      $region22: #{up_forward.4} parent=5 // pred_check_branch
        %150 = sbr.rel (%p148) target = $region24
      $region23: #{up_forward.4} parent=5 // pred_region
        // Predicated region
        $region25: #{up_forward.4} parent=23 // pred_check
          %p151 = pneg %p36
        $region26: #{up_forward.4} parent=23 // pred_check_branch
          %153 = sbr.rel (%p151) target = $region28
        $region27: #{up_forward.4} parent=23 // pred_region
          %s154 = sand.u32 %s26, 1
          %s155 = scalar_lea.sflag [#allocation3], %s154
          %s156 = sand.u32 %s26, 1
          %s157 = smul.addr %s156, 64
          %s158 = scalar_lea.vmem [#allocation2], %s157
          %s160 = ssub.s32 1024, 1024
          %161 = vsyncadd %s155, %s160
          %s162 = smul.addr %s16, 8
          %s163 = smul.addr %s162, 128
          %s164 = scalar_lea.hbm %s0, %s163
          %s165 = sshll.u32 %s158, 4
          %s166 = int_to_ptr.vmem [resolvable:$true] %s165
          %171 = dma.hbm_to_vmem [thread:$0]  %s164, 1024, %s166, %s155, 128, 128, 8
        $region28: #{up_forward.4} parent=23 // pred_fallthru
          _
      $region24: #{up_forward.4} parent=5 // pred_fallthru
        _
      %p172 = scmp.le.s32.totalorder 1, %s16
      %p173 = scmp.lt.s32.totalorder %s16, 3
      %p174 = pnand %p172, %p173
      %p175 = pneg %p174
      // Predicated region
      $region29: #{up_forward.4} parent=5 // pred_check
        _
      $region30: #{up_forward.4} parent=5 // pred_check_branch
        %177 = sbr.rel (%p174) target = $region32
      $region31: #{up_forward.4} parent=5 // pred_region
        %s178 = ssub.s32 %s16, 1
        %s179 = sand.u32 %s29, 1
        %s180 = scalar_lea.sflag [#allocation3], %s179
        %s181 = sand.u32 %s29, 1
        %s182 = smul.addr %s181, 64
        %s183 = scalar_lea.vmem [#allocation2], %s182
        // Predicated region
        $region33: #{up_forward.4} parent=31 // pred_check
          %p184 = pneg %p42
        $region34: #{up_forward.4} parent=31 // pred_check_branch
          %186 = sbr.rel (%p184) target = $region36
        $region35: #{up_forward.4} parent=31 // pred_region
          %187 = dma.done %s180, 1024
        $region36: #{up_forward.4} parent=31 // pred_fallthru
          _
        // Predicated region
        $region37: #{up_forward.4} parent=31 // pred_check
          %p188 = pneg %p63
        $region38: #{up_forward.4} parent=31 // pred_check_branch
          %190 = sbr.rel (%p188) target = $region40
        $region39: #{up_forward.4} parent=31 // pred_region
          %191 = dma.done [#allocation6], 64
        $region40: #{up_forward.4} parent=31 // pred_fallthru
          _
        // Predicated region
        $region41: #{up_forward.4} parent=31 // pred_check
          %p192 = pneg %p84
        $region42: #{up_forward.4} parent=31 // pred_check_branch
          %194 = sbr.rel (%p192) target = $region44
        $region43: #{up_forward.4} parent=31 // pred_region
          %195 = dma.done [#allocation6], 16
        $region44: #{up_forward.4} parent=31 // pred_fallthru
          _
        %s196 = sand.u32 %s29, 1
        %s197 = scalar_lea.sflag [#allocation3], %s196
        %s198 = sand.u32 %s29, 1
        %s199 = smul.addr %s198, 64
        %s200 = scalar_lea.vmem [#allocation2], %s199
        %p201 = pneg %p42
        %p202 = pneg %p39
        %p203 = pneg %p63
        %p204 = pneg %p60
        %p205 = pneg %p84
        %p206 = pneg %p81
        %p207 = pneg %p110
        %p208 = pneg %p107
        %s209 = sand.u32 %s97, 1
        %s210 = scalar_lea.sflag [#allocation4], %s209
        %s211 = sand.u32 %s97, 1
        %s212 = smul.addr %s211, 32
        %s213 = scalar_lea.vmem [#allocation8], %s212
        %v215 = vld [vmem:[%s183] sm:$0xff]
        %v216 = vld [vmem:[%s183 + $0x8] sm:$0xff]
        %v217 = vld [vmem:[%s183 + $0x10] sm:$0xff]
        %v218 = vld [vmem:[%s183 + $0x18] sm:$0xff]
        %v219 = vld [vmem:[%s183 + $0x20] sm:$0xff]
        %v220 = vld [vmem:[%s183 + $0x28] sm:$0xff]
        %v221 = vld [vmem:[%s183 + $0x30] sm:$0xff]
        %v222 = vld [vmem:[%s183 + $0x38] sm:$0xff]
        %v223 = vpack.c.bf16 %v215, %v215
        %v224 = vpack.c.bf16 %v216, %v216
        %v225 = vpack.c.bf16 %v217, %v217
        %v226 = vpack.c.bf16 %v218, %v218
        %v227 = vpack.c.bf16 %v219, %v219
        %v228 = vpack.c.bf16 %v220, %v220
        %v229 = vpack.c.bf16 %v221, %v221
        %v230 = vpack.c.bf16 %v222, %v222
        %v231 = vld [vmem:[#allocation5] sm:$0xf]
        %v232 = vld [vmem:[#allocation7] sm:$0x1]
        %v234 = vlaneseq
        %v235 = vshrl.u32 %v234, 7
        %v236 = vsub.s32 0, %v235
        %v237 = vrot.slane %v232, %v236
        %v247 = vunpack.c.l.b16 %v223
        %v248 = vunpack.c.l.b16 %v224
        %v249 = vunpack.c.l.b16 %v225
        %v250 = vunpack.c.l.b16 %v226
        %v251 = vunpack.c.l.b16 %v227
        %v252 = vunpack.c.l.b16 %v228
        %v253 = vunpack.c.l.b16 %v229
        %v254 = vunpack.c.l.b16 %v230
        %v255 = vpack.c.b16 %v248, %v247
        %v256 = vpack.c.b16 %v250, %v249
        %v257 = vpack.c.b16 %v252, %v251
        %v258 = vpack.c.b16 %v254, %v253
        %vm259 = vcmask 64512
        %v261 = vsel %vm259, %v255, 0
        %v264 = vsel %vm259, %v256, 0
        %v267 = vsel %vm259, %v257, 0
        %v270 = vsel %vm259, %v258, 0
        %vm272 = vcmask 1043456
        %v274 = vsel %vm272, %v231, 0
        %276 = vmatprep.subr.bf16.mxu0 0
        %277 = vmatpush1.bf16.msra.mxu0 %v274
        %278 = vmatprep.subr.bf16.mxu0 0
        %279 = vmatpush1.bf16.msra.mxu0 0
        %280 = vmatprep.subr.bf16.mxu0 0
        %281 = vmatpush1.bf16.msra.mxu0 0
        %282 = vmatprep.subr.bf16.mxu0 0
        %283 = vmatpush1.bf16.msra.mxu0 0
        %284 = vmatprep.subr.bf16.mxu0 0
        %285 = vmatpush1.bf16.msra.mxu0 0
        %286 = vmatprep.subr.bf16.mxu0 0
        %287 = vmatpush1.bf16.msra.mxu0 0
        %288 = vmatprep.subr.bf16.mxu0 0
        %289 = vmatpush1.bf16.msra.mxu0 0
        %290 = vmatprep.subr.bf16.mxu0 0
        %291 = vmatpush1.bf16.msra.mxu0 0
        %292 = vmatprep.subr.bf16.mxu0 0
        %293 = vmatpush1.bf16.msra.mxu0 0
        %294 = vmatprep.subr.bf16.mxu0 0
        %295 = vmatpush1.bf16.msra.mxu0 0
        %296 = vmatprep.subr.bf16.mxu0 0
        %297 = vmatpush1.bf16.msra.mxu0 0
        %298 = vmatprep.subr.bf16.mxu0 0
        %299 = vmatpush1.bf16.msra.mxu0 0
        %300 = vmatprep.subr.bf16.mxu0 0
        %301 = vmatpush1.bf16.msra.mxu0 0
        %302 = vmatprep.subr.bf16.mxu0 0
        %303 = vmatpush1.bf16.msra.mxu0 0
        %304 = vmatprep.subr.bf16.mxu0 0
        %305 = vmatpush1.bf16.msra.mxu0 0
        %306 = vmatprep.subr.bf16.mxu0 0
        %307 = vmatpush1.bf16.msra.mxu0 0
        %308 = vmatprep.mubr.bf16.mxu0 0
        %309 = vmatmul.mubr.bf16.gmra.mrb[0].mxu0 %v261
        %v310 = vpop.f32.mrb[0].mxu0
        %v311 = vadd.f32 %v237, %v310
        %v312 = vpop.f32.mrb[0].mxu0
        %v313 = vpop.f32.mrb[0].mxu0
        %v314 = vadd.f32 %v237, %v313
        %v315 = vpop.f32.mrb[0].mxu0
        %316 = vmatprep.mubr.bf16.mxu0 0
        %317 = vmatmul.mubr.bf16.gmra.mrb[0].mxu0 %v264
        %v318 = vpop.f32.mrb[0].mxu0
        %v319 = vadd.f32 %v237, %v318
        %v320 = vpop.f32.mrb[0].mxu0
        %v321 = vpop.f32.mrb[0].mxu0
        %v322 = vadd.f32 %v237, %v321
        %v323 = vpop.f32.mrb[0].mxu0
        %324 = vmatprep.mubr.bf16.mxu0 0
        %325 = vmatmul.mubr.bf16.gmra.mrb[0].mxu0 %v267
        %v326 = vpop.f32.mrb[0].mxu0
        %v327 = vadd.f32 %v237, %v326
        %v328 = vpop.f32.mrb[0].mxu0
        %v329 = vpop.f32.mrb[0].mxu0
        %v330 = vadd.f32 %v237, %v329
        %v331 = vpop.f32.mrb[0].mxu0
        %332 = vmatprep.mubr.bf16.mxu0 0
        %333 = vmatmul.mubr.bf16.gmra.mrb[0].mxu0 %v270
        %v334 = vpop.f32.mrb[0].mxu0
        %v335 = vadd.f32 %v237, %v334
        %v336 = vpop.f32.mrb[0].mxu0
        %v337 = vpop.f32.mrb[0].mxu0
        %v338 = vadd.f32 %v237, %v337
        %v339 = vpop.f32.mrb[0].mxu0
        %340 = vdwg.mxu0
        %v341 = vpack.c.bf16 %v311, %v311
        %v342 = vpack.c.bf16 %v314, %v314
        %v343 = vpack.c.bf16 %v319, %v319
        %v344 = vpack.c.bf16 %v322, %v322
        %v345 = vpack.c.bf16 %v327, %v327
        %v346 = vpack.c.bf16 %v330, %v330
        %v347 = vpack.c.bf16 %v335, %v335
        %v348 = vpack.c.bf16 %v338, %v338
        %vm349 = vcmask 125952
        %350 = vst.msk [vmem:[%s213] sm:$0xf] %vm349, %v341
        %351 = vst.msk [vmem:[%s213 + $0x4] sm:$0xf] %vm349, %v342
        %352 = vst.msk [vmem:[%s213 + $0x8] sm:$0xf] %vm349, %v343
        %353 = vst.msk [vmem:[%s213 + $0xc] sm:$0xf] %vm349, %v344
        %354 = vst.msk [vmem:[%s213 + $0x10] sm:$0xf] %vm349, %v345
        %355 = vst.msk [vmem:[%s213 + $0x14] sm:$0xf] %vm349, %v346
        %356 = vst.msk [vmem:[%s213 + $0x18] sm:$0xf] %vm349, %v347
        %357 = vst.msk [vmem:[%s213 + $0x1c] sm:$0xf] %vm349, %v348
        %s358 = sand.u32 %s97, 1
        %s359 = scalar_lea.sflag [#allocation4], %s358
        %s360 = sand.u32 %s97, 1
        %s361 = smul.addr %s360, 32
        %s362 = scalar_lea.vmem [#allocation8], %s361
        // Predicated region
        $region45: #{up_forward.4} parent=31 // pred_check
          %p363 = pneg %p107
        $region46: #{up_forward.4} parent=31 // pred_check_branch
          %365 = sbr.rel (%p363) target = $region48
        $region47: #{up_forward.4} parent=31 // pred_region
          %s367 = ssub.s32 512, 512
          %368 = vsyncadd %s359, %s367
          %s369 = smul.addr %s21, 8
          %s370 = smul.addr %s369, 64
          %s371 = scalar_lea.hbm %s3, %s370
          %s372 = sshll.u32 %s362, 4
          %s373 = int_to_ptr.vmem [resolvable:$true] %s372
          %378 = dma.vmem_to_hbm [thread:$0]  %s373, 512, %s371, %s359, 64, 64, 4
        $region48: #{up_forward.4} parent=31 // pred_fallthru
          _
      $region32: #{up_forward.4} parent=5 // pred_fallthru
        _
      %p379 = scmp.le.s32.totalorder 2, %s16
      // Predicated region
      $region49: #{up_forward.4} parent=5 // pred_check
        %p380 = pneg %p379
      $region50: #{up_forward.4} parent=5 // pred_check_branch
        %382 = sbr.rel (%p380) target = $region52
      $region51: #{up_forward.4} parent=5 // pred_region
        %s383 = ssub.s32 %s16, 2
        // Predicated region
        $region53: #{up_forward.4} parent=51 // pred_check
          %p384 = pneg %p113
        $region54: #{up_forward.4} parent=51 // pred_check_branch
          %386 = sbr.rel (%p384) target = $region56
        $region55: #{up_forward.4} parent=51 // pred_region
          %s387 = sand.u32 %s98, 1
          %s388 = scalar_lea.sflag [#allocation4], %s387
          %s389 = sand.u32 %s98, 1
          %s390 = smul.addr %s389, 32
          %s391 = scalar_lea.vmem [#allocation8], %s390
          %392 = dma.done %s388, 512
        $region56: #{up_forward.4} parent=51 // pred_fallthru
          _
      $region52: #{up_forward.4} parent=5 // pred_fallthru
        _
    $region6: #{up_forward.4} parent=1 // loop_footer
      %s20 = sadd.s32 1, %s16
    $region7: #{up_forward.4} parent=1 // loop_footer_branch
      %15 = sbr.rel target = $region3
    $region8: #{up_forward.4} parent=1 // loop_exit
      _
    %393 = vsyncpa [#allocation3], 1
    %s394 = scalar_lea.sflag [#allocation3], 1
    %395 = vsyncpa %s394, 1
    %396 = vsyncpa [#allocation6], 1
    %397 = vsyncpa [#allocation4], 1
    %s398 = scalar_lea.sflag [#allocation4], 1
    %399 = vsyncpa %s398, 1

// kernel: tile.13
$region0: #{tile.13}
  #allocation0 [shape = 's32[1]{0}', space=sflag, size = 0x4, scoped, tag = 'scoped memory for tile.13']
  %s0 = inlined_call_operand.vmem [shape: f32[4], index: 0, kind: input, shape index: {}]
  %s1 = inlined_call_operand.vmem [shape: f32[128,4], index: 1, kind: output, shape index: {}]
  // Predicated region
  $region2: #{tile.13} parent=0 // pred_check
    _
  $region3: #{tile.13} parent=0 // pred_check_branch
    %3 = sbr.rel (0) target = $region5
  $region4: #{tile.13} parent=0 // pred_region
    _
  $region5: #{tile.13} parent=0 // pred_fallthru
    _
  %v4 = vld [vmem:[%s0] ss:$0 sm:$0xff]
  %5 = vst [vmem:[%s1] sm:$0xff] %v4
  %s6 = scalar_lea.vmem %s1, 8
  %7 = vst [vmem:[%s6] sm:$0xff] %v4
  %s8 = scalar_lea.vmem %s1, 16
  %9 = vst [vmem:[%s8] sm:$0xff] %v4
  %s10 = scalar_lea.vmem %s1, 24
  %11 = vst [vmem:[%s10] sm:$0xff] %v4
  %s12 = scalar_lea.vmem %s1, 32
  %13 = vst [vmem:[%s12] sm:$0xff] %v4
  %s14 = scalar_lea.vmem %s1, 40
  %15 = vst [vmem:[%s14] sm:$0xff] %v4
  %s16 = scalar_lea.vmem %s1, 48
  %17 = vst [vmem:[%s16] sm:$0xff] %v4
  %s18 = scalar_lea.vmem %s1, 56
  %19 = vst [vmem:[%s18] sm:$0xff] %v4
  %s20 = scalar_lea.vmem %s1, 64
  %21 = vst [vmem:[%s20] sm:$0xff] %v4
  %s22 = scalar_lea.vmem %s1, 72
  %23 = vst [vmem:[%s22] sm:$0xff] %v4
  %s24 = scalar_lea.vmem %s1, 80
  %25 = vst [vmem:[%s24] sm:$0xff] %v4
  %s26 = scalar_lea.vmem %s1, 88
  %27 = vst [vmem:[%s26] sm:$0xff] %v4
  %s28 = scalar_lea.vmem %s1, 96
  %29 = vst [vmem:[%s28] sm:$0xff] %v4
  %s30 = scalar_lea.vmem %s1, 104
  %31 = vst [vmem:[%s30] sm:$0xff] %v4
  %s32 = scalar_lea.vmem %s1, 112
  %33 = vst [vmem:[%s32] sm:$0xff] %v4
  %s34 = scalar_lea.vmem %s1, 120
  %35 = vst [vmem:[%s34] sm:$0xff] %v4

// kernel: tile.14
$region0: #{tile.14}
  %s0 = inlined_call_operand.vmem [shape: f32[128,4], index: 0, kind: input, shape index: {}]
  %s1 = inlined_call_operand.hbm [shape: f32[1,512], index: 1, kind: output, shape index: {}]
  $region1: #{tile.14} parent=0
    #allocation0 [shape = 'u8[2048]{0}', space=vmem, size = 0x800, scoped, tag = 'operand span for operand 1']
    #allocation1 [shape = 's32[1]{0}', space=sflag, size = 0x4, scoped, tag = 'scoped memory for tile.14']
    #allocation2 [shape = 'u8[16384]{0}', space=vmem, size = 0x4000, scoped, tag = 'scoped mem for output reshape']
    %2 = vsyncpa [#allocation1], 0
    %v3 = vld [vmem:[%s0] sm:$0x1]
    %s4 = scalar_lea.vmem %s0, 31
    %v5 = vld [vmem:[%s4] sm:$0x2]
    %vm6 = vcmask 1041409
    %v7 = vsel %vm6, %v5, %v3
    %s8 = scalar_lea.vmem %s0, 62
    %v9 = vld [vmem:[%s8] sm:$0x4]
    %vm10 = vcmask 1042434
    %v11 = vsel %vm10, %v9, %v7
    %s12 = scalar_lea.vmem %s0, 93
    %v13 = vld [vmem:[%s12] sm:$0x8]
    %vm14 = vcmask 1043459
    %v15 = vsel %vm14, %v13, %v11
    %vm16 = vcmask 31744
    %17 = vst.msk [vmem:[#allocation2] ss:$8 sm:$0xf] %vm16, %v15
    %s18 = scalar_lea.vmem %s0, 31
    %v19 = vld [vmem:[%s18] sm:$0x1]
    %s20 = scalar_lea.vmem %s0, 62
    %v21 = vld [vmem:[%s20] sm:$0x2]
    %vm22 = vcmask 1041409
    %v23 = vsel %vm22, %v21, %v19
    %s24 = scalar_lea.vmem %s0, 93
    %v25 = vld [vmem:[%s24] sm:$0x4]
    %vm26 = vcmask 1042434
    %v27 = vsel %vm26, %v25, %v23
    %s28 = scalar_lea.vmem %s0, 124
    %v29 = vld [vmem:[%s28] sm:$0x8]
    %vm30 = vcmask 1043459
    %v31 = vsel %vm30, %v29, %v27
    %32 = vrot.lane.b32.xlu0 %v31, 124
    %v33 = vpop.permute.xlu0 %32
    %vm34 = vcmask 1048544
    %35 = vst.msk [vmem:[#allocation2] ss:$8 sm:$0xf] %vm34, %v33
    %s36 = scalar_lea.vmem %s0, 30
    %v37 = vld [vmem:[%s36] sm:$0x1]
    %s38 = scalar_lea.vmem %s0, 61
    %v39 = vld [vmem:[%s38] sm:$0x2]
    %vm40 = vcmask 1041409
    %v41 = vsel %vm40, %v39, %v37
    %s42 = scalar_lea.vmem %s0, 92
    %v43 = vld [vmem:[%s42] sm:$0x4]
    %vm44 = vcmask 1042434
    %v45 = vsel %vm44, %v43, %v41
    %s46 = scalar_lea.vmem %s0, 123
    %v47 = vld [vmem:[%s46] sm:$0x8]
    %vm48 = vcmask 1043459
    %v49 = vsel %vm48, %v47, %v45
    %50 = vrot.lane.b32.xlu0 %v49, 120
    %v51 = vpop.permute.xlu0 %50
    %vm52 = vcmask 1015744
    %53 = vst.msk [vmem:[#allocation2] ss:$8 sm:$0xf] %vm52, %v51
    %s54 = scalar_lea.vmem %s0, 29
    %v55 = vld [vmem:[%s54] sm:$0x1]
    %s56 = scalar_lea.vmem %s0, 60
    %v57 = vld [vmem:[%s56] sm:$0x2]
    %vm58 = vcmask 1041409
    %v59 = vsel %vm58, %v57, %v55
    %s60 = scalar_lea.vmem %s0, 91
    %v61 = vld [vmem:[%s60] sm:$0x4]
    %vm62 = vcmask 1042434
    %v63 = vsel %vm62, %v61, %v59
    %s64 = scalar_lea.vmem %s0, 122
    %v65 = vld [vmem:[%s64] sm:$0x8]
    %vm66 = vcmask 1043459
    %v67 = vsel %vm66, %v65, %v63
    %68 = vrot.lane.b32.xlu0 %v67, 116
    %v69 = vpop.permute.xlu0 %68
    %vm70 = vcmask 982944
    %71 = vst.msk [vmem:[#allocation2] ss:$8 sm:$0xf] %vm70, %v69
    %s72 = scalar_lea.vmem %s0, 28
    %v73 = vld [vmem:[%s72] sm:$0x1]
    %s74 = scalar_lea.vmem %s0, 59
    %v75 = vld [vmem:[%s74] sm:$0x2]
    %vm76 = vcmask 1041409
    %v77 = vsel %vm76, %v75, %v73
    %s78 = scalar_lea.vmem %s0, 90
    %v79 = vld [vmem:[%s78] sm:$0x4]
    %vm80 = vcmask 1042434
    %v81 = vsel %vm80, %v79, %v77
    %s82 = scalar_lea.vmem %s0, 121
    %v83 = vld [vmem:[%s82] sm:$0x8]
    %vm84 = vcmask 1043459
    %v85 = vsel %vm84, %v83, %v81
    %86 = vrot.lane.b32.xlu0 %v85, 112
    %v87 = vpop.permute.xlu0 %86
    %vm88 = vcmask 950144
    %89 = vst.msk [vmem:[#allocation2] ss:$8 sm:$0xf] %vm88, %v87
    %s90 = scalar_lea.vmem %s0, 27
    %v91 = vld [vmem:[%s90] sm:$0x1]
    %s92 = scalar_lea.vmem %s0, 58
    %v93 = vld [vmem:[%s92] sm:$0x2]
    %vm94 = vcmask 1041409
    %v95 = vsel %vm94, %v93, %v91
    %s96 = scalar_lea.vmem %s0, 89
    %v97 = vld [vmem:[%s96] sm:$0x4]
    %vm98 = vcmask 1042434
    %v99 = vsel %vm98, %v97, %v95
    %s100 = scalar_lea.vmem %s0, 120
    %v101 = vld [vmem:[%s100] sm:$0x8]
    %vm102 = vcmask 1043459
    %v103 = vsel %vm102, %v101, %v99
    %104 = vrot.lane.b32.xlu0 %v103, 108
    %v105 = vpop.permute.xlu0 %104
    %vm106 = vcmask 917344
    %107 = vst.msk [vmem:[#allocation2] ss:$8 sm:$0xf] %vm106, %v105
    %s108 = scalar_lea.vmem %s0, 26
    %v109 = vld [vmem:[%s108] sm:$0x1]
    %s110 = scalar_lea.vmem %s0, 57
    %v111 = vld [vmem:[%s110] sm:$0x2]
    %vm112 = vcmask 1041409
    %v113 = vsel %vm112, %v111, %v109
    %s114 = scalar_lea.vmem %s0, 88
    %v115 = vld [vmem:[%s114] sm:$0x4]
    %vm116 = vcmask 1042434
    %v117 = vsel %vm116, %v115, %v113
    %s118 = scalar_lea.vmem %s0, 119
    %v119 = vld [vmem:[%s118] sm:$0x8]
    %vm120 = vcmask 1043459
    %v121 = vsel %vm120, %v119, %v117
    %122 = vrot.lane.b32.xlu0 %v121, 104
    %v123 = vpop.permute.xlu0 %122
    %vm124 = vcmask 884544
    %125 = vst.msk [vmem:[#allocation2] ss:$8 sm:$0xf] %vm124, %v123
    %s126 = scalar_lea.vmem %s0, 25
    %v127 = vld [vmem:[%s126] sm:$0x1]
    %s128 = scalar_lea.vmem %s0, 56
    %v129 = vld [vmem:[%s128] sm:$0x2]
    %vm130 = vcmask 1041409
    %v131 = vsel %vm130, %v129, %v127
    %s132 = scalar_lea.vmem %s0, 87
    %v133 = vld [vmem:[%s132] sm:$0x4]
    %vm134 = vcmask 1042434
    %v135 = vsel %vm134, %v133, %v131
    %s136 = scalar_lea.vmem %s0, 118
    %v137 = vld [vmem:[%s136] sm:$0x8]
    %vm138 = vcmask 1043459
    %v139 = vsel %vm138, %v137, %v135
    %140 = vrot.lane.b32.xlu0 %v139, 100
    %v141 = vpop.permute.xlu0 %140
    %vm142 = vcmask 851744
    %143 = vst.msk [vmem:[#allocation2] ss:$8 sm:$0xf] %vm142, %v141
    %s144 = scalar_lea.vmem %s0, 24
    %v145 = vld [vmem:[%s144] sm:$0x1]
    %s146 = scalar_lea.vmem %s0, 55
    %v147 = vld [vmem:[%s146] sm:$0x2]
    %vm148 = vcmask 1041409
    %v149 = vsel %vm148, %v147, %v145
    %s150 = scalar_lea.vmem %s0, 86
    %v151 = vld [vmem:[%s150] sm:$0x4]
    %vm152 = vcmask 1042434
    %v153 = vsel %vm152, %v151, %v149
    %s154 = scalar_lea.vmem %s0, 117
    %v155 = vld [vmem:[%s154] sm:$0x8]
    %vm156 = vcmask 1043459
    %v157 = vsel %vm156, %v155, %v153
    %158 = vrot.lane.b32.xlu0 %v157, 96
    %v159 = vpop.permute.xlu0 %158
    %vm160 = vcmask 818944
    %161 = vst.msk [vmem:[#allocation2] ss:$8 sm:$0xf] %vm160, %v159
    %s162 = scalar_lea.vmem %s0, 23
    %v163 = vld [vmem:[%s162] sm:$0x1]
    %s164 = scalar_lea.vmem %s0, 54
    %v165 = vld [vmem:[%s164] sm:$0x2]
    %vm166 = vcmask 1041409
    %v167 = vsel %vm166, %v165, %v163
    %s168 = scalar_lea.vmem %s0, 85
    %v169 = vld [vmem:[%s168] sm:$0x4]
    %vm170 = vcmask 1042434
    %v171 = vsel %vm170, %v169, %v167
    %s172 = scalar_lea.vmem %s0, 116
    %v173 = vld [vmem:[%s172] sm:$0x8]
    %vm174 = vcmask 1043459
    %v175 = vsel %vm174, %v173, %v171
    %176 = vrot.lane.b32.xlu0 %v175, 92
    %v177 = vpop.permute.xlu0 %176
    %vm178 = vcmask 786144
    %179 = vst.msk [vmem:[#allocation2] ss:$8 sm:$0xf] %vm178, %v177
    %s180 = scalar_lea.vmem %s0, 22
    %v181 = vld [vmem:[%s180] sm:$0x1]
    %s182 = scalar_lea.vmem %s0, 53
    %v183 = vld [vmem:[%s182] sm:$0x2]
    %vm184 = vcmask 1041409
    %v185 = vsel %vm184, %v183, %v181
    %s186 = scalar_lea.vmem %s0, 84
    %v187 = vld [vmem:[%s186] sm:$0x4]
    %vm188 = vcmask 1042434
    %v189 = vsel %vm188, %v187, %v185
    %s190 = scalar_lea.vmem %s0, 115
    %v191 = vld [vmem:[%s190] sm:$0x8]
    %vm192 = vcmask 1043459
    %v193 = vsel %vm192, %v191, %v189
    %194 = vrot.lane.b32.xlu0 %v193, 88
    %v195 = vpop.permute.xlu0 %194
    %vm196 = vcmask 753344
    %197 = vst.msk [vmem:[#allocation2] ss:$8 sm:$0xf] %vm196, %v195
    %s198 = scalar_lea.vmem %s0, 21
    %v199 = vld [vmem:[%s198] sm:$0x1]
    %s200 = scalar_lea.vmem %s0, 52
    %v201 = vld [vmem:[%s200] sm:$0x2]
    %vm202 = vcmask 1041409
    %v203 = vsel %vm202, %v201, %v199
    %s204 = scalar_lea.vmem %s0, 83
    %v205 = vld [vmem:[%s204] sm:$0x4]
    %vm206 = vcmask 1042434
    %v207 = vsel %vm206, %v205, %v203
    %s208 = scalar_lea.vmem %s0, 114
    %v209 = vld [vmem:[%s208] sm:$0x8]
    %vm210 = vcmask 1043459
    %v211 = vsel %vm210, %v209, %v207
    %212 = vrot.lane.b32.xlu0 %v211, 84
    %v213 = vpop.permute.xlu0 %212
    %vm214 = vcmask 720544
    %215 = vst.msk [vmem:[#allocation2] ss:$8 sm:$0xf] %vm214, %v213
    %s216 = scalar_lea.vmem %s0, 20
    %v217 = vld [vmem:[%s216] sm:$0x1]
    %s218 = scalar_lea.vmem %s0, 51
    %v219 = vld [vmem:[%s218] sm:$0x2]
    %vm220 = vcmask 1041409
    %v221 = vsel %vm220, %v219, %v217
    %s222 = scalar_lea.vmem %s0, 82
    %v223 = vld [vmem:[%s222] sm:$0x4]
    %vm224 = vcmask 1042434
    %v225 = vsel %vm224, %v223, %v221
    %s226 = scalar_lea.vmem %s0, 113
    %v227 = vld [vmem:[%s226] sm:$0x8]
    %vm228 = vcmask 1043459
    %v229 = vsel %vm228, %v227, %v225
    %230 = vrot.lane.b32.xlu0 %v229, 80
    %v231 = vpop.permute.xlu0 %230
    %vm232 = vcmask 687744
    %233 = vst.msk [vmem:[#allocation2] ss:$8 sm:$0xf] %vm232, %v231
    %s234 = scalar_lea.vmem %s0, 19
    %v235 = vld [vmem:[%s234] sm:$0x1]
    %s236 = scalar_lea.vmem %s0, 50
    %v237 = vld [vmem:[%s236] sm:$0x2]
    %vm238 = vcmask 1041409
    %v239 = vsel %vm238, %v237, %v235
    %s240 = scalar_lea.vmem %s0, 81
    %v241 = vld [vmem:[%s240] sm:$0x4]
    %vm242 = vcmask 1042434
    %v243 = vsel %vm242, %v241, %v239
    %s244 = scalar_lea.vmem %s0, 112
    %v245 = vld [vmem:[%s244] sm:$0x8]
    %vm246 = vcmask 1043459
    %v247 = vsel %vm246, %v245, %v243
    %248 = vrot.lane.b32.xlu0 %v247, 76
    %v249 = vpop.permute.xlu0 %248
    %vm250 = vcmask 654944
    %251 = vst.msk [vmem:[#allocation2] ss:$8 sm:$0xf] %vm250, %v249
    %s252 = scalar_lea.vmem %s0, 18
    %v253 = vld [vmem:[%s252] sm:$0x1]
    %s254 = scalar_lea.vmem %s0, 49
    %v255 = vld [vmem:[%s254] sm:$0x2]
    %vm256 = vcmask 1041409
    %v257 = vsel %vm256, %v255, %v253
    %s258 = scalar_lea.vmem %s0, 80
    %v259 = vld [vmem:[%s258] sm:$0x4]
    %vm260 = vcmask 1042434
    %v261 = vsel %vm260, %v259, %v257
    %s262 = scalar_lea.vmem %s0, 111
    %v263 = vld [vmem:[%s262] sm:$0x8]
    %vm264 = vcmask 1043459
    %v265 = vsel %vm264, %v263, %v261
    %266 = vrot.lane.b32.xlu0 %v265, 72
    %v267 = vpop.permute.xlu0 %266
    %vm268 = vcmask 622144
    %269 = vst.msk [vmem:[#allocation2] ss:$8 sm:$0xf] %vm268, %v267
    %s270 = scalar_lea.vmem %s0, 17
    %v271 = vld [vmem:[%s270] sm:$0x1]
    %s272 = scalar_lea.vmem %s0, 48
    %v273 = vld [vmem:[%s272] sm:$0x2]
    %vm274 = vcmask 1041409
    %v275 = vsel %vm274, %v273, %v271
    %s276 = scalar_lea.vmem %s0, 79
    %v277 = vld [vmem:[%s276] sm:$0x4]
    %vm278 = vcmask 1042434
    %v279 = vsel %vm278, %v277, %v275
    %s280 = scalar_lea.vmem %s0, 110
    %v281 = vld [vmem:[%s280] sm:$0x8]
    %vm282 = vcmask 1043459
    %v283 = vsel %vm282, %v281, %v279
    %284 = vrot.lane.b32.xlu0 %v283, 68
    %v285 = vpop.permute.xlu0 %284
    %vm286 = vcmask 589344
    %287 = vst.msk [vmem:[#allocation2] ss:$8 sm:$0xf] %vm286, %v285
    %s288 = scalar_lea.vmem %s0, 16
    %v289 = vld [vmem:[%s288] sm:$0x1]
    %s290 = scalar_lea.vmem %s0, 47
    %v291 = vld [vmem:[%s290] sm:$0x2]
    %vm292 = vcmask 1041409
    %v293 = vsel %vm292, %v291, %v289
    %s294 = scalar_lea.vmem %s0, 78
    %v295 = vld [vmem:[%s294] sm:$0x4]
    %vm296 = vcmask 1042434
    %v297 = vsel %vm296, %v295, %v293
    %s298 = scalar_lea.vmem %s0, 109
    %v299 = vld [vmem:[%s298] sm:$0x8]
    %vm300 = vcmask 1043459
    %v301 = vsel %vm300, %v299, %v297
    %302 = vrot.lane.b32.xlu0 %v301, 64
    %v303 = vpop.permute.xlu0 %302
    %vm304 = vcmask 556544
    %305 = vst.msk [vmem:[#allocation2] ss:$8 sm:$0xf] %vm304, %v303
    %s306 = scalar_lea.vmem %s0, 15
    %v307 = vld [vmem:[%s306] sm:$0x1]
    %s308 = scalar_lea.vmem %s0, 46
    %v309 = vld [vmem:[%s308] sm:$0x2]
    %vm310 = vcmask 1041409
    %v311 = vsel %vm310, %v309, %v307
    %s312 = scalar_lea.vmem %s0, 77
    %v313 = vld [vmem:[%s312] sm:$0x4]
    %vm314 = vcmask 1042434
    %v315 = vsel %vm314, %v313, %v311
    %s316 = scalar_lea.vmem %s0, 108
    %v317 = vld [vmem:[%s316] sm:$0x8]
    %vm318 = vcmask 1043459
    %v319 = vsel %vm318, %v317, %v315
    %320 = vrot.lane.b32.xlu0 %v319, 60
    %v321 = vpop.permute.xlu0 %320
    %vm322 = vcmask 523744
    %323 = vst.msk [vmem:[#allocation2] ss:$8 sm:$0xf] %vm322, %v321
    %s324 = scalar_lea.vmem %s0, 14
    %v325 = vld [vmem:[%s324] sm:$0x1]
    %s326 = scalar_lea.vmem %s0, 45
    %v327 = vld [vmem:[%s326] sm:$0x2]
    %vm328 = vcmask 1041409
    %v329 = vsel %vm328, %v327, %v325
    %s330 = scalar_lea.vmem %s0, 76
    %v331 = vld [vmem:[%s330] sm:$0x4]
    %vm332 = vcmask 1042434
    %v333 = vsel %vm332, %v331, %v329
    %s334 = scalar_lea.vmem %s0, 107
    %v335 = vld [vmem:[%s334] sm:$0x8]
    %vm336 = vcmask 1043459
    %v337 = vsel %vm336, %v335, %v333
    %338 = vrot.lane.b32.xlu0 %v337, 56
    %v339 = vpop.permute.xlu0 %338
    %vm340 = vcmask 490944
    %341 = vst.msk [vmem:[#allocation2] ss:$8 sm:$0xf] %vm340, %v339
    %s342 = scalar_lea.vmem %s0, 13
    %v343 = vld [vmem:[%s342] sm:$0x1]
    %s344 = scalar_lea.vmem %s0, 44
    %v345 = vld [vmem:[%s344] sm:$0x2]
    %vm346 = vcmask 1041409
    %v347 = vsel %vm346, %v345, %v343
    %s348 = scalar_lea.vmem %s0, 75
    %v349 = vld [vmem:[%s348] sm:$0x4]
    %vm350 = vcmask 1042434
    %v351 = vsel %vm350, %v349, %v347
    %s352 = scalar_lea.vmem %s0, 106
    %v353 = vld [vmem:[%s352] sm:$0x8]
    %vm354 = vcmask 1043459
    %v355 = vsel %vm354, %v353, %v351
    %356 = vrot.lane.b32.xlu0 %v355, 52
    %v357 = vpop.permute.xlu0 %356
    %vm358 = vcmask 458144
    %359 = vst.msk [vmem:[#allocation2] ss:$8 sm:$0xf] %vm358, %v357
    %s360 = scalar_lea.vmem %s0, 12
    %v361 = vld [vmem:[%s360] sm:$0x1]
    %s362 = scalar_lea.vmem %s0, 43
    %v363 = vld [vmem:[%s362] sm:$0x2]
    %vm364 = vcmask 1041409
    %v365 = vsel %vm364, %v363, %v361
    %s366 = scalar_lea.vmem %s0, 74
    %v367 = vld [vmem:[%s366] sm:$0x4]
    %vm368 = vcmask 1042434
    %v369 = vsel %vm368, %v367, %v365
    %s370 = scalar_lea.vmem %s0, 105
    %v371 = vld [vmem:[%s370] sm:$0x8]
    %vm372 = vcmask 1043459
    %v373 = vsel %vm372, %v371, %v369
    %374 = vrot.lane.b32.xlu0 %v373, 48
    %v375 = vpop.permute.xlu0 %374
    %vm376 = vcmask 425344
    %377 = vst.msk [vmem:[#allocation2] ss:$8 sm:$0xf] %vm376, %v375
    %s378 = scalar_lea.vmem %s0, 11
    %v379 = vld [vmem:[%s378] sm:$0x1]
    %s380 = scalar_lea.vmem %s0, 42
    %v381 = vld [vmem:[%s380] sm:$0x2]
    %vm382 = vcmask 1041409
    %v383 = vsel %vm382, %v381, %v379
    %s384 = scalar_lea.vmem %s0, 73
    %v385 = vld [vmem:[%s384] sm:$0x4]
    %vm386 = vcmask 1042434
    %v387 = vsel %vm386, %v385, %v383
    %s388 = scalar_lea.vmem %s0, 104
    %v389 = vld [vmem:[%s388] sm:$0x8]
    %vm390 = vcmask 1043459
    %v391 = vsel %vm390, %v389, %v387
    %392 = vrot.lane.b32.xlu0 %v391, 44
    %v393 = vpop.permute.xlu0 %392
    %vm394 = vcmask 392544
    %395 = vst.msk [vmem:[#allocation2] ss:$8 sm:$0xf] %vm394, %v393
    %s396 = scalar_lea.vmem %s0, 10
    %v397 = vld [vmem:[%s396] sm:$0x1]
    %s398 = scalar_lea.vmem %s0, 41
    %v399 = vld [vmem:[%s398] sm:$0x2]
    %vm400 = vcmask 1041409
    %v401 = vsel %vm400, %v399, %v397
    %s402 = scalar_lea.vmem %s0, 72
    %v403 = vld [vmem:[%s402] sm:$0x4]
    %vm404 = vcmask 1042434
    %v405 = vsel %vm404, %v403, %v401
    %s406 = scalar_lea.vmem %s0, 103
    %v407 = vld [vmem:[%s406] sm:$0x8]
    %vm408 = vcmask 1043459
    %v409 = vsel %vm408, %v407, %v405
    %410 = vrot.lane.b32.xlu0 %v409, 40
    %v411 = vpop.permute.xlu0 %410
    %vm412 = vcmask 359744
    %413 = vst.msk [vmem:[#allocation2] ss:$8 sm:$0xf] %vm412, %v411
    %s414 = scalar_lea.vmem %s0, 9
    %v415 = vld [vmem:[%s414] sm:$0x1]
    %s416 = scalar_lea.vmem %s0, 40
    %v417 = vld [vmem:[%s416] sm:$0x2]
    %vm418 = vcmask 1041409
    %v419 = vsel %vm418, %v417, %v415
    %s420 = scalar_lea.vmem %s0, 71
    %v421 = vld [vmem:[%s420] sm:$0x4]
    %vm422 = vcmask 1042434
    %v423 = vsel %vm422, %v421, %v419
    %s424 = scalar_lea.vmem %s0, 102
    %v425 = vld [vmem:[%s424] sm:$0x8]
    %vm426 = vcmask 1043459
    %v427 = vsel %vm426, %v425, %v423
    %428 = vrot.lane.b32.xlu0 %v427, 36
    %v429 = vpop.permute.xlu0 %428
    %vm430 = vcmask 326944
    %431 = vst.msk [vmem:[#allocation2] ss:$8 sm:$0xf] %vm430, %v429
    %s432 = scalar_lea.vmem %s0, 8
    %v433 = vld [vmem:[%s432] sm:$0x1]
    %s434 = scalar_lea.vmem %s0, 39
    %v435 = vld [vmem:[%s434] sm:$0x2]
    %vm436 = vcmask 1041409
    %v437 = vsel %vm436, %v435, %v433
    %s438 = scalar_lea.vmem %s0, 70
    %v439 = vld [vmem:[%s438] sm:$0x4]
    %vm440 = vcmask 1042434
    %v441 = vsel %vm440, %v439, %v437
    %s442 = scalar_lea.vmem %s0, 101
    %v443 = vld [vmem:[%s442] sm:$0x8]
    %vm444 = vcmask 1043459
    %v445 = vsel %vm444, %v443, %v441
    %446 = vrot.lane.b32.xlu0 %v445, 32
    %v447 = vpop.permute.xlu0 %446
    %vm448 = vcmask 294144
    %449 = vst.msk [vmem:[#allocation2] ss:$8 sm:$0xf] %vm448, %v447
    %s450 = scalar_lea.vmem %s0, 7
    %v451 = vld [vmem:[%s450] sm:$0x1]
    %s452 = scalar_lea.vmem %s0, 38
    %v453 = vld [vmem:[%s452] sm:$0x2]
    %vm454 = vcmask 1041409
    %v455 = vsel %vm454, %v453, %v451
    %s456 = scalar_lea.vmem %s0, 69
    %v457 = vld [vmem:[%s456] sm:$0x4]
    %vm458 = vcmask 1042434
    %v459 = vsel %vm458, %v457, %v455
    %s460 = scalar_lea.vmem %s0, 100
    %v461 = vld [vmem:[%s460] sm:$0x8]
    %vm462 = vcmask 1043459
    %v463 = vsel %vm462, %v461, %v459
    %464 = vrot.lane.b32.xlu0 %v463, 28
    %v465 = vpop.permute.xlu0 %464
    %vm466 = vcmask 261344
    %467 = vst.msk [vmem:[#allocation2] ss:$8 sm:$0xf] %vm466, %v465
    %s468 = scalar_lea.vmem %s0, 6
    %v469 = vld [vmem:[%s468] sm:$0x1]
    %s470 = scalar_lea.vmem %s0, 37
    %v471 = vld [vmem:[%s470] sm:$0x2]
    %vm472 = vcmask 1041409
    %v473 = vsel %vm472, %v471, %v469
    %s474 = scalar_lea.vmem %s0, 68
    %v475 = vld [vmem:[%s474] sm:$0x4]
    %vm476 = vcmask 1042434
    %v477 = vsel %vm476, %v475, %v473
    %s478 = scalar_lea.vmem %s0, 99
    %v479 = vld [vmem:[%s478] sm:$0x8]
    %vm480 = vcmask 1043459
    %v481 = vsel %vm480, %v479, %v477
    %482 = vrot.lane.b32.xlu0 %v481, 24
    %v483 = vpop.permute.xlu0 %482
    %vm484 = vcmask 228544
    %485 = vst.msk [vmem:[#allocation2] ss:$8 sm:$0xf] %vm484, %v483
    %s486 = scalar_lea.vmem %s0, 5
    %v487 = vld [vmem:[%s486] sm:$0x1]
    %s488 = scalar_lea.vmem %s0, 36
    %v489 = vld [vmem:[%s488] sm:$0x2]
    %vm490 = vcmask 1041409
    %v491 = vsel %vm490, %v489, %v487
    %s492 = scalar_lea.vmem %s0, 67
    %v493 = vld [vmem:[%s492] sm:$0x4]
    %vm494 = vcmask 1042434
    %v495 = vsel %vm494, %v493, %v491
    %s496 = scalar_lea.vmem %s0, 98
    %v497 = vld [vmem:[%s496] sm:$0x8]
    %vm498 = vcmask 1043459
    %v499 = vsel %vm498, %v497, %v495
    %500 = vrot.lane.b32.xlu0 %v499, 20
    %v501 = vpop.permute.xlu0 %500
    %vm502 = vcmask 195744
    %503 = vst.msk [vmem:[#allocation2] ss:$8 sm:$0xf] %vm502, %v501
    %s504 = scalar_lea.vmem %s0, 4
    %v505 = vld [vmem:[%s504] sm:$0x1]
    %s506 = scalar_lea.vmem %s0, 35
    %v507 = vld [vmem:[%s506] sm:$0x2]
    %vm508 = vcmask 1041409
    %v509 = vsel %vm508, %v507, %v505
    %s510 = scalar_lea.vmem %s0, 66
    %v511 = vld [vmem:[%s510] sm:$0x4]
    %vm512 = vcmask 1042434
    %v513 = vsel %vm512, %v511, %v509
    %s514 = scalar_lea.vmem %s0, 97
    %v515 = vld [vmem:[%s514] sm:$0x8]
    %vm516 = vcmask 1043459
    %v517 = vsel %vm516, %v515, %v513
    %518 = vrot.lane.b32.xlu0 %v517, 16
    %v519 = vpop.permute.xlu0 %518
    %vm520 = vcmask 162944
    %521 = vst.msk [vmem:[#allocation2] ss:$8 sm:$0xf] %vm520, %v519
    %s522 = scalar_lea.vmem %s0, 3
    %v523 = vld [vmem:[%s522] sm:$0x1]
    %s524 = scalar_lea.vmem %s0, 34
    %v525 = vld [vmem:[%s524] sm:$0x2]
    %vm526 = vcmask 1041409
    %v527 = vsel %vm526, %v525, %v523
    %s528 = scalar_lea.vmem %s0, 65
    %v529 = vld [vmem:[%s528] sm:$0x4]
    %vm530 = vcmask 1042434
    %v531 = vsel %vm530, %v529, %v527
    %s532 = scalar_lea.vmem %s0, 96
    %v533 = vld [vmem:[%s532] sm:$0x8]
    %vm534 = vcmask 1043459
    %v535 = vsel %vm534, %v533, %v531
    %536 = vrot.lane.b32.xlu0 %v535, 12
    %v537 = vpop.permute.xlu0 %536
    %vm538 = vcmask 130144
    %539 = vst.msk [vmem:[#allocation2] ss:$8 sm:$0xf] %vm538, %v537
    %s540 = scalar_lea.vmem %s0, 2
    %v541 = vld [vmem:[%s540] sm:$0x1]
    %s542 = scalar_lea.vmem %s0, 33
    %v543 = vld [vmem:[%s542] sm:$0x2]
    %vm544 = vcmask 1041409
    %v545 = vsel %vm544, %v543, %v541
    %s546 = scalar_lea.vmem %s0, 64
    %v547 = vld [vmem:[%s546] sm:$0x4]
    %vm548 = vcmask 1042434
    %v549 = vsel %vm548, %v547, %v545
    %s550 = scalar_lea.vmem %s0, 95
    %v551 = vld [vmem:[%s550] sm:$0x8]
    %vm552 = vcmask 1043459
    %v553 = vsel %vm552, %v551, %v549
    %554 = vrot.lane.b32.xlu0 %v553, 8
    %v555 = vpop.permute.xlu0 %554
    %vm556 = vcmask 97344
    %557 = vst.msk [vmem:[#allocation2] ss:$8 sm:$0xf] %vm556, %v555
    %s558 = scalar_lea.vmem %s0, 1
    %v559 = vld [vmem:[%s558] sm:$0x1]
    %s560 = scalar_lea.vmem %s0, 32
    %v561 = vld [vmem:[%s560] sm:$0x2]
    %vm562 = vcmask 1041409
    %v563 = vsel %vm562, %v561, %v559
    %s564 = scalar_lea.vmem %s0, 63
    %v565 = vld [vmem:[%s564] sm:$0x4]
    %vm566 = vcmask 1042434
    %v567 = vsel %vm566, %v565, %v563
    %s568 = scalar_lea.vmem %s0, 94
    %v569 = vld [vmem:[%s568] sm:$0x8]
    %vm570 = vcmask 1043459
    %v571 = vsel %vm570, %v569, %v567
    %572 = vrot.lane.b32.xlu0 %v571, 4
    %v573 = vpop.permute.xlu0 %572
    %vm574 = vcmask 64544
    %575 = vst.msk [vmem:[#allocation2] ss:$8 sm:$0xf] %vm574, %v573
    %s577 = sshllo.u32 0, 1
    %v579 = vld [vmem:[#allocation2] sm:%s577]
    %s580 = sshllo.u32 0, 1
    %581 = vst [vmem:[#allocation0] sm:%s580] %v579
    %s582 = scalar_lea.vmem [#allocation2], 8
    %v583 = vld [vmem:[%s582] sm:%s577]
    %s584 = sshllo.u32 0, 1
    %s585 = scalar_lea.vmem [#allocation0], 1
    %586 = vst [vmem:[%s585] sm:%s584] %v583
    %s587 = scalar_lea.vmem [#allocation2], 16
    %v588 = vld [vmem:[%s587] sm:%s577]
    %s589 = sshllo.u32 0, 1
    %s590 = smul.addr 1, 2
    %s591 = scalar_lea.vmem [#allocation0], %s590
    %592 = vst [vmem:[%s591] sm:%s589] %v588
    %s593 = scalar_lea.vmem [#allocation2], 24
    %v594 = vld [vmem:[%s593] sm:%s577]
    %s595 = sshllo.u32 0, 1
    %s596 = smul.addr 1, 3
    %s597 = scalar_lea.vmem [#allocation0], %s596
    %598 = vst [vmem:[%s597] sm:%s595] %v594
    %s600 = ssub.s32 64, 64
    %601 = vsyncadd [#allocation1], %s600
    %s603 = sshll.u32 [#allocation0], 4
    %s604 = int_to_ptr.vmem [resolvable:$true] %s603
    %606 = dma.vmem_to_hbm [thread:$0]  %s604, 64, %s1, [#allocation1]
    %607 = dma.done [#allocation1], 64
    %608 = vsyncpa [#allocation1], 1

// kernel: up_forward.7
$region0: #{up_forward.7}
  #allocation0 [shape = 'u32[]', space=smem, size = 0x4, offset = 0x4, fixed_abs, tag = 'smem constant byte address 0x4 - core index']
  #allocation1 [shape = 'u32[144,128]{1,0:T(1,128)}', space=vmem, size = 0x12000, scoped, tag = 'internal scratch']
  %s0 = inlined_call_operand.hbm [shape: bf16[2,2,1,512], index: 0, kind: input, shape index: {}]
  %s1 = inlined_call_operand.hbm [shape: f32[1,512], index: 1, kind: input, shape index: {}]
  %s2 = inlined_call_operand.hbm [shape: f32[1,512], index: 2, kind: input, shape index: {}]
  %s3 = inlined_call_operand.hbm [shape: f32[2,2,1,512], index: 3, kind: output, shape index: {}]
  %s4 = sld [smem:[#allocation0]]
  $region57: #{up_forward.7} parent=0
    _
  %s6 = ssub.s32 1, %s4
  %s7 = scalar_select 0, %s6, %s4
  $region1: #{up_forward.7} parent=0
    #allocation2 [shape = 'u8[4096]{0}', space=vmem, size = 0x1000, scoped, tag = 'input window, operand 0']
    #allocation3 [shape = 's32[2]{0}', space=sflag, size = 0x8, scoped, tag = 'scoped memory for up_forward.7']
    #allocation4 [shape = 's32[2]{0}', space=sflag, size = 0x8, scoped, tag = 'scoped memory for up_forward.7']
    #allocation5 [shape = 'u8[2048]{0}', space=vmem, size = 0x800, scoped, tag = 'input window, operand 1, single buffered']
    #allocation6 [shape = 's32[1]{0}', space=sflag, size = 0x4, scoped, tag = 'scoped memory for up_forward.7']
    #allocation7 [shape = 'u8[2048]{0}', space=vmem, size = 0x800, scoped, tag = 'input window, operand 2, single buffered']
    #allocation8 [shape = 'u8[4096]{0}', space=vmem, size = 0x1000, scoped, tag = 'output window, operand 0']
    %8 = vsyncpa [#allocation3], 0
    %s9 = scalar_lea.sflag [#allocation3], 1
    %10 = vsyncpa %s9, 0
    %11 = vsyncpa [#allocation6], 0
    %12 = vsyncpa [#allocation4], 0
    %s13 = scalar_lea.sflag [#allocation4], 1
    %14 = vsyncpa %s13, 0
    loop: start=0, step=1, limit=6
    $region2: #{up_forward.7} parent=1 // loop_pre_header
      _
    $region3: #{up_forward.7} parent=1 // loop_header
      %s16 = sphi 0, %s20
      %p17 = scmp.ge.s32.totalorder %s16, 6
      %s23 = sphi 0, %s35
      %s24 = sphi 0, %s31
      %s25 = sphi 0, %s23
      %s26 = sphi 0, %s24
      %s27 = sphi 0, %s25
      %s28 = sphi 0, %s26
      %s40 = sphi 0, %s42
      %s43 = sphi 0, %s40
      %s44 = sphi 0, %s43
      %s60 = sphi 0, %s44
      %s64 = sphi 0, %s64
      %s66 = sphi 0, %s64
      %s67 = sphi 0, %s66
      %s81 = sphi 0, %s67
      %s85 = sphi 0, %s85
      %s87 = sphi 0, %s85
      %s88 = sphi 0, %s87
      %s102 = sphi 0, %s88
      %s110 = sphi 0, %s112
      %s113 = sphi 0, %s110
      %s114 = sphi 0, %s113
      %s130 = sphi 0, %s114
    $region4: #{up_forward.7} parent=1 // loop_header_branch
      %19 = sbr.rel (%p17) target = $region8
    $region5: #{up_forward.7} parent=1 // loop_body
      %s21 = ssub.s32 %s16, 1
      %s22 = ssub.s32 %s16, 2
      %s29 = sadd.s32 1, %s24
      %p30 = scmp.ge.s32.totalorder %s29, 2
      %s31 = scalar_select %p30, 0, %s29
      %s32 = sadd.s32 1, %s23
      %s33 = scalar_select %p30, %s32, %s23
      %p34 = scmp.ge.s32.totalorder %s33, 2
      %s35 = scalar_select %p34, 0, %s33
      %s36 = ssub.s32 %s23, %s35
      %s37 = ssub.s32 %s24, %s31
      %s38 = sor.u32 %s36, %s37
      %p39 = scmp.eq.s32.totalorder %s38, 0
      %s41 = sadd.s32 %s40, 1
      %s42 = scalar_select %p39, %s40, %s41
      %p45 = pneg %p39
      %p46 = scmp.eq.s32.totalorder %s16, 3
      %p47 = por %p45, %p46
      %p48 = scmp.ne.s32.totalorder %s40, %s43
      %p49 = scmp.eq.s32.totalorder %s16, 0
      %p50 = por %p48, %p49
      %p51 = scmp.ne.s32.totalorder %s40, %s43
      %p52 = scmp.eq.s32.totalorder %s21, 3
      %p53 = por %p51, %p52
      %p54 = scmp.ne.s32.totalorder %s43, %s44
      %p55 = scmp.eq.s32.totalorder %s21, 0
      %p56 = por %p54, %p55
      %p57 = scmp.ne.s32.totalorder %s43, %s44
      %p58 = scmp.eq.s32.totalorder %s22, 3
      %p59 = por %p57, %p58
      %p61 = scmp.ne.s32.totalorder %s44, %s60
      %p62 = scmp.eq.s32.totalorder %s22, 0
      %p63 = por %p61, %p62
      %s65 = sadd.s32 %s64, 1
      %p68 = scmp.eq.s32.totalorder %s16, 3
      %p69 = scmp.ne.s32.totalorder %s64, %s66
      %p70 = scmp.eq.s32.totalorder %s16, 0
      %p71 = por %p69, %p70
      %p72 = scmp.ne.s32.totalorder %s64, %s66
      %p73 = scmp.eq.s32.totalorder %s21, 3
      %p74 = por %p72, %p73
      %p75 = scmp.ne.s32.totalorder %s66, %s67
      %p76 = scmp.eq.s32.totalorder %s21, 0
      %p77 = por %p75, %p76
      %p78 = scmp.ne.s32.totalorder %s66, %s67
      %p79 = scmp.eq.s32.totalorder %s22, 3
      %p80 = por %p78, %p79
      %p82 = scmp.ne.s32.totalorder %s67, %s81
      %p83 = scmp.eq.s32.totalorder %s22, 0
      %p84 = por %p82, %p83
      %s86 = sadd.s32 %s85, 1
      %p89 = scmp.eq.s32.totalorder %s16, 3
      %p90 = scmp.ne.s32.totalorder %s85, %s87
      %p91 = scmp.eq.s32.totalorder %s16, 0
      %p92 = por %p90, %p91
      %p93 = scmp.ne.s32.totalorder %s85, %s87
      %p94 = scmp.eq.s32.totalorder %s21, 3
      %p95 = por %p93, %p94
      %p96 = scmp.ne.s32.totalorder %s87, %s88
      %p97 = scmp.eq.s32.totalorder %s21, 0
      %p98 = por %p96, %p97
      %p99 = scmp.ne.s32.totalorder %s87, %s88
      %p100 = scmp.eq.s32.totalorder %s22, 3
      %p101 = por %p99, %p100
      %p103 = scmp.ne.s32.totalorder %s88, %s102
      %p104 = scmp.eq.s32.totalorder %s22, 0
      %p105 = por %p103, %p104
      %s106 = ssub.s32 %s23, %s35
      %s107 = ssub.s32 %s24, %s31
      %s108 = sor.u32 %s106, %s107
      %p109 = scmp.eq.s32.totalorder %s108, 0
      %s111 = sadd.s32 %s110, 1
      %s112 = scalar_select %p109, %s110, %s111
      %p115 = pneg %p109
      %p116 = scmp.eq.s32.totalorder %s16, 3
      %p117 = por %p115, %p116
      %p118 = scmp.ne.s32.totalorder %s110, %s113
      %p119 = scmp.eq.s32.totalorder %s16, 0
      %p120 = por %p118, %p119
      %p121 = scmp.ne.s32.totalorder %s110, %s113
      %p122 = scmp.eq.s32.totalorder %s21, 3
      %p123 = por %p121, %p122
      %p124 = scmp.ne.s32.totalorder %s113, %s114
      %p125 = scmp.eq.s32.totalorder %s21, 0
      %p126 = por %p124, %p125
      %p127 = scmp.ne.s32.totalorder %s113, %s114
      %p128 = scmp.eq.s32.totalorder %s22, 3
      %p129 = por %p127, %p128
      %p131 = scmp.ne.s32.totalorder %s114, %s130
      %p132 = scmp.eq.s32.totalorder %s22, 0
      %p133 = por %p131, %p132
      %p134 = scmp.le.s32.totalorder 1, %s16
      %p135 = scmp.lt.s32.totalorder %s16, 5
      %p136 = pnand %p134, %p135
      %p137 = pneg %p136
      // Predicated region
      $region9: #{up_forward.7} parent=5 // pred_check
        _
      $region10: #{up_forward.7} parent=5 // pred_check_branch
        %139 = sbr.rel (%p136) target = $region12
      $region11: #{up_forward.7} parent=5 // pred_region
        %s140 = ssub.s32 %s16, 1
        // Predicated region
        $region13: #{up_forward.7} parent=11 // pred_check
          %p141 = pneg %p77
        $region14: #{up_forward.7} parent=11 // pred_check_branch
          %143 = sbr.rel (%p141) target = $region16
        $region15: #{up_forward.7} parent=11 // pred_region
          %s145 = ssub.s32 64, 64
          %146 = vsyncadd [#allocation6], %s145
          %s148 = sshll.u32 [#allocation5], 4
          %s149 = int_to_ptr.vmem [resolvable:$true] %s148
          %151 = dma.hbm_to_vmem [thread:$0]  %s1, 64, %s149, [#allocation6]
        $region16: #{up_forward.7} parent=11 // pred_fallthru
          _
        // Predicated region
        $region17: #{up_forward.7} parent=11 // pred_check
          %p152 = pneg %p98
        $region18: #{up_forward.7} parent=11 // pred_check_branch
          %154 = sbr.rel (%p152) target = $region20
        $region19: #{up_forward.7} parent=11 // pred_region
          %s156 = ssub.s32 64, 64
          %157 = vsyncadd [#allocation6], %s156
          %s159 = sshll.u32 [#allocation7], 4
          %s160 = int_to_ptr.vmem [resolvable:$true] %s159
          %162 = dma.hbm_to_vmem [thread:$0]  %s2, 64, %s160, [#allocation6]
        $region20: #{up_forward.7} parent=11 // pred_fallthru
          _
      $region12: #{up_forward.7} parent=5 // pred_fallthru
        _
      %p163 = scmp.lt.s32.totalorder %s16, 4
      // Predicated region
      $region21: #{up_forward.7} parent=5 // pred_check
        %p164 = pneg %p163
      $region22: #{up_forward.7} parent=5 // pred_check_branch
        %166 = sbr.rel (%p164) target = $region24
      $region23: #{up_forward.7} parent=5 // pred_region
        // Predicated region
        $region25: #{up_forward.7} parent=23 // pred_check
          %p167 = pneg %p50
        $region26: #{up_forward.7} parent=23 // pred_check_branch
          %169 = sbr.rel (%p167) target = $region28
        $region27: #{up_forward.7} parent=23 // pred_region
          %s170 = sand.u32 %s40, 1
          %s171 = scalar_lea.sflag [#allocation3], %s170
          %s172 = sand.u32 %s40, 1
          %s173 = smul.addr %s172, 4
          %s174 = scalar_lea.vmem [#allocation2], %s173
          %s176 = ssub.s32 64, 64
          %177 = vsyncadd %s171, %s176
          %s178 = smul.addr %s24, 4
          %s179 = smul.addr %s23, 8
          %s180 = sadd.s32 %s178, %s179
          %s181 = smul.addr %s180, 16
          %s182 = scalar_lea.hbm %s0, %s181
          %s184 = sshll.u32 %s174, 4
          %s185 = int_to_ptr.vmem [resolvable:$true] %s184
          %187 = dma.hbm_to_vmem [thread:$0]  %s182, 64, %s185, %s171
        $region28: #{up_forward.7} parent=23 // pred_fallthru
          _
      $region24: #{up_forward.7} parent=5 // pred_fallthru
        _
      %p188 = scmp.le.s32.totalorder 1, %s16
      %p189 = scmp.lt.s32.totalorder %s16, 5
      %p190 = pnand %p188, %p189
      %p191 = pneg %p190
      // Predicated region
      $region29: #{up_forward.7} parent=5 // pred_check
        _
      $region30: #{up_forward.7} parent=5 // pred_check_branch
        %193 = sbr.rel (%p190) target = $region32
      $region31: #{up_forward.7} parent=5 // pred_region
        %s194 = ssub.s32 %s16, 1
        %s195 = sand.u32 %s43, 1
        %s196 = scalar_lea.sflag [#allocation3], %s195
        %s197 = sand.u32 %s43, 1
        %s198 = smul.addr %s197, 4
        %s199 = scalar_lea.vmem [#allocation2], %s198
        // Predicated region
        $region33: #{up_forward.7} parent=31 // pred_check
          %p200 = pneg %p56
        $region34: #{up_forward.7} parent=31 // pred_check_branch
          %202 = sbr.rel (%p200) target = $region36
        $region35: #{up_forward.7} parent=31 // pred_region
          %203 = dma.done %s196, 64
        $region36: #{up_forward.7} parent=31 // pred_fallthru
          _
        // Predicated region
        $region37: #{up_forward.7} parent=31 // pred_check
          %p204 = pneg %p77
        $region38: #{up_forward.7} parent=31 // pred_check_branch
          %206 = sbr.rel (%p204) target = $region40
        $region39: #{up_forward.7} parent=31 // pred_region
          %207 = dma.done [#allocation6], 64
        $region40: #{up_forward.7} parent=31 // pred_fallthru
          _
        // Predicated region
        $region41: #{up_forward.7} parent=31 // pred_check
          %p208 = pneg %p98
        $region42: #{up_forward.7} parent=31 // pred_check_branch
          %210 = sbr.rel (%p208) target = $region44
        $region43: #{up_forward.7} parent=31 // pred_region
          %211 = dma.done [#allocation6], 64
        $region44: #{up_forward.7} parent=31 // pred_fallthru
          _
        %s212 = sand.u32 %s43, 1
        %s213 = scalar_lea.sflag [#allocation3], %s212
        %s214 = sand.u32 %s43, 1
        %s215 = smul.addr %s214, 4
        %s216 = scalar_lea.vmem [#allocation2], %s215
        %p217 = pneg %p56
        %p218 = pneg %p53
        %p219 = pneg %p77
        %p220 = pneg %p74
        %p221 = pneg %p98
        %p222 = pneg %p95
        %p223 = pneg %p126
        %p224 = pneg %p123
        %s225 = sand.u32 %s113, 1
        %s226 = scalar_lea.sflag [#allocation4], %s225
        %s227 = sand.u32 %s113, 1
        %s228 = smul.addr %s227, 4
        %s229 = scalar_lea.vmem [#allocation8], %s228
        %v230 = vld [vmem:[%s199] sm:$0xf]
        %v231 = vunpack.c.l.bf16 %v230
        %v232 = vld [vmem:[#allocation5] sm:$0xf]
        %v235 = vunpack.c.l.s4 857870592
        %v236 = vunpack.c.0.s8 %v235
        %v237 = vlaneseq
        %v238 = vshrl.u32 %v237, 7
        %v239 = vsub.s32 %v236, %v238
        %v240 = vrot.slane %v232, %v239
        %v242 = vmul.f32 %v231, %v240
        %v243 = vld [vmem:[#allocation7] sm:$0xf]
        %v246 = vunpack.c.l.s4 857870592
        %v247 = vunpack.c.0.s8 %v246
        %v248 = vlaneseq
        %v249 = vshrl.u32 %v248, 7
        %v250 = vsub.s32 %v247, %v249
        %v251 = vrot.slane %v243, %v250
        %v253 = vadd.f32 %v242, %v251
        %v254 = vmax.f32 %v253, 0.0
        %v257 = vunpack.c.l.s4 1966171168
        %v258 = vunpack.c.0.s8 %v257
        %v259 = vlaneseq
        %v260 = vshrl.u32 %v259, 7
        %v261 = vsub.s32 %v258, %v260
        %v262 = vrot.slane %v254, %v261
        %v264 = vlaneseq
        %vm265 = vcmp.ge.s32.totalorder %v264, 0
        %vm266 = vcmp.lt.s32.totalorder %v264, 512
        %vm267 = vmand %vm265, %vm266
        %268 = vst.msk [vmem:[%s229] sm:$0xf] %vm267, %v262
        %s269 = sand.u32 %s113, 1
        %s270 = scalar_lea.sflag [#allocation4], %s269
        %s271 = sand.u32 %s113, 1
        %s272 = smul.addr %s271, 4
        %s273 = scalar_lea.vmem [#allocation8], %s272
        // Predicated region
        $region45: #{up_forward.7} parent=31 // pred_check
          %p274 = pneg %p123
        $region46: #{up_forward.7} parent=31 // pred_check_branch
          %276 = sbr.rel (%p274) target = $region48
        $region47: #{up_forward.7} parent=31 // pred_region
          %s278 = ssub.s32 64, 64
          %279 = vsyncadd %s270, %s278
          %s280 = smul.addr %s26, 4
          %s281 = smul.addr %s25, 8
          %s282 = sadd.s32 %s280, %s281
          %s283 = smul.addr %s282, 16
          %s284 = scalar_lea.hbm %s3, %s283
          %s286 = sshll.u32 %s273, 4
          %s287 = int_to_ptr.vmem [resolvable:$true] %s286
          %289 = dma.vmem_to_hbm [thread:$0]  %s287, 64, %s284, %s270
        $region48: #{up_forward.7} parent=31 // pred_fallthru
          _
      $region32: #{up_forward.7} parent=5 // pred_fallthru
        _
      %p290 = scmp.le.s32.totalorder 2, %s16
      // Predicated region
      $region49: #{up_forward.7} parent=5 // pred_check
        %p291 = pneg %p290
      $region50: #{up_forward.7} parent=5 // pred_check_branch
        %293 = sbr.rel (%p291) target = $region52
      $region51: #{up_forward.7} parent=5 // pred_region
        %s294 = ssub.s32 %s16, 2
        // Predicated region
        $region53: #{up_forward.7} parent=51 // pred_check
          %p295 = pneg %p129
        $region54: #{up_forward.7} parent=51 // pred_check_branch
          %297 = sbr.rel (%p295) target = $region56
        $region55: #{up_forward.7} parent=51 // pred_region
          %s298 = sand.u32 %s114, 1
          %s299 = scalar_lea.sflag [#allocation4], %s298
          %s300 = sand.u32 %s114, 1
          %s301 = smul.addr %s300, 4
          %s302 = scalar_lea.vmem [#allocation8], %s301
          %303 = dma.done %s299, 64
        $region56: #{up_forward.7} parent=51 // pred_fallthru
          _
      $region52: #{up_forward.7} parent=5 // pred_fallthru
        _
    $region6: #{up_forward.7} parent=1 // loop_footer
      %s20 = sadd.s32 1, %s16
    $region7: #{up_forward.7} parent=1 // loop_footer_branch
      %15 = sbr.rel target = $region3
    $region8: #{up_forward.7} parent=1 // loop_exit
      _
    %304 = vsyncpa [#allocation3], 1
    %s305 = scalar_lea.sflag [#allocation3], 1
    %306 = vsyncpa %s305, 1
    %307 = vsyncpa [#allocation6], 1
    %308 = vsyncpa [#allocation4], 1
    %s309 = scalar_lea.sflag [#allocation4], 1
    %310 = vsyncpa %s309, 1

// kernel: up_forward.6
$region0: #{up_forward.6}
  #allocation0 [shape = 'u32[]', space=smem, size = 0x4, offset = 0x4, fixed_abs, tag = 'smem constant byte address 0x4 - core index']
  #allocation1 [shape = 'u32[144,128]{1,0:T(1,128)}', space=vmem, size = 0x12000, scoped, tag = 'internal scratch']
  #allocation2 [shape = 'bf16[10,18,4]{2,1,0:T(8,128)(2,1)}', space=vmem, size = 0xf000, scoped, tag = 'scratch operand']
  %s0 = inlined_call_operand.hbm [shape: bf16[2,16,16,4], index: 0, kind: input, shape index: {}, may-alias: {0,1,2}]
  %s1 = inlined_call_operand.hbm [shape: bf16[2,16,16,4], index: 1, kind: input, shape index: {}, may-alias: {0,1,2}]
  %s2 = inlined_call_operand.hbm [shape: bf16[2,16,16,4], index: 2, kind: input, shape index: {}, may-alias: {0,1,2}]
  %s3 = inlined_call_operand.hbm [shape: f32[1,4], index: 3, kind: input, shape index: {}]
  %s4 = inlined_call_operand.hbm [shape: f32[1,4], index: 4, kind: input, shape index: {}]
  %s5 = inlined_call_operand.hbm [shape: bf16[36,4], index: 5, kind: input, shape index: {}]
  %s6 = inlined_call_operand.hbm [shape: bf16[2,16,16,4], index: 6, kind: output, shape index: {0}]
  %s7 = inlined_call_operand.hbm [shape: f32[2,2,1,4], index: 7, kind: output, shape index: {1}]
  %s8 = inlined_call_operand.hbm [shape: f32[2,2,1,4], index: 8, kind: output, shape index: {2}]
  %9 = xla_tuple %s6, %s7, %s8
  %s10 = sld [smem:[#allocation0]]
  $region97: #{up_forward.6} parent=0
    _
  %s12 = ssub.s32 1, %s10
  %s13 = scalar_select 0, %s12, %s10
  $region1: #{up_forward.6} parent=0
    #allocation3 [shape = 'u8[65536]{0}', space=vmem, size = 0x10000, scoped, tag = 'input window, operand 0']
    #allocation4 [shape = 's32[2]{0}', space=sflag, size = 0x8, scoped, tag = 'scoped memory for up_forward.6']
    #allocation5 [shape = 's32[2]{0}', space=sflag, size = 0x8, scoped, tag = 'scoped memory for up_forward.6']
    #allocation6 [shape = 'u8[8192]{0}', space=vmem, size = 0x2000, scoped, tag = 'input window, operand 1']
    #allocation7 [shape = 's32[2]{0}', space=sflag, size = 0x8, scoped, tag = 'scoped memory for up_forward.6']
    #allocation8 [shape = 'u8[8192]{0}', space=vmem, size = 0x2000, scoped, tag = 'input window, operand 2']
    #allocation9 [shape = 'u8[512]{0}', space=vmem, size = 0x400, scoped, tag = 'input window, operand 3, single buffered']
    #allocation10 [shape = 's32[1]{0}', space=sflag, size = 0x4, scoped, tag = 'scoped memory for up_forward.6']
    #allocation11 [shape = 'u8[512]{0}', space=vmem, size = 0x400, scoped, tag = 'input window, operand 4, single buffered']
    #allocation12 [shape = 'u8[10240]{0}', space=vmem, size = 0x2800, scoped, tag = 'input window, operand 5, single buffered']
    #allocation13 [shape = 's32[1]{0}', space=sflag, size = 0x4, scoped, tag = 'scoped memory for up_forward.6']
    #allocation14 [shape = 'u8[65536]{0}', space=vmem, size = 0x10000, scoped, tag = 'output window, operand 0']
    #allocation15 [shape = 'u8[1024]{0}', space=vmem, size = 0x400, scoped, tag = 'output window, operand 1']
    #allocation16 [shape = 's32[2]{0}', space=sflag, size = 0x8, scoped, tag = 'scoped memory for up_forward.6']
    #allocation17 [shape = 'u8[1024]{0}', space=vmem, size = 0x400, scoped, tag = 'output window, operand 2']
    %14 = vsyncpa [#allocation4], 0
    %s15 = scalar_lea.sflag [#allocation4], 1
    %16 = vsyncpa %s15, 0
    %17 = vsyncpa [#allocation7], 0
    %s18 = scalar_lea.sflag [#allocation7], 1
    %19 = vsyncpa %s18, 0
    %20 = vsyncpa [#allocation10], 0
    %21 = vsyncpa [#allocation13], 0
    %22 = vsyncpa [#allocation5], 0
    %s23 = scalar_lea.sflag [#allocation5], 1
    %24 = vsyncpa %s23, 0
    %25 = vsyncpa [#allocation16], 0
    %s26 = scalar_lea.sflag [#allocation16], 1
    %27 = vsyncpa %s26, 0
    loop: start=0, step=1, limit=6
    $region2: #{up_forward.6} parent=1 // loop_pre_header
      _
    $region3: #{up_forward.6} parent=1 // loop_header
      %s29 = sphi 0, %s33
      %p30 = scmp.ge.s32.totalorder %s29, 6
      %s36 = sphi 0, %s48
      %s37 = sphi 0, %s44
      %s38 = sphi 0, %s36
      %s39 = sphi 0, %s37
      %s40 = sphi 0, %s38
      %s41 = sphi 0, %s39
      %s53 = sphi 0, %s55
      %s56 = sphi 0, %s53
      %s57 = sphi 0, %s56
      %s73 = sphi 0, %s57
      %s89 = sphi 0, %s91
      %s92 = sphi 0, %s89
      %s93 = sphi 0, %s92
      %s109 = sphi 0, %s93
      %s125 = sphi 0, %s127
      %s128 = sphi 0, %s125
      %s129 = sphi 0, %s128
      %s145 = sphi 0, %s129
      %s149 = sphi 0, %s149
      %s151 = sphi 0, %s149
      %s152 = sphi 0, %s151
      %s166 = sphi 0, %s152
      %s170 = sphi 0, %s170
      %s172 = sphi 0, %s170
      %s173 = sphi 0, %s172
      %s187 = sphi 0, %s173
      %s191 = sphi 0, %s191
      %s193 = sphi 0, %s191
      %s194 = sphi 0, %s193
      %s208 = sphi 0, %s194
      %s216 = sphi 0, %s218
      %s219 = sphi 0, %s216
      %s220 = sphi 0, %s219
      %s236 = sphi 0, %s220
      %s244 = sphi 0, %s246
      %s247 = sphi 0, %s244
      %s248 = sphi 0, %s247
      %s264 = sphi 0, %s248
      %s272 = sphi 0, %s274
      %s275 = sphi 0, %s272
      %s276 = sphi 0, %s275
      %s292 = sphi 0, %s276
    $region4: #{up_forward.6} parent=1 // loop_header_branch
      %32 = sbr.rel (%p30) target = $region8
    $region5: #{up_forward.6} parent=1 // loop_body
      %s34 = ssub.s32 %s29, 1
      %s35 = ssub.s32 %s29, 2
      %s42 = sadd.s32 1, %s37
      %p43 = scmp.ge.s32.totalorder %s42, 2
      %s44 = scalar_select %p43, 0, %s42
      %s45 = sadd.s32 1, %s36
      %s46 = scalar_select %p43, %s45, %s36
      %p47 = scmp.ge.s32.totalorder %s46, 2
      %s48 = scalar_select %p47, 0, %s46
      %s49 = ssub.s32 %s36, %s48
      %s50 = ssub.s32 %s37, %s44
      %s51 = sor.u32 %s49, %s50
      %p52 = scmp.eq.s32.totalorder %s51, 0
      %s54 = sadd.s32 %s53, 1
      %s55 = scalar_select %p52, %s53, %s54
      %p58 = pneg %p52
      %p59 = scmp.eq.s32.totalorder %s29, 3
      %p60 = por %p58, %p59
      %p61 = scmp.ne.s32.totalorder %s53, %s56
      %p62 = scmp.eq.s32.totalorder %s29, 0
      %p63 = por %p61, %p62
      %p64 = scmp.ne.s32.totalorder %s53, %s56
      %p65 = scmp.eq.s32.totalorder %s34, 3
      %p66 = por %p64, %p65
      %p67 = scmp.ne.s32.totalorder %s56, %s57
      %p68 = scmp.eq.s32.totalorder %s34, 0
      %p69 = por %p67, %p68
      %p70 = scmp.ne.s32.totalorder %s56, %s57
      %p71 = scmp.eq.s32.totalorder %s35, 3
      %p72 = por %p70, %p71
      %p74 = scmp.ne.s32.totalorder %s57, %s73
      %p75 = scmp.eq.s32.totalorder %s35, 0
      %p76 = por %p74, %p75
      %s77 = smul.u32 %s37, 8
      %s78 = ssub.s32 %s77, 1
      %p79 = scmp.gt.s32.totalorder %s78, 0
      %s80 = scalar_select %p79, %s78, 0
      %s81 = smul.u32 %s44, 8
      %s82 = ssub.s32 %s81, 1
      %p83 = scmp.gt.s32.totalorder %s82, 0
      %s84 = scalar_select %p83, %s82, 0
      %s85 = ssub.s32 %s36, %s48
      %s86 = ssub.s32 %s80, %s84
      %s87 = sor.u32 %s85, %s86
      %p88 = scmp.eq.s32.totalorder %s87, 0
      %s90 = sadd.s32 %s89, 1
      %s91 = scalar_select %p88, %s89, %s90
      %p94 = pneg %p88
      %p95 = scmp.eq.s32.totalorder %s29, 3
      %p96 = por %p94, %p95
      %p97 = scmp.ne.s32.totalorder %s89, %s92
      %p98 = scmp.eq.s32.totalorder %s29, 0
      %p99 = por %p97, %p98
      %p100 = scmp.ne.s32.totalorder %s89, %s92
      %p101 = scmp.eq.s32.totalorder %s34, 3
      %p102 = por %p100, %p101
      %p103 = scmp.ne.s32.totalorder %s92, %s93
      %p104 = scmp.eq.s32.totalorder %s34, 0
      %p105 = por %p103, %p104
      %p106 = scmp.ne.s32.totalorder %s92, %s93
      %p107 = scmp.eq.s32.totalorder %s35, 3
      %p108 = por %p106, %p107
      %p110 = scmp.ne.s32.totalorder %s93, %s109
      %p111 = scmp.eq.s32.totalorder %s35, 0
      %p112 = por %p110, %p111
      %s113 = smul.u32 %s37, 8
      %s114 = sadd.s32 %s113, 8
      %p115 = scmp.lt.s32.totalorder %s114, 15
      %s116 = scalar_select %p115, %s114, 15
      %s117 = smul.u32 %s44, 8
      %s118 = sadd.s32 %s117, 8
      %p119 = scmp.lt.s32.totalorder %s118, 15
      %s120 = scalar_select %p119, %s118, 15
      %s121 = ssub.s32 %s36, %s48
      %s122 = ssub.s32 %s116, %s120
      %s123 = sor.u32 %s121, %s122
      %p124 = scmp.eq.s32.totalorder %s123, 0
      %s126 = sadd.s32 %s125, 1
      %s127 = scalar_select %p124, %s125, %s126
      %p130 = pneg %p124
      %p131 = scmp.eq.s32.totalorder %s29, 3
      %p132 = por %p130, %p131
      %p133 = scmp.ne.s32.totalorder %s125, %s128
      %p134 = scmp.eq.s32.totalorder %s29, 0
      %p135 = por %p133, %p134
      %p136 = scmp.ne.s32.totalorder %s125, %s128
      %p137 = scmp.eq.s32.totalorder %s34, 3
      %p138 = por %p136, %p137
      %p139 = scmp.ne.s32.totalorder %s128, %s129
      %p140 = scmp.eq.s32.totalorder %s34, 0
      %p141 = por %p139, %p140
      %p142 = scmp.ne.s32.totalorder %s128, %s129
      %p143 = scmp.eq.s32.totalorder %s35, 3
      %p144 = por %p142, %p143
      %p146 = scmp.ne.s32.totalorder %s129, %s145
      %p147 = scmp.eq.s32.totalorder %s35, 0
      %p148 = por %p146, %p147
      %s150 = sadd.s32 %s149, 1
      %p153 = scmp.eq.s32.totalorder %s29, 3
      %p154 = scmp.ne.s32.totalorder %s149, %s151
      %p155 = scmp.eq.s32.totalorder %s29, 0
      %p156 = por %p154, %p155
      %p157 = scmp.ne.s32.totalorder %s149, %s151
      %p158 = scmp.eq.s32.totalorder %s34, 3
      %p159 = por %p157, %p158
      %p160 = scmp.ne.s32.totalorder %s151, %s152
      %p161 = scmp.eq.s32.totalorder %s34, 0
      %p162 = por %p160, %p161
      %p163 = scmp.ne.s32.totalorder %s151, %s152
      %p164 = scmp.eq.s32.totalorder %s35, 3
      %p165 = por %p163, %p164
      %p167 = scmp.ne.s32.totalorder %s152, %s166
      %p168 = scmp.eq.s32.totalorder %s35, 0
      %p169 = por %p167, %p168
      %s171 = sadd.s32 %s170, 1
      %p174 = scmp.eq.s32.totalorder %s29, 3
      %p175 = scmp.ne.s32.totalorder %s170, %s172
      %p176 = scmp.eq.s32.totalorder %s29, 0
      %p177 = por %p175, %p176
      %p178 = scmp.ne.s32.totalorder %s170, %s172
      %p179 = scmp.eq.s32.totalorder %s34, 3
      %p180 = por %p178, %p179
      %p181 = scmp.ne.s32.totalorder %s172, %s173
      %p182 = scmp.eq.s32.totalorder %s34, 0
      %p183 = por %p181, %p182
      %p184 = scmp.ne.s32.totalorder %s172, %s173
      %p185 = scmp.eq.s32.totalorder %s35, 3
      %p186 = por %p184, %p185
      %p188 = scmp.ne.s32.totalorder %s173, %s187
      %p189 = scmp.eq.s32.totalorder %s35, 0
      %p190 = por %p188, %p189
      %s192 = sadd.s32 %s191, 1
      %p195 = scmp.eq.s32.totalorder %s29, 3
      %p196 = scmp.ne.s32.totalorder %s191, %s193
      %p197 = scmp.eq.s32.totalorder %s29, 0
      %p198 = por %p196, %p197
      %p199 = scmp.ne.s32.totalorder %s191, %s193
      %p200 = scmp.eq.s32.totalorder %s34, 3
      %p201 = por %p199, %p200
      %p202 = scmp.ne.s32.totalorder %s193, %s194
      %p203 = scmp.eq.s32.totalorder %s34, 0
      %p204 = por %p202, %p203
      %p205 = scmp.ne.s32.totalorder %s193, %s194
      %p206 = scmp.eq.s32.totalorder %s35, 3
      %p207 = por %p205, %p206
      %p209 = scmp.ne.s32.totalorder %s194, %s208
      %p210 = scmp.eq.s32.totalorder %s35, 0
      %p211 = por %p209, %p210
      %s212 = ssub.s32 %s36, %s48
      %s213 = ssub.s32 %s37, %s44
      %s214 = sor.u32 %s212, %s213
      %p215 = scmp.eq.s32.totalorder %s214, 0
      %s217 = sadd.s32 %s216, 1
      %s218 = scalar_select %p215, %s216, %s217
      %p221 = pneg %p215
      %p222 = scmp.eq.s32.totalorder %s29, 3
      %p223 = por %p221, %p222
      %p224 = scmp.ne.s32.totalorder %s216, %s219
      %p225 = scmp.eq.s32.totalorder %s29, 0
      %p226 = por %p224, %p225
      %p227 = scmp.ne.s32.totalorder %s216, %s219
      %p228 = scmp.eq.s32.totalorder %s34, 3
      %p229 = por %p227, %p228
      %p230 = scmp.ne.s32.totalorder %s219, %s220
      %p231 = scmp.eq.s32.totalorder %s34, 0
      %p232 = por %p230, %p231
      %p233 = scmp.ne.s32.totalorder %s219, %s220
      %p234 = scmp.eq.s32.totalorder %s35, 3
      %p235 = por %p233, %p234
      %p237 = scmp.ne.s32.totalorder %s220, %s236
      %p238 = scmp.eq.s32.totalorder %s35, 0
      %p239 = por %p237, %p238
      %s240 = ssub.s32 %s36, %s48
      %s241 = ssub.s32 %s37, %s44
      %s242 = sor.u32 %s240, %s241
      %p243 = scmp.eq.s32.totalorder %s242, 0
      %s245 = sadd.s32 %s244, 1
      %s246 = scalar_select %p243, %s244, %s245
      %p249 = pneg %p243
      %p250 = scmp.eq.s32.totalorder %s29, 3
      %p251 = por %p249, %p250
      %p252 = scmp.ne.s32.totalorder %s244, %s247
      %p253 = scmp.eq.s32.totalorder %s29, 0
      %p254 = por %p252, %p253
      %p255 = scmp.ne.s32.totalorder %s244, %s247
      %p256 = scmp.eq.s32.totalorder %s34, 3
      %p257 = por %p255, %p256
      %p258 = scmp.ne.s32.totalorder %s247, %s248
      %p259 = scmp.eq.s32.totalorder %s34, 0
      %p260 = por %p258, %p259
      %p261 = scmp.ne.s32.totalorder %s247, %s248
      %p262 = scmp.eq.s32.totalorder %s35, 3
      %p263 = por %p261, %p262
      %p265 = scmp.ne.s32.totalorder %s248, %s264
      %p266 = scmp.eq.s32.totalorder %s35, 0
      %p267 = por %p265, %p266
      %s268 = ssub.s32 %s36, %s48
      %s269 = ssub.s32 %s37, %s44
      %s270 = sor.u32 %s268, %s269
      %p271 = scmp.eq.s32.totalorder %s270, 0
      %s273 = sadd.s32 %s272, 1
      %s274 = scalar_select %p271, %s272, %s273
      %p277 = pneg %p271
      %p278 = scmp.eq.s32.totalorder %s29, 3
      %p279 = por %p277, %p278
      %p280 = scmp.ne.s32.totalorder %s272, %s275
      %p281 = scmp.eq.s32.totalorder %s29, 0
      %p282 = por %p280, %p281
      %p283 = scmp.ne.s32.totalorder %s272, %s275
      %p284 = scmp.eq.s32.totalorder %s34, 3
      %p285 = por %p283, %p284
      %p286 = scmp.ne.s32.totalorder %s275, %s276
      %p287 = scmp.eq.s32.totalorder %s34, 0
      %p288 = por %p286, %p287
      %p289 = scmp.ne.s32.totalorder %s275, %s276
      %p290 = scmp.eq.s32.totalorder %s35, 3
      %p291 = por %p289, %p290
      %p293 = scmp.ne.s32.totalorder %s276, %s292
      %p294 = scmp.eq.s32.totalorder %s35, 0
      %p295 = por %p293, %p294
      %p296 = scmp.le.s32.totalorder 1, %s29
      %p297 = scmp.lt.s32.totalorder %s29, 5
      %p298 = pnand %p296, %p297
      %p299 = pneg %p298
      // Predicated region
      $region9: #{up_forward.6} parent=5 // pred_check
        _
      $region10: #{up_forward.6} parent=5 // pred_check_branch
        %301 = sbr.rel (%p298) target = $region12
      $region11: #{up_forward.6} parent=5 // pred_region
        %s302 = ssub.s32 %s29, 1
        // Predicated region
        $region13: #{up_forward.6} parent=11 // pred_check
          %p303 = pneg %p162
        $region14: #{up_forward.6} parent=11 // pred_check_branch
          %305 = sbr.rel (%p303) target = $region16
        $region15: #{up_forward.6} parent=11 // pred_region
          %s307 = ssub.s32 16, 16
          %308 = vsyncadd [#allocation10], %s307
          %s310 = sshll.u32 [#allocation9], 4
          %s311 = int_to_ptr.vmem [resolvable:$true] %s310
          %313 = dma.hbm_to_vmem [thread:$0]  %s3, 16, %s311, [#allocation10]
        $region16: #{up_forward.6} parent=11 // pred_fallthru
          _
        // Predicated region
        $region17: #{up_forward.6} parent=11 // pred_check
          %p314 = pneg %p183
        $region18: #{up_forward.6} parent=11 // pred_check_branch
          %316 = sbr.rel (%p314) target = $region20
        $region19: #{up_forward.6} parent=11 // pred_region
          %s318 = ssub.s32 16, 16
          %319 = vsyncadd [#allocation10], %s318
          %s321 = sshll.u32 [#allocation11], 4
          %s322 = int_to_ptr.vmem [resolvable:$true] %s321
          %324 = dma.hbm_to_vmem [thread:$0]  %s4, 16, %s322, [#allocation10]
        $region20: #{up_forward.6} parent=11 // pred_fallthru
          _
        // Predicated region
        $region21: #{up_forward.6} parent=11 // pred_check
          %p325 = pneg %p204
        $region22: #{up_forward.6} parent=11 // pred_check_branch
          %327 = sbr.rel (%p325) target = $region24
        $region23: #{up_forward.6} parent=11 // pred_region
          %s329 = ssub.s32 320, 320
          %330 = vsyncadd [#allocation13], %s329
          %s331 = sshll.u32 [#allocation12], 4
          %s332 = int_to_ptr.vmem [resolvable:$true] %s331
          %337 = dma.hbm_to_vmem [thread:$0]  %s5, 320, %s332, [#allocation13], 64, 64, 4
        $region24: #{up_forward.6} parent=11 // pred_fallthru
          _
      $region12: #{up_forward.6} parent=5 // pred_fallthru
        _
      %p338 = scmp.lt.s32.totalorder %s29, 4
      // Predicated region
      $region25: #{up_forward.6} parent=5 // pred_check
        %p339 = pneg %p338
      $region26: #{up_forward.6} parent=5 // pred_check_branch
        %341 = sbr.rel (%p339) target = $region28
      $region27: #{up_forward.6} parent=5 // pred_region
        // Predicated region
        $region29: #{up_forward.6} parent=27 // pred_check
          %p342 = pneg %p63
        $region30: #{up_forward.6} parent=27 // pred_check_branch
          %344 = sbr.rel (%p342) target = $region32
        $region31: #{up_forward.6} parent=27 // pred_region
          %s345 = sand.u32 %s53, 1
          %s346 = scalar_lea.sflag [#allocation4], %s345
          %s347 = sand.u32 %s53, 1
          %s348 = smul.addr %s347, 64
          %s349 = scalar_lea.vmem [#allocation3], %s348
          %s350 = smul.u32 8, %s37
          %s352 = ssub.s32 1024, 1024
          %353 = vsyncadd %s346, %s352
          %s354 = smul.addr %s350, 2
          %s355 = smul.addr %s36, 32
          %s356 = sadd.s32 %s354, %s355
          %s357 = smul.addr %s356, 64
          %s358 = scalar_lea.hbm %s0, %s357
          %s359 = sshll.u32 %s349, 4
          %s360 = int_to_ptr.vmem [resolvable:$true] %s359
          %365 = dma.hbm_to_vmem [thread:$0]  %s358, 1024, %s360, %s346, 64, 64, 4
        $region32: #{up_forward.6} parent=27 // pred_fallthru
          _
        // Predicated region
        $region33: #{up_forward.6} parent=27 // pred_check
          %p366 = pneg %p99
        $region34: #{up_forward.6} parent=27 // pred_check_branch
          %368 = sbr.rel (%p366) target = $region36
        $region35: #{up_forward.6} parent=27 // pred_region
          %s369 = sand.u32 %s29, 1
          %s370 = scalar_lea.sflag [#allocation7], %s369
          %s371 = sand.u32 %s89, 1
          %s372 = smul.addr %s371, 8
          %s373 = scalar_lea.vmem [#allocation6], %s372
          %s374 = smul.u32 %s37, 8
          %s375 = ssub.s32 %s374, 1
          %p376 = scmp.gt.s32.totalorder %s375, 0
          %s377 = scalar_select %p376, %s375, 0
          %s379 = ssub.s32 128, 128
          %380 = vsyncadd %s370, %s379
          %s381 = smul.addr %s377, 2
          %s382 = smul.addr %s36, 32
          %s383 = sadd.s32 %s381, %s382
          %s384 = smul.addr %s383, 64
          %s385 = scalar_lea.hbm %s1, %s384
          %s386 = sshll.u32 %s373, 4
          %s387 = int_to_ptr.vmem [resolvable:$true] %s386
          %392 = dma.hbm_to_vmem [thread:$0]  %s385, 128, %s387, %s370, 64, 64, 4
        $region36: #{up_forward.6} parent=27 // pred_fallthru
          _
        // Predicated region
        $region37: #{up_forward.6} parent=27 // pred_check
          %p393 = pneg %p135
        $region38: #{up_forward.6} parent=27 // pred_check_branch
          %395 = sbr.rel (%p393) target = $region40
        $region39: #{up_forward.6} parent=27 // pred_region
          %s396 = sand.u32 %s29, 1
          %s397 = scalar_lea.sflag [#allocation7], %s396
          %s398 = sand.u32 %s125, 1
          %s399 = smul.addr %s398, 8
          %s400 = scalar_lea.vmem [#allocation8], %s399
          %s401 = smul.u32 %s37, 8
          %s402 = sadd.s32 %s401, 8
          %p403 = scmp.lt.s32.totalorder %s402, 15
          %s404 = scalar_select %p403, %s402, 15
          %s406 = ssub.s32 128, 128
          %407 = vsyncadd %s397, %s406
          %s408 = smul.addr %s404, 2
          %s409 = smul.addr %s36, 32
          %s410 = sadd.s32 %s408, %s409
          %s411 = smul.addr %s410, 64
          %s412 = scalar_lea.hbm %s2, %s411
          %s413 = sshll.u32 %s400, 4
          %s414 = int_to_ptr.vmem [resolvable:$true] %s413
          %419 = dma.hbm_to_vmem [thread:$0]  %s412, 128, %s414, %s397, 64, 64, 4
        $region40: #{up_forward.6} parent=27 // pred_fallthru
          _
      $region28: #{up_forward.6} parent=5 // pred_fallthru
        _
      %p420 = scmp.le.s32.totalorder 1, %s29
      %p421 = scmp.lt.s32.totalorder %s29, 5
      %p422 = pnand %p420, %p421
      %p423 = pneg %p422
      // Predicated region
      $region41: #{up_forward.6} parent=5 // pred_check
        _
      $region42: #{up_forward.6} parent=5 // pred_check_branch
        %425 = sbr.rel (%p422) target = $region44
      $region43: #{up_forward.6} parent=5 // pred_region
        %s426 = ssub.s32 %s29, 1
        %s427 = sand.u32 %s56, 1
        %s428 = scalar_lea.sflag [#allocation4], %s427
        %s429 = sand.u32 %s56, 1
        %s430 = smul.addr %s429, 64
        %s431 = scalar_lea.vmem [#allocation3], %s430
        // Predicated region
        $region45: #{up_forward.6} parent=43 // pred_check
          %p432 = pneg %p69
        $region46: #{up_forward.6} parent=43 // pred_check_branch
          %434 = sbr.rel (%p432) target = $region48
        $region47: #{up_forward.6} parent=43 // pred_region
          %435 = dma.done %s428, 1024
        $region48: #{up_forward.6} parent=43 // pred_fallthru
          _
        %s436 = sand.u32 %s34, 1
        %s437 = scalar_lea.sflag [#allocation7], %s436
        %s438 = sand.u32 %s92, 1
        %s439 = smul.addr %s438, 8
        %s440 = scalar_lea.vmem [#allocation6], %s439
        // Predicated region
        $region49: #{up_forward.6} parent=43 // pred_check
          %p441 = pneg %p105
        $region50: #{up_forward.6} parent=43 // pred_check_branch
          %443 = sbr.rel (%p441) target = $region52
        $region51: #{up_forward.6} parent=43 // pred_region
          %444 = dma.done %s437, 128
        $region52: #{up_forward.6} parent=43 // pred_fallthru
          _
        %s445 = sand.u32 %s34, 1
        %s446 = scalar_lea.sflag [#allocation7], %s445
        %s447 = sand.u32 %s128, 1
        %s448 = smul.addr %s447, 8
        %s449 = scalar_lea.vmem [#allocation8], %s448
        // Predicated region
        $region53: #{up_forward.6} parent=43 // pred_check
          %p450 = pneg %p141
        $region54: #{up_forward.6} parent=43 // pred_check_branch
          %452 = sbr.rel (%p450) target = $region56
        $region55: #{up_forward.6} parent=43 // pred_region
          %453 = dma.done %s446, 128
        $region56: #{up_forward.6} parent=43 // pred_fallthru
          _
        // Predicated region
        $region57: #{up_forward.6} parent=43 // pred_check
          %p454 = pneg %p162
        $region58: #{up_forward.6} parent=43 // pred_check_branch
          %456 = sbr.rel (%p454) target = $region60
        $region59: #{up_forward.6} parent=43 // pred_region
          %457 = dma.done [#allocation10], 16
        $region60: #{up_forward.6} parent=43 // pred_fallthru
          _
        // Predicated region
        $region61: #{up_forward.6} parent=43 // pred_check
          %p458 = pneg %p183
        $region62: #{up_forward.6} parent=43 // pred_check_branch
          %460 = sbr.rel (%p458) target = $region64
        $region63: #{up_forward.6} parent=43 // pred_region
          %461 = dma.done [#allocation10], 16
        $region64: #{up_forward.6} parent=43 // pred_fallthru
          _
        // Predicated region
        $region65: #{up_forward.6} parent=43 // pred_check
          %p462 = pneg %p204
        $region66: #{up_forward.6} parent=43 // pred_check_branch
          %464 = sbr.rel (%p462) target = $region68
        $region67: #{up_forward.6} parent=43 // pred_region
          %465 = dma.done [#allocation13], 320
        $region68: #{up_forward.6} parent=43 // pred_fallthru
          _
        %s466 = sand.u32 %s56, 1
        %s467 = scalar_lea.sflag [#allocation4], %s466
        %s468 = sand.u32 %s56, 1
        %s469 = smul.addr %s468, 64
        %s470 = scalar_lea.vmem [#allocation3], %s469
        %p471 = pneg %p69
        %p472 = pneg %p66
        %s473 = sand.u32 %s34, 1
        %s474 = scalar_lea.sflag [#allocation7], %s473
        %s475 = sand.u32 %s92, 1
        %s476 = smul.addr %s475, 8
        %s477 = scalar_lea.vmem [#allocation6], %s476
        %p478 = pneg %p105
        %p479 = pneg %p102
        %s480 = sand.u32 %s34, 1
        %s481 = scalar_lea.sflag [#allocation7], %s480
        %s482 = sand.u32 %s128, 1
        %s483 = smul.addr %s482, 8
        %s484 = scalar_lea.vmem [#allocation8], %s483
        %p485 = pneg %p141
        %p486 = pneg %p138
        %p487 = pneg %p162
        %p488 = pneg %p159
        %p489 = pneg %p183
        %p490 = pneg %p180
        %p491 = pneg %p204
        %p492 = pneg %p201
        %p493 = pneg %p232
        %p494 = pneg %p229
        %s495 = sand.u32 %s219, 1
        %s496 = scalar_lea.sflag [#allocation5], %s495
        %s497 = sand.u32 %s219, 1
        %s498 = smul.addr %s497, 64
        %s499 = scalar_lea.vmem [#allocation14], %s498
        %p500 = pneg %p260
        %p501 = pneg %p257
        %s502 = sand.u32 %s34, 1
        %s503 = scalar_lea.sflag [#allocation16], %s502
        %s504 = sand.u32 %s247, 1
        %s505 = scalar_lea.vmem [#allocation15], %s504
        %p506 = pneg %p288
        %p507 = pneg %p285
        %s508 = sand.u32 %s34, 1
        %s509 = scalar_lea.sflag [#allocation16], %s508
        %s510 = sand.u32 %s275, 1
        %s511 = scalar_lea.vmem [#allocation17], %s510
        %s512 = smul.u32 8, %s39
        %s513 = smul.u32 %s39, 8
        %s514 = ssub.s32 %s513, 1
        %p515 = scmp.gt.s32.totalorder %s514, 0
        %s516 = scalar_select %p515, %s514, 0
        %s517 = smul.u32 %s39, 8
        %s518 = sadd.s32 %s517, 8
        %p519 = scmp.lt.s32.totalorder %s518, 15
        %s520 = scalar_select %p519, %s518, 15
        %s521 = smul.u32 8, %s39
        %p523 = scmp.gt.s32.totalorder %s39, 0
        %s524 = scalar_select %p523, 1, 0
        %s525 = scvt.s32.f32 %s524
        %s526 = sadd.s32 %s39, 1
        %p527 = scmp.lt.s32.totalorder %s526, 2
        %s528 = scalar_select %p527, 1, 0
        %s529 = scvt.s32.f32 %s528
        %v530 = vld [vmem:[#allocation9] sm:$0x1]
        %v531 = vld [vmem:[#allocation11] sm:$0x1]
        %vm532 = vcmask 27648
        %533 = vst.msk [vmem:[#allocation2] sm:$0xf] %vm532, 0
        %534 = vst.msk [vmem:[#allocation2 + $0x4] sm:$0xf] %vm532, 0
        %vm535 = vcmask 24576
        %536 = vst.msk [vmem:[#allocation2 + $0x8] sm:$0x1] %vm535, 0
        %537 = vst.msk [vmem:[#allocation2 + $0xc] sm:$0xf] %vm532, 0
        %538 = vst.msk [vmem:[#allocation2 + $0x10] sm:$0xf] %vm532, 0
        %539 = vst.msk [vmem:[#allocation2 + $0x14] sm:$0x1] %vm535, 0
        %540 = vst.msk [vmem:[#allocation2 + $0x18] sm:$0xf] %vm532, 0
        %541 = vst.msk [vmem:[#allocation2 + $0x1c] sm:$0xf] %vm532, 0
        %542 = vst.msk [vmem:[#allocation2 + $0x20] sm:$0x1] %vm535, 0
        %543 = vst.msk [vmem:[#allocation2 + $0x24] sm:$0xf] %vm532, 0
        %544 = vst.msk [vmem:[#allocation2 + $0x28] sm:$0xf] %vm532, 0
        %545 = vst.msk [vmem:[#allocation2 + $0x2c] sm:$0x1] %vm535, 0
        %546 = vst.msk [vmem:[#allocation2 + $0x30] sm:$0xf] %vm532, 0
        %547 = vst.msk [vmem:[#allocation2 + $0x34] sm:$0xf] %vm532, 0
        %548 = vst.msk [vmem:[#allocation2 + $0x38] sm:$0x1] %vm535, 0
        %549 = vst.msk [vmem:[#allocation2 + $0x3c] sm:$0xf] %vm532, 0
        %550 = vst.msk [vmem:[#allocation2 + $0x40] sm:$0xf] %vm532, 0
        %551 = vst.msk [vmem:[#allocation2 + $0x44] sm:$0x1] %vm535, 0
        %552 = vst.msk [vmem:[#allocation2 + $0x48] sm:$0xf] %vm532, 0
        %553 = vst.msk [vmem:[#allocation2 + $0x4c] sm:$0xf] %vm532, 0
        %554 = vst.msk [vmem:[#allocation2 + $0x50] sm:$0x1] %vm535, 0
        %555 = vst.msk [vmem:[#allocation2 + $0x54] sm:$0xf] %vm532, 0
        %556 = vst.msk [vmem:[#allocation2 + $0x58] sm:$0xf] %vm532, 0
        %557 = vst.msk [vmem:[#allocation2 + $0x5c] sm:$0x1] %vm535, 0
        %558 = vst.msk [vmem:[#allocation2 + $0x60] sm:$0xf] %vm532, 0
        %559 = vst.msk [vmem:[#allocation2 + $0x64] sm:$0xf] %vm532, 0
        %560 = vst.msk [vmem:[#allocation2 + $0x68] sm:$0x1] %vm535, 0
        %561 = vst.msk [vmem:[#allocation2 + $0x6c] sm:$0xf] %vm532, 0
        %562 = vst.msk [vmem:[#allocation2 + $0x70] sm:$0xf] %vm532, 0
        %563 = vst.msk [vmem:[#allocation2 + $0x74] sm:$0x1] %vm535, 0
        %v564 = vld [vmem:[%s431] sm:$0xf]
        %v565 = vld [vmem:[%s431 + $0x4] sm:$0xf]
        %v566 = vld [vmem:[%s431 + $0x8] sm:$0xf]
        %v567 = vld [vmem:[%s431 + $0xc] sm:$0xf]
        %v568 = vld [vmem:[%s431 + $0x10] sm:$0xf]
        %v569 = vld [vmem:[%s431 + $0x14] sm:$0xf]
        %v570 = vld [vmem:[%s431 + $0x18] sm:$0xf]
        %v571 = vld [vmem:[%s431 + $0x1c] sm:$0xf]
        %v572 = vld [vmem:[%s431 + $0x20] sm:$0xf]
        %v573 = vld [vmem:[%s431 + $0x24] sm:$0xf]
        %v574 = vld [vmem:[%s431 + $0x28] sm:$0xf]
        %v575 = vld [vmem:[%s431 + $0x2c] sm:$0xf]
        %v576 = vld [vmem:[%s431 + $0x30] sm:$0xf]
        %v577 = vld [vmem:[%s431 + $0x34] sm:$0xf]
        %v578 = vld [vmem:[%s431 + $0x38] sm:$0xf]
        %v579 = vld [vmem:[%s431 + $0x3c] sm:$0xf]
        %v580 = vunpack.c.l.bf16 %v564
        %v581 = vunpack.c.l.bf16 %v565
        %v582 = vunpack.c.l.bf16 %v566
        %v583 = vunpack.c.l.bf16 %v567
        %v584 = vunpack.c.l.bf16 %v568
        %v585 = vunpack.c.l.bf16 %v569
        %v586 = vunpack.c.l.bf16 %v570
        %v587 = vunpack.c.l.bf16 %v571
        %v588 = vunpack.c.l.bf16 %v572
        %v589 = vunpack.c.l.bf16 %v573
        %v590 = vunpack.c.l.bf16 %v574
        %v591 = vunpack.c.l.bf16 %v575
        %v592 = vunpack.c.l.bf16 %v576
        %v593 = vunpack.c.l.bf16 %v577
        %v594 = vunpack.c.l.bf16 %v578
        %v595 = vunpack.c.l.bf16 %v579
        %v597 = vlaneseq
        %v598 = vshrl.u32 %v597, 7
        %v599 = vsub.s32 0, %v598
        %v600 = vrot.slane %v530, %v599
        %v602 = vmul.f32 %v580, %v600
        %v603 = vmul.f32 %v581, %v600
        %v604 = vmul.f32 %v582, %v600
        %v605 = vmul.f32 %v583, %v600
        %v606 = vmul.f32 %v584, %v600
        %v607 = vmul.f32 %v585, %v600
        %v608 = vmul.f32 %v586, %v600
        %v609 = vmul.f32 %v587, %v600
        %v610 = vmul.f32 %v588, %v600
        %v611 = vmul.f32 %v589, %v600
        %v612 = vmul.f32 %v590, %v600
        %v613 = vmul.f32 %v591, %v600
        %v614 = vmul.f32 %v592, %v600
        %v615 = vmul.f32 %v593, %v600
        %v616 = vmul.f32 %v594, %v600
        %v617 = vmul.f32 %v595, %v600
        %v619 = vlaneseq
        %v620 = vshrl.u32 %v619, 7
        %v621 = vsub.s32 0, %v620
        %v622 = vrot.slane %v531, %v621
        %v624 = vadd.f32 %v602, %v622
        %v625 = vadd.f32 %v603, %v622
        %v626 = vadd.f32 %v604, %v622
        %v627 = vadd.f32 %v605, %v622
        %v628 = vadd.f32 %v606, %v622
        %v629 = vadd.f32 %v607, %v622
        %v630 = vadd.f32 %v608, %v622
        %v631 = vadd.f32 %v609, %v622
        %v632 = vadd.f32 %v610, %v622
        %v633 = vadd.f32 %v611, %v622
        %v634 = vadd.f32 %v612, %v622
        %v635 = vadd.f32 %v613, %v622
        %v636 = vadd.f32 %v614, %v622
        %v637 = vadd.f32 %v615, %v622
        %v638 = vadd.f32 %v616, %v622
        %v639 = vadd.f32 %v617, %v622
        %v640 = vmax.f32 %v624, 0.0
        %v641 = vmax.f32 %v625, 0.0
        %v642 = vmax.f32 %v626, 0.0
        %v643 = vmax.f32 %v627, 0.0
        %v644 = vmax.f32 %v628, 0.0
        %v645 = vmax.f32 %v629, 0.0
        %v646 = vmax.f32 %v630, 0.0
        %v647 = vmax.f32 %v631, 0.0
        %v648 = vmax.f32 %v632, 0.0
        %v649 = vmax.f32 %v633, 0.0
        %v650 = vmax.f32 %v634, 0.0
        %v651 = vmax.f32 %v635, 0.0
        %v652 = vmax.f32 %v636, 0.0
        %v653 = vmax.f32 %v637, 0.0
        %v654 = vmax.f32 %v638, 0.0
        %v655 = vmax.f32 %v639, 0.0
        %v656 = vpack.c.bf16 %v641, %v640
        %v657 = vpack.c.bf16 %v643, %v642
        %v658 = vpack.c.bf16 %v645, %v644
        %v659 = vpack.c.bf16 %v647, %v646
        %v660 = vpack.c.bf16 %v649, %v648
        %v661 = vpack.c.bf16 %v651, %v650
        %v662 = vpack.c.bf16 %v653, %v652
        %v663 = vpack.c.bf16 %v655, %v654
        %v672 = vunpack.c.l.b16 %v656
        %v673 = vunpack.c.h.b16 %v656
        %v674 = vunpack.c.l.b16 %v657
        %v675 = vunpack.c.h.b16 %v657
        %v676 = vunpack.c.l.b16 %v658
        %v677 = vunpack.c.h.b16 %v658
        %v678 = vunpack.c.l.b16 %v659
        %v679 = vunpack.c.h.b16 %v659
        %v680 = vunpack.c.l.b16 %v660
        %v681 = vunpack.c.h.b16 %v660
        %v682 = vunpack.c.l.b16 %v661
        %v683 = vunpack.c.h.b16 %v661
        %v684 = vunpack.c.l.b16 %v662
        %v685 = vunpack.c.h.b16 %v662
        %v686 = vunpack.c.l.b16 %v663
        %v687 = vunpack.c.h.b16 %v663
        %v688 = vpack.c.b16 %v672, %v672
        %v689 = vpack.c.b16 %v673, %v673
        %v690 = vpack.c.b16 %v674, %v674
        %v691 = vpack.c.b16 %v675, %v675
        %v692 = vpack.c.b16 %v676, %v676
        %v693 = vpack.c.b16 %v677, %v677
        %v694 = vpack.c.b16 %v678, %v678
        %v695 = vpack.c.b16 %v679, %v679
        %v696 = vpack.c.b16 %v680, %v680
        %v697 = vpack.c.b16 %v681, %v681
        %v698 = vpack.c.b16 %v682, %v682
        %v699 = vpack.c.b16 %v683, %v683
        %v700 = vpack.c.b16 %v684, %v684
        %v701 = vpack.c.b16 %v685, %v685
        %v702 = vpack.c.b16 %v686, %v686
        %v703 = vpack.c.b16 %v687, %v687
        %vm704 = vsmask.f32 256
        %vm705 = vsmask.f32 4368
        %vm706 = vmor %vm704, %vm705
        %v708 = vshrl.u32 %v688, 16
        %v710 = vrot.slane %v708, 7
        %v711 = vshll.u32 %v688, 16
        %v713 = vor.u32 %v710, %v711
        %v714 = vrot.slane %v710, 4
        %v716 = vshrl.u32 %v689, 16
        %v718 = vrot.slane %v716, 7
        %v719 = vshll.u32 %v689, 16
        %v721 = vor.u32 %v718, %v719
        %v722 = vsel %vm706, %v714, %v721
        %v723 = vrot.slane %v718, 4
        %v725 = vshrl.u32 %v690, 16
        %v727 = vrot.slane %v725, 7
        %v728 = vshll.u32 %v690, 16
        %v730 = vor.u32 %v727, %v728
        %v731 = vrot.slane %v727, 4
        %v733 = vshrl.u32 %v691, 16
        %v735 = vrot.slane %v733, 7
        %v736 = vshll.u32 %v691, 16
        %v738 = vor.u32 %v735, %v736
        %v739 = vsel %vm706, %v731, %v738
        %v740 = vrot.slane %v735, 4
        %v742 = vshrl.u32 %v692, 16
        %v744 = vrot.slane %v742, 7
        %v745 = vshll.u32 %v692, 16
        %v747 = vor.u32 %v744, %v745
        %v748 = vrot.slane %v744, 4
        %v750 = vshrl.u32 %v693, 16
        %v752 = vrot.slane %v750, 7
        %v753 = vshll.u32 %v693, 16
        %v755 = vor.u32 %v752, %v753
        %v756 = vsel %vm706, %v748, %v755
        %v757 = vrot.slane %v752, 4
        %v759 = vshrl.u32 %v694, 16
        %v761 = vrot.slane %v759, 7
        %v762 = vshll.u32 %v694, 16
        %v764 = vor.u32 %v761, %v762
        %v765 = vrot.slane %v761, 4
        %v767 = vshrl.u32 %v695, 16
        %v769 = vrot.slane %v767, 7
        %v770 = vshll.u32 %v695, 16
        %v772 = vor.u32 %v769, %v770
        %v773 = vsel %vm706, %v765, %v772
        %v774 = vrot.slane %v769, 4
        %v776 = vshrl.u32 %v696, 16
        %v778 = vrot.slane %v776, 7
        %v779 = vshll.u32 %v696, 16
        %v781 = vor.u32 %v778, %v779
        %v782 = vrot.slane %v778, 4
        %v784 = vshrl.u32 %v697, 16
        %v786 = vrot.slane %v784, 7
        %v787 = vshll.u32 %v697, 16
        %v789 = vor.u32 %v786, %v787
        %v790 = vsel %vm706, %v782, %v789
        %v791 = vrot.slane %v786, 4
        %v793 = vshrl.u32 %v698, 16
        %v795 = vrot.slane %v793, 7
        %v796 = vshll.u32 %v698, 16
        %v798 = vor.u32 %v795, %v796
        %v799 = vrot.slane %v795, 4
        %v801 = vshrl.u32 %v699, 16
        %v803 = vrot.slane %v801, 7
        %v804 = vshll.u32 %v699, 16
        %v806 = vor.u32 %v803, %v804
        %v807 = vsel %vm706, %v799, %v806
        %v808 = vrot.slane %v803, 4
        %v810 = vshrl.u32 %v700, 16
        %v812 = vrot.slane %v810, 7
        %v813 = vshll.u32 %v700, 16
        %v815 = vor.u32 %v812, %v813
        %v816 = vrot.slane %v812, 4
        %v818 = vshrl.u32 %v701, 16
        %v820 = vrot.slane %v818, 7
        %v821 = vshll.u32 %v701, 16
        %v823 = vor.u32 %v820, %v821
        %v824 = vsel %vm706, %v816, %v823
        %v825 = vrot.slane %v820, 4
        %v827 = vshrl.u32 %v702, 16
        %v829 = vrot.slane %v827, 7
        %v830 = vshll.u32 %v702, 16
        %v832 = vor.u32 %v829, %v830
        %v833 = vrot.slane %v829, 4
        %v835 = vshrl.u32 %v703, 16
        %v837 = vrot.slane %v835, 7
        %v838 = vshll.u32 %v703, 16
        %v840 = vor.u32 %v837, %v838
        %v841 = vsel %vm706, %v833, %v840
        %v842 = vrot.slane %v837, 4
        %s867 = scalar_lea.vmem [#allocation2], 12
        %vm868 = vcmask 27648
        %vm869 = vsmask.f32 7938
        %vm870 = vmand %vm868, %vm869
        %v871 = vld [vmem:[%s867] sm:$0xf]
        %v872 = vsel %vm870, %v713, %v871
        %873 = vst [vmem:[%s867] sm:$0xf] %v872
        %874 = vst.msk [vmem:[%s867 + $0x4] sm:$0xf] %vm532, %v722
        %vm875 = vcmask 24576
        %vm876 = vmand %vm875, %vm704
        %v877 = vld [vmem:[%s867 + $0x8] sm:$0x1]
        %v878 = vsel %vm876, %v723, %v877
        %879 = vst [vmem:[%s867 + $0x8] sm:$0x1] %v878
        %v880 = vld [vmem:[%s867 + $0xc] sm:$0xf]
        %v881 = vsel %vm870, %v730, %v880
        %882 = vst [vmem:[%s867 + $0xc] sm:$0xf] %v881
        %883 = vst.msk [vmem:[%s867 + $0x10] sm:$0xf] %vm532, %v739
        %v884 = vld [vmem:[%s867 + $0x14] sm:$0x1]
        %v885 = vsel %vm876, %v740, %v884
        %886 = vst [vmem:[%s867 + $0x14] sm:$0x1] %v885
        %v887 = vld [vmem:[%s867 + $0x18] sm:$0xf]
        %v888 = vsel %vm870, %v747, %v887
        %889 = vst [vmem:[%s867 + $0x18] sm:$0xf] %v888
        %890 = vst.msk [vmem:[%s867 + $0x1c] sm:$0xf] %vm532, %v756
        %v891 = vld [vmem:[%s867 + $0x20] sm:$0x1]
        %v892 = vsel %vm876, %v757, %v891
        %893 = vst [vmem:[%s867 + $0x20] sm:$0x1] %v892
        %v894 = vld [vmem:[%s867 + $0x24] sm:$0xf]
        %v895 = vsel %vm870, %v764, %v894
        %896 = vst [vmem:[%s867 + $0x24] sm:$0xf] %v895
        %897 = vst.msk [vmem:[%s867 + $0x28] sm:$0xf] %vm532, %v773
        %v898 = vld [vmem:[%s867 + $0x2c] sm:$0x1]
        %v899 = vsel %vm876, %v774, %v898
        %900 = vst [vmem:[%s867 + $0x2c] sm:$0x1] %v899
        %v901 = vld [vmem:[%s867 + $0x30] sm:$0xf]
        %v902 = vsel %vm870, %v781, %v901
        %903 = vst [vmem:[%s867 + $0x30] sm:$0xf] %v902
        %904 = vst.msk [vmem:[%s867 + $0x34] sm:$0xf] %vm532, %v790
        %v905 = vld [vmem:[%s867 + $0x38] sm:$0x1]
        %v906 = vsel %vm876, %v791, %v905
        %907 = vst [vmem:[%s867 + $0x38] sm:$0x1] %v906
        %v908 = vld [vmem:[%s867 + $0x3c] sm:$0xf]
        %v909 = vsel %vm870, %v798, %v908
        %910 = vst [vmem:[%s867 + $0x3c] sm:$0xf] %v909
        %911 = vst.msk [vmem:[%s867 + $0x40] sm:$0xf] %vm532, %v807
        %v912 = vld [vmem:[%s867 + $0x44] sm:$0x1]
        %v913 = vsel %vm876, %v808, %v912
        %914 = vst [vmem:[%s867 + $0x44] sm:$0x1] %v913
        %v915 = vld [vmem:[%s867 + $0x48] sm:$0xf]
        %v916 = vsel %vm870, %v815, %v915
        %917 = vst [vmem:[%s867 + $0x48] sm:$0xf] %v916
        %918 = vst.msk [vmem:[%s867 + $0x4c] sm:$0xf] %vm532, %v824
        %v919 = vld [vmem:[%s867 + $0x50] sm:$0x1]
        %v920 = vsel %vm876, %v825, %v919
        %921 = vst [vmem:[%s867 + $0x50] sm:$0x1] %v920
        %v922 = vld [vmem:[%s867 + $0x54] sm:$0xf]
        %v923 = vsel %vm870, %v832, %v922
        %924 = vst [vmem:[%s867 + $0x54] sm:$0xf] %v923
        %925 = vst.msk [vmem:[%s867 + $0x58] sm:$0xf] %vm532, %v841
        %v926 = vld [vmem:[%s867 + $0x5c] sm:$0x1]
        %v927 = vsel %vm876, %v842, %v926
        %928 = vst [vmem:[%s867 + $0x5c] sm:$0x1] %v927
        %v929 = vld [vmem:[%s440] sm:$0xf]
        %v930 = vld [vmem:[%s440 + $0x4] sm:$0xf]
        %v931 = vunpack.c.l.bf16 %v929
        %v932 = vunpack.c.l.bf16 %v930
        %v933 = vmul.f32 %v931, %v600
        %v934 = vmul.f32 %v932, %v600
        %v935 = vadd.f32 %v933, %v622
        %v936 = vadd.f32 %v934, %v622
        %v937 = vmax.f32 %v935, 0.0
        %v938 = vmax.f32 %v936, 0.0
        %v939 = vstv %s525
        %v940 = vmul.f32 %v937, %v939
        %v941 = vmul.f32 %v938, %v939
        %v942 = vpack.c.bf16 %v941, %v940
        %v944 = vunpack.c.l.b16 %v942
        %v945 = vunpack.c.h.b16 %v942
        %v946 = vpack.c.b16 %v944, %v944
        %v947 = vpack.c.b16 %v945, %v945
        %v949 = vshrl.u32 %v946, 16
        %v951 = vrot.slane %v949, 7
        %v952 = vshll.u32 %v946, 16
        %v954 = vor.u32 %v951, %v952
        %v955 = vrot.slane %v951, 4
        %v957 = vshrl.u32 %v947, 16
        %v959 = vrot.slane %v957, 7
        %v960 = vshll.u32 %v947, 16
        %v962 = vor.u32 %v959, %v960
        %v963 = vsel %vm706, %v955, %v962
        %v964 = vrot.slane %v959, 4
        %v968 = vld [vmem:[#allocation2] sm:$0xf]
        %v969 = vsel %vm870, %v954, %v968
        %970 = vst [vmem:[#allocation2] sm:$0xf] %v969
        %971 = vst.msk [vmem:[#allocation2 + $0x4] sm:$0xf] %vm532, %v963
        %v972 = vld [vmem:[#allocation2 + $0x8] sm:$0x1]
        %v973 = vsel %vm876, %v964, %v972
        %974 = vst [vmem:[#allocation2 + $0x8] sm:$0x1] %v973
        %v975 = vld [vmem:[%s449] sm:$0xf]
        %v976 = vld [vmem:[%s449 + $0x4] sm:$0xf]
        %v977 = vunpack.c.l.bf16 %v975
        %v978 = vunpack.c.l.bf16 %v976
        %v979 = vmul.f32 %v977, %v600
        %v980 = vmul.f32 %v978, %v600
        %v981 = vadd.f32 %v979, %v622
        %v982 = vadd.f32 %v980, %v622
        %v983 = vmax.f32 %v981, 0.0
        %v984 = vmax.f32 %v982, 0.0
        %v985 = vstv %s529
        %v986 = vmul.f32 %v983, %v985
        %v987 = vmul.f32 %v984, %v985
        %v988 = vpack.c.bf16 %v987, %v986
        %v990 = vunpack.c.l.b16 %v988
        %v991 = vunpack.c.h.b16 %v988
        %v992 = vpack.c.b16 %v990, %v990
        %v993 = vpack.c.b16 %v991, %v991
        %v995 = vshrl.u32 %v992, 16
        %v997 = vrot.slane %v995, 7
        %v998 = vshll.u32 %v992, 16
        %v1000 = vor.u32 %v997, %v998
        %v1001 = vrot.slane %v997, 4
        %v1003 = vshrl.u32 %v993, 16
        %v1005 = vrot.slane %v1003, 7
        %v1006 = vshll.u32 %v993, 16
        %v1008 = vor.u32 %v1005, %v1006
        %v1009 = vsel %vm706, %v1001, %v1008
        %v1010 = vrot.slane %v1005, 4
        %s1014 = scalar_lea.vmem [#allocation2], 108
        %v1015 = vld [vmem:[%s1014] sm:$0xf]
        %v1016 = vsel %vm870, %v1000, %v1015
        %1017 = vst [vmem:[%s1014] sm:$0xf] %v1016
        %1018 = vst.msk [vmem:[%s1014 + $0x4] sm:$0xf] %vm532, %v1009
        %v1019 = vld [vmem:[%s1014 + $0x8] sm:$0x1]
        %v1020 = vsel %vm876, %v1010, %v1019
        %1021 = vst [vmem:[%s1014 + $0x8] sm:$0x1] %v1020
        %v1022 = vld [vmem:[#allocation2] sm:$0xf]
        %v1023 = vld [vmem:[#allocation2 + $0x4] sm:$0xf]
        %v1024 = vld [vmem:[#allocation2 + $0x8] sm:$0x1]
        %v1025 = vld [vmem:[#allocation2 + $0xc] sm:$0xf]
        %v1026 = vld [vmem:[#allocation2 + $0x10] sm:$0xf]
        %v1027 = vld [vmem:[#allocation2 + $0x14] sm:$0x1]
        %v1028 = vld [vmem:[#allocation2 + $0x18] sm:$0xf]
        %v1029 = vld [vmem:[#allocation2 + $0x1c] sm:$0xf]
        %v1030 = vld [vmem:[#allocation2 + $0x20] sm:$0x1]
        %v1031 = vld [vmem:[#allocation2 + $0x24] sm:$0xf]
        %v1032 = vld [vmem:[#allocation2 + $0x28] sm:$0xf]
        %v1033 = vld [vmem:[#allocation2 + $0x2c] sm:$0x1]
        %v1034 = vld [vmem:[#allocation2 + $0x30] sm:$0xf]
        %v1035 = vld [vmem:[#allocation2 + $0x34] sm:$0xf]
        %v1036 = vld [vmem:[#allocation2 + $0x38] sm:$0x1]
        %v1037 = vld [vmem:[#allocation2 + $0x3c] sm:$0xf]
        %v1038 = vld [vmem:[#allocation2 + $0x40] sm:$0xf]
        %v1039 = vld [vmem:[#allocation2 + $0x44] sm:$0x1]
        %v1040 = vld [vmem:[#allocation2 + $0x48] sm:$0xf]
        %v1041 = vld [vmem:[#allocation2 + $0x4c] sm:$0xf]
        %v1042 = vld [vmem:[#allocation2 + $0x50] sm:$0x1]
        %v1043 = vld [vmem:[#allocation2 + $0x54] sm:$0xf]
        %v1044 = vld [vmem:[#allocation2 + $0x58] sm:$0xf]
        %v1045 = vld [vmem:[#allocation2 + $0x5c] sm:$0x1]
        %v1046 = vld [vmem:[#allocation2 + $0x60] sm:$0xf]
        %v1047 = vld [vmem:[#allocation2 + $0x64] sm:$0xf]
        %v1048 = vld [vmem:[#allocation2 + $0x68] sm:$0x1]
        %v1049 = vld [vmem:[#allocation2 + $0x6c] sm:$0xf]
        %v1050 = vld [vmem:[#allocation2 + $0x70] sm:$0xf]
        %v1051 = vld [vmem:[#allocation2 + $0x74] sm:$0x1]
        %vm1052 = vsmask.f32 3328
        %vm1053 = vsmask.f32 7440
        %vm1054 = vmor %vm1052, %vm1053
        %v1056 = vshrl.u32 %v1022, 16
        %v1058 = vrot.slane %v1056, 4
        %v1059 = vshll.u32 %v1022, 16
        %v1061 = vrot.slane %v1059, 5
        %v1062 = vor.u32 %v1058, %v1061
        %v1063 = vrot.slane %v1062, 4
        %v1065 = vshll.u32 %v1023, 16
        %v1067 = vrot.slane %v1065, 5
        %v1068 = vsel %vm1054, %v1063, %v1067
        %v1069 = vshrl.u32 %v1023, 16
        %v1071 = vrot.slane %v1069, 4
        %v1072 = vor.u32 %v1071, %v1067
        %v1073 = vrot.slane %v1072, 4
        %v1075 = vshll.u32 %v1024, 16
        %v1077 = vrot.slane %v1075, 5
        %v1078 = vsel %vm1054, %v1073, %v1077
        %v1080 = vshrl.u32 %v1025, 16
        %v1082 = vrot.slane %v1080, 4
        %v1083 = vshll.u32 %v1025, 16
        %v1085 = vrot.slane %v1083, 5
        %v1086 = vor.u32 %v1082, %v1085
        %v1087 = vrot.slane %v1086, 4
        %v1089 = vshll.u32 %v1026, 16
        %v1091 = vrot.slane %v1089, 5
        %v1092 = vsel %vm1054, %v1087, %v1091
        %v1093 = vshrl.u32 %v1026, 16
        %v1095 = vrot.slane %v1093, 4
        %v1096 = vor.u32 %v1095, %v1091
        %v1097 = vrot.slane %v1096, 4
        %v1099 = vshll.u32 %v1027, 16
        %v1101 = vrot.slane %v1099, 5
        %v1102 = vsel %vm1054, %v1097, %v1101
        %v1104 = vshrl.u32 %v1028, 16
        %v1106 = vrot.slane %v1104, 4
        %v1107 = vshll.u32 %v1028, 16
        %v1109 = vrot.slane %v1107, 5
        %v1110 = vor.u32 %v1106, %v1109
        %v1111 = vrot.slane %v1110, 4
        %v1113 = vshll.u32 %v1029, 16
        %v1115 = vrot.slane %v1113, 5
        %v1116 = vsel %vm1054, %v1111, %v1115
        %v1117 = vshrl.u32 %v1029, 16
        %v1119 = vrot.slane %v1117, 4
        %v1120 = vor.u32 %v1119, %v1115
        %v1121 = vrot.slane %v1120, 4
        %v1123 = vshll.u32 %v1030, 16
        %v1125 = vrot.slane %v1123, 5
        %v1126 = vsel %vm1054, %v1121, %v1125
        %v1128 = vshrl.u32 %v1031, 16
        %v1130 = vrot.slane %v1128, 4
        %v1131 = vshll.u32 %v1031, 16
        %v1133 = vrot.slane %v1131, 5
        %v1134 = vor.u32 %v1130, %v1133
        %v1135 = vrot.slane %v1134, 4
        %v1137 = vshll.u32 %v1032, 16
        %v1139 = vrot.slane %v1137, 5
        %v1140 = vsel %vm1054, %v1135, %v1139
        %v1141 = vshrl.u32 %v1032, 16
        %v1143 = vrot.slane %v1141, 4
        %v1144 = vor.u32 %v1143, %v1139
        %v1145 = vrot.slane %v1144, 4
        %v1147 = vshll.u32 %v1033, 16
        %v1149 = vrot.slane %v1147, 5
        %v1150 = vsel %vm1054, %v1145, %v1149
        %v1152 = vshrl.u32 %v1034, 16
        %v1154 = vrot.slane %v1152, 4
        %v1155 = vshll.u32 %v1034, 16
        %v1157 = vrot.slane %v1155, 5
        %v1158 = vor.u32 %v1154, %v1157
        %v1159 = vrot.slane %v1158, 4
        %v1161 = vshll.u32 %v1035, 16
        %v1163 = vrot.slane %v1161, 5
        %v1164 = vsel %vm1054, %v1159, %v1163
        %v1165 = vshrl.u32 %v1035, 16
        %v1167 = vrot.slane %v1165, 4
        %v1168 = vor.u32 %v1167, %v1163
        %v1169 = vrot.slane %v1168, 4
        %v1171 = vshll.u32 %v1036, 16
        %v1173 = vrot.slane %v1171, 5
        %v1174 = vsel %vm1054, %v1169, %v1173
        %v1176 = vshrl.u32 %v1037, 16
        %v1178 = vrot.slane %v1176, 4
        %v1179 = vshll.u32 %v1037, 16
        %v1181 = vrot.slane %v1179, 5
        %v1182 = vor.u32 %v1178, %v1181
        %v1183 = vrot.slane %v1182, 4
        %v1185 = vshll.u32 %v1038, 16
        %v1187 = vrot.slane %v1185, 5
        %v1188 = vsel %vm1054, %v1183, %v1187
        %v1189 = vshrl.u32 %v1038, 16
        %v1191 = vrot.slane %v1189, 4
        %v1192 = vor.u32 %v1191, %v1187
        %v1193 = vrot.slane %v1192, 4
        %v1195 = vshll.u32 %v1039, 16
        %v1197 = vrot.slane %v1195, 5
        %v1198 = vsel %vm1054, %v1193, %v1197
        %v1200 = vshrl.u32 %v1040, 16
        %v1202 = vrot.slane %v1200, 4
        %v1203 = vshll.u32 %v1040, 16
        %v1205 = vrot.slane %v1203, 5
        %v1206 = vor.u32 %v1202, %v1205
        %v1207 = vrot.slane %v1206, 4
        %v1209 = vshll.u32 %v1041, 16
        %v1211 = vrot.slane %v1209, 5
        %v1212 = vsel %vm1054, %v1207, %v1211
        %v1213 = vshrl.u32 %v1041, 16
        %v1215 = vrot.slane %v1213, 4
        %v1216 = vor.u32 %v1215, %v1211
        %v1217 = vrot.slane %v1216, 4
        %v1219 = vshll.u32 %v1042, 16
        %v1221 = vrot.slane %v1219, 5
        %v1222 = vsel %vm1054, %v1217, %v1221
        %v1224 = vshrl.u32 %v1043, 16
        %v1226 = vrot.slane %v1224, 4
        %v1227 = vshll.u32 %v1043, 16
        %v1229 = vrot.slane %v1227, 5
        %v1230 = vor.u32 %v1226, %v1229
        %v1231 = vrot.slane %v1230, 4
        %v1233 = vshll.u32 %v1044, 16
        %v1235 = vrot.slane %v1233, 5
        %v1236 = vsel %vm1054, %v1231, %v1235
        %v1237 = vshrl.u32 %v1044, 16
        %v1239 = vrot.slane %v1237, 4
        %v1240 = vor.u32 %v1239, %v1235
        %v1241 = vrot.slane %v1240, 4
        %v1243 = vshll.u32 %v1045, 16
        %v1245 = vrot.slane %v1243, 5
        %v1246 = vsel %vm1054, %v1241, %v1245
        %vm1271 = vcmask 1042432
        %vm1272 = vcmask 1046532
        %vm1273 = vmor %vm1271, %vm1272
        %v1274 = vrot.slane %v1022, 5
        %v1275 = vrot.slane %v1274, 4
        %v1276 = vrot.slane %v1023, 5
        %v1277 = vsel %vm1273, %v1275, %v1276
        %v1278 = vrot.slane %v1276, 4
        %v1279 = vrot.slane %v1024, 5
        %v1280 = vsel %vm1273, %v1278, %v1279
        %v1281 = vrot.slane %v1025, 5
        %v1282 = vrot.slane %v1281, 4
        %v1283 = vrot.slane %v1026, 5
        %v1284 = vsel %vm1273, %v1282, %v1283
        %v1285 = vrot.slane %v1283, 4
        %v1286 = vrot.slane %v1027, 5
        %v1287 = vsel %vm1273, %v1285, %v1286
        %v1288 = vrot.slane %v1028, 5
        %v1289 = vrot.slane %v1288, 4
        %v1290 = vrot.slane %v1029, 5
        %v1291 = vsel %vm1273, %v1289, %v1290
        %v1292 = vrot.slane %v1290, 4
        %v1293 = vrot.slane %v1030, 5
        %v1294 = vsel %vm1273, %v1292, %v1293
        %v1295 = vrot.slane %v1031, 5
        %v1296 = vrot.slane %v1295, 4
        %v1297 = vrot.slane %v1032, 5
        %v1298 = vsel %vm1273, %v1296, %v1297
        %v1299 = vrot.slane %v1297, 4
        %v1300 = vrot.slane %v1033, 5
        %v1301 = vsel %vm1273, %v1299, %v1300
        %v1302 = vrot.slane %v1034, 5
        %v1303 = vrot.slane %v1302, 4
        %v1304 = vrot.slane %v1035, 5
        %v1305 = vsel %vm1273, %v1303, %v1304
        %v1306 = vrot.slane %v1304, 4
        %v1307 = vrot.slane %v1036, 5
        %v1308 = vsel %vm1273, %v1306, %v1307
        %v1309 = vrot.slane %v1037, 5
        %v1310 = vrot.slane %v1309, 4
        %v1311 = vrot.slane %v1038, 5
        %v1312 = vsel %vm1273, %v1310, %v1311
        %v1313 = vrot.slane %v1311, 4
        %v1314 = vrot.slane %v1039, 5
        %v1315 = vsel %vm1273, %v1313, %v1314
        %v1316 = vrot.slane %v1040, 5
        %v1317 = vrot.slane %v1316, 4
        %v1318 = vrot.slane %v1041, 5
        %v1319 = vsel %vm1273, %v1317, %v1318
        %v1320 = vrot.slane %v1318, 4
        %v1321 = vrot.slane %v1042, 5
        %v1322 = vsel %vm1273, %v1320, %v1321
        %v1323 = vrot.slane %v1043, 5
        %v1324 = vrot.slane %v1323, 4
        %v1325 = vrot.slane %v1044, 5
        %v1326 = vsel %vm1273, %v1324, %v1325
        %v1327 = vrot.slane %v1325, 4
        %v1328 = vrot.slane %v1045, 5
        %v1329 = vsel %vm1273, %v1327, %v1328
        %v1331 = vshrl.u32 %v1046, 16
        %v1333 = vrot.slane %v1331, 4
        %v1334 = vshll.u32 %v1046, 16
        %v1336 = vrot.slane %v1334, 5
        %v1337 = vor.u32 %v1333, %v1336
        %v1338 = vrot.slane %v1337, 4
        %v1340 = vshll.u32 %v1047, 16
        %v1342 = vrot.slane %v1340, 5
        %v1343 = vsel %vm1054, %v1338, %v1342
        %v1344 = vshrl.u32 %v1047, 16
        %v1346 = vrot.slane %v1344, 4
        %v1347 = vor.u32 %v1346, %v1342
        %v1348 = vrot.slane %v1347, 4
        %v1350 = vshll.u32 %v1048, 16
        %v1352 = vrot.slane %v1350, 5
        %v1353 = vsel %vm1054, %v1348, %v1352
        %v1357 = vrot.slane %v1046, 5
        %v1358 = vrot.slane %v1357, 4
        %v1359 = vrot.slane %v1047, 5
        %v1360 = vsel %vm1273, %v1358, %v1359
        %v1361 = vrot.slane %v1359, 4
        %v1362 = vrot.slane %v1048, 5
        %v1363 = vsel %vm1273, %v1361, %v1362
        %v1365 = vshrl.u32 %v1049, 16
        %v1367 = vrot.slane %v1365, 4
        %v1368 = vshll.u32 %v1049, 16
        %v1370 = vrot.slane %v1368, 5
        %v1371 = vor.u32 %v1367, %v1370
        %v1372 = vrot.slane %v1371, 4
        %v1374 = vshll.u32 %v1050, 16
        %v1376 = vrot.slane %v1374, 5
        %v1377 = vsel %vm1054, %v1372, %v1376
        %v1378 = vshrl.u32 %v1050, 16
        %v1380 = vrot.slane %v1378, 4
        %v1381 = vor.u32 %v1380, %v1376
        %v1382 = vrot.slane %v1381, 4
        %v1384 = vshll.u32 %v1051, 16
        %v1386 = vrot.slane %v1384, 5
        %v1387 = vsel %vm1054, %v1382, %v1386
        %v1391 = vrot.slane %v1049, 5
        %v1392 = vrot.slane %v1391, 4
        %v1393 = vrot.slane %v1050, 5
        %v1394 = vsel %vm1273, %v1392, %v1393
        %v1395 = vrot.slane %v1393, 4
        %v1396 = vrot.slane %v1051, 5
        %v1397 = vsel %vm1273, %v1395, %v1396
        %v1398 = vunpack.c.l.b16 %v1022
        %v1399 = vunpack.c.l.b16 %v1023
        %v1400 = vunpack.c.l.b16 %v1025
        %v1401 = vunpack.c.l.b16 %v1026
        %v1402 = vunpack.c.l.b16 %v1028
        %v1403 = vunpack.c.l.b16 %v1029
        %v1404 = vunpack.c.l.b16 %v1031
        %v1405 = vunpack.c.l.b16 %v1032
        %v1406 = vunpack.c.l.b16 %v1034
        %v1407 = vunpack.c.l.b16 %v1035
        %v1408 = vunpack.c.l.b16 %v1037
        %v1409 = vunpack.c.l.b16 %v1038
        %v1410 = vunpack.c.l.b16 %v1040
        %v1411 = vunpack.c.l.b16 %v1041
        %v1412 = vunpack.c.l.b16 %v1043
        %v1413 = vunpack.c.l.b16 %v1044
        %v1414 = vpack.c.b16 %v1399, %v1398
        %v1415 = vpack.c.b16 %v1401, %v1400
        %v1416 = vpack.c.b16 %v1403, %v1402
        %v1417 = vpack.c.b16 %v1405, %v1404
        %v1418 = vpack.c.b16 %v1407, %v1406
        %v1419 = vpack.c.b16 %v1409, %v1408
        %v1420 = vpack.c.b16 %v1411, %v1410
        %v1421 = vpack.c.b16 %v1413, %v1412
        %v1422 = vunpack.c.l.b16 %v1068
        %v1423 = vunpack.c.l.b16 %v1078
        %v1424 = vunpack.c.l.b16 %v1092
        %v1425 = vunpack.c.l.b16 %v1102
        %v1426 = vunpack.c.l.b16 %v1116
        %v1427 = vunpack.c.l.b16 %v1126
        %v1428 = vunpack.c.l.b16 %v1140
        %v1429 = vunpack.c.l.b16 %v1150
        %v1430 = vunpack.c.l.b16 %v1164
        %v1431 = vunpack.c.l.b16 %v1174
        %v1432 = vunpack.c.l.b16 %v1188
        %v1433 = vunpack.c.l.b16 %v1198
        %v1434 = vunpack.c.l.b16 %v1212
        %v1435 = vunpack.c.l.b16 %v1222
        %v1436 = vunpack.c.l.b16 %v1236
        %v1437 = vunpack.c.l.b16 %v1246
        %v1438 = vpack.c.b16 %v1423, %v1422
        %v1439 = vpack.c.b16 %v1425, %v1424
        %v1440 = vpack.c.b16 %v1427, %v1426
        %v1441 = vpack.c.b16 %v1429, %v1428
        %v1442 = vpack.c.b16 %v1431, %v1430
        %v1443 = vpack.c.b16 %v1433, %v1432
        %v1444 = vpack.c.b16 %v1435, %v1434
        %v1445 = vpack.c.b16 %v1437, %v1436
        %1446 = vrot.lane.b32.xlu0 %v1438, 4
        %v1447 = vpop.permute.xlu0 %1446
        %1448 = vrot.lane.b32.xlu0 %v1439, 4
        %v1449 = vpop.permute.xlu0 %1448
        %1450 = vrot.lane.b32.xlu0 %v1440, 4
        %v1451 = vpop.permute.xlu0 %1450
        %1452 = vrot.lane.b32.xlu0 %v1441, 4
        %v1453 = vpop.permute.xlu0 %1452
        %1454 = vrot.lane.b32.xlu0 %v1442, 4
        %v1455 = vpop.permute.xlu0 %1454
        %1456 = vrot.lane.b32.xlu0 %v1443, 4
        %v1457 = vpop.permute.xlu0 %1456
        %1458 = vrot.lane.b32.xlu0 %v1444, 4
        %v1459 = vpop.permute.xlu0 %1458
        %1460 = vrot.lane.b32.xlu0 %v1445, 4
        %v1461 = vpop.permute.xlu0 %1460
        %v1462 = vunpack.c.l.b16 %v1277
        %v1463 = vunpack.c.l.b16 %v1280
        %v1464 = vunpack.c.l.b16 %v1284
        %v1465 = vunpack.c.l.b16 %v1287
        %v1466 = vunpack.c.l.b16 %v1291
        %v1467 = vunpack.c.l.b16 %v1294
        %v1468 = vunpack.c.l.b16 %v1298
        %v1469 = vunpack.c.l.b16 %v1301
        %v1470 = vunpack.c.l.b16 %v1305
        %v1471 = vunpack.c.l.b16 %v1308
        %v1472 = vunpack.c.l.b16 %v1312
        %v1473 = vunpack.c.l.b16 %v1315
        %v1474 = vunpack.c.l.b16 %v1319
        %v1475 = vunpack.c.l.b16 %v1322
        %v1476 = vunpack.c.l.b16 %v1326
        %v1477 = vunpack.c.l.b16 %v1329
        %v1478 = vpack.c.b16 %v1463, %v1462
        %v1479 = vpack.c.b16 %v1465, %v1464
        %v1480 = vpack.c.b16 %v1467, %v1466
        %v1481 = vpack.c.b16 %v1469, %v1468
        %v1482 = vpack.c.b16 %v1471, %v1470
        %v1483 = vpack.c.b16 %v1473, %v1472
        %v1484 = vpack.c.b16 %v1475, %v1474
        %v1485 = vpack.c.b16 %v1477, %v1476
        %1486 = vrot.lane.b32.xlu0 %v1478, 8
        %v1487 = vpop.permute.xlu0 %1486
        %1488 = vrot.lane.b32.xlu0 %v1479, 8
        %v1489 = vpop.permute.xlu0 %1488
        %1490 = vrot.lane.b32.xlu0 %v1480, 8
        %v1491 = vpop.permute.xlu0 %1490
        %1492 = vrot.lane.b32.xlu0 %v1481, 8
        %v1493 = vpop.permute.xlu0 %1492
        %1494 = vrot.lane.b32.xlu0 %v1482, 8
        %v1495 = vpop.permute.xlu0 %1494
        %1496 = vrot.lane.b32.xlu0 %v1483, 8
        %v1497 = vpop.permute.xlu0 %1496
        %1498 = vrot.lane.b32.xlu0 %v1484, 8
        %v1499 = vpop.permute.xlu0 %1498
        %1500 = vrot.lane.b32.xlu0 %v1485, 8
        %v1501 = vpop.permute.xlu0 %1500
        %v1502 = vunpack.c.l.b16 %v1046
        %v1503 = vunpack.c.l.b16 %v1047
        %v1504 = vpack.c.b16 %v1503, %v1502
        %1505 = vrot.lane.b32.xlu0 %v1415, 12
        %v1506 = vpop.permute.xlu0 %1505
        %1507 = vrot.lane.b32.xlu0 %v1416, 12
        %v1508 = vpop.permute.xlu0 %1507
        %1509 = vrot.lane.b32.xlu0 %v1417, 12
        %v1510 = vpop.permute.xlu0 %1509
        %1511 = vrot.lane.b32.xlu0 %v1418, 12
        %v1512 = vpop.permute.xlu0 %1511
        %1513 = vrot.lane.b32.xlu0 %v1419, 12
        %v1514 = vpop.permute.xlu0 %1513
        %1515 = vrot.lane.b32.xlu0 %v1420, 12
        %v1516 = vpop.permute.xlu0 %1515
        %1517 = vrot.lane.b32.xlu0 %v1421, 12
        %v1518 = vpop.permute.xlu0 %1517
        %1519 = vrot.lane.b32.xlu0 %v1504, 12
        %v1520 = vpop.permute.xlu0 %1519
        %v1521 = vunpack.c.l.b16 %v1343
        %v1522 = vunpack.c.l.b16 %v1353
        %v1523 = vpack.c.b16 %v1522, %v1521
        %1524 = vrot.lane.b32.xlu0 %v1439, 16
        %v1525 = vpop.permute.xlu0 %1524
        %1526 = vrot.lane.b32.xlu0 %v1440, 16
        %v1527 = vpop.permute.xlu0 %1526
        %1528 = vrot.lane.b32.xlu0 %v1441, 16
        %v1529 = vpop.permute.xlu0 %1528
        %1530 = vrot.lane.b32.xlu0 %v1442, 16
        %v1531 = vpop.permute.xlu0 %1530
        %1532 = vrot.lane.b32.xlu0 %v1443, 16
        %v1533 = vpop.permute.xlu0 %1532
        %1534 = vrot.lane.b32.xlu0 %v1444, 16
        %v1535 = vpop.permute.xlu0 %1534
        %1536 = vrot.lane.b32.xlu0 %v1445, 16
        %v1537 = vpop.permute.xlu0 %1536
        %1538 = vrot.lane.b32.xlu0 %v1523, 16
        %v1539 = vpop.permute.xlu0 %1538
        %v1540 = vunpack.c.l.b16 %v1360
        %v1541 = vunpack.c.l.b16 %v1363
        %v1542 = vpack.c.b16 %v1541, %v1540
        %1543 = vrot.lane.b32.xlu0 %v1479, 20
        %v1544 = vpop.permute.xlu0 %1543
        %1545 = vrot.lane.b32.xlu0 %v1480, 20
        %v1546 = vpop.permute.xlu0 %1545
        %1547 = vrot.lane.b32.xlu0 %v1481, 20
        %v1548 = vpop.permute.xlu0 %1547
        %1549 = vrot.lane.b32.xlu0 %v1482, 20
        %v1550 = vpop.permute.xlu0 %1549
        %1551 = vrot.lane.b32.xlu0 %v1483, 20
        %v1552 = vpop.permute.xlu0 %1551
        %1553 = vrot.lane.b32.xlu0 %v1484, 20
        %v1554 = vpop.permute.xlu0 %1553
        %1555 = vrot.lane.b32.xlu0 %v1485, 20
        %v1556 = vpop.permute.xlu0 %1555
        %1557 = vrot.lane.b32.xlu0 %v1542, 20
        %v1558 = vpop.permute.xlu0 %1557
        %v1559 = vunpack.c.l.b16 %v1049
        %v1560 = vunpack.c.l.b16 %v1050
        %v1561 = vpack.c.b16 %v1560, %v1559
        %1562 = vrot.lane.b32.xlu0 %v1416, 24
        %v1563 = vpop.permute.xlu0 %1562
        %1564 = vrot.lane.b32.xlu0 %v1417, 24
        %v1565 = vpop.permute.xlu0 %1564
        %1566 = vrot.lane.b32.xlu0 %v1418, 24
        %v1567 = vpop.permute.xlu0 %1566
        %1568 = vrot.lane.b32.xlu0 %v1419, 24
        %v1569 = vpop.permute.xlu0 %1568
        %1570 = vrot.lane.b32.xlu0 %v1420, 24
        %v1571 = vpop.permute.xlu0 %1570
        %1572 = vrot.lane.b32.xlu0 %v1421, 24
        %v1573 = vpop.permute.xlu0 %1572
        %1574 = vrot.lane.b32.xlu0 %v1504, 24
        %v1575 = vpop.permute.xlu0 %1574
        %1576 = vrot.lane.b32.xlu0 %v1561, 24
        %v1577 = vpop.permute.xlu0 %1576
        %v1578 = vunpack.c.l.b16 %v1377
        %v1579 = vunpack.c.l.b16 %v1387
        %v1580 = vpack.c.b16 %v1579, %v1578
        %1581 = vrot.lane.b32.xlu0 %v1440, 28
        %v1582 = vpop.permute.xlu0 %1581
        %1583 = vrot.lane.b32.xlu0 %v1441, 28
        %v1584 = vpop.permute.xlu0 %1583
        %1585 = vrot.lane.b32.xlu0 %v1442, 28
        %v1586 = vpop.permute.xlu0 %1585
        %1587 = vrot.lane.b32.xlu0 %v1443, 28
        %v1588 = vpop.permute.xlu0 %1587
        %1589 = vrot.lane.b32.xlu0 %v1444, 28
        %v1590 = vpop.permute.xlu0 %1589
        %1591 = vrot.lane.b32.xlu0 %v1445, 28
        %v1592 = vpop.permute.xlu0 %1591
        %1593 = vrot.lane.b32.xlu0 %v1523, 28
        %v1594 = vpop.permute.xlu0 %1593
        %1595 = vrot.lane.b32.xlu0 %v1580, 28
        %v1596 = vpop.permute.xlu0 %1595
        %v1597 = vunpack.c.l.b16 %v1394
        %v1598 = vunpack.c.l.b16 %v1397
        %v1599 = vpack.c.b16 %v1598, %v1597
        %1600 = vrot.lane.b32.xlu0 %v1480, 32
        %v1601 = vpop.permute.xlu0 %1600
        %1602 = vrot.lane.b32.xlu0 %v1481, 32
        %v1603 = vpop.permute.xlu0 %1602
        %1604 = vrot.lane.b32.xlu0 %v1482, 32
        %v1605 = vpop.permute.xlu0 %1604
        %1606 = vrot.lane.b32.xlu0 %v1483, 32
        %v1607 = vpop.permute.xlu0 %1606
        %1608 = vrot.lane.b32.xlu0 %v1484, 32
        %v1609 = vpop.permute.xlu0 %1608
        %1610 = vrot.lane.b32.xlu0 %v1485, 32
        %v1611 = vpop.permute.xlu0 %1610
        %1612 = vrot.lane.b32.xlu0 %v1542, 32
        %v1613 = vpop.permute.xlu0 %1612
        %1614 = vrot.lane.b32.xlu0 %v1599, 32
        %v1615 = vpop.permute.xlu0 %1614
        %vm1616 = vcmask 31744
        %v1619 = vsel %vm1616, %v1414, %v1447
        %v1622 = vsel %vm1616, %v1415, %v1449
        %v1625 = vsel %vm1616, %v1416, %v1451
        %v1628 = vsel %vm1616, %v1417, %v1453
        %v1631 = vsel %vm1616, %v1418, %v1455
        %v1634 = vsel %vm1616, %v1419, %v1457
        %v1637 = vsel %vm1616, %v1420, %v1459
        %v1640 = vsel %vm1616, %v1421, %v1461
        %vm1641 = vcmask 64512
        %v1643 = vsel %vm1641, %v1619, %v1487
        %v1645 = vsel %vm1641, %v1622, %v1489
        %v1647 = vsel %vm1641, %v1625, %v1491
        %v1649 = vsel %vm1641, %v1628, %v1493
        %v1651 = vsel %vm1641, %v1631, %v1495
        %v1653 = vsel %vm1641, %v1634, %v1497
        %v1655 = vsel %vm1641, %v1637, %v1499
        %v1657 = vsel %vm1641, %v1640, %v1501
        %vm1658 = vcmask 97280
        %v1660 = vsel %vm1658, %v1643, %v1506
        %v1662 = vsel %vm1658, %v1645, %v1508
        %v1664 = vsel %vm1658, %v1647, %v1510
        %v1666 = vsel %vm1658, %v1649, %v1512
        %v1668 = vsel %vm1658, %v1651, %v1514
        %v1670 = vsel %vm1658, %v1653, %v1516
        %v1672 = vsel %vm1658, %v1655, %v1518
        %v1674 = vsel %vm1658, %v1657, %v1520
        %vm1675 = vcmask 130048
        %v1677 = vsel %vm1675, %v1660, %v1525
        %v1679 = vsel %vm1675, %v1662, %v1527
        %v1681 = vsel %vm1675, %v1664, %v1529
        %v1683 = vsel %vm1675, %v1666, %v1531
        %v1685 = vsel %vm1675, %v1668, %v1533
        %v1687 = vsel %vm1675, %v1670, %v1535
        %v1689 = vsel %vm1675, %v1672, %v1537
        %v1691 = vsel %vm1675, %v1674, %v1539
        %vm1692 = vcmask 162816
        %v1694 = vsel %vm1692, %v1677, %v1544
        %v1696 = vsel %vm1692, %v1679, %v1546
        %v1698 = vsel %vm1692, %v1681, %v1548
        %v1700 = vsel %vm1692, %v1683, %v1550
        %v1702 = vsel %vm1692, %v1685, %v1552
        %v1704 = vsel %vm1692, %v1687, %v1554
        %v1706 = vsel %vm1692, %v1689, %v1556
        %v1708 = vsel %vm1692, %v1691, %v1558
        %vm1709 = vcmask 195584
        %v1711 = vsel %vm1709, %v1694, %v1563
        %v1713 = vsel %vm1709, %v1696, %v1565
        %v1715 = vsel %vm1709, %v1698, %v1567
        %v1717 = vsel %vm1709, %v1700, %v1569
        %v1719 = vsel %vm1709, %v1702, %v1571
        %v1721 = vsel %vm1709, %v1704, %v1573
        %v1723 = vsel %vm1709, %v1706, %v1575
        %v1725 = vsel %vm1709, %v1708, %v1577
        %vm1726 = vcmask 228352
        %v1728 = vsel %vm1726, %v1711, %v1582
        %v1730 = vsel %vm1726, %v1713, %v1584
        %v1732 = vsel %vm1726, %v1715, %v1586
        %v1734 = vsel %vm1726, %v1717, %v1588
        %v1736 = vsel %vm1726, %v1719, %v1590
        %v1738 = vsel %vm1726, %v1721, %v1592
        %v1740 = vsel %vm1726, %v1723, %v1594
        %v1742 = vsel %vm1726, %v1725, %v1596
        %vm1743 = vcmask 261120
        %v1745 = vsel %vm1743, %v1728, %v1601
        %v1747 = vsel %vm1743, %v1730, %v1603
        %v1749 = vsel %vm1743, %v1732, %v1605
        %v1751 = vsel %vm1743, %v1734, %v1607
        %v1753 = vsel %vm1743, %v1736, %v1609
        %v1755 = vsel %vm1743, %v1738, %v1611
        %v1757 = vsel %vm1743, %v1740, %v1613
        %v1759 = vsel %vm1743, %v1742, %v1615
        %v1760 = vld [vmem:[#allocation12] sm:$0xf]
        %v1761 = vld [vmem:[#allocation12 + $0x4] sm:$0xf]
        %v1762 = vld [vmem:[#allocation12 + $0x8] sm:$0xf]
        %v1763 = vld [vmem:[#allocation12 + $0xc] sm:$0xf]
        %v1764 = vld [vmem:[#allocation12 + $0x10] sm:$0x3]
        %v1770 = vunpack.c.l.b16 %v1760
        %v1771 = vunpack.c.l.b16 %v1761
        %v1772 = vunpack.c.l.b16 %v1762
        %v1773 = vunpack.c.l.b16 %v1763
        %v1774 = vunpack.c.l.b16 %v1764
        %v1775 = vpack.c.b16 %v1771, %v1770
        %v1776 = vpack.c.b16 %v1773, %v1772
        %v1777 = vpack.c.b16 %v1774, %v1774
        %vm1780 = vcmask 293888
        %v1781 = vsel %vm1780, %v1745, 0
        %v1783 = vsel %vm1780, %v1747, 0
        %v1785 = vsel %vm1780, %v1749, 0
        %v1787 = vsel %vm1780, %v1751, 0
        %v1789 = vsel %vm1780, %v1753, 0
        %v1791 = vsel %vm1780, %v1755, 0
        %v1793 = vsel %vm1780, %v1757, 0
        %v1795 = vsel %vm1780, %v1759, 0
        %vm1797 = vcmask 1041408
        %v1799 = vsel %vm1797, %v1777, 0
        %1801 = vmatprep.subr.bf16.mxu0 0
        %1802 = vmatpush1.bf16.msra.mxu0 %v1775
        %1803 = vmatprep.subr.bf16.mxu0 0
        %1804 = vmatpush1.bf16.msra.mxu0 %v1776
        %1805 = vmatprep.subr.bf16.mxu0 0
        %1806 = vmatpush1.bf16.msra.mxu0 %v1799
        %1807 = vmatprep.subr.bf16.mxu0 0
        %1808 = vmatpush1.bf16.msra.mxu0 0
        %1809 = vmatprep.subr.bf16.mxu0 0
        %1810 = vmatpush1.bf16.msra.mxu0 0
        %1811 = vmatprep.subr.bf16.mxu0 0
        %1812 = vmatpush1.bf16.msra.mxu0 0
        %1813 = vmatprep.subr.bf16.mxu0 0
        %1814 = vmatpush1.bf16.msra.mxu0 0
        %1815 = vmatprep.subr.bf16.mxu0 0
        %1816 = vmatpush1.bf16.msra.mxu0 0
        %1817 = vmatprep.subr.bf16.mxu0 0
        %1818 = vmatpush1.bf16.msra.mxu0 0
        %1819 = vmatprep.subr.bf16.mxu0 0
        %1820 = vmatpush1.bf16.msra.mxu0 0
        %1821 = vmatprep.subr.bf16.mxu0 0
        %1822 = vmatpush1.bf16.msra.mxu0 0
        %1823 = vmatprep.subr.bf16.mxu0 0
        %1824 = vmatpush1.bf16.msra.mxu0 0
        %1825 = vmatprep.subr.bf16.mxu0 0
        %1826 = vmatpush1.bf16.msra.mxu0 0
        %1827 = vmatprep.subr.bf16.mxu0 0
        %1828 = vmatpush1.bf16.msra.mxu0 0
        %1829 = vmatprep.subr.bf16.mxu0 0
        %1830 = vmatpush1.bf16.msra.mxu0 0
        %1831 = vmatprep.subr.bf16.mxu0 0
        %1832 = vmatpush1.bf16.msra.mxu0 0
        %1833 = vmatprep.mubr.bf16.mxu0 0
        %1834 = vmatmul.mubr.bf16.gmra.mrb[0].mxu0 %v1781
        %v1835 = vpop.f32.mrb[0].mxu0
        %v1836 = vadd.f32 0.0, %v1835
        %v1837 = vpop.f32.mrb[0].mxu0
        %v1838 = vpop.f32.mrb[0].mxu0
        %v1839 = vadd.f32 0.0, %v1838
        %v1840 = vpop.f32.mrb[0].mxu0
        %1841 = vmatprep.mubr.bf16.mxu0 0
        %1842 = vmatmul.mubr.bf16.gmra.mrb[0].mxu0 %v1783
        %v1843 = vpop.f32.mrb[0].mxu0
        %v1844 = vadd.f32 0.0, %v1843
        %v1845 = vpop.f32.mrb[0].mxu0
        %v1846 = vpop.f32.mrb[0].mxu0
        %v1847 = vadd.f32 0.0, %v1846
        %v1848 = vpop.f32.mrb[0].mxu0
        %1849 = vmatprep.mubr.bf16.mxu0 0
        %1850 = vmatmul.mubr.bf16.gmra.mrb[0].mxu0 %v1785
        %v1851 = vpop.f32.mrb[0].mxu0
        %v1852 = vadd.f32 0.0, %v1851
        %v1853 = vpop.f32.mrb[0].mxu0
        %v1854 = vpop.f32.mrb[0].mxu0
        %v1855 = vadd.f32 0.0, %v1854
        %v1856 = vpop.f32.mrb[0].mxu0
        %1857 = vmatprep.mubr.bf16.mxu0 0
        %1858 = vmatmul.mubr.bf16.gmra.mrb[0].mxu0 %v1787
        %v1859 = vpop.f32.mrb[0].mxu0
        %v1860 = vadd.f32 0.0, %v1859
        %v1861 = vpop.f32.mrb[0].mxu0
        %v1862 = vpop.f32.mrb[0].mxu0
        %v1863 = vadd.f32 0.0, %v1862
        %v1864 = vpop.f32.mrb[0].mxu0
        %1865 = vmatprep.mubr.bf16.mxu0 0
        %1866 = vmatmul.mubr.bf16.gmra.mrb[0].mxu0 %v1789
        %v1867 = vpop.f32.mrb[0].mxu0
        %v1868 = vadd.f32 0.0, %v1867
        %v1869 = vpop.f32.mrb[0].mxu0
        %v1870 = vpop.f32.mrb[0].mxu0
        %v1871 = vadd.f32 0.0, %v1870
        %v1872 = vpop.f32.mrb[0].mxu0
        %1873 = vmatprep.mubr.bf16.mxu0 0
        %1874 = vmatmul.mubr.bf16.gmra.mrb[0].mxu0 %v1791
        %v1875 = vpop.f32.mrb[0].mxu0
        %v1876 = vadd.f32 0.0, %v1875
        %v1877 = vpop.f32.mrb[0].mxu0
        %v1878 = vpop.f32.mrb[0].mxu0
        %v1879 = vadd.f32 0.0, %v1878
        %v1880 = vpop.f32.mrb[0].mxu0
        %1881 = vmatprep.mubr.bf16.mxu0 0
        %1882 = vmatmul.mubr.bf16.gmra.mrb[0].mxu0 %v1793
        %v1883 = vpop.f32.mrb[0].mxu0
        %v1884 = vadd.f32 0.0, %v1883
        %v1885 = vpop.f32.mrb[0].mxu0
        %v1886 = vpop.f32.mrb[0].mxu0
        %v1887 = vadd.f32 0.0, %v1886
        %v1888 = vpop.f32.mrb[0].mxu0
        %1889 = vmatprep.mubr.bf16.mxu0 0
        %1890 = vmatmul.mubr.bf16.gmra.mrb[0].mxu0 %v1795
        %v1891 = vpop.f32.mrb[0].mxu0
        %v1892 = vadd.f32 0.0, %v1891
        %v1893 = vpop.f32.mrb[0].mxu0
        %v1894 = vpop.f32.mrb[0].mxu0
        %v1895 = vadd.f32 0.0, %v1894
        %v1896 = vpop.f32.mrb[0].mxu0
        %1897 = vdwg.mxu0
        %v1898 = vpack.c.bf16 %v1839, %v1836
        %v1899 = vpack.c.bf16 %v1847, %v1844
        %v1900 = vpack.c.bf16 %v1855, %v1852
        %v1901 = vpack.c.bf16 %v1863, %v1860
        %v1902 = vpack.c.bf16 %v1871, %v1868
        %v1903 = vpack.c.bf16 %v1879, %v1876
        %v1904 = vpack.c.bf16 %v1887, %v1884
        %v1905 = vpack.c.bf16 %v1895, %v1892
        %v1914 = vunpack.c.l.b16 %v1898
        %v1915 = vunpack.c.h.b16 %v1898
        %v1916 = vunpack.c.l.b16 %v1899
        %v1917 = vunpack.c.h.b16 %v1899
        %v1918 = vunpack.c.l.b16 %v1900
        %v1919 = vunpack.c.h.b16 %v1900
        %v1920 = vunpack.c.l.b16 %v1901
        %v1921 = vunpack.c.h.b16 %v1901
        %v1922 = vunpack.c.l.b16 %v1902
        %v1923 = vunpack.c.h.b16 %v1902
        %v1924 = vunpack.c.l.b16 %v1903
        %v1925 = vunpack.c.h.b16 %v1903
        %v1926 = vunpack.c.l.b16 %v1904
        %v1927 = vunpack.c.h.b16 %v1904
        %v1928 = vunpack.c.l.b16 %v1905
        %v1929 = vunpack.c.h.b16 %v1905
        %v1930 = vpack.c.b16 %v1914, %v1914
        %v1931 = vpack.c.b16 %v1915, %v1915
        %v1932 = vpack.c.b16 %v1916, %v1916
        %v1933 = vpack.c.b16 %v1917, %v1917
        %v1934 = vpack.c.b16 %v1918, %v1918
        %v1935 = vpack.c.b16 %v1919, %v1919
        %v1936 = vpack.c.b16 %v1920, %v1920
        %v1937 = vpack.c.b16 %v1921, %v1921
        %v1938 = vpack.c.b16 %v1922, %v1922
        %v1939 = vpack.c.b16 %v1923, %v1923
        %v1940 = vpack.c.b16 %v1924, %v1924
        %v1941 = vpack.c.b16 %v1925, %v1925
        %v1942 = vpack.c.b16 %v1926, %v1926
        %v1943 = vpack.c.b16 %v1927, %v1927
        %v1944 = vpack.c.b16 %v1928, %v1928
        %v1945 = vpack.c.b16 %v1929, %v1929
        %1962 = vst.msk [vmem:[%s499] sm:$0xf] %vm532, %v1930
        %1963 = vst.msk [vmem:[%s499 + $0x4] sm:$0xf] %vm532, %v1931
        %1964 = vst.msk [vmem:[%s499 + $0x8] sm:$0xf] %vm532, %v1932
        %1965 = vst.msk [vmem:[%s499 + $0xc] sm:$0xf] %vm532, %v1933
        %1966 = vst.msk [vmem:[%s499 + $0x10] sm:$0xf] %vm532, %v1934
        %1967 = vst.msk [vmem:[%s499 + $0x14] sm:$0xf] %vm532, %v1935
        %1968 = vst.msk [vmem:[%s499 + $0x18] sm:$0xf] %vm532, %v1936
        %1969 = vst.msk [vmem:[%s499 + $0x1c] sm:$0xf] %vm532, %v1937
        %1970 = vst.msk [vmem:[%s499 + $0x20] sm:$0xf] %vm532, %v1938
        %1971 = vst.msk [vmem:[%s499 + $0x24] sm:$0xf] %vm532, %v1939
        %1972 = vst.msk [vmem:[%s499 + $0x28] sm:$0xf] %vm532, %v1940
        %1973 = vst.msk [vmem:[%s499 + $0x2c] sm:$0xf] %vm532, %v1941
        %1974 = vst.msk [vmem:[%s499 + $0x30] sm:$0xf] %vm532, %v1942
        %1975 = vst.msk [vmem:[%s499 + $0x34] sm:$0xf] %vm532, %v1943
        %1976 = vst.msk [vmem:[%s499 + $0x38] sm:$0xf] %vm532, %v1944
        %1977 = vst.msk [vmem:[%s499 + $0x3c] sm:$0xf] %vm532, %v1945
        %v1978 = vsel %vm1616, %v1836, 0.0
        %v1979 = vsel %vm1616, %v1839, 0.0
        %v1980 = vadd.f32 %v1978, %v1979
        %v1981 = vsel %vm1616, %v1844, 0.0
        %v1982 = vadd.f32 %v1980, %v1981
        %v1983 = vsel %vm1616, %v1847, 0.0
        %v1984 = vadd.f32 %v1982, %v1983
        %v1985 = vsel %vm1616, %v1852, 0.0
        %v1986 = vadd.f32 %v1984, %v1985
        %v1987 = vsel %vm1616, %v1855, 0.0
        %v1988 = vadd.f32 %v1986, %v1987
        %v1989 = vsel %vm1616, %v1860, 0.0
        %v1990 = vadd.f32 %v1988, %v1989
        %v1991 = vsel %vm1616, %v1863, 0.0
        %v1992 = vadd.f32 %v1990, %v1991
        %v1993 = vsel %vm1616, %v1868, 0.0
        %v1994 = vadd.f32 %v1992, %v1993
        %v1995 = vsel %vm1616, %v1871, 0.0
        %v1996 = vadd.f32 %v1994, %v1995
        %v1997 = vsel %vm1616, %v1876, 0.0
        %v1998 = vadd.f32 %v1996, %v1997
        %v1999 = vsel %vm1616, %v1879, 0.0
        %v2000 = vadd.f32 %v1998, %v1999
        %v2001 = vsel %vm1616, %v1884, 0.0
        %v2002 = vadd.f32 %v2000, %v2001
        %v2003 = vsel %vm1616, %v1887, 0.0
        %v2004 = vadd.f32 %v2002, %v2003
        %v2005 = vsel %vm1616, %v1892, 0.0
        %v2006 = vadd.f32 %v2004, %v2005
        %v2007 = vsel %vm1616, %v1895, 0.0
        %v2008 = vadd.f32 %v2006, %v2007
        %v2009 = vrot.slane %v2008, 4
        %v2010 = vadd.f32 %v2008, %v2009
        %v2011 = vrot.slane %v2010, 2
        %v2012 = vadd.f32 %v2010, %v2011
        %v2013 = vrot.slane %v2012, 1
        %v2014 = vadd.f32 %v2012, %v2013
        %2015 = vst.msk [vmem:[%s505] sm:$0x1] %vm535, %v2014
        %v2016 = vmul.f32 %v1836, %v1836
        %v2017 = vmul.f32 %v1839, %v1839
        %v2018 = vmul.f32 %v1844, %v1844
        %v2019 = vmul.f32 %v1847, %v1847
        %v2020 = vmul.f32 %v1852, %v1852
        %v2021 = vmul.f32 %v1855, %v1855
        %v2022 = vmul.f32 %v1860, %v1860
        %v2023 = vmul.f32 %v1863, %v1863
        %v2024 = vmul.f32 %v1868, %v1868
        %v2025 = vmul.f32 %v1871, %v1871
        %v2026 = vmul.f32 %v1876, %v1876
        %v2027 = vmul.f32 %v1879, %v1879
        %v2028 = vmul.f32 %v1884, %v1884
        %v2029 = vmul.f32 %v1887, %v1887
        %v2030 = vmul.f32 %v1892, %v1892
        %v2031 = vmul.f32 %v1895, %v1895
        %v2032 = vsel %vm1616, %v2016, 0.0
        %v2033 = vsel %vm1616, %v2017, 0.0
        %v2034 = vadd.f32 %v2032, %v2033
        %v2035 = vsel %vm1616, %v2018, 0.0
        %v2036 = vadd.f32 %v2034, %v2035
        %v2037 = vsel %vm1616, %v2019, 0.0
        %v2038 = vadd.f32 %v2036, %v2037
        %v2039 = vsel %vm1616, %v2020, 0.0
        %v2040 = vadd.f32 %v2038, %v2039
        %v2041 = vsel %vm1616, %v2021, 0.0
        %v2042 = vadd.f32 %v2040, %v2041
        %v2043 = vsel %vm1616, %v2022, 0.0
        %v2044 = vadd.f32 %v2042, %v2043
        %v2045 = vsel %vm1616, %v2023, 0.0
        %v2046 = vadd.f32 %v2044, %v2045
        %v2047 = vsel %vm1616, %v2024, 0.0
        %v2048 = vadd.f32 %v2046, %v2047
        %v2049 = vsel %vm1616, %v2025, 0.0
        %v2050 = vadd.f32 %v2048, %v2049
        %v2051 = vsel %vm1616, %v2026, 0.0
        %v2052 = vadd.f32 %v2050, %v2051
        %v2053 = vsel %vm1616, %v2027, 0.0
        %v2054 = vadd.f32 %v2052, %v2053
        %v2055 = vsel %vm1616, %v2028, 0.0
        %v2056 = vadd.f32 %v2054, %v2055
        %v2057 = vsel %vm1616, %v2029, 0.0
        %v2058 = vadd.f32 %v2056, %v2057
        %v2059 = vsel %vm1616, %v2030, 0.0
        %v2060 = vadd.f32 %v2058, %v2059
        %v2061 = vsel %vm1616, %v2031, 0.0
        %v2062 = vadd.f32 %v2060, %v2061
        %v2063 = vrot.slane %v2062, 4
        %v2064 = vadd.f32 %v2062, %v2063
        %v2065 = vrot.slane %v2064, 2
        %v2066 = vadd.f32 %v2064, %v2065
        %v2067 = vrot.slane %v2066, 1
        %v2068 = vadd.f32 %v2066, %v2067
        %2069 = vst.msk [vmem:[%s511] sm:$0x1] %vm535, %v2068
        %s2070 = sand.u32 %s219, 1
        %s2071 = scalar_lea.sflag [#allocation5], %s2070
        %s2072 = sand.u32 %s219, 1
        %s2073 = smul.addr %s2072, 64
        %s2074 = scalar_lea.vmem [#allocation14], %s2073
        %s2075 = sand.u32 %s34, 1
        %s2076 = scalar_lea.sflag [#allocation16], %s2075
        %s2077 = sand.u32 %s247, 1
        %s2078 = scalar_lea.vmem [#allocation15], %s2077
        %s2079 = sand.u32 %s34, 1
        %s2080 = scalar_lea.sflag [#allocation16], %s2079
        %s2081 = sand.u32 %s275, 1
        %s2082 = scalar_lea.vmem [#allocation17], %s2081
        // Predicated region
        $region69: #{up_forward.6} parent=43 // pred_check
          %p2083 = pneg %p229
        $region70: #{up_forward.6} parent=43 // pred_check_branch
          %2085 = sbr.rel (%p2083) target = $region72
        $region71: #{up_forward.6} parent=43 // pred_region
          %s2086 = smul.u32 8, %s39
          %s2088 = ssub.s32 1024, 1024
          %2089 = vsyncadd %s2071, %s2088
          %s2090 = smul.addr %s2086, 2
          %s2091 = smul.addr %s38, 32
          %s2092 = sadd.s32 %s2090, %s2091
          %s2093 = smul.addr %s2092, 64
          %s2094 = scalar_lea.hbm %s6, %s2093
          %s2095 = sshll.u32 %s2074, 4
          %s2096 = int_to_ptr.vmem [resolvable:$true] %s2095
          %2101 = dma.vmem_to_hbm [thread:$0]  %s2096, 1024, %s2094, %s2071, 64, 64, 4
        $region72: #{up_forward.6} parent=43 // pred_fallthru
          _
        // Predicated region
        $region73: #{up_forward.6} parent=43 // pred_check
          %p2102 = pneg %p257
        $region74: #{up_forward.6} parent=43 // pred_check_branch
          %2104 = sbr.rel (%p2102) target = $region76
        $region75: #{up_forward.6} parent=43 // pred_region
          %s2106 = ssub.s32 16, 16
          %2107 = vsyncadd %s2076, %s2106
          %s2108 = smul.addr %s38, 2
          %s2109 = sadd.s32 %s39, %s2108
          %s2110 = smul.addr %s2109, 16
          %s2111 = scalar_lea.hbm %s7, %s2110
          %s2113 = sshll.u32 %s2078, 4
          %s2114 = int_to_ptr.vmem [resolvable:$true] %s2113
          %2116 = dma.vmem_to_hbm [thread:$0]  %s2114, 16, %s2111, %s2076
        $region76: #{up_forward.6} parent=43 // pred_fallthru
          _
        // Predicated region
        $region77: #{up_forward.6} parent=43 // pred_check
          %p2117 = pneg %p285
        $region78: #{up_forward.6} parent=43 // pred_check_branch
          %2119 = sbr.rel (%p2117) target = $region80
        $region79: #{up_forward.6} parent=43 // pred_region
          %s2121 = ssub.s32 16, 16
          %2122 = vsyncadd %s2080, %s2121
          %s2123 = smul.addr %s38, 2
          %s2124 = sadd.s32 %s39, %s2123
          %s2125 = smul.addr %s2124, 16
          %s2126 = scalar_lea.hbm %s8, %s2125
          %s2128 = sshll.u32 %s2082, 4
          %s2129 = int_to_ptr.vmem [resolvable:$true] %s2128
          %2131 = dma.vmem_to_hbm [thread:$0]  %s2129, 16, %s2126, %s2080
        $region80: #{up_forward.6} parent=43 // pred_fallthru
          _
      $region44: #{up_forward.6} parent=5 // pred_fallthru
        _
      %p2132 = scmp.le.s32.totalorder 2, %s29
      // Predicated region
      $region81: #{up_forward.6} parent=5 // pred_check
        %p2133 = pneg %p2132
      $region82: #{up_forward.6} parent=5 // pred_check_branch
        %2135 = sbr.rel (%p2133) target = $region84
      $region83: #{up_forward.6} parent=5 // pred_region
        %s2136 = ssub.s32 %s29, 2
        // Predicated region
        $region85: #{up_forward.6} parent=83 // pred_check
          %p2137 = pneg %p235
        $region86: #{up_forward.6} parent=83 // pred_check_branch
          %2139 = sbr.rel (%p2137) target = $region88
        $region87: #{up_forward.6} parent=83 // pred_region
          %s2140 = sand.u32 %s220, 1
          %s2141 = scalar_lea.sflag [#allocation5], %s2140
          %s2142 = sand.u32 %s220, 1
          %s2143 = smul.addr %s2142, 64
          %s2144 = scalar_lea.vmem [#allocation14], %s2143
          %2145 = dma.done %s2141, 1024
        $region88: #{up_forward.6} parent=83 // pred_fallthru
          _
        // Predicated region
        $region89: #{up_forward.6} parent=83 // pred_check
          %p2146 = pneg %p263
        $region90: #{up_forward.6} parent=83 // pred_check_branch
          %2148 = sbr.rel (%p2146) target = $region92
        $region91: #{up_forward.6} parent=83 // pred_region
          %s2149 = sand.u32 %s35, 1
          %s2150 = scalar_lea.sflag [#allocation16], %s2149
          %s2151 = sand.u32 %s248, 1
          %s2152 = scalar_lea.vmem [#allocation15], %s2151
          %2153 = dma.done %s2150, 16
        $region92: #{up_forward.6} parent=83 // pred_fallthru
          _
        // Predicated region
        $region93: #{up_forward.6} parent=83 // pred_check
          %p2154 = pneg %p291
        $region94: #{up_forward.6} parent=83 // pred_check_branch
          %2156 = sbr.rel (%p2154) target = $region96
        $region95: #{up_forward.6} parent=83 // pred_region
          %s2157 = sand.u32 %s35, 1
          %s2158 = scalar_lea.sflag [#allocation16], %s2157
          %s2159 = sand.u32 %s276, 1
          %s2160 = scalar_lea.vmem [#allocation17], %s2159
          %2161 = dma.done %s2158, 16
        $region96: #{up_forward.6} parent=83 // pred_fallthru
          _
      $region84: #{up_forward.6} parent=5 // pred_fallthru
        _
    $region6: #{up_forward.6} parent=1 // loop_footer
      %s33 = sadd.s32 1, %s29
    $region7: #{up_forward.6} parent=1 // loop_footer_branch
      %28 = sbr.rel target = $region3
    $region8: #{up_forward.6} parent=1 // loop_exit
      _
    %2162 = vsyncpa [#allocation4], 1
    %s2163 = scalar_lea.sflag [#allocation4], 1
    %2164 = vsyncpa %s2163, 1
    %2165 = vsyncpa [#allocation7], 1
    %s2166 = scalar_lea.sflag [#allocation7], 1
    %2167 = vsyncpa %s2166, 1
    %2168 = vsyncpa [#allocation10], 1
    %2169 = vsyncpa [#allocation13], 1
    %2170 = vsyncpa [#allocation5], 1
    %s2171 = scalar_lea.sflag [#allocation5], 1
    %2172 = vsyncpa %s2171, 1
    %2173 = vsyncpa [#allocation16], 1
    %s2174 = scalar_lea.sflag [#allocation16], 1
    %2175 = vsyncpa %s2174, 1

// kernel: up_forward.5
$region0: #{up_forward.5}
  #allocation0 [shape = 'u32[]', space=smem, size = 0x4, offset = 0x4, fixed_abs, tag = 'smem constant byte address 0x4 - core index']
  #allocation1 [shape = 'u32[144,128]{1,0:T(1,128)}', space=vmem, size = 0x12000, scoped, tag = 'internal scratch']
  #allocation2 [shape = 'bf16[10,18,4]{2,1,0:T(8,128)(2,1)}', space=vmem, size = 0xf000, scoped, tag = 'scratch operand']
  #allocation3 [shape = 'bf16[10,18,4]{2,1,0:T(8,128)(2,1)}', space=vmem, size = 0xf000, scoped, tag = 'scratch operand']
  %s0 = inlined_call_operand.hbm [shape: f32[2,16,16,4], index: 0, kind: input, shape index: {}, may-alias: {0,1,2}]
  %s1 = inlined_call_operand.hbm [shape: f32[2,16,16,4], index: 1, kind: input, shape index: {}, may-alias: {0,1,2}]
  %s2 = inlined_call_operand.hbm [shape: f32[2,16,16,4], index: 2, kind: input, shape index: {}, may-alias: {0,1,2}]
  %s3 = inlined_call_operand.hbm [shape: bf16[2,16,16,4], index: 3, kind: input, shape index: {}, may-alias: {3,4,5}]
  %s4 = inlined_call_operand.hbm [shape: bf16[2,16,16,4], index: 4, kind: input, shape index: {}, may-alias: {3,4,5}]
  %s5 = inlined_call_operand.hbm [shape: bf16[2,16,16,4], index: 5, kind: input, shape index: {}, may-alias: {3,4,5}]
  %s6 = inlined_call_operand.hbm [shape: bf16[36,4], index: 6, kind: input, shape index: {}]
  %s7 = inlined_call_operand.hbm [shape: bf16[36,4], index: 7, kind: input, shape index: {}]
  %s8 = inlined_call_operand.hbm [shape: bf16[2,16,16,4], index: 8, kind: output, shape index: {0}]
  %s9 = inlined_call_operand.hbm [shape: f32[2,2,1,4], index: 9, kind: output, shape index: {1}]
  %s10 = inlined_call_operand.hbm [shape: f32[2,2,1,4], index: 10, kind: output, shape index: {2}]
  %11 = xla_tuple %s8, %s9, %s10
  %s12 = sld [smem:[#allocation0]]
  $region113: #{up_forward.5} parent=0
    _
  %s14 = ssub.s32 1, %s12
  %s15 = scalar_select 0, %s14, %s12
  $region1: #{up_forward.5} parent=0
    #allocation4 [shape = 'u8[131072]{0}', space=vmem, size = 0x20000, scoped, tag = 'input window, operand 0']
    #allocation5 [shape = 's32[2]{0}', space=sflag, size = 0x8, scoped, tag = 'scoped memory for up_forward.5']
    #allocation6 [shape = 's32[2]{0}', space=sflag, size = 0x8, scoped, tag = 'scoped memory for up_forward.5']
    #allocation7 [shape = 'u8[16384]{0}', space=vmem, size = 0x4000, scoped, tag = 'input window, operand 1']
    #allocation8 [shape = 's32[2]{0}', space=sflag, size = 0x8, scoped, tag = 'scoped memory for up_forward.5']
    #allocation9 [shape = 'u8[16384]{0}', space=vmem, size = 0x4000, scoped, tag = 'input window, operand 2']
    #allocation10 [shape = 'u8[65536]{0}', space=vmem, size = 0x10000, scoped, tag = 'input window, operand 3']
    #allocation11 [shape = 's32[2]{0}', space=sflag, size = 0x8, scoped, tag = 'scoped memory for up_forward.5']
    #allocation12 [shape = 'u8[8192]{0}', space=vmem, size = 0x2000, scoped, tag = 'input window, operand 4']
    #allocation13 [shape = 'u8[8192]{0}', space=vmem, size = 0x2000, scoped, tag = 'input window, operand 5']
    #allocation14 [shape = 's32[2]{0}', space=sflag, size = 0x8, scoped, tag = 'scoped memory for up_forward.5']
    #allocation15 [shape = 'u8[10240]{0}', space=vmem, size = 0x2800, scoped, tag = 'input window, operand 6, single buffered']
    #allocation16 [shape = 'u8[10240]{0}', space=vmem, size = 0x2800, scoped, tag = 'input window, operand 7, single buffered']
    #allocation17 [shape = 's32[1]{0}', space=sflag, size = 0x4, scoped, tag = 'scoped memory for up_forward.5']
    #allocation18 [shape = 'u8[65536]{0}', space=vmem, size = 0x10000, scoped, tag = 'output window, operand 0']
    #allocation19 [shape = 'u8[1024]{0}', space=vmem, size = 0x400, scoped, tag = 'output window, operand 1']
    #allocation20 [shape = 's32[2]{0}', space=sflag, size = 0x8, scoped, tag = 'scoped memory for up_forward.5']
    #allocation21 [shape = 'u8[1024]{0}', space=vmem, size = 0x400, scoped, tag = 'output window, operand 2']
    %16 = vsyncpa [#allocation5], 0
    %s17 = scalar_lea.sflag [#allocation5], 1
    %18 = vsyncpa %s17, 0
    %19 = vsyncpa [#allocation8], 0
    %s20 = scalar_lea.sflag [#allocation8], 1
    %21 = vsyncpa %s20, 0
    %22 = vsyncpa [#allocation11], 0
    %s23 = scalar_lea.sflag [#allocation11], 1
    %24 = vsyncpa %s23, 0
    %25 = vsyncpa [#allocation14], 0
    %s26 = scalar_lea.sflag [#allocation14], 1
    %27 = vsyncpa %s26, 0
    %28 = vsyncpa [#allocation17], 0
    %29 = vsyncpa [#allocation6], 0
    %s30 = scalar_lea.sflag [#allocation6], 1
    %31 = vsyncpa %s30, 0
    %32 = vsyncpa [#allocation20], 0
    %s33 = scalar_lea.sflag [#allocation20], 1
    %34 = vsyncpa %s33, 0
    loop: start=0, step=1, limit=6
    $region2: #{up_forward.5} parent=1 // loop_pre_header
      _
    $region3: #{up_forward.5} parent=1 // loop_header
      %s36 = sphi 0, %s40
      %p37 = scmp.ge.s32.totalorder %s36, 6
      %s43 = sphi 0, %s55
      %s44 = sphi 0, %s51
      %s45 = sphi 0, %s43
      %s46 = sphi 0, %s44
      %s47 = sphi 0, %s45
      %s48 = sphi 0, %s46
      %s60 = sphi 0, %s62
      %s63 = sphi 0, %s60
      %s64 = sphi 0, %s63
      %s80 = sphi 0, %s64
      %s96 = sphi 0, %s98
      %s99 = sphi 0, %s96
      %s100 = sphi 0, %s99
      %s116 = sphi 0, %s100
      %s132 = sphi 0, %s134
      %s135 = sphi 0, %s132
      %s136 = sphi 0, %s135
      %s152 = sphi 0, %s136
      %s160 = sphi 0, %s162
      %s163 = sphi 0, %s160
      %s164 = sphi 0, %s163
      %s180 = sphi 0, %s164
      %s196 = sphi 0, %s198
      %s199 = sphi 0, %s196
      %s200 = sphi 0, %s199
      %s216 = sphi 0, %s200
      %s232 = sphi 0, %s234
      %s235 = sphi 0, %s232
      %s236 = sphi 0, %s235
      %s252 = sphi 0, %s236
      %s256 = sphi 0, %s256
      %s258 = sphi 0, %s256
      %s259 = sphi 0, %s258
      %s273 = sphi 0, %s259
      %s277 = sphi 0, %s277
      %s279 = sphi 0, %s277
      %s280 = sphi 0, %s279
      %s294 = sphi 0, %s280
      %s302 = sphi 0, %s304
      %s305 = sphi 0, %s302
      %s306 = sphi 0, %s305
      %s322 = sphi 0, %s306
      %s330 = sphi 0, %s332
      %s333 = sphi 0, %s330
      %s334 = sphi 0, %s333
      %s350 = sphi 0, %s334
      %s358 = sphi 0, %s360
      %s361 = sphi 0, %s358
      %s362 = sphi 0, %s361
      %s378 = sphi 0, %s362
    $region4: #{up_forward.5} parent=1 // loop_header_branch
      %39 = sbr.rel (%p37) target = $region8
    $region5: #{up_forward.5} parent=1 // loop_body
      %s41 = ssub.s32 %s36, 1
      %s42 = ssub.s32 %s36, 2
      %s49 = sadd.s32 1, %s44
      %p50 = scmp.ge.s32.totalorder %s49, 2
      %s51 = scalar_select %p50, 0, %s49
      %s52 = sadd.s32 1, %s43
      %s53 = scalar_select %p50, %s52, %s43
      %p54 = scmp.ge.s32.totalorder %s53, 2
      %s55 = scalar_select %p54, 0, %s53
      %s56 = ssub.s32 %s43, %s55
      %s57 = ssub.s32 %s44, %s51
      %s58 = sor.u32 %s56, %s57
      %p59 = scmp.eq.s32.totalorder %s58, 0
      %s61 = sadd.s32 %s60, 1
      %s62 = scalar_select %p59, %s60, %s61
      %p65 = pneg %p59
      %p66 = scmp.eq.s32.totalorder %s36, 3
      %p67 = por %p65, %p66
      %p68 = scmp.ne.s32.totalorder %s60, %s63
      %p69 = scmp.eq.s32.totalorder %s36, 0
      %p70 = por %p68, %p69
      %p71 = scmp.ne.s32.totalorder %s60, %s63
      %p72 = scmp.eq.s32.totalorder %s41, 3
      %p73 = por %p71, %p72
      %p74 = scmp.ne.s32.totalorder %s63, %s64
      %p75 = scmp.eq.s32.totalorder %s41, 0
      %p76 = por %p74, %p75
      %p77 = scmp.ne.s32.totalorder %s63, %s64
      %p78 = scmp.eq.s32.totalorder %s42, 3
      %p79 = por %p77, %p78
      %p81 = scmp.ne.s32.totalorder %s64, %s80
      %p82 = scmp.eq.s32.totalorder %s42, 0
      %p83 = por %p81, %p82
      %s84 = smul.u32 %s44, 8
      %s85 = ssub.s32 %s84, 1
      %p86 = scmp.gt.s32.totalorder %s85, 0
      %s87 = scalar_select %p86, %s85, 0
      %s88 = smul.u32 %s51, 8
      %s89 = ssub.s32 %s88, 1
      %p90 = scmp.gt.s32.totalorder %s89, 0
      %s91 = scalar_select %p90, %s89, 0
      %s92 = ssub.s32 %s43, %s55
      %s93 = ssub.s32 %s87, %s91
      %s94 = sor.u32 %s92, %s93
      %p95 = scmp.eq.s32.totalorder %s94, 0
      %s97 = sadd.s32 %s96, 1
      %s98 = scalar_select %p95, %s96, %s97
      %p101 = pneg %p95
      %p102 = scmp.eq.s32.totalorder %s36, 3
      %p103 = por %p101, %p102
      %p104 = scmp.ne.s32.totalorder %s96, %s99
      %p105 = scmp.eq.s32.totalorder %s36, 0
      %p106 = por %p104, %p105
      %p107 = scmp.ne.s32.totalorder %s96, %s99
      %p108 = scmp.eq.s32.totalorder %s41, 3
      %p109 = por %p107, %p108
      %p110 = scmp.ne.s32.totalorder %s99, %s100
      %p111 = scmp.eq.s32.totalorder %s41, 0
      %p112 = por %p110, %p111
      %p113 = scmp.ne.s32.totalorder %s99, %s100
      %p114 = scmp.eq.s32.totalorder %s42, 3
      %p115 = por %p113, %p114
      %p117 = scmp.ne.s32.totalorder %s100, %s116
      %p118 = scmp.eq.s32.totalorder %s42, 0
      %p119 = por %p117, %p118
      %s120 = smul.u32 %s44, 8
      %s121 = sadd.s32 %s120, 8
      %p122 = scmp.lt.s32.totalorder %s121, 15
      %s123 = scalar_select %p122, %s121, 15
      %s124 = smul.u32 %s51, 8
      %s125 = sadd.s32 %s124, 8
      %p126 = scmp.lt.s32.totalorder %s125, 15
      %s127 = scalar_select %p126, %s125, 15
      %s128 = ssub.s32 %s43, %s55
      %s129 = ssub.s32 %s123, %s127
      %s130 = sor.u32 %s128, %s129
      %p131 = scmp.eq.s32.totalorder %s130, 0
      %s133 = sadd.s32 %s132, 1
      %s134 = scalar_select %p131, %s132, %s133
      %p137 = pneg %p131
      %p138 = scmp.eq.s32.totalorder %s36, 3
      %p139 = por %p137, %p138
      %p140 = scmp.ne.s32.totalorder %s132, %s135
      %p141 = scmp.eq.s32.totalorder %s36, 0
      %p142 = por %p140, %p141
      %p143 = scmp.ne.s32.totalorder %s132, %s135
      %p144 = scmp.eq.s32.totalorder %s41, 3
      %p145 = por %p143, %p144
      %p146 = scmp.ne.s32.totalorder %s135, %s136
      %p147 = scmp.eq.s32.totalorder %s41, 0
      %p148 = por %p146, %p147
      %p149 = scmp.ne.s32.totalorder %s135, %s136
      %p150 = scmp.eq.s32.totalorder %s42, 3
      %p151 = por %p149, %p150
      %p153 = scmp.ne.s32.totalorder %s136, %s152
      %p154 = scmp.eq.s32.totalorder %s42, 0
      %p155 = por %p153, %p154
      %s156 = ssub.s32 %s43, %s55
      %s157 = ssub.s32 %s44, %s51
      %s158 = sor.u32 %s156, %s157
      %p159 = scmp.eq.s32.totalorder %s158, 0
      %s161 = sadd.s32 %s160, 1
      %s162 = scalar_select %p159, %s160, %s161
      %p165 = pneg %p159
      %p166 = scmp.eq.s32.totalorder %s36, 3
      %p167 = por %p165, %p166
      %p168 = scmp.ne.s32.totalorder %s160, %s163
      %p169 = scmp.eq.s32.totalorder %s36, 0
      %p170 = por %p168, %p169
      %p171 = scmp.ne.s32.totalorder %s160, %s163
      %p172 = scmp.eq.s32.totalorder %s41, 3
      %p173 = por %p171, %p172
      %p174 = scmp.ne.s32.totalorder %s163, %s164
      %p175 = scmp.eq.s32.totalorder %s41, 0
      %p176 = por %p174, %p175
      %p177 = scmp.ne.s32.totalorder %s163, %s164
      %p178 = scmp.eq.s32.totalorder %s42, 3
      %p179 = por %p177, %p178
      %p181 = scmp.ne.s32.totalorder %s164, %s180
      %p182 = scmp.eq.s32.totalorder %s42, 0
      %p183 = por %p181, %p182
      %s184 = smul.u32 %s44, 8
      %s185 = ssub.s32 %s184, 1
      %p186 = scmp.gt.s32.totalorder %s185, 0
      %s187 = scalar_select %p186, %s185, 0
      %s188 = smul.u32 %s51, 8
      %s189 = ssub.s32 %s188, 1
      %p190 = scmp.gt.s32.totalorder %s189, 0
      %s191 = scalar_select %p190, %s189, 0
      %s192 = ssub.s32 %s43, %s55
      %s193 = ssub.s32 %s187, %s191
      %s194 = sor.u32 %s192, %s193
      %p195 = scmp.eq.s32.totalorder %s194, 0
      %s197 = sadd.s32 %s196, 1
      %s198 = scalar_select %p195, %s196, %s197
      %p201 = pneg %p195
      %p202 = scmp.eq.s32.totalorder %s36, 3
      %p203 = por %p201, %p202
      %p204 = scmp.ne.s32.totalorder %s196, %s199
      %p205 = scmp.eq.s32.totalorder %s36, 0
      %p206 = por %p204, %p205
      %p207 = scmp.ne.s32.totalorder %s196, %s199
      %p208 = scmp.eq.s32.totalorder %s41, 3
      %p209 = por %p207, %p208
      %p210 = scmp.ne.s32.totalorder %s199, %s200
      %p211 = scmp.eq.s32.totalorder %s41, 0
      %p212 = por %p210, %p211
      %p213 = scmp.ne.s32.totalorder %s199, %s200
      %p214 = scmp.eq.s32.totalorder %s42, 3
      %p215 = por %p213, %p214
      %p217 = scmp.ne.s32.totalorder %s200, %s216
      %p218 = scmp.eq.s32.totalorder %s42, 0
      %p219 = por %p217, %p218
      %s220 = smul.u32 %s44, 8
      %s221 = sadd.s32 %s220, 8
      %p222 = scmp.lt.s32.totalorder %s221, 15
      %s223 = scalar_select %p222, %s221, 15
      %s224 = smul.u32 %s51, 8
      %s225 = sadd.s32 %s224, 8
      %p226 = scmp.lt.s32.totalorder %s225, 15
      %s227 = scalar_select %p226, %s225, 15
      %s228 = ssub.s32 %s43, %s55
      %s229 = ssub.s32 %s223, %s227
      %s230 = sor.u32 %s228, %s229
      %p231 = scmp.eq.s32.totalorder %s230, 0
      %s233 = sadd.s32 %s232, 1
      %s234 = scalar_select %p231, %s232, %s233
      %p237 = pneg %p231
      %p238 = scmp.eq.s32.totalorder %s36, 3
      %p239 = por %p237, %p238
      %p240 = scmp.ne.s32.totalorder %s232, %s235
      %p241 = scmp.eq.s32.totalorder %s36, 0
      %p242 = por %p240, %p241
      %p243 = scmp.ne.s32.totalorder %s232, %s235
      %p244 = scmp.eq.s32.totalorder %s41, 3
      %p245 = por %p243, %p244
      %p246 = scmp.ne.s32.totalorder %s235, %s236
      %p247 = scmp.eq.s32.totalorder %s41, 0
      %p248 = por %p246, %p247
      %p249 = scmp.ne.s32.totalorder %s235, %s236
      %p250 = scmp.eq.s32.totalorder %s42, 3
      %p251 = por %p249, %p250
      %p253 = scmp.ne.s32.totalorder %s236, %s252
      %p254 = scmp.eq.s32.totalorder %s42, 0
      %p255 = por %p253, %p254
      %s257 = sadd.s32 %s256, 1
      %p260 = scmp.eq.s32.totalorder %s36, 3
      %p261 = scmp.ne.s32.totalorder %s256, %s258
      %p262 = scmp.eq.s32.totalorder %s36, 0
      %p263 = por %p261, %p262
      %p264 = scmp.ne.s32.totalorder %s256, %s258
      %p265 = scmp.eq.s32.totalorder %s41, 3
      %p266 = por %p264, %p265
      %p267 = scmp.ne.s32.totalorder %s258, %s259
      %p268 = scmp.eq.s32.totalorder %s41, 0
      %p269 = por %p267, %p268
      %p270 = scmp.ne.s32.totalorder %s258, %s259
      %p271 = scmp.eq.s32.totalorder %s42, 3
      %p272 = por %p270, %p271
      %p274 = scmp.ne.s32.totalorder %s259, %s273
      %p275 = scmp.eq.s32.totalorder %s42, 0
      %p276 = por %p274, %p275
      %s278 = sadd.s32 %s277, 1
      %p281 = scmp.eq.s32.totalorder %s36, 3
      %p282 = scmp.ne.s32.totalorder %s277, %s279
      %p283 = scmp.eq.s32.totalorder %s36, 0
      %p284 = por %p282, %p283
      %p285 = scmp.ne.s32.totalorder %s277, %s279
      %p286 = scmp.eq.s32.totalorder %s41, 3
      %p287 = por %p285, %p286
      %p288 = scmp.ne.s32.totalorder %s279, %s280
      %p289 = scmp.eq.s32.totalorder %s41, 0
      %p290 = por %p288, %p289
      %p291 = scmp.ne.s32.totalorder %s279, %s280
      %p292 = scmp.eq.s32.totalorder %s42, 3
      %p293 = por %p291, %p292
      %p295 = scmp.ne.s32.totalorder %s280, %s294
      %p296 = scmp.eq.s32.totalorder %s42, 0
      %p297 = por %p295, %p296
      %s298 = ssub.s32 %s43, %s55
      %s299 = ssub.s32 %s44, %s51
      %s300 = sor.u32 %s298, %s299
      %p301 = scmp.eq.s32.totalorder %s300, 0
      %s303 = sadd.s32 %s302, 1
      %s304 = scalar_select %p301, %s302, %s303
      %p307 = pneg %p301
      %p308 = scmp.eq.s32.totalorder %s36, 3
      %p309 = por %p307, %p308
      %p310 = scmp.ne.s32.totalorder %s302, %s305
      %p311 = scmp.eq.s32.totalorder %s36, 0
      %p312 = por %p310, %p311
      %p313 = scmp.ne.s32.totalorder %s302, %s305
      %p314 = scmp.eq.s32.totalorder %s41, 3
      %p315 = por %p313, %p314
      %p316 = scmp.ne.s32.totalorder %s305, %s306
      %p317 = scmp.eq.s32.totalorder %s41, 0
      %p318 = por %p316, %p317
      %p319 = scmp.ne.s32.totalorder %s305, %s306
      %p320 = scmp.eq.s32.totalorder %s42, 3
      %p321 = por %p319, %p320
      %p323 = scmp.ne.s32.totalorder %s306, %s322
      %p324 = scmp.eq.s32.totalorder %s42, 0
      %p325 = por %p323, %p324
      %s326 = ssub.s32 %s43, %s55
      %s327 = ssub.s32 %s44, %s51
      %s328 = sor.u32 %s326, %s327
      %p329 = scmp.eq.s32.totalorder %s328, 0
      %s331 = sadd.s32 %s330, 1
      %s332 = scalar_select %p329, %s330, %s331
      %p335 = pneg %p329
      %p336 = scmp.eq.s32.totalorder %s36, 3
      %p337 = por %p335, %p336
      %p338 = scmp.ne.s32.totalorder %s330, %s333
      %p339 = scmp.eq.s32.totalorder %s36, 0
      %p340 = por %p338, %p339
      %p341 = scmp.ne.s32.totalorder %s330, %s333
      %p342 = scmp.eq.s32.totalorder %s41, 3
      %p343 = por %p341, %p342
      %p344 = scmp.ne.s32.totalorder %s333, %s334
      %p345 = scmp.eq.s32.totalorder %s41, 0
      %p346 = por %p344, %p345
      %p347 = scmp.ne.s32.totalorder %s333, %s334
      %p348 = scmp.eq.s32.totalorder %s42, 3
      %p349 = por %p347, %p348
      %p351 = scmp.ne.s32.totalorder %s334, %s350
      %p352 = scmp.eq.s32.totalorder %s42, 0
      %p353 = por %p351, %p352
      %s354 = ssub.s32 %s43, %s55
      %s355 = ssub.s32 %s44, %s51
      %s356 = sor.u32 %s354, %s355
      %p357 = scmp.eq.s32.totalorder %s356, 0
      %s359 = sadd.s32 %s358, 1
      %s360 = scalar_select %p357, %s358, %s359
      %p363 = pneg %p357
      %p364 = scmp.eq.s32.totalorder %s36, 3
      %p365 = por %p363, %p364
      %p366 = scmp.ne.s32.totalorder %s358, %s361
      %p367 = scmp.eq.s32.totalorder %s36, 0
      %p368 = por %p366, %p367
      %p369 = scmp.ne.s32.totalorder %s358, %s361
      %p370 = scmp.eq.s32.totalorder %s41, 3
      %p371 = por %p369, %p370
      %p372 = scmp.ne.s32.totalorder %s361, %s362
      %p373 = scmp.eq.s32.totalorder %s41, 0
      %p374 = por %p372, %p373
      %p375 = scmp.ne.s32.totalorder %s361, %s362
      %p376 = scmp.eq.s32.totalorder %s42, 3
      %p377 = por %p375, %p376
      %p379 = scmp.ne.s32.totalorder %s362, %s378
      %p380 = scmp.eq.s32.totalorder %s42, 0
      %p381 = por %p379, %p380
      %p382 = scmp.le.s32.totalorder 1, %s36
      %p383 = scmp.lt.s32.totalorder %s36, 5
      %p384 = pnand %p382, %p383
      %p385 = pneg %p384
      // Predicated region
      $region9: #{up_forward.5} parent=5 // pred_check
        _
      $region10: #{up_forward.5} parent=5 // pred_check_branch
        %387 = sbr.rel (%p384) target = $region12
      $region11: #{up_forward.5} parent=5 // pred_region
        %s388 = ssub.s32 %s36, 1
        // Predicated region
        $region13: #{up_forward.5} parent=11 // pred_check
          %p389 = pneg %p269
        $region14: #{up_forward.5} parent=11 // pred_check_branch
          %391 = sbr.rel (%p389) target = $region16
        $region15: #{up_forward.5} parent=11 // pred_region
          %s393 = ssub.s32 320, 320
          %394 = vsyncadd [#allocation14], %s393
          %s395 = sshll.u32 [#allocation15], 4
          %s396 = int_to_ptr.vmem [resolvable:$true] %s395
          %401 = dma.hbm_to_vmem [thread:$0]  %s6, 320, %s396, [#allocation14], 64, 64, 4
        $region16: #{up_forward.5} parent=11 // pred_fallthru
          _
        // Predicated region
        $region17: #{up_forward.5} parent=11 // pred_check
          %p402 = pneg %p290
        $region18: #{up_forward.5} parent=11 // pred_check_branch
          %404 = sbr.rel (%p402) target = $region20
        $region19: #{up_forward.5} parent=11 // pred_region
          %s406 = ssub.s32 320, 320
          %407 = vsyncadd [#allocation17], %s406
          %s408 = sshll.u32 [#allocation16], 4
          %s409 = int_to_ptr.vmem [resolvable:$true] %s408
          %414 = dma.hbm_to_vmem [thread:$0]  %s7, 320, %s409, [#allocation17], 64, 64, 4
        $region20: #{up_forward.5} parent=11 // pred_fallthru
          _
      $region12: #{up_forward.5} parent=5 // pred_fallthru
        _
      %p415 = scmp.lt.s32.totalorder %s36, 4
      // Predicated region
      $region21: #{up_forward.5} parent=5 // pred_check
        %p416 = pneg %p415
      $region22: #{up_forward.5} parent=5 // pred_check_branch
        %418 = sbr.rel (%p416) target = $region24
      $region23: #{up_forward.5} parent=5 // pred_region
        // Predicated region
        $region25: #{up_forward.5} parent=23 // pred_check
          %p419 = pneg %p70
        $region26: #{up_forward.5} parent=23 // pred_check_branch
          %421 = sbr.rel (%p419) target = $region28
        $region27: #{up_forward.5} parent=23 // pred_region
          %s422 = sand.u32 %s60, 1
          %s423 = scalar_lea.sflag [#allocation5], %s422
          %s424 = sand.u32 %s60, 1
          %s425 = smul.addr %s424, 128
          %s426 = scalar_lea.vmem [#allocation4], %s425
          %s427 = smul.u32 8, %s44
          %s429 = ssub.s32 2048, 2048
          %430 = vsyncadd %s423, %s429
          %s431 = smul.addr %s427, 2
          %s432 = smul.addr %s43, 32
          %s433 = sadd.s32 %s431, %s432
          %s434 = smul.addr %s433, 128
          %s435 = scalar_lea.hbm %s0, %s434
          %s436 = sshll.u32 %s426, 4
          %s437 = int_to_ptr.vmem [resolvable:$true] %s436
          %442 = dma.hbm_to_vmem [thread:$0]  %s435, 2048, %s437, %s423, 128, 128, 8
        $region28: #{up_forward.5} parent=23 // pred_fallthru
          _
        // Predicated region
        $region29: #{up_forward.5} parent=23 // pred_check
          %p443 = pneg %p106
        $region30: #{up_forward.5} parent=23 // pred_check_branch
          %445 = sbr.rel (%p443) target = $region32
        $region31: #{up_forward.5} parent=23 // pred_region
          %s446 = sand.u32 %s36, 1
          %s447 = scalar_lea.sflag [#allocation8], %s446
          %s448 = sand.u32 %s96, 1
          %s449 = smul.addr %s448, 16
          %s450 = scalar_lea.vmem [#allocation7], %s449
          %s451 = smul.u32 %s44, 8
          %s452 = ssub.s32 %s451, 1
          %p453 = scmp.gt.s32.totalorder %s452, 0
          %s454 = scalar_select %p453, %s452, 0
          %s456 = ssub.s32 256, 256
          %457 = vsyncadd %s447, %s456
          %s458 = smul.addr %s454, 2
          %s459 = smul.addr %s43, 32
          %s460 = sadd.s32 %s458, %s459
          %s461 = smul.addr %s460, 128
          %s462 = scalar_lea.hbm %s1, %s461
          %s463 = sshll.u32 %s450, 4
          %s464 = int_to_ptr.vmem [resolvable:$true] %s463
          %469 = dma.hbm_to_vmem [thread:$0]  %s462, 256, %s464, %s447, 128, 128, 8
        $region32: #{up_forward.5} parent=23 // pred_fallthru
          _
        // Predicated region
        $region33: #{up_forward.5} parent=23 // pred_check
          %p470 = pneg %p142
        $region34: #{up_forward.5} parent=23 // pred_check_branch
          %472 = sbr.rel (%p470) target = $region36
        $region35: #{up_forward.5} parent=23 // pred_region
          %s473 = sand.u32 %s36, 1
          %s474 = scalar_lea.sflag [#allocation8], %s473
          %s475 = sand.u32 %s132, 1
          %s476 = smul.addr %s475, 16
          %s477 = scalar_lea.vmem [#allocation9], %s476
          %s478 = smul.u32 %s44, 8
          %s479 = sadd.s32 %s478, 8
          %p480 = scmp.lt.s32.totalorder %s479, 15
          %s481 = scalar_select %p480, %s479, 15
          %s483 = ssub.s32 256, 256
          %484 = vsyncadd %s474, %s483
          %s485 = smul.addr %s481, 2
          %s486 = smul.addr %s43, 32
          %s487 = sadd.s32 %s485, %s486
          %s488 = smul.addr %s487, 128
          %s489 = scalar_lea.hbm %s2, %s488
          %s490 = sshll.u32 %s477, 4
          %s491 = int_to_ptr.vmem [resolvable:$true] %s490
          %496 = dma.hbm_to_vmem [thread:$0]  %s489, 256, %s491, %s474, 128, 128, 8
        $region36: #{up_forward.5} parent=23 // pred_fallthru
          _
        // Predicated region
        $region37: #{up_forward.5} parent=23 // pred_check
          %p497 = pneg %p170
        $region38: #{up_forward.5} parent=23 // pred_check_branch
          %499 = sbr.rel (%p497) target = $region40
        $region39: #{up_forward.5} parent=23 // pred_region
          %s500 = sand.u32 %s36, 1
          %s501 = scalar_lea.sflag [#allocation11], %s500
          %s502 = sand.u32 %s160, 1
          %s503 = smul.addr %s502, 64
          %s504 = scalar_lea.vmem [#allocation10], %s503
          %s505 = smul.u32 8, %s44
          %s507 = ssub.s32 1024, 1024
          %508 = vsyncadd %s501, %s507
          %s509 = smul.addr %s505, 2
          %s510 = smul.addr %s43, 32
          %s511 = sadd.s32 %s509, %s510
          %s512 = smul.addr %s511, 64
          %s513 = scalar_lea.hbm %s3, %s512
          %s514 = sshll.u32 %s504, 4
          %s515 = int_to_ptr.vmem [resolvable:$true] %s514
          %520 = dma.hbm_to_vmem [thread:$0]  %s513, 1024, %s515, %s501, 64, 64, 4
        $region40: #{up_forward.5} parent=23 // pred_fallthru
          _
        // Predicated region
        $region41: #{up_forward.5} parent=23 // pred_check
          %p521 = pneg %p206
        $region42: #{up_forward.5} parent=23 // pred_check_branch
          %523 = sbr.rel (%p521) target = $region44
        $region43: #{up_forward.5} parent=23 // pred_region
          %s524 = sand.u32 %s36, 1
          %s525 = scalar_lea.sflag [#allocation11], %s524
          %s526 = sand.u32 %s196, 1
          %s527 = smul.addr %s526, 8
          %s528 = scalar_lea.vmem [#allocation12], %s527
          %s529 = smul.u32 %s44, 8
          %s530 = ssub.s32 %s529, 1
          %p531 = scmp.gt.s32.totalorder %s530, 0
          %s532 = scalar_select %p531, %s530, 0
          %s534 = ssub.s32 128, 128
          %535 = vsyncadd %s525, %s534
          %s536 = smul.addr %s532, 2
          %s537 = smul.addr %s43, 32
          %s538 = sadd.s32 %s536, %s537
          %s539 = smul.addr %s538, 64
          %s540 = scalar_lea.hbm %s4, %s539
          %s541 = sshll.u32 %s528, 4
          %s542 = int_to_ptr.vmem [resolvable:$true] %s541
          %547 = dma.hbm_to_vmem [thread:$0]  %s540, 128, %s542, %s525, 64, 64, 4
        $region44: #{up_forward.5} parent=23 // pred_fallthru
          _
        // Predicated region
        $region45: #{up_forward.5} parent=23 // pred_check
          %p548 = pneg %p242
        $region46: #{up_forward.5} parent=23 // pred_check_branch
          %550 = sbr.rel (%p548) target = $region48
        $region47: #{up_forward.5} parent=23 // pred_region
          %s551 = sand.u32 %s36, 1
          %s552 = scalar_lea.sflag [#allocation14], %s551
          %s553 = sand.u32 %s232, 1
          %s554 = smul.addr %s553, 8
          %s555 = scalar_lea.vmem [#allocation13], %s554
          %s556 = smul.u32 %s44, 8
          %s557 = sadd.s32 %s556, 8
          %p558 = scmp.lt.s32.totalorder %s557, 15
          %s559 = scalar_select %p558, %s557, 15
          %s561 = ssub.s32 128, 128
          %562 = vsyncadd %s552, %s561
          %s563 = smul.addr %s559, 2
          %s564 = smul.addr %s43, 32
          %s565 = sadd.s32 %s563, %s564
          %s566 = smul.addr %s565, 64
          %s567 = scalar_lea.hbm %s5, %s566
          %s568 = sshll.u32 %s555, 4
          %s569 = int_to_ptr.vmem [resolvable:$true] %s568
          %574 = dma.hbm_to_vmem [thread:$0]  %s567, 128, %s569, %s552, 64, 64, 4
        $region48: #{up_forward.5} parent=23 // pred_fallthru
          _
      $region24: #{up_forward.5} parent=5 // pred_fallthru
        _
      %p575 = scmp.le.s32.totalorder 1, %s36
      %p576 = scmp.lt.s32.totalorder %s36, 5
      %p577 = pnand %p575, %p576
      %p578 = pneg %p577
      // Predicated region
      $region49: #{up_forward.5} parent=5 // pred_check
        _
      $region50: #{up_forward.5} parent=5 // pred_check_branch
        %580 = sbr.rel (%p577) target = $region52
      $region51: #{up_forward.5} parent=5 // pred_region
        %s581 = ssub.s32 %s36, 1
        %s582 = sand.u32 %s63, 1
        %s583 = scalar_lea.sflag [#allocation5], %s582
        %s584 = sand.u32 %s63, 1
        %s585 = smul.addr %s584, 128
        %s586 = scalar_lea.vmem [#allocation4], %s585
        // Predicated region
        $region53: #{up_forward.5} parent=51 // pred_check
          %p587 = pneg %p76
        $region54: #{up_forward.5} parent=51 // pred_check_branch
          %589 = sbr.rel (%p587) target = $region56
        $region55: #{up_forward.5} parent=51 // pred_region
          %590 = dma.done %s583, 2048
        $region56: #{up_forward.5} parent=51 // pred_fallthru
          _
        %s591 = sand.u32 %s41, 1
        %s592 = scalar_lea.sflag [#allocation8], %s591
        %s593 = sand.u32 %s99, 1
        %s594 = smul.addr %s593, 16
        %s595 = scalar_lea.vmem [#allocation7], %s594
        // Predicated region
        $region57: #{up_forward.5} parent=51 // pred_check
          %p596 = pneg %p112
        $region58: #{up_forward.5} parent=51 // pred_check_branch
          %598 = sbr.rel (%p596) target = $region60
        $region59: #{up_forward.5} parent=51 // pred_region
          %599 = dma.done %s592, 256
        $region60: #{up_forward.5} parent=51 // pred_fallthru
          _
        %s600 = sand.u32 %s41, 1
        %s601 = scalar_lea.sflag [#allocation8], %s600
        %s602 = sand.u32 %s135, 1
        %s603 = smul.addr %s602, 16
        %s604 = scalar_lea.vmem [#allocation9], %s603
        // Predicated region
        $region61: #{up_forward.5} parent=51 // pred_check
          %p605 = pneg %p148
        $region62: #{up_forward.5} parent=51 // pred_check_branch
          %607 = sbr.rel (%p605) target = $region64
        $region63: #{up_forward.5} parent=51 // pred_region
          %608 = dma.done %s601, 256
        $region64: #{up_forward.5} parent=51 // pred_fallthru
          _
        %s609 = sand.u32 %s41, 1
        %s610 = scalar_lea.sflag [#allocation11], %s609
        %s611 = sand.u32 %s163, 1
        %s612 = smul.addr %s611, 64
        %s613 = scalar_lea.vmem [#allocation10], %s612
        // Predicated region
        $region65: #{up_forward.5} parent=51 // pred_check
          %p614 = pneg %p176
        $region66: #{up_forward.5} parent=51 // pred_check_branch
          %616 = sbr.rel (%p614) target = $region68
        $region67: #{up_forward.5} parent=51 // pred_region
          %617 = dma.done %s610, 1024
        $region68: #{up_forward.5} parent=51 // pred_fallthru
          _
        %s618 = sand.u32 %s41, 1
        %s619 = scalar_lea.sflag [#allocation11], %s618
        %s620 = sand.u32 %s199, 1
        %s621 = smul.addr %s620, 8
        %s622 = scalar_lea.vmem [#allocation12], %s621
        // Predicated region
        $region69: #{up_forward.5} parent=51 // pred_check
          %p623 = pneg %p212
        $region70: #{up_forward.5} parent=51 // pred_check_branch
          %625 = sbr.rel (%p623) target = $region72
        $region71: #{up_forward.5} parent=51 // pred_region
          %626 = dma.done %s619, 128
        $region72: #{up_forward.5} parent=51 // pred_fallthru
          _
        %s627 = sand.u32 %s41, 1
        %s628 = scalar_lea.sflag [#allocation14], %s627
        %s629 = sand.u32 %s235, 1
        %s630 = smul.addr %s629, 8
        %s631 = scalar_lea.vmem [#allocation13], %s630
        // Predicated region
        $region73: #{up_forward.5} parent=51 // pred_check
          %p632 = pneg %p248
        $region74: #{up_forward.5} parent=51 // pred_check_branch
          %634 = sbr.rel (%p632) target = $region76
        $region75: #{up_forward.5} parent=51 // pred_region
          %635 = dma.done %s628, 128
        $region76: #{up_forward.5} parent=51 // pred_fallthru
          _
        // Predicated region
        $region77: #{up_forward.5} parent=51 // pred_check
          %p636 = pneg %p269
        $region78: #{up_forward.5} parent=51 // pred_check_branch
          %638 = sbr.rel (%p636) target = $region80
        $region79: #{up_forward.5} parent=51 // pred_region
          %639 = dma.done [#allocation14], 320
        $region80: #{up_forward.5} parent=51 // pred_fallthru
          _
        // Predicated region
        $region81: #{up_forward.5} parent=51 // pred_check
          %p640 = pneg %p290
        $region82: #{up_forward.5} parent=51 // pred_check_branch
          %642 = sbr.rel (%p640) target = $region84
        $region83: #{up_forward.5} parent=51 // pred_region
          %643 = dma.done [#allocation17], 320
        $region84: #{up_forward.5} parent=51 // pred_fallthru
          _
        %s644 = sand.u32 %s63, 1
        %s645 = scalar_lea.sflag [#allocation5], %s644
        %s646 = sand.u32 %s63, 1
        %s647 = smul.addr %s646, 128
        %s648 = scalar_lea.vmem [#allocation4], %s647
        %p649 = pneg %p76
        %p650 = pneg %p73
        %s651 = sand.u32 %s41, 1
        %s652 = scalar_lea.sflag [#allocation8], %s651
        %s653 = sand.u32 %s99, 1
        %s654 = smul.addr %s653, 16
        %s655 = scalar_lea.vmem [#allocation7], %s654
        %p656 = pneg %p112
        %p657 = pneg %p109
        %s658 = sand.u32 %s41, 1
        %s659 = scalar_lea.sflag [#allocation8], %s658
        %s660 = sand.u32 %s135, 1
        %s661 = smul.addr %s660, 16
        %s662 = scalar_lea.vmem [#allocation9], %s661
        %p663 = pneg %p148
        %p664 = pneg %p145
        %s665 = sand.u32 %s41, 1
        %s666 = scalar_lea.sflag [#allocation11], %s665
        %s667 = sand.u32 %s163, 1
        %s668 = smul.addr %s667, 64
        %s669 = scalar_lea.vmem [#allocation10], %s668
        %p670 = pneg %p176
        %p671 = pneg %p173
        %s672 = sand.u32 %s41, 1
        %s673 = scalar_lea.sflag [#allocation11], %s672
        %s674 = sand.u32 %s199, 1
        %s675 = smul.addr %s674, 8
        %s676 = scalar_lea.vmem [#allocation12], %s675
        %p677 = pneg %p212
        %p678 = pneg %p209
        %s679 = sand.u32 %s41, 1
        %s680 = scalar_lea.sflag [#allocation14], %s679
        %s681 = sand.u32 %s235, 1
        %s682 = smul.addr %s681, 8
        %s683 = scalar_lea.vmem [#allocation13], %s682
        %p684 = pneg %p248
        %p685 = pneg %p245
        %p686 = pneg %p269
        %p687 = pneg %p266
        %p688 = pneg %p290
        %p689 = pneg %p287
        %p690 = pneg %p318
        %p691 = pneg %p315
        %s692 = sand.u32 %s305, 1
        %s693 = scalar_lea.sflag [#allocation6], %s692
        %s694 = sand.u32 %s305, 1
        %s695 = smul.addr %s694, 64
        %s696 = scalar_lea.vmem [#allocation18], %s695
        %p697 = pneg %p346
        %p698 = pneg %p343
        %s699 = sand.u32 %s41, 1
        %s700 = scalar_lea.sflag [#allocation20], %s699
        %s701 = sand.u32 %s333, 1
        %s702 = scalar_lea.vmem [#allocation19], %s701
        %p703 = pneg %p374
        %p704 = pneg %p371
        %s705 = sand.u32 %s41, 1
        %s706 = scalar_lea.sflag [#allocation20], %s705
        %s707 = sand.u32 %s361, 1
        %s708 = scalar_lea.vmem [#allocation21], %s707
        %s709 = smul.u32 8, %s46
        %s710 = smul.u32 %s46, 8
        %s711 = ssub.s32 %s710, 1
        %p712 = scmp.gt.s32.totalorder %s711, 0
        %s713 = scalar_select %p712, %s711, 0
        %s714 = smul.u32 %s46, 8
        %s715 = sadd.s32 %s714, 8
        %p716 = scmp.lt.s32.totalorder %s715, 15
        %s717 = scalar_select %p716, %s715, 15
        %s718 = smul.u32 8, %s46
        %s719 = smul.u32 %s46, 8
        %s720 = ssub.s32 %s719, 1
        %p721 = scmp.gt.s32.totalorder %s720, 0
        %s722 = scalar_select %p721, %s720, 0
        %s723 = smul.u32 %s46, 8
        %s724 = sadd.s32 %s723, 8
        %p725 = scmp.lt.s32.totalorder %s724, 15
        %s726 = scalar_select %p725, %s724, 15
        %s727 = smul.u32 8, %s46
        %p729 = scmp.gt.s32.totalorder %s46, 0
        %s730 = scalar_select %p729, 1, 0
        %s731 = scvt.s32.f32 %s730
        %s732 = sadd.s32 %s46, 1
        %p733 = scmp.lt.s32.totalorder %s732, 2
        %s734 = scalar_select %p733, 1, 0
        %s735 = scvt.s32.f32 %s734
        %vm736 = vcmask 27648
        %737 = vst.msk [vmem:[#allocation2] sm:$0xf] %vm736, 0
        %738 = vst.msk [vmem:[#allocation2 + $0x4] sm:$0xf] %vm736, 0
        %vm739 = vcmask 24576
        %740 = vst.msk [vmem:[#allocation2 + $0x8] sm:$0x1] %vm739, 0
        %741 = vst.msk [vmem:[#allocation2 + $0xc] sm:$0xf] %vm736, 0
        %742 = vst.msk [vmem:[#allocation2 + $0x10] sm:$0xf] %vm736, 0
        %743 = vst.msk [vmem:[#allocation2 + $0x14] sm:$0x1] %vm739, 0
        %744 = vst.msk [vmem:[#allocation2 + $0x18] sm:$0xf] %vm736, 0
        %745 = vst.msk [vmem:[#allocation2 + $0x1c] sm:$0xf] %vm736, 0
        %746 = vst.msk [vmem:[#allocation2 + $0x20] sm:$0x1] %vm739, 0
        %747 = vst.msk [vmem:[#allocation2 + $0x24] sm:$0xf] %vm736, 0
        %748 = vst.msk [vmem:[#allocation2 + $0x28] sm:$0xf] %vm736, 0
        %749 = vst.msk [vmem:[#allocation2 + $0x2c] sm:$0x1] %vm739, 0
        %750 = vst.msk [vmem:[#allocation2 + $0x30] sm:$0xf] %vm736, 0
        %751 = vst.msk [vmem:[#allocation2 + $0x34] sm:$0xf] %vm736, 0
        %752 = vst.msk [vmem:[#allocation2 + $0x38] sm:$0x1] %vm739, 0
        %753 = vst.msk [vmem:[#allocation2 + $0x3c] sm:$0xf] %vm736, 0
        %754 = vst.msk [vmem:[#allocation2 + $0x40] sm:$0xf] %vm736, 0
        %755 = vst.msk [vmem:[#allocation2 + $0x44] sm:$0x1] %vm739, 0
        %756 = vst.msk [vmem:[#allocation2 + $0x48] sm:$0xf] %vm736, 0
        %757 = vst.msk [vmem:[#allocation2 + $0x4c] sm:$0xf] %vm736, 0
        %758 = vst.msk [vmem:[#allocation2 + $0x50] sm:$0x1] %vm739, 0
        %759 = vst.msk [vmem:[#allocation2 + $0x54] sm:$0xf] %vm736, 0
        %760 = vst.msk [vmem:[#allocation2 + $0x58] sm:$0xf] %vm736, 0
        %761 = vst.msk [vmem:[#allocation2 + $0x5c] sm:$0x1] %vm739, 0
        %762 = vst.msk [vmem:[#allocation2 + $0x60] sm:$0xf] %vm736, 0
        %763 = vst.msk [vmem:[#allocation2 + $0x64] sm:$0xf] %vm736, 0
        %764 = vst.msk [vmem:[#allocation2 + $0x68] sm:$0x1] %vm739, 0
        %765 = vst.msk [vmem:[#allocation2 + $0x6c] sm:$0xf] %vm736, 0
        %766 = vst.msk [vmem:[#allocation2 + $0x70] sm:$0xf] %vm736, 0
        %767 = vst.msk [vmem:[#allocation2 + $0x74] sm:$0x1] %vm739, 0
        %v768 = vld [vmem:[%s586] sm:$0xff]
        %v769 = vld [vmem:[%s586 + $0x8] sm:$0xff]
        %v770 = vld [vmem:[%s586 + $0x10] sm:$0xff]
        %v771 = vld [vmem:[%s586 + $0x18] sm:$0xff]
        %v772 = vld [vmem:[%s586 + $0x20] sm:$0xff]
        %v773 = vld [vmem:[%s586 + $0x28] sm:$0xff]
        %v774 = vld [vmem:[%s586 + $0x30] sm:$0xff]
        %v775 = vld [vmem:[%s586 + $0x38] sm:$0xff]
        %v776 = vld [vmem:[%s586 + $0x40] sm:$0xff]
        %v777 = vld [vmem:[%s586 + $0x48] sm:$0xff]
        %v778 = vld [vmem:[%s586 + $0x50] sm:$0xff]
        %v779 = vld [vmem:[%s586 + $0x58] sm:$0xff]
        %v780 = vld [vmem:[%s586 + $0x60] sm:$0xff]
        %v781 = vld [vmem:[%s586 + $0x68] sm:$0xff]
        %v782 = vld [vmem:[%s586 + $0x70] sm:$0xff]
        %v783 = vld [vmem:[%s586 + $0x78] sm:$0xff]
        %v784 = vpack.c.bf16 %v769, %v768
        %v785 = vpack.c.bf16 %v771, %v770
        %v786 = vpack.c.bf16 %v773, %v772
        %v787 = vpack.c.bf16 %v775, %v774
        %v788 = vpack.c.bf16 %v777, %v776
        %v789 = vpack.c.bf16 %v779, %v778
        %v790 = vpack.c.bf16 %v781, %v780
        %v791 = vpack.c.bf16 %v783, %v782
        %v800 = vunpack.c.l.b16 %v784
        %v801 = vunpack.c.h.b16 %v784
        %v802 = vunpack.c.l.b16 %v785
        %v803 = vunpack.c.h.b16 %v785
        %v804 = vunpack.c.l.b16 %v786
        %v805 = vunpack.c.h.b16 %v786
        %v806 = vunpack.c.l.b16 %v787
        %v807 = vunpack.c.h.b16 %v787
        %v808 = vunpack.c.l.b16 %v788
        %v809 = vunpack.c.h.b16 %v788
        %v810 = vunpack.c.l.b16 %v789
        %v811 = vunpack.c.h.b16 %v789
        %v812 = vunpack.c.l.b16 %v790
        %v813 = vunpack.c.h.b16 %v790
        %v814 = vunpack.c.l.b16 %v791
        %v815 = vunpack.c.h.b16 %v791
        %v816 = vpack.c.b16 %v800, %v800
        %v817 = vpack.c.b16 %v801, %v801
        %v818 = vpack.c.b16 %v802, %v802
        %v819 = vpack.c.b16 %v803, %v803
        %v820 = vpack.c.b16 %v804, %v804
        %v821 = vpack.c.b16 %v805, %v805
        %v822 = vpack.c.b16 %v806, %v806
        %v823 = vpack.c.b16 %v807, %v807
        %v824 = vpack.c.b16 %v808, %v808
        %v825 = vpack.c.b16 %v809, %v809
        %v826 = vpack.c.b16 %v810, %v810
        %v827 = vpack.c.b16 %v811, %v811
        %v828 = vpack.c.b16 %v812, %v812
        %v829 = vpack.c.b16 %v813, %v813
        %v830 = vpack.c.b16 %v814, %v814
        %v831 = vpack.c.b16 %v815, %v815
        %vm832 = vsmask.f32 256
        %vm833 = vsmask.f32 4368
        %vm834 = vmor %vm832, %vm833
        %v836 = vshrl.u32 %v816, 16
        %v838 = vrot.slane %v836, 7
        %v839 = vshll.u32 %v816, 16
        %v841 = vor.u32 %v838, %v839
        %v842 = vrot.slane %v838, 4
        %v844 = vshrl.u32 %v817, 16
        %v846 = vrot.slane %v844, 7
        %v847 = vshll.u32 %v817, 16
        %v849 = vor.u32 %v846, %v847
        %v850 = vsel %vm834, %v842, %v849
        %v851 = vrot.slane %v846, 4
        %v853 = vshrl.u32 %v818, 16
        %v855 = vrot.slane %v853, 7
        %v856 = vshll.u32 %v818, 16
        %v858 = vor.u32 %v855, %v856
        %v859 = vrot.slane %v855, 4
        %v861 = vshrl.u32 %v819, 16
        %v863 = vrot.slane %v861, 7
        %v864 = vshll.u32 %v819, 16
        %v866 = vor.u32 %v863, %v864
        %v867 = vsel %vm834, %v859, %v866
        %v868 = vrot.slane %v863, 4
        %v870 = vshrl.u32 %v820, 16
        %v872 = vrot.slane %v870, 7
        %v873 = vshll.u32 %v820, 16
        %v875 = vor.u32 %v872, %v873
        %v876 = vrot.slane %v872, 4
        %v878 = vshrl.u32 %v821, 16
        %v880 = vrot.slane %v878, 7
        %v881 = vshll.u32 %v821, 16
        %v883 = vor.u32 %v880, %v881
        %v884 = vsel %vm834, %v876, %v883
        %v885 = vrot.slane %v880, 4
        %v887 = vshrl.u32 %v822, 16
        %v889 = vrot.slane %v887, 7
        %v890 = vshll.u32 %v822, 16
        %v892 = vor.u32 %v889, %v890
        %v893 = vrot.slane %v889, 4
        %v895 = vshrl.u32 %v823, 16
        %v897 = vrot.slane %v895, 7
        %v898 = vshll.u32 %v823, 16
        %v900 = vor.u32 %v897, %v898
        %v901 = vsel %vm834, %v893, %v900
        %v902 = vrot.slane %v897, 4
        %v904 = vshrl.u32 %v824, 16
        %v906 = vrot.slane %v904, 7
        %v907 = vshll.u32 %v824, 16
        %v909 = vor.u32 %v906, %v907
        %v910 = vrot.slane %v906, 4
        %v912 = vshrl.u32 %v825, 16
        %v914 = vrot.slane %v912, 7
        %v915 = vshll.u32 %v825, 16
        %v917 = vor.u32 %v914, %v915
        %v918 = vsel %vm834, %v910, %v917
        %v919 = vrot.slane %v914, 4
        %v921 = vshrl.u32 %v826, 16
        %v923 = vrot.slane %v921, 7
        %v924 = vshll.u32 %v826, 16
        %v926 = vor.u32 %v923, %v924
        %v927 = vrot.slane %v923, 4
        %v929 = vshrl.u32 %v827, 16
        %v931 = vrot.slane %v929, 7
        %v932 = vshll.u32 %v827, 16
        %v934 = vor.u32 %v931, %v932
        %v935 = vsel %vm834, %v927, %v934
        %v936 = vrot.slane %v931, 4
        %v938 = vshrl.u32 %v828, 16
        %v940 = vrot.slane %v938, 7
        %v941 = vshll.u32 %v828, 16
        %v943 = vor.u32 %v940, %v941
        %v944 = vrot.slane %v940, 4
        %v946 = vshrl.u32 %v829, 16
        %v948 = vrot.slane %v946, 7
        %v949 = vshll.u32 %v829, 16
        %v951 = vor.u32 %v948, %v949
        %v952 = vsel %vm834, %v944, %v951
        %v953 = vrot.slane %v948, 4
        %v955 = vshrl.u32 %v830, 16
        %v957 = vrot.slane %v955, 7
        %v958 = vshll.u32 %v830, 16
        %v960 = vor.u32 %v957, %v958
        %v961 = vrot.slane %v957, 4
        %v963 = vshrl.u32 %v831, 16
        %v965 = vrot.slane %v963, 7
        %v966 = vshll.u32 %v831, 16
        %v968 = vor.u32 %v965, %v966
        %v969 = vsel %vm834, %v961, %v968
        %v970 = vrot.slane %v965, 4
        %s995 = scalar_lea.vmem [#allocation2], 12
        %vm996 = vcmask 27648
        %vm997 = vsmask.f32 7938
        %vm998 = vmand %vm996, %vm997
        %v999 = vld [vmem:[%s995] sm:$0xf]
        %v1000 = vsel %vm998, %v841, %v999
        %1001 = vst [vmem:[%s995] sm:$0xf] %v1000
        %1002 = vst.msk [vmem:[%s995 + $0x4] sm:$0xf] %vm736, %v850
        %vm1003 = vcmask 24576
        %vm1004 = vmand %vm1003, %vm832
        %v1005 = vld [vmem:[%s995 + $0x8] sm:$0x1]
        %v1006 = vsel %vm1004, %v851, %v1005
        %1007 = vst [vmem:[%s995 + $0x8] sm:$0x1] %v1006
        %v1008 = vld [vmem:[%s995 + $0xc] sm:$0xf]
        %v1009 = vsel %vm998, %v858, %v1008
        %1010 = vst [vmem:[%s995 + $0xc] sm:$0xf] %v1009
        %1011 = vst.msk [vmem:[%s995 + $0x10] sm:$0xf] %vm736, %v867
        %v1012 = vld [vmem:[%s995 + $0x14] sm:$0x1]
        %v1013 = vsel %vm1004, %v868, %v1012
        %1014 = vst [vmem:[%s995 + $0x14] sm:$0x1] %v1013
        %v1015 = vld [vmem:[%s995 + $0x18] sm:$0xf]
        %v1016 = vsel %vm998, %v875, %v1015
        %1017 = vst [vmem:[%s995 + $0x18] sm:$0xf] %v1016
        %1018 = vst.msk [vmem:[%s995 + $0x1c] sm:$0xf] %vm736, %v884
        %v1019 = vld [vmem:[%s995 + $0x20] sm:$0x1]
        %v1020 = vsel %vm1004, %v885, %v1019
        %1021 = vst [vmem:[%s995 + $0x20] sm:$0x1] %v1020
        %v1022 = vld [vmem:[%s995 + $0x24] sm:$0xf]
        %v1023 = vsel %vm998, %v892, %v1022
        %1024 = vst [vmem:[%s995 + $0x24] sm:$0xf] %v1023
        %1025 = vst.msk [vmem:[%s995 + $0x28] sm:$0xf] %vm736, %v901
        %v1026 = vld [vmem:[%s995 + $0x2c] sm:$0x1]
        %v1027 = vsel %vm1004, %v902, %v1026
        %1028 = vst [vmem:[%s995 + $0x2c] sm:$0x1] %v1027
        %v1029 = vld [vmem:[%s995 + $0x30] sm:$0xf]
        %v1030 = vsel %vm998, %v909, %v1029
        %1031 = vst [vmem:[%s995 + $0x30] sm:$0xf] %v1030
        %1032 = vst.msk [vmem:[%s995 + $0x34] sm:$0xf] %vm736, %v918
        %v1033 = vld [vmem:[%s995 + $0x38] sm:$0x1]
        %v1034 = vsel %vm1004, %v919, %v1033
        %1035 = vst [vmem:[%s995 + $0x38] sm:$0x1] %v1034
        %v1036 = vld [vmem:[%s995 + $0x3c] sm:$0xf]
        %v1037 = vsel %vm998, %v926, %v1036
        %1038 = vst [vmem:[%s995 + $0x3c] sm:$0xf] %v1037
        %1039 = vst.msk [vmem:[%s995 + $0x40] sm:$0xf] %vm736, %v935
        %v1040 = vld [vmem:[%s995 + $0x44] sm:$0x1]
        %v1041 = vsel %vm1004, %v936, %v1040
        %1042 = vst [vmem:[%s995 + $0x44] sm:$0x1] %v1041
        %v1043 = vld [vmem:[%s995 + $0x48] sm:$0xf]
        %v1044 = vsel %vm998, %v943, %v1043
        %1045 = vst [vmem:[%s995 + $0x48] sm:$0xf] %v1044
        %1046 = vst.msk [vmem:[%s995 + $0x4c] sm:$0xf] %vm736, %v952
        %v1047 = vld [vmem:[%s995 + $0x50] sm:$0x1]
        %v1048 = vsel %vm1004, %v953, %v1047
        %1049 = vst [vmem:[%s995 + $0x50] sm:$0x1] %v1048
        %v1050 = vld [vmem:[%s995 + $0x54] sm:$0xf]
        %v1051 = vsel %vm998, %v960, %v1050
        %1052 = vst [vmem:[%s995 + $0x54] sm:$0xf] %v1051
        %1053 = vst.msk [vmem:[%s995 + $0x58] sm:$0xf] %vm736, %v969
        %v1054 = vld [vmem:[%s995 + $0x5c] sm:$0x1]
        %v1055 = vsel %vm1004, %v970, %v1054
        %1056 = vst [vmem:[%s995 + $0x5c] sm:$0x1] %v1055
        %v1057 = vld [vmem:[%s595] sm:$0xff]
        %v1058 = vld [vmem:[%s595 + $0x8] sm:$0xff]
        %v1059 = vstv %s731
        %v1060 = vmul.f32 %v1057, %v1059
        %v1061 = vmul.f32 %v1058, %v1059
        %v1062 = vpack.c.bf16 %v1061, %v1060
        %v1064 = vunpack.c.l.b16 %v1062
        %v1065 = vunpack.c.h.b16 %v1062
        %v1066 = vpack.c.b16 %v1064, %v1064
        %v1067 = vpack.c.b16 %v1065, %v1065
        %v1069 = vshrl.u32 %v1066, 16
        %v1071 = vrot.slane %v1069, 7
        %v1072 = vshll.u32 %v1066, 16
        %v1074 = vor.u32 %v1071, %v1072
        %v1075 = vrot.slane %v1071, 4
        %v1077 = vshrl.u32 %v1067, 16
        %v1079 = vrot.slane %v1077, 7
        %v1080 = vshll.u32 %v1067, 16
        %v1082 = vor.u32 %v1079, %v1080
        %v1083 = vsel %vm834, %v1075, %v1082
        %v1084 = vrot.slane %v1079, 4
        %v1088 = vld [vmem:[#allocation2] sm:$0xf]
        %v1089 = vsel %vm998, %v1074, %v1088
        %1090 = vst [vmem:[#allocation2] sm:$0xf] %v1089
        %1091 = vst.msk [vmem:[#allocation2 + $0x4] sm:$0xf] %vm736, %v1083
        %v1092 = vld [vmem:[#allocation2 + $0x8] sm:$0x1]
        %v1093 = vsel %vm1004, %v1084, %v1092
        %1094 = vst [vmem:[#allocation2 + $0x8] sm:$0x1] %v1093
        %v1095 = vld [vmem:[%s604] sm:$0xff]
        %v1096 = vld [vmem:[%s604 + $0x8] sm:$0xff]
        %v1097 = vstv %s735
        %v1098 = vmul.f32 %v1095, %v1097
        %v1099 = vmul.f32 %v1096, %v1097
        %v1100 = vpack.c.bf16 %v1099, %v1098
        %v1102 = vunpack.c.l.b16 %v1100
        %v1103 = vunpack.c.h.b16 %v1100
        %v1104 = vpack.c.b16 %v1102, %v1102
        %v1105 = vpack.c.b16 %v1103, %v1103
        %v1107 = vshrl.u32 %v1104, 16
        %v1109 = vrot.slane %v1107, 7
        %v1110 = vshll.u32 %v1104, 16
        %v1112 = vor.u32 %v1109, %v1110
        %v1113 = vrot.slane %v1109, 4
        %v1115 = vshrl.u32 %v1105, 16
        %v1117 = vrot.slane %v1115, 7
        %v1118 = vshll.u32 %v1105, 16
        %v1120 = vor.u32 %v1117, %v1118
        %v1121 = vsel %vm834, %v1113, %v1120
        %v1122 = vrot.slane %v1117, 4
        %s1126 = scalar_lea.vmem [#allocation2], 108
        %v1127 = vld [vmem:[%s1126] sm:$0xf]
        %v1128 = vsel %vm998, %v1112, %v1127
        %1129 = vst [vmem:[%s1126] sm:$0xf] %v1128
        %1130 = vst.msk [vmem:[%s1126 + $0x4] sm:$0xf] %vm736, %v1121
        %v1131 = vld [vmem:[%s1126 + $0x8] sm:$0x1]
        %v1132 = vsel %vm1004, %v1122, %v1131
        %1133 = vst [vmem:[%s1126 + $0x8] sm:$0x1] %v1132
        %v1134 = vld [vmem:[#allocation2] sm:$0xf]
        %v1135 = vld [vmem:[#allocation2 + $0x4] sm:$0xf]
        %v1136 = vld [vmem:[#allocation2 + $0x8] sm:$0x1]
        %v1137 = vld [vmem:[#allocation2 + $0xc] sm:$0xf]
        %v1138 = vld [vmem:[#allocation2 + $0x10] sm:$0xf]
        %v1139 = vld [vmem:[#allocation2 + $0x14] sm:$0x1]
        %v1140 = vld [vmem:[#allocation2 + $0x18] sm:$0xf]
        %v1141 = vld [vmem:[#allocation2 + $0x1c] sm:$0xf]
        %v1142 = vld [vmem:[#allocation2 + $0x20] sm:$0x1]
        %v1143 = vld [vmem:[#allocation2 + $0x24] sm:$0xf]
        %v1144 = vld [vmem:[#allocation2 + $0x28] sm:$0xf]
        %v1145 = vld [vmem:[#allocation2 + $0x2c] sm:$0x1]
        %v1146 = vld [vmem:[#allocation2 + $0x30] sm:$0xf]
        %v1147 = vld [vmem:[#allocation2 + $0x34] sm:$0xf]
        %v1148 = vld [vmem:[#allocation2 + $0x38] sm:$0x1]
        %v1149 = vld [vmem:[#allocation2 + $0x3c] sm:$0xf]
        %v1150 = vld [vmem:[#allocation2 + $0x40] sm:$0xf]
        %v1151 = vld [vmem:[#allocation2 + $0x44] sm:$0x1]
        %v1152 = vld [vmem:[#allocation2 + $0x48] sm:$0xf]
        %v1153 = vld [vmem:[#allocation2 + $0x4c] sm:$0xf]
        %v1154 = vld [vmem:[#allocation2 + $0x50] sm:$0x1]
        %v1155 = vld [vmem:[#allocation2 + $0x54] sm:$0xf]
        %v1156 = vld [vmem:[#allocation2 + $0x58] sm:$0xf]
        %v1157 = vld [vmem:[#allocation2 + $0x5c] sm:$0x1]
        %v1158 = vld [vmem:[#allocation2 + $0x60] sm:$0xf]
        %v1159 = vld [vmem:[#allocation2 + $0x64] sm:$0xf]
        %v1160 = vld [vmem:[#allocation2 + $0x68] sm:$0x1]
        %v1161 = vld [vmem:[#allocation2 + $0x6c] sm:$0xf]
        %v1162 = vld [vmem:[#allocation2 + $0x70] sm:$0xf]
        %v1163 = vld [vmem:[#allocation2 + $0x74] sm:$0x1]
        %1164 = vst.msk [vmem:[#allocation3] sm:$0xf] %vm736, 0
        %1165 = vst.msk [vmem:[#allocation3 + $0x4] sm:$0xf] %vm736, 0
        %1166 = vst.msk [vmem:[#allocation3 + $0x8] sm:$0x1] %vm739, 0
        %1167 = vst.msk [vmem:[#allocation3 + $0xc] sm:$0xf] %vm736, 0
        %1168 = vst.msk [vmem:[#allocation3 + $0x10] sm:$0xf] %vm736, 0
        %1169 = vst.msk [vmem:[#allocation3 + $0x14] sm:$0x1] %vm739, 0
        %1170 = vst.msk [vmem:[#allocation3 + $0x18] sm:$0xf] %vm736, 0
        %1171 = vst.msk [vmem:[#allocation3 + $0x1c] sm:$0xf] %vm736, 0
        %1172 = vst.msk [vmem:[#allocation3 + $0x20] sm:$0x1] %vm739, 0
        %1173 = vst.msk [vmem:[#allocation3 + $0x24] sm:$0xf] %vm736, 0
        %1174 = vst.msk [vmem:[#allocation3 + $0x28] sm:$0xf] %vm736, 0
        %1175 = vst.msk [vmem:[#allocation3 + $0x2c] sm:$0x1] %vm739, 0
        %1176 = vst.msk [vmem:[#allocation3 + $0x30] sm:$0xf] %vm736, 0
        %1177 = vst.msk [vmem:[#allocation3 + $0x34] sm:$0xf] %vm736, 0
        %1178 = vst.msk [vmem:[#allocation3 + $0x38] sm:$0x1] %vm739, 0
        %1179 = vst.msk [vmem:[#allocation3 + $0x3c] sm:$0xf] %vm736, 0
        %1180 = vst.msk [vmem:[#allocation3 + $0x40] sm:$0xf] %vm736, 0
        %1181 = vst.msk [vmem:[#allocation3 + $0x44] sm:$0x1] %vm739, 0
        %1182 = vst.msk [vmem:[#allocation3 + $0x48] sm:$0xf] %vm736, 0
        %1183 = vst.msk [vmem:[#allocation3 + $0x4c] sm:$0xf] %vm736, 0
        %1184 = vst.msk [vmem:[#allocation3 + $0x50] sm:$0x1] %vm739, 0
        %1185 = vst.msk [vmem:[#allocation3 + $0x54] sm:$0xf] %vm736, 0
        %1186 = vst.msk [vmem:[#allocation3 + $0x58] sm:$0xf] %vm736, 0
        %1187 = vst.msk [vmem:[#allocation3 + $0x5c] sm:$0x1] %vm739, 0
        %1188 = vst.msk [vmem:[#allocation3 + $0x60] sm:$0xf] %vm736, 0
        %1189 = vst.msk [vmem:[#allocation3 + $0x64] sm:$0xf] %vm736, 0
        %1190 = vst.msk [vmem:[#allocation3 + $0x68] sm:$0x1] %vm739, 0
        %1191 = vst.msk [vmem:[#allocation3 + $0x6c] sm:$0xf] %vm736, 0
        %1192 = vst.msk [vmem:[#allocation3 + $0x70] sm:$0xf] %vm736, 0
        %1193 = vst.msk [vmem:[#allocation3 + $0x74] sm:$0x1] %vm739, 0
        %v1194 = vld [vmem:[%s613] sm:$0xf]
        %v1195 = vld [vmem:[%s613 + $0x4] sm:$0xf]
        %v1196 = vld [vmem:[%s613 + $0x8] sm:$0xf]
        %v1197 = vld [vmem:[%s613 + $0xc] sm:$0xf]
        %v1198 = vld [vmem:[%s613 + $0x10] sm:$0xf]
        %v1199 = vld [vmem:[%s613 + $0x14] sm:$0xf]
        %v1200 = vld [vmem:[%s613 + $0x18] sm:$0xf]
        %v1201 = vld [vmem:[%s613 + $0x1c] sm:$0xf]
        %v1202 = vld [vmem:[%s613 + $0x20] sm:$0xf]
        %v1203 = vld [vmem:[%s613 + $0x24] sm:$0xf]
        %v1204 = vld [vmem:[%s613 + $0x28] sm:$0xf]
        %v1205 = vld [vmem:[%s613 + $0x2c] sm:$0xf]
        %v1206 = vld [vmem:[%s613 + $0x30] sm:$0xf]
        %v1207 = vld [vmem:[%s613 + $0x34] sm:$0xf]
        %v1208 = vld [vmem:[%s613 + $0x38] sm:$0xf]
        %v1209 = vld [vmem:[%s613 + $0x3c] sm:$0xf]
        %v1211 = vshrl.u32 %v1194, 16
        %v1213 = vrot.slane %v1211, 7
        %v1214 = vshll.u32 %v1194, 16
        %v1216 = vor.u32 %v1213, %v1214
        %v1217 = vrot.slane %v1213, 4
        %v1219 = vshrl.u32 %v1195, 16
        %v1221 = vrot.slane %v1219, 7
        %v1222 = vshll.u32 %v1195, 16
        %v1224 = vor.u32 %v1221, %v1222
        %v1225 = vsel %vm834, %v1217, %v1224
        %v1226 = vrot.slane %v1221, 4
        %v1228 = vshrl.u32 %v1196, 16
        %v1230 = vrot.slane %v1228, 7
        %v1231 = vshll.u32 %v1196, 16
        %v1233 = vor.u32 %v1230, %v1231
        %v1234 = vrot.slane %v1230, 4
        %v1236 = vshrl.u32 %v1197, 16
        %v1238 = vrot.slane %v1236, 7
        %v1239 = vshll.u32 %v1197, 16
        %v1241 = vor.u32 %v1238, %v1239
        %v1242 = vsel %vm834, %v1234, %v1241
        %v1243 = vrot.slane %v1238, 4
        %v1245 = vshrl.u32 %v1198, 16
        %v1247 = vrot.slane %v1245, 7
        %v1248 = vshll.u32 %v1198, 16
        %v1250 = vor.u32 %v1247, %v1248
        %v1251 = vrot.slane %v1247, 4
        %v1253 = vshrl.u32 %v1199, 16
        %v1255 = vrot.slane %v1253, 7
        %v1256 = vshll.u32 %v1199, 16
        %v1258 = vor.u32 %v1255, %v1256
        %v1259 = vsel %vm834, %v1251, %v1258
        %v1260 = vrot.slane %v1255, 4
        %v1262 = vshrl.u32 %v1200, 16
        %v1264 = vrot.slane %v1262, 7
        %v1265 = vshll.u32 %v1200, 16
        %v1267 = vor.u32 %v1264, %v1265
        %v1268 = vrot.slane %v1264, 4
        %v1270 = vshrl.u32 %v1201, 16
        %v1272 = vrot.slane %v1270, 7
        %v1273 = vshll.u32 %v1201, 16
        %v1275 = vor.u32 %v1272, %v1273
        %v1276 = vsel %vm834, %v1268, %v1275
        %v1277 = vrot.slane %v1272, 4
        %v1279 = vshrl.u32 %v1202, 16
        %v1281 = vrot.slane %v1279, 7
        %v1282 = vshll.u32 %v1202, 16
        %v1284 = vor.u32 %v1281, %v1282
        %v1285 = vrot.slane %v1281, 4
        %v1287 = vshrl.u32 %v1203, 16
        %v1289 = vrot.slane %v1287, 7
        %v1290 = vshll.u32 %v1203, 16
        %v1292 = vor.u32 %v1289, %v1290
        %v1293 = vsel %vm834, %v1285, %v1292
        %v1294 = vrot.slane %v1289, 4
        %v1296 = vshrl.u32 %v1204, 16
        %v1298 = vrot.slane %v1296, 7
        %v1299 = vshll.u32 %v1204, 16
        %v1301 = vor.u32 %v1298, %v1299
        %v1302 = vrot.slane %v1298, 4
        %v1304 = vshrl.u32 %v1205, 16
        %v1306 = vrot.slane %v1304, 7
        %v1307 = vshll.u32 %v1205, 16
        %v1309 = vor.u32 %v1306, %v1307
        %v1310 = vsel %vm834, %v1302, %v1309
        %v1311 = vrot.slane %v1306, 4
        %v1313 = vshrl.u32 %v1206, 16
        %v1315 = vrot.slane %v1313, 7
        %v1316 = vshll.u32 %v1206, 16
        %v1318 = vor.u32 %v1315, %v1316
        %v1319 = vrot.slane %v1315, 4
        %v1321 = vshrl.u32 %v1207, 16
        %v1323 = vrot.slane %v1321, 7
        %v1324 = vshll.u32 %v1207, 16
        %v1326 = vor.u32 %v1323, %v1324
        %v1327 = vsel %vm834, %v1319, %v1326
        %v1328 = vrot.slane %v1323, 4
        %v1330 = vshrl.u32 %v1208, 16
        %v1332 = vrot.slane %v1330, 7
        %v1333 = vshll.u32 %v1208, 16
        %v1335 = vor.u32 %v1332, %v1333
        %v1336 = vrot.slane %v1332, 4
        %v1338 = vshrl.u32 %v1209, 16
        %v1340 = vrot.slane %v1338, 7
        %v1341 = vshll.u32 %v1209, 16
        %v1343 = vor.u32 %v1340, %v1341
        %v1344 = vsel %vm834, %v1336, %v1343
        %v1345 = vrot.slane %v1340, 4
        %s1370 = scalar_lea.vmem [#allocation3], 12
        %v1371 = vld [vmem:[%s1370] sm:$0xf]
        %v1372 = vsel %vm998, %v1216, %v1371
        %1373 = vst [vmem:[%s1370] sm:$0xf] %v1372
        %1374 = vst.msk [vmem:[%s1370 + $0x4] sm:$0xf] %vm736, %v1225
        %v1375 = vld [vmem:[%s1370 + $0x8] sm:$0x1]
        %v1376 = vsel %vm1004, %v1226, %v1375
        %1377 = vst [vmem:[%s1370 + $0x8] sm:$0x1] %v1376
        %v1378 = vld [vmem:[%s1370 + $0xc] sm:$0xf]
        %v1379 = vsel %vm998, %v1233, %v1378
        %1380 = vst [vmem:[%s1370 + $0xc] sm:$0xf] %v1379
        %1381 = vst.msk [vmem:[%s1370 + $0x10] sm:$0xf] %vm736, %v1242
        %v1382 = vld [vmem:[%s1370 + $0x14] sm:$0x1]
        %v1383 = vsel %vm1004, %v1243, %v1382
        %1384 = vst [vmem:[%s1370 + $0x14] sm:$0x1] %v1383
        %v1385 = vld [vmem:[%s1370 + $0x18] sm:$0xf]
        %v1386 = vsel %vm998, %v1250, %v1385
        %1387 = vst [vmem:[%s1370 + $0x18] sm:$0xf] %v1386
        %1388 = vst.msk [vmem:[%s1370 + $0x1c] sm:$0xf] %vm736, %v1259
        %v1389 = vld [vmem:[%s1370 + $0x20] sm:$0x1]
        %v1390 = vsel %vm1004, %v1260, %v1389
        %1391 = vst [vmem:[%s1370 + $0x20] sm:$0x1] %v1390
        %v1392 = vld [vmem:[%s1370 + $0x24] sm:$0xf]
        %v1393 = vsel %vm998, %v1267, %v1392
        %1394 = vst [vmem:[%s1370 + $0x24] sm:$0xf] %v1393
        %1395 = vst.msk [vmem:[%s1370 + $0x28] sm:$0xf] %vm736, %v1276
        %v1396 = vld [vmem:[%s1370 + $0x2c] sm:$0x1]
        %v1397 = vsel %vm1004, %v1277, %v1396
        %1398 = vst [vmem:[%s1370 + $0x2c] sm:$0x1] %v1397
        %v1399 = vld [vmem:[%s1370 + $0x30] sm:$0xf]
        %v1400 = vsel %vm998, %v1284, %v1399
        %1401 = vst [vmem:[%s1370 + $0x30] sm:$0xf] %v1400
        %1402 = vst.msk [vmem:[%s1370 + $0x34] sm:$0xf] %vm736, %v1293
        %v1403 = vld [vmem:[%s1370 + $0x38] sm:$0x1]
        %v1404 = vsel %vm1004, %v1294, %v1403
        %1405 = vst [vmem:[%s1370 + $0x38] sm:$0x1] %v1404
        %v1406 = vld [vmem:[%s1370 + $0x3c] sm:$0xf]
        %v1407 = vsel %vm998, %v1301, %v1406
        %1408 = vst [vmem:[%s1370 + $0x3c] sm:$0xf] %v1407
        %1409 = vst.msk [vmem:[%s1370 + $0x40] sm:$0xf] %vm736, %v1310
        %v1410 = vld [vmem:[%s1370 + $0x44] sm:$0x1]
        %v1411 = vsel %vm1004, %v1311, %v1410
        %1412 = vst [vmem:[%s1370 + $0x44] sm:$0x1] %v1411
        %v1413 = vld [vmem:[%s1370 + $0x48] sm:$0xf]
        %v1414 = vsel %vm998, %v1318, %v1413
        %1415 = vst [vmem:[%s1370 + $0x48] sm:$0xf] %v1414
        %1416 = vst.msk [vmem:[%s1370 + $0x4c] sm:$0xf] %vm736, %v1327
        %v1417 = vld [vmem:[%s1370 + $0x50] sm:$0x1]
        %v1418 = vsel %vm1004, %v1328, %v1417
        %1419 = vst [vmem:[%s1370 + $0x50] sm:$0x1] %v1418
        %v1420 = vld [vmem:[%s1370 + $0x54] sm:$0xf]
        %v1421 = vsel %vm998, %v1335, %v1420
        %1422 = vst [vmem:[%s1370 + $0x54] sm:$0xf] %v1421
        %1423 = vst.msk [vmem:[%s1370 + $0x58] sm:$0xf] %vm736, %v1344
        %v1424 = vld [vmem:[%s1370 + $0x5c] sm:$0x1]
        %v1425 = vsel %vm1004, %v1345, %v1424
        %1426 = vst [vmem:[%s1370 + $0x5c] sm:$0x1] %v1425
        %v1427 = vld [vmem:[%s622] sm:$0xf]
        %v1428 = vld [vmem:[%s622 + $0x4] sm:$0xf]
        %v1429 = vunpack.c.l.bf16 %v1427
        %v1430 = vunpack.c.l.bf16 %v1428
        %v1431 = vmul.f32 %v1429, %v1059
        %v1432 = vmul.f32 %v1430, %v1059
        %v1433 = vpack.c.bf16 %v1432, %v1431
        %v1435 = vunpack.c.l.b16 %v1433
        %v1436 = vunpack.c.h.b16 %v1433
        %v1437 = vpack.c.b16 %v1435, %v1435
        %v1438 = vpack.c.b16 %v1436, %v1436
        %v1440 = vshrl.u32 %v1437, 16
        %v1442 = vrot.slane %v1440, 7
        %v1443 = vshll.u32 %v1437, 16
        %v1445 = vor.u32 %v1442, %v1443
        %v1446 = vrot.slane %v1442, 4
        %v1448 = vshrl.u32 %v1438, 16
        %v1450 = vrot.slane %v1448, 7
        %v1451 = vshll.u32 %v1438, 16
        %v1453 = vor.u32 %v1450, %v1451
        %v1454 = vsel %vm834, %v1446, %v1453
        %v1455 = vrot.slane %v1450, 4
        %v1459 = vld [vmem:[#allocation3] sm:$0xf]
        %v1460 = vsel %vm998, %v1445, %v1459
        %1461 = vst [vmem:[#allocation3] sm:$0xf] %v1460
        %1462 = vst.msk [vmem:[#allocation3 + $0x4] sm:$0xf] %vm736, %v1454
        %v1463 = vld [vmem:[#allocation3 + $0x8] sm:$0x1]
        %v1464 = vsel %vm1004, %v1455, %v1463
        %1465 = vst [vmem:[#allocation3 + $0x8] sm:$0x1] %v1464
        %v1466 = vld [vmem:[%s631] sm:$0xf]
        %v1467 = vld [vmem:[%s631 + $0x4] sm:$0xf]
        %v1468 = vunpack.c.l.bf16 %v1466
        %v1469 = vunpack.c.l.bf16 %v1467
        %v1470 = vmul.f32 %v1468, %v1097
        %v1471 = vmul.f32 %v1469, %v1097
        %v1472 = vpack.c.bf16 %v1471, %v1470
        %v1474 = vunpack.c.l.b16 %v1472
        %v1475 = vunpack.c.h.b16 %v1472
        %v1476 = vpack.c.b16 %v1474, %v1474
        %v1477 = vpack.c.b16 %v1475, %v1475
        %v1479 = vshrl.u32 %v1476, 16
        %v1481 = vrot.slane %v1479, 7
        %v1482 = vshll.u32 %v1476, 16
        %v1484 = vor.u32 %v1481, %v1482
        %v1485 = vrot.slane %v1481, 4
        %v1487 = vshrl.u32 %v1477, 16
        %v1489 = vrot.slane %v1487, 7
        %v1490 = vshll.u32 %v1477, 16
        %v1492 = vor.u32 %v1489, %v1490
        %v1493 = vsel %vm834, %v1485, %v1492
        %v1494 = vrot.slane %v1489, 4
        %s1498 = scalar_lea.vmem [#allocation3], 108
        %v1499 = vld [vmem:[%s1498] sm:$0xf]
        %v1500 = vsel %vm998, %v1484, %v1499
        %1501 = vst [vmem:[%s1498] sm:$0xf] %v1500
        %1502 = vst.msk [vmem:[%s1498 + $0x4] sm:$0xf] %vm736, %v1493
        %v1503 = vld [vmem:[%s1498 + $0x8] sm:$0x1]
        %v1504 = vsel %vm1004, %v1494, %v1503
        %1505 = vst [vmem:[%s1498 + $0x8] sm:$0x1] %v1504
        %v1506 = vld [vmem:[#allocation3] sm:$0xf]
        %v1507 = vld [vmem:[#allocation3 + $0x4] sm:$0xf]
        %v1508 = vld [vmem:[#allocation3 + $0x8] sm:$0x1]
        %v1509 = vld [vmem:[#allocation3 + $0xc] sm:$0xf]
        %v1510 = vld [vmem:[#allocation3 + $0x10] sm:$0xf]
        %v1511 = vld [vmem:[#allocation3 + $0x14] sm:$0x1]
        %v1512 = vld [vmem:[#allocation3 + $0x18] sm:$0xf]
        %v1513 = vld [vmem:[#allocation3 + $0x1c] sm:$0xf]
        %v1514 = vld [vmem:[#allocation3 + $0x20] sm:$0x1]
        %v1515 = vld [vmem:[#allocation3 + $0x24] sm:$0xf]
        %v1516 = vld [vmem:[#allocation3 + $0x28] sm:$0xf]
        %v1517 = vld [vmem:[#allocation3 + $0x2c] sm:$0x1]
        %v1518 = vld [vmem:[#allocation3 + $0x30] sm:$0xf]
        %v1519 = vld [vmem:[#allocation3 + $0x34] sm:$0xf]
        %v1520 = vld [vmem:[#allocation3 + $0x38] sm:$0x1]
        %v1521 = vld [vmem:[#allocation3 + $0x3c] sm:$0xf]
        %v1522 = vld [vmem:[#allocation3 + $0x40] sm:$0xf]
        %v1523 = vld [vmem:[#allocation3 + $0x44] sm:$0x1]
        %v1524 = vld [vmem:[#allocation3 + $0x48] sm:$0xf]
        %v1525 = vld [vmem:[#allocation3 + $0x4c] sm:$0xf]
        %v1526 = vld [vmem:[#allocation3 + $0x50] sm:$0x1]
        %v1527 = vld [vmem:[#allocation3 + $0x54] sm:$0xf]
        %v1528 = vld [vmem:[#allocation3 + $0x58] sm:$0xf]
        %v1529 = vld [vmem:[#allocation3 + $0x5c] sm:$0x1]
        %v1530 = vld [vmem:[#allocation3 + $0x60] sm:$0xf]
        %v1531 = vld [vmem:[#allocation3 + $0x64] sm:$0xf]
        %v1532 = vld [vmem:[#allocation3 + $0x68] sm:$0x1]
        %v1533 = vld [vmem:[#allocation3 + $0x6c] sm:$0xf]
        %v1534 = vld [vmem:[#allocation3 + $0x70] sm:$0xf]
        %v1535 = vld [vmem:[#allocation3 + $0x74] sm:$0x1]
        %vm1536 = vsmask.f32 3328
        %vm1537 = vsmask.f32 7440
        %vm1538 = vmor %vm1536, %vm1537
        %v1540 = vshrl.u32 %v1134, 16
        %v1542 = vrot.slane %v1540, 4
        %v1543 = vshll.u32 %v1134, 16
        %v1545 = vrot.slane %v1543, 5
        %v1546 = vor.u32 %v1542, %v1545
        %v1547 = vrot.slane %v1546, 4
        %v1549 = vshll.u32 %v1135, 16
        %v1551 = vrot.slane %v1549, 5
        %v1552 = vsel %vm1538, %v1547, %v1551
        %v1553 = vshrl.u32 %v1135, 16
        %v1555 = vrot.slane %v1553, 4
        %v1556 = vor.u32 %v1555, %v1551
        %v1557 = vrot.slane %v1556, 4
        %v1559 = vshll.u32 %v1136, 16
        %v1561 = vrot.slane %v1559, 5
        %v1562 = vsel %vm1538, %v1557, %v1561
        %v1564 = vshrl.u32 %v1137, 16
        %v1566 = vrot.slane %v1564, 4
        %v1567 = vshll.u32 %v1137, 16
        %v1569 = vrot.slane %v1567, 5
        %v1570 = vor.u32 %v1566, %v1569
        %v1571 = vrot.slane %v1570, 4
        %v1573 = vshll.u32 %v1138, 16
        %v1575 = vrot.slane %v1573, 5
        %v1576 = vsel %vm1538, %v1571, %v1575
        %v1577 = vshrl.u32 %v1138, 16
        %v1579 = vrot.slane %v1577, 4
        %v1580 = vor.u32 %v1579, %v1575
        %v1581 = vrot.slane %v1580, 4
        %v1583 = vshll.u32 %v1139, 16
        %v1585 = vrot.slane %v1583, 5
        %v1586 = vsel %vm1538, %v1581, %v1585
        %v1588 = vshrl.u32 %v1140, 16
        %v1590 = vrot.slane %v1588, 4
        %v1591 = vshll.u32 %v1140, 16
        %v1593 = vrot.slane %v1591, 5
        %v1594 = vor.u32 %v1590, %v1593
        %v1595 = vrot.slane %v1594, 4
        %v1597 = vshll.u32 %v1141, 16
        %v1599 = vrot.slane %v1597, 5
        %v1600 = vsel %vm1538, %v1595, %v1599
        %v1601 = vshrl.u32 %v1141, 16
        %v1603 = vrot.slane %v1601, 4
        %v1604 = vor.u32 %v1603, %v1599
        %v1605 = vrot.slane %v1604, 4
        %v1607 = vshll.u32 %v1142, 16
        %v1609 = vrot.slane %v1607, 5
        %v1610 = vsel %vm1538, %v1605, %v1609
        %v1612 = vshrl.u32 %v1143, 16
        %v1614 = vrot.slane %v1612, 4
        %v1615 = vshll.u32 %v1143, 16
        %v1617 = vrot.slane %v1615, 5
        %v1618 = vor.u32 %v1614, %v1617
        %v1619 = vrot.slane %v1618, 4
        %v1621 = vshll.u32 %v1144, 16
        %v1623 = vrot.slane %v1621, 5
        %v1624 = vsel %vm1538, %v1619, %v1623
        %v1625 = vshrl.u32 %v1144, 16
        %v1627 = vrot.slane %v1625, 4
        %v1628 = vor.u32 %v1627, %v1623
        %v1629 = vrot.slane %v1628, 4
        %v1631 = vshll.u32 %v1145, 16
        %v1633 = vrot.slane %v1631, 5
        %v1634 = vsel %vm1538, %v1629, %v1633
        %v1636 = vshrl.u32 %v1146, 16
        %v1638 = vrot.slane %v1636, 4
        %v1639 = vshll.u32 %v1146, 16
        %v1641 = vrot.slane %v1639, 5
        %v1642 = vor.u32 %v1638, %v1641
        %v1643 = vrot.slane %v1642, 4
        %v1645 = vshll.u32 %v1147, 16
        %v1647 = vrot.slane %v1645, 5
        %v1648 = vsel %vm1538, %v1643, %v1647
        %v1649 = vshrl.u32 %v1147, 16
        %v1651 = vrot.slane %v1649, 4
        %v1652 = vor.u32 %v1651, %v1647
        %v1653 = vrot.slane %v1652, 4
        %v1655 = vshll.u32 %v1148, 16
        %v1657 = vrot.slane %v1655, 5
        %v1658 = vsel %vm1538, %v1653, %v1657
        %v1660 = vshrl.u32 %v1149, 16
        %v1662 = vrot.slane %v1660, 4
        %v1663 = vshll.u32 %v1149, 16
        %v1665 = vrot.slane %v1663, 5
        %v1666 = vor.u32 %v1662, %v1665
        %v1667 = vrot.slane %v1666, 4
        %v1669 = vshll.u32 %v1150, 16
        %v1671 = vrot.slane %v1669, 5
        %v1672 = vsel %vm1538, %v1667, %v1671
        %v1673 = vshrl.u32 %v1150, 16
        %v1675 = vrot.slane %v1673, 4
        %v1676 = vor.u32 %v1675, %v1671
        %v1677 = vrot.slane %v1676, 4
        %v1679 = vshll.u32 %v1151, 16
        %v1681 = vrot.slane %v1679, 5
        %v1682 = vsel %vm1538, %v1677, %v1681
        %v1684 = vshrl.u32 %v1152, 16
        %v1686 = vrot.slane %v1684, 4
        %v1687 = vshll.u32 %v1152, 16
        %v1689 = vrot.slane %v1687, 5
        %v1690 = vor.u32 %v1686, %v1689
        %v1691 = vrot.slane %v1690, 4
        %v1693 = vshll.u32 %v1153, 16
        %v1695 = vrot.slane %v1693, 5
        %v1696 = vsel %vm1538, %v1691, %v1695
        %v1697 = vshrl.u32 %v1153, 16
        %v1699 = vrot.slane %v1697, 4
        %v1700 = vor.u32 %v1699, %v1695
        %v1701 = vrot.slane %v1700, 4
        %v1703 = vshll.u32 %v1154, 16
        %v1705 = vrot.slane %v1703, 5
        %v1706 = vsel %vm1538, %v1701, %v1705
        %v1708 = vshrl.u32 %v1155, 16
        %v1710 = vrot.slane %v1708, 4
        %v1711 = vshll.u32 %v1155, 16
        %v1713 = vrot.slane %v1711, 5
        %v1714 = vor.u32 %v1710, %v1713
        %v1715 = vrot.slane %v1714, 4
        %v1717 = vshll.u32 %v1156, 16
        %v1719 = vrot.slane %v1717, 5
        %v1720 = vsel %vm1538, %v1715, %v1719
        %v1721 = vshrl.u32 %v1156, 16
        %v1723 = vrot.slane %v1721, 4
        %v1724 = vor.u32 %v1723, %v1719
        %v1725 = vrot.slane %v1724, 4
        %v1727 = vshll.u32 %v1157, 16
        %v1729 = vrot.slane %v1727, 5
        %v1730 = vsel %vm1538, %v1725, %v1729
        %vm1755 = vcmask 1042432
        %vm1756 = vcmask 1046532
        %vm1757 = vmor %vm1755, %vm1756
        %v1758 = vrot.slane %v1134, 5
        %v1759 = vrot.slane %v1758, 4
        %v1760 = vrot.slane %v1135, 5
        %v1761 = vsel %vm1757, %v1759, %v1760
        %v1762 = vrot.slane %v1760, 4
        %v1763 = vrot.slane %v1136, 5
        %v1764 = vsel %vm1757, %v1762, %v1763
        %v1765 = vrot.slane %v1137, 5
        %v1766 = vrot.slane %v1765, 4
        %v1767 = vrot.slane %v1138, 5
        %v1768 = vsel %vm1757, %v1766, %v1767
        %v1769 = vrot.slane %v1767, 4
        %v1770 = vrot.slane %v1139, 5
        %v1771 = vsel %vm1757, %v1769, %v1770
        %v1772 = vrot.slane %v1140, 5
        %v1773 = vrot.slane %v1772, 4
        %v1774 = vrot.slane %v1141, 5
        %v1775 = vsel %vm1757, %v1773, %v1774
        %v1776 = vrot.slane %v1774, 4
        %v1777 = vrot.slane %v1142, 5
        %v1778 = vsel %vm1757, %v1776, %v1777
        %v1779 = vrot.slane %v1143, 5
        %v1780 = vrot.slane %v1779, 4
        %v1781 = vrot.slane %v1144, 5
        %v1782 = vsel %vm1757, %v1780, %v1781
        %v1783 = vrot.slane %v1781, 4
        %v1784 = vrot.slane %v1145, 5
        %v1785 = vsel %vm1757, %v1783, %v1784
        %v1786 = vrot.slane %v1146, 5
        %v1787 = vrot.slane %v1786, 4
        %v1788 = vrot.slane %v1147, 5
        %v1789 = vsel %vm1757, %v1787, %v1788
        %v1790 = vrot.slane %v1788, 4
        %v1791 = vrot.slane %v1148, 5
        %v1792 = vsel %vm1757, %v1790, %v1791
        %v1793 = vrot.slane %v1149, 5
        %v1794 = vrot.slane %v1793, 4
        %v1795 = vrot.slane %v1150, 5
        %v1796 = vsel %vm1757, %v1794, %v1795
        %v1797 = vrot.slane %v1795, 4
        %v1798 = vrot.slane %v1151, 5
        %v1799 = vsel %vm1757, %v1797, %v1798
        %v1800 = vrot.slane %v1152, 5
        %v1801 = vrot.slane %v1800, 4
        %v1802 = vrot.slane %v1153, 5
        %v1803 = vsel %vm1757, %v1801, %v1802
        %v1804 = vrot.slane %v1802, 4
        %v1805 = vrot.slane %v1154, 5
        %v1806 = vsel %vm1757, %v1804, %v1805
        %v1807 = vrot.slane %v1155, 5
        %v1808 = vrot.slane %v1807, 4
        %v1809 = vrot.slane %v1156, 5
        %v1810 = vsel %vm1757, %v1808, %v1809
        %v1811 = vrot.slane %v1809, 4
        %v1812 = vrot.slane %v1157, 5
        %v1813 = vsel %vm1757, %v1811, %v1812
        %v1815 = vshrl.u32 %v1158, 16
        %v1817 = vrot.slane %v1815, 4
        %v1818 = vshll.u32 %v1158, 16
        %v1820 = vrot.slane %v1818, 5
        %v1821 = vor.u32 %v1817, %v1820
        %v1822 = vrot.slane %v1821, 4
        %v1824 = vshll.u32 %v1159, 16
        %v1826 = vrot.slane %v1824, 5
        %v1827 = vsel %vm1538, %v1822, %v1826
        %v1828 = vshrl.u32 %v1159, 16
        %v1830 = vrot.slane %v1828, 4
        %v1831 = vor.u32 %v1830, %v1826
        %v1832 = vrot.slane %v1831, 4
        %v1834 = vshll.u32 %v1160, 16
        %v1836 = vrot.slane %v1834, 5
        %v1837 = vsel %vm1538, %v1832, %v1836
        %v1841 = vrot.slane %v1158, 5
        %v1842 = vrot.slane %v1841, 4
        %v1843 = vrot.slane %v1159, 5
        %v1844 = vsel %vm1757, %v1842, %v1843
        %v1845 = vrot.slane %v1843, 4
        %v1846 = vrot.slane %v1160, 5
        %v1847 = vsel %vm1757, %v1845, %v1846
        %v1849 = vshrl.u32 %v1161, 16
        %v1851 = vrot.slane %v1849, 4
        %v1852 = vshll.u32 %v1161, 16
        %v1854 = vrot.slane %v1852, 5
        %v1855 = vor.u32 %v1851, %v1854
        %v1856 = vrot.slane %v1855, 4
        %v1858 = vshll.u32 %v1162, 16
        %v1860 = vrot.slane %v1858, 5
        %v1861 = vsel %vm1538, %v1856, %v1860
        %v1862 = vshrl.u32 %v1162, 16
        %v1864 = vrot.slane %v1862, 4
        %v1865 = vor.u32 %v1864, %v1860
        %v1866 = vrot.slane %v1865, 4
        %v1868 = vshll.u32 %v1163, 16
        %v1870 = vrot.slane %v1868, 5
        %v1871 = vsel %vm1538, %v1866, %v1870
        %v1875 = vrot.slane %v1161, 5
        %v1876 = vrot.slane %v1875, 4
        %v1877 = vrot.slane %v1162, 5
        %v1878 = vsel %vm1757, %v1876, %v1877
        %v1879 = vrot.slane %v1877, 4
        %v1880 = vrot.slane %v1163, 5
        %v1881 = vsel %vm1757, %v1879, %v1880
        %v1882 = vunpack.c.l.b16 %v1134
        %v1883 = vunpack.c.l.b16 %v1135
        %v1884 = vunpack.c.l.b16 %v1137
        %v1885 = vunpack.c.l.b16 %v1138
        %v1886 = vunpack.c.l.b16 %v1140
        %v1887 = vunpack.c.l.b16 %v1141
        %v1888 = vunpack.c.l.b16 %v1143
        %v1889 = vunpack.c.l.b16 %v1144
        %v1890 = vunpack.c.l.b16 %v1146
        %v1891 = vunpack.c.l.b16 %v1147
        %v1892 = vunpack.c.l.b16 %v1149
        %v1893 = vunpack.c.l.b16 %v1150
        %v1894 = vunpack.c.l.b16 %v1152
        %v1895 = vunpack.c.l.b16 %v1153
        %v1896 = vunpack.c.l.b16 %v1155
        %v1897 = vunpack.c.l.b16 %v1156
        %v1898 = vpack.c.b16 %v1883, %v1882
        %v1899 = vpack.c.b16 %v1885, %v1884
        %v1900 = vpack.c.b16 %v1887, %v1886
        %v1901 = vpack.c.b16 %v1889, %v1888
        %v1902 = vpack.c.b16 %v1891, %v1890
        %v1903 = vpack.c.b16 %v1893, %v1892
        %v1904 = vpack.c.b16 %v1895, %v1894
        %v1905 = vpack.c.b16 %v1897, %v1896
        %v1906 = vunpack.c.l.b16 %v1552
        %v1907 = vunpack.c.l.b16 %v1562
        %v1908 = vunpack.c.l.b16 %v1576
        %v1909 = vunpack.c.l.b16 %v1586
        %v1910 = vunpack.c.l.b16 %v1600
        %v1911 = vunpack.c.l.b16 %v1610
        %v1912 = vunpack.c.l.b16 %v1624
        %v1913 = vunpack.c.l.b16 %v1634
        %v1914 = vunpack.c.l.b16 %v1648
        %v1915 = vunpack.c.l.b16 %v1658
        %v1916 = vunpack.c.l.b16 %v1672
        %v1917 = vunpack.c.l.b16 %v1682
        %v1918 = vunpack.c.l.b16 %v1696
        %v1919 = vunpack.c.l.b16 %v1706
        %v1920 = vunpack.c.l.b16 %v1720
        %v1921 = vunpack.c.l.b16 %v1730
        %v1922 = vpack.c.b16 %v1907, %v1906
        %v1923 = vpack.c.b16 %v1909, %v1908
        %v1924 = vpack.c.b16 %v1911, %v1910
        %v1925 = vpack.c.b16 %v1913, %v1912
        %v1926 = vpack.c.b16 %v1915, %v1914
        %v1927 = vpack.c.b16 %v1917, %v1916
        %v1928 = vpack.c.b16 %v1919, %v1918
        %v1929 = vpack.c.b16 %v1921, %v1920
        %1930 = vrot.lane.b32.xlu0 %v1922, 4
        %v1931 = vpop.permute.xlu0 %1930
        %1932 = vrot.lane.b32.xlu0 %v1923, 4
        %v1933 = vpop.permute.xlu0 %1932
        %1934 = vrot.lane.b32.xlu0 %v1924, 4
        %v1935 = vpop.permute.xlu0 %1934
        %1936 = vrot.lane.b32.xlu0 %v1925, 4
        %v1937 = vpop.permute.xlu0 %1936
        %1938 = vrot.lane.b32.xlu0 %v1926, 4
        %v1939 = vpop.permute.xlu0 %1938
        %1940 = vrot.lane.b32.xlu0 %v1927, 4
        %v1941 = vpop.permute.xlu0 %1940
        %1942 = vrot.lane.b32.xlu0 %v1928, 4
        %v1943 = vpop.permute.xlu0 %1942
        %1944 = vrot.lane.b32.xlu0 %v1929, 4
        %v1945 = vpop.permute.xlu0 %1944
        %v1946 = vunpack.c.l.b16 %v1761
        %v1947 = vunpack.c.l.b16 %v1764
        %v1948 = vunpack.c.l.b16 %v1768
        %v1949 = vunpack.c.l.b16 %v1771
        %v1950 = vunpack.c.l.b16 %v1775
        %v1951 = vunpack.c.l.b16 %v1778
        %v1952 = vunpack.c.l.b16 %v1782
        %v1953 = vunpack.c.l.b16 %v1785
        %v1954 = vunpack.c.l.b16 %v1789
        %v1955 = vunpack.c.l.b16 %v1792
        %v1956 = vunpack.c.l.b16 %v1796
        %v1957 = vunpack.c.l.b16 %v1799
        %v1958 = vunpack.c.l.b16 %v1803
        %v1959 = vunpack.c.l.b16 %v1806
        %v1960 = vunpack.c.l.b16 %v1810
        %v1961 = vunpack.c.l.b16 %v1813
        %v1962 = vpack.c.b16 %v1947, %v1946
        %v1963 = vpack.c.b16 %v1949, %v1948
        %v1964 = vpack.c.b16 %v1951, %v1950
        %v1965 = vpack.c.b16 %v1953, %v1952
        %v1966 = vpack.c.b16 %v1955, %v1954
        %v1967 = vpack.c.b16 %v1957, %v1956
        %v1968 = vpack.c.b16 %v1959, %v1958
        %v1969 = vpack.c.b16 %v1961, %v1960
        %1970 = vrot.lane.b32.xlu0 %v1962, 8
        %v1971 = vpop.permute.xlu0 %1970
        %1972 = vrot.lane.b32.xlu0 %v1963, 8
        %v1973 = vpop.permute.xlu0 %1972
        %1974 = vrot.lane.b32.xlu0 %v1964, 8
        %v1975 = vpop.permute.xlu0 %1974
        %1976 = vrot.lane.b32.xlu0 %v1965, 8
        %v1977 = vpop.permute.xlu0 %1976
        %1978 = vrot.lane.b32.xlu0 %v1966, 8
        %v1979 = vpop.permute.xlu0 %1978
        %1980 = vrot.lane.b32.xlu0 %v1967, 8
        %v1981 = vpop.permute.xlu0 %1980
        %1982 = vrot.lane.b32.xlu0 %v1968, 8
        %v1983 = vpop.permute.xlu0 %1982
        %1984 = vrot.lane.b32.xlu0 %v1969, 8
        %v1985 = vpop.permute.xlu0 %1984
        %v1986 = vunpack.c.l.b16 %v1158
        %v1987 = vunpack.c.l.b16 %v1159
        %v1988 = vpack.c.b16 %v1987, %v1986
        %1989 = vrot.lane.b32.xlu0 %v1899, 12
        %v1990 = vpop.permute.xlu0 %1989
        %1991 = vrot.lane.b32.xlu0 %v1900, 12
        %v1992 = vpop.permute.xlu0 %1991
        %1993 = vrot.lane.b32.xlu0 %v1901, 12
        %v1994 = vpop.permute.xlu0 %1993
        %1995 = vrot.lane.b32.xlu0 %v1902, 12
        %v1996 = vpop.permute.xlu0 %1995
        %1997 = vrot.lane.b32.xlu0 %v1903, 12
        %v1998 = vpop.permute.xlu0 %1997
        %1999 = vrot.lane.b32.xlu0 %v1904, 12
        %v2000 = vpop.permute.xlu0 %1999
        %2001 = vrot.lane.b32.xlu0 %v1905, 12
        %v2002 = vpop.permute.xlu0 %2001
        %2003 = vrot.lane.b32.xlu0 %v1988, 12
        %v2004 = vpop.permute.xlu0 %2003
        %v2005 = vunpack.c.l.b16 %v1827
        %v2006 = vunpack.c.l.b16 %v1837
        %v2007 = vpack.c.b16 %v2006, %v2005
        %2008 = vrot.lane.b32.xlu0 %v1923, 16
        %v2009 = vpop.permute.xlu0 %2008
        %2010 = vrot.lane.b32.xlu0 %v1924, 16
        %v2011 = vpop.permute.xlu0 %2010
        %2012 = vrot.lane.b32.xlu0 %v1925, 16
        %v2013 = vpop.permute.xlu0 %2012
        %2014 = vrot.lane.b32.xlu0 %v1926, 16
        %v2015 = vpop.permute.xlu0 %2014
        %2016 = vrot.lane.b32.xlu0 %v1927, 16
        %v2017 = vpop.permute.xlu0 %2016
        %2018 = vrot.lane.b32.xlu0 %v1928, 16
        %v2019 = vpop.permute.xlu0 %2018
        %2020 = vrot.lane.b32.xlu0 %v1929, 16
        %v2021 = vpop.permute.xlu0 %2020
        %2022 = vrot.lane.b32.xlu0 %v2007, 16
        %v2023 = vpop.permute.xlu0 %2022
        %v2024 = vunpack.c.l.b16 %v1844
        %v2025 = vunpack.c.l.b16 %v1847
        %v2026 = vpack.c.b16 %v2025, %v2024
        %2027 = vrot.lane.b32.xlu0 %v1963, 20
        %v2028 = vpop.permute.xlu0 %2027
        %2029 = vrot.lane.b32.xlu0 %v1964, 20
        %v2030 = vpop.permute.xlu0 %2029
        %2031 = vrot.lane.b32.xlu0 %v1965, 20
        %v2032 = vpop.permute.xlu0 %2031
        %2033 = vrot.lane.b32.xlu0 %v1966, 20
        %v2034 = vpop.permute.xlu0 %2033
        %2035 = vrot.lane.b32.xlu0 %v1967, 20
        %v2036 = vpop.permute.xlu0 %2035
        %2037 = vrot.lane.b32.xlu0 %v1968, 20
        %v2038 = vpop.permute.xlu0 %2037
        %2039 = vrot.lane.b32.xlu0 %v1969, 20
        %v2040 = vpop.permute.xlu0 %2039
        %2041 = vrot.lane.b32.xlu0 %v2026, 20
        %v2042 = vpop.permute.xlu0 %2041
        %v2043 = vunpack.c.l.b16 %v1161
        %v2044 = vunpack.c.l.b16 %v1162
        %v2045 = vpack.c.b16 %v2044, %v2043
        %2046 = vrot.lane.b32.xlu0 %v1900, 24
        %v2047 = vpop.permute.xlu0 %2046
        %2048 = vrot.lane.b32.xlu0 %v1901, 24
        %v2049 = vpop.permute.xlu0 %2048
        %2050 = vrot.lane.b32.xlu0 %v1902, 24
        %v2051 = vpop.permute.xlu0 %2050
        %2052 = vrot.lane.b32.xlu0 %v1903, 24
        %v2053 = vpop.permute.xlu0 %2052
        %2054 = vrot.lane.b32.xlu0 %v1904, 24
        %v2055 = vpop.permute.xlu0 %2054
        %2056 = vrot.lane.b32.xlu0 %v1905, 24
        %v2057 = vpop.permute.xlu0 %2056
        %2058 = vrot.lane.b32.xlu0 %v1988, 24
        %v2059 = vpop.permute.xlu0 %2058
        %2060 = vrot.lane.b32.xlu0 %v2045, 24
        %v2061 = vpop.permute.xlu0 %2060
        %v2062 = vunpack.c.l.b16 %v1861
        %v2063 = vunpack.c.l.b16 %v1871
        %v2064 = vpack.c.b16 %v2063, %v2062
        %2065 = vrot.lane.b32.xlu0 %v1924, 28
        %v2066 = vpop.permute.xlu0 %2065
        %2067 = vrot.lane.b32.xlu0 %v1925, 28
        %v2068 = vpop.permute.xlu0 %2067
        %2069 = vrot.lane.b32.xlu0 %v1926, 28
        %v2070 = vpop.permute.xlu0 %2069
        %2071 = vrot.lane.b32.xlu0 %v1927, 28
        %v2072 = vpop.permute.xlu0 %2071
        %2073 = vrot.lane.b32.xlu0 %v1928, 28
        %v2074 = vpop.permute.xlu0 %2073
        %2075 = vrot.lane.b32.xlu0 %v1929, 28
        %v2076 = vpop.permute.xlu0 %2075
        %2077 = vrot.lane.b32.xlu0 %v2007, 28
        %v2078 = vpop.permute.xlu0 %2077
        %2079 = vrot.lane.b32.xlu0 %v2064, 28
        %v2080 = vpop.permute.xlu0 %2079
        %v2081 = vunpack.c.l.b16 %v1878
        %v2082 = vunpack.c.l.b16 %v1881
        %v2083 = vpack.c.b16 %v2082, %v2081
        %2084 = vrot.lane.b32.xlu0 %v1964, 32
        %v2085 = vpop.permute.xlu0 %2084
        %2086 = vrot.lane.b32.xlu0 %v1965, 32
        %v2087 = vpop.permute.xlu0 %2086
        %2088 = vrot.lane.b32.xlu0 %v1966, 32
        %v2089 = vpop.permute.xlu0 %2088
        %2090 = vrot.lane.b32.xlu0 %v1967, 32
        %v2091 = vpop.permute.xlu0 %2090
        %2092 = vrot.lane.b32.xlu0 %v1968, 32
        %v2093 = vpop.permute.xlu0 %2092
        %2094 = vrot.lane.b32.xlu0 %v1969, 32
        %v2095 = vpop.permute.xlu0 %2094
        %2096 = vrot.lane.b32.xlu0 %v2026, 32
        %v2097 = vpop.permute.xlu0 %2096
        %2098 = vrot.lane.b32.xlu0 %v2083, 32
        %v2099 = vpop.permute.xlu0 %2098
        %vm2100 = vcmask 31744
        %v2103 = vsel %vm2100, %v1898, %v1931
        %v2106 = vsel %vm2100, %v1899, %v1933
        %v2109 = vsel %vm2100, %v1900, %v1935
        %v2112 = vsel %vm2100, %v1901, %v1937
        %v2115 = vsel %vm2100, %v1902, %v1939
        %v2118 = vsel %vm2100, %v1903, %v1941
        %v2121 = vsel %vm2100, %v1904, %v1943
        %v2124 = vsel %vm2100, %v1905, %v1945
        %vm2125 = vcmask 64512
        %v2127 = vsel %vm2125, %v2103, %v1971
        %v2129 = vsel %vm2125, %v2106, %v1973
        %v2131 = vsel %vm2125, %v2109, %v1975
        %v2133 = vsel %vm2125, %v2112, %v1977
        %v2135 = vsel %vm2125, %v2115, %v1979
        %v2137 = vsel %vm2125, %v2118, %v1981
        %v2139 = vsel %vm2125, %v2121, %v1983
        %v2141 = vsel %vm2125, %v2124, %v1985
        %vm2142 = vcmask 97280
        %v2144 = vsel %vm2142, %v2127, %v1990
        %v2146 = vsel %vm2142, %v2129, %v1992
        %v2148 = vsel %vm2142, %v2131, %v1994
        %v2150 = vsel %vm2142, %v2133, %v1996
        %v2152 = vsel %vm2142, %v2135, %v1998
        %v2154 = vsel %vm2142, %v2137, %v2000
        %v2156 = vsel %vm2142, %v2139, %v2002
        %v2158 = vsel %vm2142, %v2141, %v2004
        %vm2159 = vcmask 130048
        %v2161 = vsel %vm2159, %v2144, %v2009
        %v2163 = vsel %vm2159, %v2146, %v2011
        %v2165 = vsel %vm2159, %v2148, %v2013
        %v2167 = vsel %vm2159, %v2150, %v2015
        %v2169 = vsel %vm2159, %v2152, %v2017
        %v2171 = vsel %vm2159, %v2154, %v2019
        %v2173 = vsel %vm2159, %v2156, %v2021
        %v2175 = vsel %vm2159, %v2158, %v2023
        %vm2176 = vcmask 162816
        %v2178 = vsel %vm2176, %v2161, %v2028
        %v2180 = vsel %vm2176, %v2163, %v2030
        %v2182 = vsel %vm2176, %v2165, %v2032
        %v2184 = vsel %vm2176, %v2167, %v2034
        %v2186 = vsel %vm2176, %v2169, %v2036
        %v2188 = vsel %vm2176, %v2171, %v2038
        %v2190 = vsel %vm2176, %v2173, %v2040
        %v2192 = vsel %vm2176, %v2175, %v2042
        %vm2193 = vcmask 195584
        %v2195 = vsel %vm2193, %v2178, %v2047
        %v2197 = vsel %vm2193, %v2180, %v2049
        %v2199 = vsel %vm2193, %v2182, %v2051
        %v2201 = vsel %vm2193, %v2184, %v2053
        %v2203 = vsel %vm2193, %v2186, %v2055
        %v2205 = vsel %vm2193, %v2188, %v2057
        %v2207 = vsel %vm2193, %v2190, %v2059
        %v2209 = vsel %vm2193, %v2192, %v2061
        %vm2210 = vcmask 228352
        %v2212 = vsel %vm2210, %v2195, %v2066
        %v2214 = vsel %vm2210, %v2197, %v2068
        %v2216 = vsel %vm2210, %v2199, %v2070
        %v2218 = vsel %vm2210, %v2201, %v2072
        %v2220 = vsel %vm2210, %v2203, %v2074
        %v2222 = vsel %vm2210, %v2205, %v2076
        %v2224 = vsel %vm2210, %v2207, %v2078
        %v2226 = vsel %vm2210, %v2209, %v2080
        %vm2227 = vcmask 261120
        %v2229 = vsel %vm2227, %v2212, %v2085
        %v2231 = vsel %vm2227, %v2214, %v2087
        %v2233 = vsel %vm2227, %v2216, %v2089
        %v2235 = vsel %vm2227, %v2218, %v2091
        %v2237 = vsel %vm2227, %v2220, %v2093
        %v2239 = vsel %vm2227, %v2222, %v2095
        %v2241 = vsel %vm2227, %v2224, %v2097
        %v2243 = vsel %vm2227, %v2226, %v2099
        %v2244 = vld [vmem:[#allocation15] sm:$0xf]
        %v2245 = vld [vmem:[#allocation15 + $0x4] sm:$0xf]
        %v2246 = vld [vmem:[#allocation15 + $0x8] sm:$0xf]
        %v2247 = vld [vmem:[#allocation15 + $0xc] sm:$0xf]
        %v2248 = vld [vmem:[#allocation15 + $0x10] sm:$0x3]
        %v2250 = vshrl.u32 %v1506, 16
        %v2252 = vrot.slane %v2250, 4
        %v2253 = vshll.u32 %v1506, 16
        %v2255 = vrot.slane %v2253, 5
        %v2256 = vor.u32 %v2252, %v2255
        %v2257 = vrot.slane %v2256, 4
        %v2259 = vshll.u32 %v1507, 16
        %v2261 = vrot.slane %v2259, 5
        %v2262 = vsel %vm1538, %v2257, %v2261
        %v2263 = vshrl.u32 %v1507, 16
        %v2265 = vrot.slane %v2263, 4
        %v2266 = vor.u32 %v2265, %v2261
        %v2267 = vrot.slane %v2266, 4
        %v2269 = vshll.u32 %v1508, 16
        %v2271 = vrot.slane %v2269, 5
        %v2272 = vsel %vm1538, %v2267, %v2271
        %v2274 = vshrl.u32 %v1509, 16
        %v2276 = vrot.slane %v2274, 4
        %v2277 = vshll.u32 %v1509, 16
        %v2279 = vrot.slane %v2277, 5
        %v2280 = vor.u32 %v2276, %v2279
        %v2281 = vrot.slane %v2280, 4
        %v2283 = vshll.u32 %v1510, 16
        %v2285 = vrot.slane %v2283, 5
        %v2286 = vsel %vm1538, %v2281, %v2285
        %v2287 = vshrl.u32 %v1510, 16
        %v2289 = vrot.slane %v2287, 4
        %v2290 = vor.u32 %v2289, %v2285
        %v2291 = vrot.slane %v2290, 4
        %v2293 = vshll.u32 %v1511, 16
        %v2295 = vrot.slane %v2293, 5
        %v2296 = vsel %vm1538, %v2291, %v2295
        %v2298 = vshrl.u32 %v1512, 16
        %v2300 = vrot.slane %v2298, 4
        %v2301 = vshll.u32 %v1512, 16
        %v2303 = vrot.slane %v2301, 5
        %v2304 = vor.u32 %v2300, %v2303
        %v2305 = vrot.slane %v2304, 4
        %v2307 = vshll.u32 %v1513, 16
        %v2309 = vrot.slane %v2307, 5
        %v2310 = vsel %vm1538, %v2305, %v2309
        %v2311 = vshrl.u32 %v1513, 16
        %v2313 = vrot.slane %v2311, 4
        %v2314 = vor.u32 %v2313, %v2309
        %v2315 = vrot.slane %v2314, 4
        %v2317 = vshll.u32 %v1514, 16
        %v2319 = vrot.slane %v2317, 5
        %v2320 = vsel %vm1538, %v2315, %v2319
        %v2322 = vshrl.u32 %v1515, 16
        %v2324 = vrot.slane %v2322, 4
        %v2325 = vshll.u32 %v1515, 16
        %v2327 = vrot.slane %v2325, 5
        %v2328 = vor.u32 %v2324, %v2327
        %v2329 = vrot.slane %v2328, 4
        %v2331 = vshll.u32 %v1516, 16
        %v2333 = vrot.slane %v2331, 5
        %v2334 = vsel %vm1538, %v2329, %v2333
        %v2335 = vshrl.u32 %v1516, 16
        %v2337 = vrot.slane %v2335, 4
        %v2338 = vor.u32 %v2337, %v2333
        %v2339 = vrot.slane %v2338, 4
        %v2341 = vshll.u32 %v1517, 16
        %v2343 = vrot.slane %v2341, 5
        %v2344 = vsel %vm1538, %v2339, %v2343
        %v2346 = vshrl.u32 %v1518, 16
        %v2348 = vrot.slane %v2346, 4
        %v2349 = vshll.u32 %v1518, 16
        %v2351 = vrot.slane %v2349, 5
        %v2352 = vor.u32 %v2348, %v2351
        %v2353 = vrot.slane %v2352, 4
        %v2355 = vshll.u32 %v1519, 16
        %v2357 = vrot.slane %v2355, 5
        %v2358 = vsel %vm1538, %v2353, %v2357
        %v2359 = vshrl.u32 %v1519, 16
        %v2361 = vrot.slane %v2359, 4
        %v2362 = vor.u32 %v2361, %v2357
        %v2363 = vrot.slane %v2362, 4
        %v2365 = vshll.u32 %v1520, 16
        %v2367 = vrot.slane %v2365, 5
        %v2368 = vsel %vm1538, %v2363, %v2367
        %v2370 = vshrl.u32 %v1521, 16
        %v2372 = vrot.slane %v2370, 4
        %v2373 = vshll.u32 %v1521, 16
        %v2375 = vrot.slane %v2373, 5
        %v2376 = vor.u32 %v2372, %v2375
        %v2377 = vrot.slane %v2376, 4
        %v2379 = vshll.u32 %v1522, 16
        %v2381 = vrot.slane %v2379, 5
        %v2382 = vsel %vm1538, %v2377, %v2381
        %v2383 = vshrl.u32 %v1522, 16
        %v2385 = vrot.slane %v2383, 4
        %v2386 = vor.u32 %v2385, %v2381
        %v2387 = vrot.slane %v2386, 4
        %v2389 = vshll.u32 %v1523, 16
        %v2391 = vrot.slane %v2389, 5
        %v2392 = vsel %vm1538, %v2387, %v2391
        %v2394 = vshrl.u32 %v1524, 16
        %v2396 = vrot.slane %v2394, 4
        %v2397 = vshll.u32 %v1524, 16
        %v2399 = vrot.slane %v2397, 5
        %v2400 = vor.u32 %v2396, %v2399
        %v2401 = vrot.slane %v2400, 4
        %v2403 = vshll.u32 %v1525, 16
        %v2405 = vrot.slane %v2403, 5
        %v2406 = vsel %vm1538, %v2401, %v2405
        %v2407 = vshrl.u32 %v1525, 16
        %v2409 = vrot.slane %v2407, 4
        %v2410 = vor.u32 %v2409, %v2405
        %v2411 = vrot.slane %v2410, 4
        %v2413 = vshll.u32 %v1526, 16
        %v2415 = vrot.slane %v2413, 5
        %v2416 = vsel %vm1538, %v2411, %v2415
        %v2418 = vshrl.u32 %v1527, 16
        %v2420 = vrot.slane %v2418, 4
        %v2421 = vshll.u32 %v1527, 16
        %v2423 = vrot.slane %v2421, 5
        %v2424 = vor.u32 %v2420, %v2423
        %v2425 = vrot.slane %v2424, 4
        %v2427 = vshll.u32 %v1528, 16
        %v2429 = vrot.slane %v2427, 5
        %v2430 = vsel %vm1538, %v2425, %v2429
        %v2431 = vshrl.u32 %v1528, 16
        %v2433 = vrot.slane %v2431, 4
        %v2434 = vor.u32 %v2433, %v2429
        %v2435 = vrot.slane %v2434, 4
        %v2437 = vshll.u32 %v1529, 16
        %v2439 = vrot.slane %v2437, 5
        %v2440 = vsel %vm1538, %v2435, %v2439
        %v2465 = vrot.slane %v1506, 5
        %v2466 = vrot.slane %v2465, 4
        %v2467 = vrot.slane %v1507, 5
        %v2468 = vsel %vm1757, %v2466, %v2467
        %v2469 = vrot.slane %v2467, 4
        %v2470 = vrot.slane %v1508, 5
        %v2471 = vsel %vm1757, %v2469, %v2470
        %v2472 = vrot.slane %v1509, 5
        %v2473 = vrot.slane %v2472, 4
        %v2474 = vrot.slane %v1510, 5
        %v2475 = vsel %vm1757, %v2473, %v2474
        %v2476 = vrot.slane %v2474, 4
        %v2477 = vrot.slane %v1511, 5
        %v2478 = vsel %vm1757, %v2476, %v2477
        %v2479 = vrot.slane %v1512, 5
        %v2480 = vrot.slane %v2479, 4
        %v2481 = vrot.slane %v1513, 5
        %v2482 = vsel %vm1757, %v2480, %v2481
        %v2483 = vrot.slane %v2481, 4
        %v2484 = vrot.slane %v1514, 5
        %v2485 = vsel %vm1757, %v2483, %v2484
        %v2486 = vrot.slane %v1515, 5
        %v2487 = vrot.slane %v2486, 4
        %v2488 = vrot.slane %v1516, 5
        %v2489 = vsel %vm1757, %v2487, %v2488
        %v2490 = vrot.slane %v2488, 4
        %v2491 = vrot.slane %v1517, 5
        %v2492 = vsel %vm1757, %v2490, %v2491
        %v2493 = vrot.slane %v1518, 5
        %v2494 = vrot.slane %v2493, 4
        %v2495 = vrot.slane %v1519, 5
        %v2496 = vsel %vm1757, %v2494, %v2495
        %v2497 = vrot.slane %v2495, 4
        %v2498 = vrot.slane %v1520, 5
        %v2499 = vsel %vm1757, %v2497, %v2498
        %v2500 = vrot.slane %v1521, 5
        %v2501 = vrot.slane %v2500, 4
        %v2502 = vrot.slane %v1522, 5
        %v2503 = vsel %vm1757, %v2501, %v2502
        %v2504 = vrot.slane %v2502, 4
        %v2505 = vrot.slane %v1523, 5
        %v2506 = vsel %vm1757, %v2504, %v2505
        %v2507 = vrot.slane %v1524, 5
        %v2508 = vrot.slane %v2507, 4
        %v2509 = vrot.slane %v1525, 5
        %v2510 = vsel %vm1757, %v2508, %v2509
        %v2511 = vrot.slane %v2509, 4
        %v2512 = vrot.slane %v1526, 5
        %v2513 = vsel %vm1757, %v2511, %v2512
        %v2514 = vrot.slane %v1527, 5
        %v2515 = vrot.slane %v2514, 4
        %v2516 = vrot.slane %v1528, 5
        %v2517 = vsel %vm1757, %v2515, %v2516
        %v2518 = vrot.slane %v2516, 4
        %v2519 = vrot.slane %v1529, 5
        %v2520 = vsel %vm1757, %v2518, %v2519
        %v2522 = vshrl.u32 %v1530, 16
        %v2524 = vrot.slane %v2522, 4
        %v2525 = vshll.u32 %v1530, 16
        %v2527 = vrot.slane %v2525, 5
        %v2528 = vor.u32 %v2524, %v2527
        %v2529 = vrot.slane %v2528, 4
        %v2531 = vshll.u32 %v1531, 16
        %v2533 = vrot.slane %v2531, 5
        %v2534 = vsel %vm1538, %v2529, %v2533
        %v2535 = vshrl.u32 %v1531, 16
        %v2537 = vrot.slane %v2535, 4
        %v2538 = vor.u32 %v2537, %v2533
        %v2539 = vrot.slane %v2538, 4
        %v2541 = vshll.u32 %v1532, 16
        %v2543 = vrot.slane %v2541, 5
        %v2544 = vsel %vm1538, %v2539, %v2543
        %v2548 = vrot.slane %v1530, 5
        %v2549 = vrot.slane %v2548, 4
        %v2550 = vrot.slane %v1531, 5
        %v2551 = vsel %vm1757, %v2549, %v2550
        %v2552 = vrot.slane %v2550, 4
        %v2553 = vrot.slane %v1532, 5
        %v2554 = vsel %vm1757, %v2552, %v2553
        %v2556 = vshrl.u32 %v1533, 16
        %v2558 = vrot.slane %v2556, 4
        %v2559 = vshll.u32 %v1533, 16
        %v2561 = vrot.slane %v2559, 5
        %v2562 = vor.u32 %v2558, %v2561
        %v2563 = vrot.slane %v2562, 4
        %v2565 = vshll.u32 %v1534, 16
        %v2567 = vrot.slane %v2565, 5
        %v2568 = vsel %vm1538, %v2563, %v2567
        %v2569 = vshrl.u32 %v1534, 16
        %v2571 = vrot.slane %v2569, 4
        %v2572 = vor.u32 %v2571, %v2567
        %v2573 = vrot.slane %v2572, 4
        %v2575 = vshll.u32 %v1535, 16
        %v2577 = vrot.slane %v2575, 5
        %v2578 = vsel %vm1538, %v2573, %v2577
        %v2582 = vrot.slane %v1533, 5
        %v2583 = vrot.slane %v2582, 4
        %v2584 = vrot.slane %v1534, 5
        %v2585 = vsel %vm1757, %v2583, %v2584
        %v2586 = vrot.slane %v2584, 4
        %v2587 = vrot.slane %v1535, 5
        %v2588 = vsel %vm1757, %v2586, %v2587
        %v2589 = vunpack.c.l.b16 %v1506
        %v2590 = vunpack.c.l.b16 %v1507
        %v2591 = vunpack.c.l.b16 %v1509
        %v2592 = vunpack.c.l.b16 %v1510
        %v2593 = vunpack.c.l.b16 %v1512
        %v2594 = vunpack.c.l.b16 %v1513
        %v2595 = vunpack.c.l.b16 %v1515
        %v2596 = vunpack.c.l.b16 %v1516
        %v2597 = vunpack.c.l.b16 %v1518
        %v2598 = vunpack.c.l.b16 %v1519
        %v2599 = vunpack.c.l.b16 %v1521
        %v2600 = vunpack.c.l.b16 %v1522
        %v2601 = vunpack.c.l.b16 %v1524
        %v2602 = vunpack.c.l.b16 %v1525
        %v2603 = vunpack.c.l.b16 %v1527
        %v2604 = vunpack.c.l.b16 %v1528
        %v2605 = vpack.c.b16 %v2590, %v2589
        %v2606 = vpack.c.b16 %v2592, %v2591
        %v2607 = vpack.c.b16 %v2594, %v2593
        %v2608 = vpack.c.b16 %v2596, %v2595
        %v2609 = vpack.c.b16 %v2598, %v2597
        %v2610 = vpack.c.b16 %v2600, %v2599
        %v2611 = vpack.c.b16 %v2602, %v2601
        %v2612 = vpack.c.b16 %v2604, %v2603
        %v2613 = vunpack.c.l.b16 %v2262
        %v2614 = vunpack.c.l.b16 %v2272
        %v2615 = vunpack.c.l.b16 %v2286
        %v2616 = vunpack.c.l.b16 %v2296
        %v2617 = vunpack.c.l.b16 %v2310
        %v2618 = vunpack.c.l.b16 %v2320
        %v2619 = vunpack.c.l.b16 %v2334
        %v2620 = vunpack.c.l.b16 %v2344
        %v2621 = vunpack.c.l.b16 %v2358
        %v2622 = vunpack.c.l.b16 %v2368
        %v2623 = vunpack.c.l.b16 %v2382
        %v2624 = vunpack.c.l.b16 %v2392
        %v2625 = vunpack.c.l.b16 %v2406
        %v2626 = vunpack.c.l.b16 %v2416
        %v2627 = vunpack.c.l.b16 %v2430
        %v2628 = vunpack.c.l.b16 %v2440
        %v2629 = vpack.c.b16 %v2614, %v2613
        %v2630 = vpack.c.b16 %v2616, %v2615
        %v2631 = vpack.c.b16 %v2618, %v2617
        %v2632 = vpack.c.b16 %v2620, %v2619
        %v2633 = vpack.c.b16 %v2622, %v2621
        %v2634 = vpack.c.b16 %v2624, %v2623
        %v2635 = vpack.c.b16 %v2626, %v2625
        %v2636 = vpack.c.b16 %v2628, %v2627
        %2637 = vrot.lane.b32.xlu0 %v2629, 4
        %v2638 = vpop.permute.xlu0 %2637
        %2639 = vrot.lane.b32.xlu0 %v2630, 4
        %v2640 = vpop.permute.xlu0 %2639
        %2641 = vrot.lane.b32.xlu0 %v2631, 4
        %v2642 = vpop.permute.xlu0 %2641
        %2643 = vrot.lane.b32.xlu0 %v2632, 4
        %v2644 = vpop.permute.xlu0 %2643
        %2645 = vrot.lane.b32.xlu0 %v2633, 4
        %v2646 = vpop.permute.xlu0 %2645
        %2647 = vrot.lane.b32.xlu0 %v2634, 4
        %v2648 = vpop.permute.xlu0 %2647
        %2649 = vrot.lane.b32.xlu0 %v2635, 4
        %v2650 = vpop.permute.xlu0 %2649
        %2651 = vrot.lane.b32.xlu0 %v2636, 4
        %v2652 = vpop.permute.xlu0 %2651
        %v2653 = vunpack.c.l.b16 %v2468
        %v2654 = vunpack.c.l.b16 %v2471
        %v2655 = vunpack.c.l.b16 %v2475
        %v2656 = vunpack.c.l.b16 %v2478
        %v2657 = vunpack.c.l.b16 %v2482
        %v2658 = vunpack.c.l.b16 %v2485
        %v2659 = vunpack.c.l.b16 %v2489
        %v2660 = vunpack.c.l.b16 %v2492
        %v2661 = vunpack.c.l.b16 %v2496
        %v2662 = vunpack.c.l.b16 %v2499
        %v2663 = vunpack.c.l.b16 %v2503
        %v2664 = vunpack.c.l.b16 %v2506
        %v2665 = vunpack.c.l.b16 %v2510
        %v2666 = vunpack.c.l.b16 %v2513
        %v2667 = vunpack.c.l.b16 %v2517
        %v2668 = vunpack.c.l.b16 %v2520
        %v2669 = vpack.c.b16 %v2654, %v2653
        %v2670 = vpack.c.b16 %v2656, %v2655
        %v2671 = vpack.c.b16 %v2658, %v2657
        %v2672 = vpack.c.b16 %v2660, %v2659
        %v2673 = vpack.c.b16 %v2662, %v2661
        %v2674 = vpack.c.b16 %v2664, %v2663
        %v2675 = vpack.c.b16 %v2666, %v2665
        %v2676 = vpack.c.b16 %v2668, %v2667
        %2677 = vrot.lane.b32.xlu0 %v2669, 8
        %v2678 = vpop.permute.xlu0 %2677
        %2679 = vrot.lane.b32.xlu0 %v2670, 8
        %v2680 = vpop.permute.xlu0 %2679
        %2681 = vrot.lane.b32.xlu0 %v2671, 8
        %v2682 = vpop.permute.xlu0 %2681
        %2683 = vrot.lane.b32.xlu0 %v2672, 8
        %v2684 = vpop.permute.xlu0 %2683
        %2685 = vrot.lane.b32.xlu0 %v2673, 8
        %v2686 = vpop.permute.xlu0 %2685
        %2687 = vrot.lane.b32.xlu0 %v2674, 8
        %v2688 = vpop.permute.xlu0 %2687
        %2689 = vrot.lane.b32.xlu0 %v2675, 8
        %v2690 = vpop.permute.xlu0 %2689
        %2691 = vrot.lane.b32.xlu0 %v2676, 8
        %v2692 = vpop.permute.xlu0 %2691
        %v2693 = vunpack.c.l.b16 %v1530
        %v2694 = vunpack.c.l.b16 %v1531
        %v2695 = vpack.c.b16 %v2694, %v2693
        %2696 = vrot.lane.b32.xlu0 %v2606, 12
        %v2697 = vpop.permute.xlu0 %2696
        %2698 = vrot.lane.b32.xlu0 %v2607, 12
        %v2699 = vpop.permute.xlu0 %2698
        %2700 = vrot.lane.b32.xlu0 %v2608, 12
        %v2701 = vpop.permute.xlu0 %2700
        %2702 = vrot.lane.b32.xlu0 %v2609, 12
        %v2703 = vpop.permute.xlu0 %2702
        %2704 = vrot.lane.b32.xlu0 %v2610, 12
        %v2705 = vpop.permute.xlu0 %2704
        %2706 = vrot.lane.b32.xlu0 %v2611, 12
        %v2707 = vpop.permute.xlu0 %2706
        %2708 = vrot.lane.b32.xlu0 %v2612, 12
        %v2709 = vpop.permute.xlu0 %2708
        %2710 = vrot.lane.b32.xlu0 %v2695, 12
        %v2711 = vpop.permute.xlu0 %2710
        %v2712 = vunpack.c.l.b16 %v2534
        %v2713 = vunpack.c.l.b16 %v2544
        %v2714 = vpack.c.b16 %v2713, %v2712
        %2715 = vrot.lane.b32.xlu0 %v2630, 16
        %v2716 = vpop.permute.xlu0 %2715
        %2717 = vrot.lane.b32.xlu0 %v2631, 16
        %v2718 = vpop.permute.xlu0 %2717
        %2719 = vrot.lane.b32.xlu0 %v2632, 16
        %v2720 = vpop.permute.xlu0 %2719
        %2721 = vrot.lane.b32.xlu0 %v2633, 16
        %v2722 = vpop.permute.xlu0 %2721
        %2723 = vrot.lane.b32.xlu0 %v2634, 16
        %v2724 = vpop.permute.xlu0 %2723
        %2725 = vrot.lane.b32.xlu0 %v2635, 16
        %v2726 = vpop.permute.xlu0 %2725
        %2727 = vrot.lane.b32.xlu0 %v2636, 16
        %v2728 = vpop.permute.xlu0 %2727
        %2729 = vrot.lane.b32.xlu0 %v2714, 16
        %v2730 = vpop.permute.xlu0 %2729
        %v2731 = vunpack.c.l.b16 %v2551
        %v2732 = vunpack.c.l.b16 %v2554
        %v2733 = vpack.c.b16 %v2732, %v2731
        %2734 = vrot.lane.b32.xlu0 %v2670, 20
        %v2735 = vpop.permute.xlu0 %2734
        %2736 = vrot.lane.b32.xlu0 %v2671, 20
        %v2737 = vpop.permute.xlu0 %2736
        %2738 = vrot.lane.b32.xlu0 %v2672, 20
        %v2739 = vpop.permute.xlu0 %2738
        %2740 = vrot.lane.b32.xlu0 %v2673, 20
        %v2741 = vpop.permute.xlu0 %2740
        %2742 = vrot.lane.b32.xlu0 %v2674, 20
        %v2743 = vpop.permute.xlu0 %2742
        %2744 = vrot.lane.b32.xlu0 %v2675, 20
        %v2745 = vpop.permute.xlu0 %2744
        %2746 = vrot.lane.b32.xlu0 %v2676, 20
        %v2747 = vpop.permute.xlu0 %2746
        %2748 = vrot.lane.b32.xlu0 %v2733, 20
        %v2749 = vpop.permute.xlu0 %2748
        %v2750 = vunpack.c.l.b16 %v1533
        %v2751 = vunpack.c.l.b16 %v1534
        %v2752 = vpack.c.b16 %v2751, %v2750
        %2753 = vrot.lane.b32.xlu0 %v2607, 24
        %v2754 = vpop.permute.xlu0 %2753
        %2755 = vrot.lane.b32.xlu0 %v2608, 24
        %v2756 = vpop.permute.xlu0 %2755
        %2757 = vrot.lane.b32.xlu0 %v2609, 24
        %v2758 = vpop.permute.xlu0 %2757
        %2759 = vrot.lane.b32.xlu0 %v2610, 24
        %v2760 = vpop.permute.xlu0 %2759
        %2761 = vrot.lane.b32.xlu0 %v2611, 24
        %v2762 = vpop.permute.xlu0 %2761
        %2763 = vrot.lane.b32.xlu0 %v2612, 24
        %v2764 = vpop.permute.xlu0 %2763
        %2765 = vrot.lane.b32.xlu0 %v2695, 24
        %v2766 = vpop.permute.xlu0 %2765
        %2767 = vrot.lane.b32.xlu0 %v2752, 24
        %v2768 = vpop.permute.xlu0 %2767
        %v2769 = vunpack.c.l.b16 %v2568
        %v2770 = vunpack.c.l.b16 %v2578
        %v2771 = vpack.c.b16 %v2770, %v2769
        %2772 = vrot.lane.b32.xlu0 %v2631, 28
        %v2773 = vpop.permute.xlu0 %2772
        %2774 = vrot.lane.b32.xlu0 %v2632, 28
        %v2775 = vpop.permute.xlu0 %2774
        %2776 = vrot.lane.b32.xlu0 %v2633, 28
        %v2777 = vpop.permute.xlu0 %2776
        %2778 = vrot.lane.b32.xlu0 %v2634, 28
        %v2779 = vpop.permute.xlu0 %2778
        %2780 = vrot.lane.b32.xlu0 %v2635, 28
        %v2781 = vpop.permute.xlu0 %2780
        %2782 = vrot.lane.b32.xlu0 %v2636, 28
        %v2783 = vpop.permute.xlu0 %2782
        %2784 = vrot.lane.b32.xlu0 %v2714, 28
        %v2785 = vpop.permute.xlu0 %2784
        %2786 = vrot.lane.b32.xlu0 %v2771, 28
        %v2787 = vpop.permute.xlu0 %2786
        %v2788 = vunpack.c.l.b16 %v2585
        %v2789 = vunpack.c.l.b16 %v2588
        %v2790 = vpack.c.b16 %v2789, %v2788
        %2791 = vrot.lane.b32.xlu0 %v2671, 32
        %v2792 = vpop.permute.xlu0 %2791
        %2793 = vrot.lane.b32.xlu0 %v2672, 32
        %v2794 = vpop.permute.xlu0 %2793
        %2795 = vrot.lane.b32.xlu0 %v2673, 32
        %v2796 = vpop.permute.xlu0 %2795
        %2797 = vrot.lane.b32.xlu0 %v2674, 32
        %v2798 = vpop.permute.xlu0 %2797
        %2799 = vrot.lane.b32.xlu0 %v2675, 32
        %v2800 = vpop.permute.xlu0 %2799
        %2801 = vrot.lane.b32.xlu0 %v2676, 32
        %v2802 = vpop.permute.xlu0 %2801
        %2803 = vrot.lane.b32.xlu0 %v2733, 32
        %v2804 = vpop.permute.xlu0 %2803
        %2805 = vrot.lane.b32.xlu0 %v2790, 32
        %v2806 = vpop.permute.xlu0 %2805
        %v2809 = vsel %vm2100, %v2605, %v2638
        %v2812 = vsel %vm2100, %v2606, %v2640
        %v2815 = vsel %vm2100, %v2607, %v2642
        %v2818 = vsel %vm2100, %v2608, %v2644
        %v2821 = vsel %vm2100, %v2609, %v2646
        %v2824 = vsel %vm2100, %v2610, %v2648
        %v2827 = vsel %vm2100, %v2611, %v2650
        %v2830 = vsel %vm2100, %v2612, %v2652
        %v2832 = vsel %vm2125, %v2809, %v2678
        %v2834 = vsel %vm2125, %v2812, %v2680
        %v2836 = vsel %vm2125, %v2815, %v2682
        %v2838 = vsel %vm2125, %v2818, %v2684
        %v2840 = vsel %vm2125, %v2821, %v2686
        %v2842 = vsel %vm2125, %v2824, %v2688
        %v2844 = vsel %vm2125, %v2827, %v2690
        %v2846 = vsel %vm2125, %v2830, %v2692
        %v2848 = vsel %vm2142, %v2832, %v2697
        %v2850 = vsel %vm2142, %v2834, %v2699
        %v2852 = vsel %vm2142, %v2836, %v2701
        %v2854 = vsel %vm2142, %v2838, %v2703
        %v2856 = vsel %vm2142, %v2840, %v2705
        %v2858 = vsel %vm2142, %v2842, %v2707
        %v2860 = vsel %vm2142, %v2844, %v2709
        %v2862 = vsel %vm2142, %v2846, %v2711
        %v2864 = vsel %vm2159, %v2848, %v2716
        %v2866 = vsel %vm2159, %v2850, %v2718
        %v2868 = vsel %vm2159, %v2852, %v2720
        %v2870 = vsel %vm2159, %v2854, %v2722
        %v2872 = vsel %vm2159, %v2856, %v2724
        %v2874 = vsel %vm2159, %v2858, %v2726
        %v2876 = vsel %vm2159, %v2860, %v2728
        %v2878 = vsel %vm2159, %v2862, %v2730
        %v2880 = vsel %vm2176, %v2864, %v2735
        %v2882 = vsel %vm2176, %v2866, %v2737
        %v2884 = vsel %vm2176, %v2868, %v2739
        %v2886 = vsel %vm2176, %v2870, %v2741
        %v2888 = vsel %vm2176, %v2872, %v2743
        %v2890 = vsel %vm2176, %v2874, %v2745
        %v2892 = vsel %vm2176, %v2876, %v2747
        %v2894 = vsel %vm2176, %v2878, %v2749
        %v2896 = vsel %vm2193, %v2880, %v2754
        %v2898 = vsel %vm2193, %v2882, %v2756
        %v2900 = vsel %vm2193, %v2884, %v2758
        %v2902 = vsel %vm2193, %v2886, %v2760
        %v2904 = vsel %vm2193, %v2888, %v2762
        %v2906 = vsel %vm2193, %v2890, %v2764
        %v2908 = vsel %vm2193, %v2892, %v2766
        %v2910 = vsel %vm2193, %v2894, %v2768
        %v2912 = vsel %vm2210, %v2896, %v2773
        %v2914 = vsel %vm2210, %v2898, %v2775
        %v2916 = vsel %vm2210, %v2900, %v2777
        %v2918 = vsel %vm2210, %v2902, %v2779
        %v2920 = vsel %vm2210, %v2904, %v2781
        %v2922 = vsel %vm2210, %v2906, %v2783
        %v2924 = vsel %vm2210, %v2908, %v2785
        %v2926 = vsel %vm2210, %v2910, %v2787
        %v2928 = vsel %vm2227, %v2912, %v2792
        %v2930 = vsel %vm2227, %v2914, %v2794
        %v2932 = vsel %vm2227, %v2916, %v2796
        %v2934 = vsel %vm2227, %v2918, %v2798
        %v2936 = vsel %vm2227, %v2920, %v2800
        %v2938 = vsel %vm2227, %v2922, %v2802
        %v2940 = vsel %vm2227, %v2924, %v2804
        %v2942 = vsel %vm2227, %v2926, %v2806
        %v2943 = vld [vmem:[#allocation16] sm:$0xf]
        %v2944 = vld [vmem:[#allocation16 + $0x4] sm:$0xf]
        %v2945 = vld [vmem:[#allocation16 + $0x8] sm:$0xf]
        %v2946 = vld [vmem:[#allocation16 + $0xc] sm:$0xf]
        %v2947 = vld [vmem:[#allocation16 + $0x10] sm:$0x3]
        %v2953 = vunpack.c.l.b16 %v2943
        %v2954 = vunpack.c.l.b16 %v2944
        %v2955 = vunpack.c.l.b16 %v2945
        %v2956 = vunpack.c.l.b16 %v2946
        %v2957 = vunpack.c.l.b16 %v2947
        %v2958 = vpack.c.b16 %v2954, %v2953
        %v2959 = vpack.c.b16 %v2956, %v2955
        %v2960 = vpack.c.b16 %v2957, %v2957
        %vm2963 = vcmask 293888
        %v2964 = vsel %vm2963, %v2928, 0
        %v2966 = vsel %vm2963, %v2930, 0
        %v2968 = vsel %vm2963, %v2932, 0
        %v2970 = vsel %vm2963, %v2934, 0
        %v2972 = vsel %vm2963, %v2936, 0
        %v2974 = vsel %vm2963, %v2938, 0
        %v2976 = vsel %vm2963, %v2940, 0
        %v2978 = vsel %vm2963, %v2942, 0
        %vm2980 = vcmask 1041408
        %v2982 = vsel %vm2980, %v2960, 0
        %2984 = vmatprep.subr.bf16.mxu0 0
        %2985 = vmatpush1.bf16.msra.mxu0 %v2958
        %2986 = vmatprep.subr.bf16.mxu0 0
        %2987 = vmatpush1.bf16.msra.mxu0 %v2959
        %2988 = vmatprep.subr.bf16.mxu0 0
        %2989 = vmatpush1.bf16.msra.mxu0 %v2982
        %2990 = vmatprep.subr.bf16.mxu0 0
        %2991 = vmatpush1.bf16.msra.mxu0 0
        %2992 = vmatprep.subr.bf16.mxu0 0
        %2993 = vmatpush1.bf16.msra.mxu0 0
        %2994 = vmatprep.subr.bf16.mxu0 0
        %2995 = vmatpush1.bf16.msra.mxu0 0
        %2996 = vmatprep.subr.bf16.mxu0 0
        %2997 = vmatpush1.bf16.msra.mxu0 0
        %2998 = vmatprep.subr.bf16.mxu0 0
        %2999 = vmatpush1.bf16.msra.mxu0 0
        %3000 = vmatprep.subr.bf16.mxu0 0
        %3001 = vmatpush1.bf16.msra.mxu0 0
        %3002 = vmatprep.subr.bf16.mxu0 0
        %3003 = vmatpush1.bf16.msra.mxu0 0
        %3004 = vmatprep.subr.bf16.mxu0 0
        %3005 = vmatpush1.bf16.msra.mxu0 0
        %3006 = vmatprep.subr.bf16.mxu0 0
        %3007 = vmatpush1.bf16.msra.mxu0 0
        %3008 = vmatprep.subr.bf16.mxu0 0
        %3009 = vmatpush1.bf16.msra.mxu0 0
        %3010 = vmatprep.subr.bf16.mxu0 0
        %3011 = vmatpush1.bf16.msra.mxu0 0
        %3012 = vmatprep.subr.bf16.mxu0 0
        %3013 = vmatpush1.bf16.msra.mxu0 0
        %3014 = vmatprep.subr.bf16.mxu0 0
        %3015 = vmatpush1.bf16.msra.mxu0 0
        %3016 = vmatprep.mubr.bf16.mxu0 0
        %3017 = vmatmul.mubr.bf16.gmra.mrb[0].mxu0 %v2964
        %v3018 = vpop.f32.mrb[0].mxu0
        %v3019 = vadd.f32 0.0, %v3018
        %v3020 = vpop.f32.mrb[0].mxu0
        %v3021 = vpop.f32.mrb[0].mxu0
        %v3022 = vadd.f32 0.0, %v3021
        %v3023 = vpop.f32.mrb[0].mxu0
        %3024 = vmatprep.mubr.bf16.mxu0 0
        %3025 = vmatmul.mubr.bf16.gmra.mrb[0].mxu0 %v2966
        %v3026 = vpop.f32.mrb[0].mxu0
        %v3027 = vadd.f32 0.0, %v3026
        %v3028 = vpop.f32.mrb[0].mxu0
        %v3029 = vpop.f32.mrb[0].mxu0
        %v3030 = vadd.f32 0.0, %v3029
        %v3031 = vpop.f32.mrb[0].mxu0
        %3032 = vmatprep.mubr.bf16.mxu0 0
        %3033 = vmatmul.mubr.bf16.gmra.mrb[0].mxu0 %v2968
        %v3034 = vpop.f32.mrb[0].mxu0
        %v3035 = vadd.f32 0.0, %v3034
        %v3036 = vpop.f32.mrb[0].mxu0
        %v3037 = vpop.f32.mrb[0].mxu0
        %v3038 = vadd.f32 0.0, %v3037
        %v3039 = vpop.f32.mrb[0].mxu0
        %3040 = vmatprep.mubr.bf16.mxu0 0
        %3041 = vmatmul.mubr.bf16.gmra.mrb[0].mxu0 %v2970
        %v3042 = vpop.f32.mrb[0].mxu0
        %v3043 = vadd.f32 0.0, %v3042
        %v3044 = vpop.f32.mrb[0].mxu0
        %v3045 = vpop.f32.mrb[0].mxu0
        %v3046 = vadd.f32 0.0, %v3045
        %v3047 = vpop.f32.mrb[0].mxu0
        %3048 = vmatprep.mubr.bf16.mxu0 0
        %3049 = vmatmul.mubr.bf16.gmra.mrb[0].mxu0 %v2972
        %v3050 = vpop.f32.mrb[0].mxu0
        %v3051 = vadd.f32 0.0, %v3050
        %v3052 = vpop.f32.mrb[0].mxu0
        %v3053 = vpop.f32.mrb[0].mxu0
        %v3054 = vadd.f32 0.0, %v3053
        %v3055 = vpop.f32.mrb[0].mxu0
        %3056 = vmatprep.mubr.bf16.mxu0 0
        %3057 = vmatmul.mubr.bf16.gmra.mrb[0].mxu0 %v2974
        %v3058 = vpop.f32.mrb[0].mxu0
        %v3059 = vadd.f32 0.0, %v3058
        %v3060 = vpop.f32.mrb[0].mxu0
        %v3061 = vpop.f32.mrb[0].mxu0
        %v3062 = vadd.f32 0.0, %v3061
        %v3063 = vpop.f32.mrb[0].mxu0
        %3064 = vmatprep.mubr.bf16.mxu0 0
        %3065 = vmatmul.mubr.bf16.gmra.mrb[0].mxu0 %v2976
        %v3066 = vpop.f32.mrb[0].mxu0
        %v3067 = vadd.f32 0.0, %v3066
        %v3068 = vpop.f32.mrb[0].mxu0
        %v3069 = vpop.f32.mrb[0].mxu0
        %v3070 = vadd.f32 0.0, %v3069
        %v3071 = vpop.f32.mrb[0].mxu0
        %3072 = vmatprep.mubr.bf16.mxu0 0
        %3073 = vmatmul.mubr.bf16.gmra.mrb[0].mxu0 %v2978
        %v3074 = vpop.f32.mrb[0].mxu0
        %v3075 = vadd.f32 0.0, %v3074
        %v3076 = vpop.f32.mrb[0].mxu0
        %v3077 = vpop.f32.mrb[0].mxu0
        %v3078 = vadd.f32 0.0, %v3077
        %v3079 = vpop.f32.mrb[0].mxu0
        %3080 = vdwg.mxu0
        %v3086 = vunpack.c.l.b16 %v2244
        %v3087 = vunpack.c.l.b16 %v2245
        %v3088 = vunpack.c.l.b16 %v2246
        %v3089 = vunpack.c.l.b16 %v2247
        %v3090 = vunpack.c.l.b16 %v2248
        %v3091 = vpack.c.b16 %v3087, %v3086
        %v3092 = vpack.c.b16 %v3089, %v3088
        %v3093 = vpack.c.b16 %v3090, %v3090
        %v3096 = vsel %vm2963, %v2229, 0
        %v3098 = vsel %vm2963, %v2231, 0
        %v3100 = vsel %vm2963, %v2233, 0
        %v3102 = vsel %vm2963, %v2235, 0
        %v3104 = vsel %vm2963, %v2237, 0
        %v3106 = vsel %vm2963, %v2239, 0
        %v3108 = vsel %vm2963, %v2241, 0
        %v3110 = vsel %vm2963, %v2243, 0
        %v3113 = vsel %vm2980, %v3093, 0
        %3115 = vmatprep.subr.bf16.mxu0 0
        %3116 = vmatpush1.bf16.msra.mxu0 %v3091
        %3117 = vmatprep.subr.bf16.mxu0 0
        %3118 = vmatpush1.bf16.msra.mxu0 %v3092
        %3119 = vmatprep.subr.bf16.mxu0 0
        %3120 = vmatpush1.bf16.msra.mxu0 %v3113
        %3121 = vmatprep.subr.bf16.mxu0 0
        %3122 = vmatpush1.bf16.msra.mxu0 0
        %3123 = vmatprep.subr.bf16.mxu0 0
        %3124 = vmatpush1.bf16.msra.mxu0 0
        %3125 = vmatprep.subr.bf16.mxu0 0
        %3126 = vmatpush1.bf16.msra.mxu0 0
        %3127 = vmatprep.subr.bf16.mxu0 0
        %3128 = vmatpush1.bf16.msra.mxu0 0
        %3129 = vmatprep.subr.bf16.mxu0 0
        %3130 = vmatpush1.bf16.msra.mxu0 0
        %3131 = vmatprep.subr.bf16.mxu0 0
        %3132 = vmatpush1.bf16.msra.mxu0 0
        %3133 = vmatprep.subr.bf16.mxu0 0
        %3134 = vmatpush1.bf16.msra.mxu0 0
        %3135 = vmatprep.subr.bf16.mxu0 0
        %3136 = vmatpush1.bf16.msra.mxu0 0
        %3137 = vmatprep.subr.bf16.mxu0 0
        %3138 = vmatpush1.bf16.msra.mxu0 0
        %3139 = vmatprep.subr.bf16.mxu0 0
        %3140 = vmatpush1.bf16.msra.mxu0 0
        %3141 = vmatprep.subr.bf16.mxu0 0
        %3142 = vmatpush1.bf16.msra.mxu0 0
        %3143 = vmatprep.subr.bf16.mxu0 0
        %3144 = vmatpush1.bf16.msra.mxu0 0
        %3145 = vmatprep.subr.bf16.mxu0 0
        %3146 = vmatpush1.bf16.msra.mxu0 0
        %3147 = vmatprep.mubr.bf16.mxu0 0
        %3148 = vmatmul.mubr.bf16.gmra.mrb[0].mxu0 %v3096
        %v3149 = vpop.f32.mrb[0].mxu0
        %v3150 = vadd.f32 %v3019, %v3149
        %v3151 = vpop.f32.mrb[0].mxu0
        %v3152 = vpop.f32.mrb[0].mxu0
        %v3153 = vadd.f32 %v3022, %v3152
        %v3154 = vpop.f32.mrb[0].mxu0
        %3155 = vmatprep.mubr.bf16.mxu0 0
        %3156 = vmatmul.mubr.bf16.gmra.mrb[0].mxu0 %v3098
        %v3157 = vpop.f32.mrb[0].mxu0
        %v3158 = vadd.f32 %v3027, %v3157
        %v3159 = vpop.f32.mrb[0].mxu0
        %v3160 = vpop.f32.mrb[0].mxu0
        %v3161 = vadd.f32 %v3030, %v3160
        %v3162 = vpop.f32.mrb[0].mxu0
        %3163 = vmatprep.mubr.bf16.mxu0 0
        %3164 = vmatmul.mubr.bf16.gmra.mrb[0].mxu0 %v3100
        %v3165 = vpop.f32.mrb[0].mxu0
        %v3166 = vadd.f32 %v3035, %v3165
        %v3167 = vpop.f32.mrb[0].mxu0
        %v3168 = vpop.f32.mrb[0].mxu0
        %v3169 = vadd.f32 %v3038, %v3168
        %v3170 = vpop.f32.mrb[0].mxu0
        %3171 = vmatprep.mubr.bf16.mxu0 0
        %3172 = vmatmul.mubr.bf16.gmra.mrb[0].mxu0 %v3102
        %v3173 = vpop.f32.mrb[0].mxu0
        %v3174 = vadd.f32 %v3043, %v3173
        %v3175 = vpop.f32.mrb[0].mxu0
        %v3176 = vpop.f32.mrb[0].mxu0
        %v3177 = vadd.f32 %v3046, %v3176
        %v3178 = vpop.f32.mrb[0].mxu0
        %3179 = vmatprep.mubr.bf16.mxu0 0
        %3180 = vmatmul.mubr.bf16.gmra.mrb[0].mxu0 %v3104
        %v3181 = vpop.f32.mrb[0].mxu0
        %v3182 = vadd.f32 %v3051, %v3181
        %v3183 = vpop.f32.mrb[0].mxu0
        %v3184 = vpop.f32.mrb[0].mxu0
        %v3185 = vadd.f32 %v3054, %v3184
        %v3186 = vpop.f32.mrb[0].mxu0
        %3187 = vmatprep.mubr.bf16.mxu0 0
        %3188 = vmatmul.mubr.bf16.gmra.mrb[0].mxu0 %v3106
        %v3189 = vpop.f32.mrb[0].mxu0
        %v3190 = vadd.f32 %v3059, %v3189
        %v3191 = vpop.f32.mrb[0].mxu0
        %v3192 = vpop.f32.mrb[0].mxu0
        %v3193 = vadd.f32 %v3062, %v3192
        %v3194 = vpop.f32.mrb[0].mxu0
        %3195 = vmatprep.mubr.bf16.mxu0 0
        %3196 = vmatmul.mubr.bf16.gmra.mrb[0].mxu0 %v3108
        %v3197 = vpop.f32.mrb[0].mxu0
        %v3198 = vadd.f32 %v3067, %v3197
        %v3199 = vpop.f32.mrb[0].mxu0
        %v3200 = vpop.f32.mrb[0].mxu0
        %v3201 = vadd.f32 %v3070, %v3200
        %v3202 = vpop.f32.mrb[0].mxu0
        %3203 = vmatprep.mubr.bf16.mxu0 0
        %3204 = vmatmul.mubr.bf16.gmra.mrb[0].mxu0 %v3110
        %v3205 = vpop.f32.mrb[0].mxu0
        %v3206 = vadd.f32 %v3075, %v3205
        %v3207 = vpop.f32.mrb[0].mxu0
        %v3208 = vpop.f32.mrb[0].mxu0
        %v3209 = vadd.f32 %v3078, %v3208
        %v3210 = vpop.f32.mrb[0].mxu0
        %3211 = vdwg.mxu0
        %v3212 = vpack.c.bf16 %v3153, %v3150
        %v3213 = vpack.c.bf16 %v3161, %v3158
        %v3214 = vpack.c.bf16 %v3169, %v3166
        %v3215 = vpack.c.bf16 %v3177, %v3174
        %v3216 = vpack.c.bf16 %v3185, %v3182
        %v3217 = vpack.c.bf16 %v3193, %v3190
        %v3218 = vpack.c.bf16 %v3201, %v3198
        %v3219 = vpack.c.bf16 %v3209, %v3206
        %v3228 = vunpack.c.l.b16 %v3212
        %v3229 = vunpack.c.h.b16 %v3212
        %v3230 = vunpack.c.l.b16 %v3213
        %v3231 = vunpack.c.h.b16 %v3213
        %v3232 = vunpack.c.l.b16 %v3214
        %v3233 = vunpack.c.h.b16 %v3214
        %v3234 = vunpack.c.l.b16 %v3215
        %v3235 = vunpack.c.h.b16 %v3215
        %v3236 = vunpack.c.l.b16 %v3216
        %v3237 = vunpack.c.h.b16 %v3216
        %v3238 = vunpack.c.l.b16 %v3217
        %v3239 = vunpack.c.h.b16 %v3217
        %v3240 = vunpack.c.l.b16 %v3218
        %v3241 = vunpack.c.h.b16 %v3218
        %v3242 = vunpack.c.l.b16 %v3219
        %v3243 = vunpack.c.h.b16 %v3219
        %v3244 = vpack.c.b16 %v3228, %v3228
        %v3245 = vpack.c.b16 %v3229, %v3229
        %v3246 = vpack.c.b16 %v3230, %v3230
        %v3247 = vpack.c.b16 %v3231, %v3231
        %v3248 = vpack.c.b16 %v3232, %v3232
        %v3249 = vpack.c.b16 %v3233, %v3233
        %v3250 = vpack.c.b16 %v3234, %v3234
        %v3251 = vpack.c.b16 %v3235, %v3235
        %v3252 = vpack.c.b16 %v3236, %v3236
        %v3253 = vpack.c.b16 %v3237, %v3237
        %v3254 = vpack.c.b16 %v3238, %v3238
        %v3255 = vpack.c.b16 %v3239, %v3239
        %v3256 = vpack.c.b16 %v3240, %v3240
        %v3257 = vpack.c.b16 %v3241, %v3241
        %v3258 = vpack.c.b16 %v3242, %v3242
        %v3259 = vpack.c.b16 %v3243, %v3243
        %3276 = vst.msk [vmem:[%s696] sm:$0xf] %vm736, %v3244
        %3277 = vst.msk [vmem:[%s696 + $0x4] sm:$0xf] %vm736, %v3245
        %3278 = vst.msk [vmem:[%s696 + $0x8] sm:$0xf] %vm736, %v3246
        %3279 = vst.msk [vmem:[%s696 + $0xc] sm:$0xf] %vm736, %v3247
        %3280 = vst.msk [vmem:[%s696 + $0x10] sm:$0xf] %vm736, %v3248
        %3281 = vst.msk [vmem:[%s696 + $0x14] sm:$0xf] %vm736, %v3249
        %3282 = vst.msk [vmem:[%s696 + $0x18] sm:$0xf] %vm736, %v3250
        %3283 = vst.msk [vmem:[%s696 + $0x1c] sm:$0xf] %vm736, %v3251
        %3284 = vst.msk [vmem:[%s696 + $0x20] sm:$0xf] %vm736, %v3252
        %3285 = vst.msk [vmem:[%s696 + $0x24] sm:$0xf] %vm736, %v3253
        %3286 = vst.msk [vmem:[%s696 + $0x28] sm:$0xf] %vm736, %v3254
        %3287 = vst.msk [vmem:[%s696 + $0x2c] sm:$0xf] %vm736, %v3255
        %3288 = vst.msk [vmem:[%s696 + $0x30] sm:$0xf] %vm736, %v3256
        %3289 = vst.msk [vmem:[%s696 + $0x34] sm:$0xf] %vm736, %v3257
        %3290 = vst.msk [vmem:[%s696 + $0x38] sm:$0xf] %vm736, %v3258
        %3291 = vst.msk [vmem:[%s696 + $0x3c] sm:$0xf] %vm736, %v3259
        %v3292 = vsel %vm2100, %v3150, 0.0
        %v3293 = vsel %vm2100, %v3153, 0.0
        %v3294 = vadd.f32 %v3292, %v3293
        %v3295 = vsel %vm2100, %v3158, 0.0
        %v3296 = vadd.f32 %v3294, %v3295
        %v3297 = vsel %vm2100, %v3161, 0.0
        %v3298 = vadd.f32 %v3296, %v3297
        %v3299 = vsel %vm2100, %v3166, 0.0
        %v3300 = vadd.f32 %v3298, %v3299
        %v3301 = vsel %vm2100, %v3169, 0.0
        %v3302 = vadd.f32 %v3300, %v3301
        %v3303 = vsel %vm2100, %v3174, 0.0
        %v3304 = vadd.f32 %v3302, %v3303
        %v3305 = vsel %vm2100, %v3177, 0.0
        %v3306 = vadd.f32 %v3304, %v3305
        %v3307 = vsel %vm2100, %v3182, 0.0
        %v3308 = vadd.f32 %v3306, %v3307
        %v3309 = vsel %vm2100, %v3185, 0.0
        %v3310 = vadd.f32 %v3308, %v3309
        %v3311 = vsel %vm2100, %v3190, 0.0
        %v3312 = vadd.f32 %v3310, %v3311
        %v3313 = vsel %vm2100, %v3193, 0.0
        %v3314 = vadd.f32 %v3312, %v3313
        %v3315 = vsel %vm2100, %v3198, 0.0
        %v3316 = vadd.f32 %v3314, %v3315
        %v3317 = vsel %vm2100, %v3201, 0.0
        %v3318 = vadd.f32 %v3316, %v3317
        %v3319 = vsel %vm2100, %v3206, 0.0
        %v3320 = vadd.f32 %v3318, %v3319
        %v3321 = vsel %vm2100, %v3209, 0.0
        %v3322 = vadd.f32 %v3320, %v3321
        %v3323 = vrot.slane %v3322, 4
        %v3324 = vadd.f32 %v3322, %v3323
        %v3325 = vrot.slane %v3324, 2
        %v3326 = vadd.f32 %v3324, %v3325
        %v3327 = vrot.slane %v3326, 1
        %v3328 = vadd.f32 %v3326, %v3327
        %3329 = vst.msk [vmem:[%s702] sm:$0x1] %vm739, %v3328
        %v3330 = vmul.f32 %v3150, %v3150
        %v3331 = vmul.f32 %v3153, %v3153
        %v3332 = vmul.f32 %v3158, %v3158
        %v3333 = vmul.f32 %v3161, %v3161
        %v3334 = vmul.f32 %v3166, %v3166
        %v3335 = vmul.f32 %v3169, %v3169
        %v3336 = vmul.f32 %v3174, %v3174
        %v3337 = vmul.f32 %v3177, %v3177
        %v3338 = vmul.f32 %v3182, %v3182
        %v3339 = vmul.f32 %v3185, %v3185
        %v3340 = vmul.f32 %v3190, %v3190
        %v3341 = vmul.f32 %v3193, %v3193
        %v3342 = vmul.f32 %v3198, %v3198
        %v3343 = vmul.f32 %v3201, %v3201
        %v3344 = vmul.f32 %v3206, %v3206
        %v3345 = vmul.f32 %v3209, %v3209
        %v3346 = vsel %vm2100, %v3330, 0.0
        %v3347 = vsel %vm2100, %v3331, 0.0
        %v3348 = vadd.f32 %v3346, %v3347
        %v3349 = vsel %vm2100, %v3332, 0.0
        %v3350 = vadd.f32 %v3348, %v3349
        %v3351 = vsel %vm2100, %v3333, 0.0
        %v3352 = vadd.f32 %v3350, %v3351
        %v3353 = vsel %vm2100, %v3334, 0.0
        %v3354 = vadd.f32 %v3352, %v3353
        %v3355 = vsel %vm2100, %v3335, 0.0
        %v3356 = vadd.f32 %v3354, %v3355
        %v3357 = vsel %vm2100, %v3336, 0.0
        %v3358 = vadd.f32 %v3356, %v3357
        %v3359 = vsel %vm2100, %v3337, 0.0
        %v3360 = vadd.f32 %v3358, %v3359
        %v3361 = vsel %vm2100, %v3338, 0.0
        %v3362 = vadd.f32 %v3360, %v3361
        %v3363 = vsel %vm2100, %v3339, 0.0
        %v3364 = vadd.f32 %v3362, %v3363
        %v3365 = vsel %vm2100, %v3340, 0.0
        %v3366 = vadd.f32 %v3364, %v3365
        %v3367 = vsel %vm2100, %v3341, 0.0
        %v3368 = vadd.f32 %v3366, %v3367
        %v3369 = vsel %vm2100, %v3342, 0.0
        %v3370 = vadd.f32 %v3368, %v3369
        %v3371 = vsel %vm2100, %v3343, 0.0
        %v3372 = vadd.f32 %v3370, %v3371
        %v3373 = vsel %vm2100, %v3344, 0.0
        %v3374 = vadd.f32 %v3372, %v3373
        %v3375 = vsel %vm2100, %v3345, 0.0
        %v3376 = vadd.f32 %v3374, %v3375
        %v3377 = vrot.slane %v3376, 4
        %v3378 = vadd.f32 %v3376, %v3377
        %v3379 = vrot.slane %v3378, 2
        %v3380 = vadd.f32 %v3378, %v3379
        %v3381 = vrot.slane %v3380, 1
        %v3382 = vadd.f32 %v3380, %v3381
        %3383 = vst.msk [vmem:[%s708] sm:$0x1] %vm739, %v3382
        %s3384 = sand.u32 %s305, 1
        %s3385 = scalar_lea.sflag [#allocation6], %s3384
        %s3386 = sand.u32 %s305, 1
        %s3387 = smul.addr %s3386, 64
        %s3388 = scalar_lea.vmem [#allocation18], %s3387
        %s3389 = sand.u32 %s41, 1
        %s3390 = scalar_lea.sflag [#allocation20], %s3389
        %s3391 = sand.u32 %s333, 1
        %s3392 = scalar_lea.vmem [#allocation19], %s3391
        %s3393 = sand.u32 %s41, 1
        %s3394 = scalar_lea.sflag [#allocation20], %s3393
        %s3395 = sand.u32 %s361, 1
        %s3396 = scalar_lea.vmem [#allocation21], %s3395
        // Predicated region
        $region85: #{up_forward.5} parent=51 // pred_check
          %p3397 = pneg %p315
        $region86: #{up_forward.5} parent=51 // pred_check_branch
          %3399 = sbr.rel (%p3397) target = $region88
        $region87: #{up_forward.5} parent=51 // pred_region
          %s3400 = smul.u32 8, %s46
          %s3402 = ssub.s32 1024, 1024
          %3403 = vsyncadd %s3385, %s3402
          %s3404 = smul.addr %s3400, 2
          %s3405 = smul.addr %s45, 32
          %s3406 = sadd.s32 %s3404, %s3405
          %s3407 = smul.addr %s3406, 64
          %s3408 = scalar_lea.hbm %s8, %s3407
          %s3409 = sshll.u32 %s3388, 4
          %s3410 = int_to_ptr.vmem [resolvable:$true] %s3409
          %3415 = dma.vmem_to_hbm [thread:$0]  %s3410, 1024, %s3408, %s3385, 64, 64, 4
        $region88: #{up_forward.5} parent=51 // pred_fallthru
          _
        // Predicated region
        $region89: #{up_forward.5} parent=51 // pred_check
          %p3416 = pneg %p343
        $region90: #{up_forward.5} parent=51 // pred_check_branch
          %3418 = sbr.rel (%p3416) target = $region92
        $region91: #{up_forward.5} parent=51 // pred_region
          %s3420 = ssub.s32 16, 16
          %3421 = vsyncadd %s3390, %s3420
          %s3422 = smul.addr %s45, 2
          %s3423 = sadd.s32 %s46, %s3422
          %s3424 = smul.addr %s3423, 16
          %s3425 = scalar_lea.hbm %s9, %s3424
          %s3427 = sshll.u32 %s3392, 4
          %s3428 = int_to_ptr.vmem [resolvable:$true] %s3427
          %3430 = dma.vmem_to_hbm [thread:$0]  %s3428, 16, %s3425, %s3390
        $region92: #{up_forward.5} parent=51 // pred_fallthru
          _
        // Predicated region
        $region93: #{up_forward.5} parent=51 // pred_check
          %p3431 = pneg %p371
        $region94: #{up_forward.5} parent=51 // pred_check_branch
          %3433 = sbr.rel (%p3431) target = $region96
        $region95: #{up_forward.5} parent=51 // pred_region
          %s3435 = ssub.s32 16, 16
          %3436 = vsyncadd %s3394, %s3435
          %s3437 = smul.addr %s45, 2
          %s3438 = sadd.s32 %s46, %s3437
          %s3439 = smul.addr %s3438, 16
          %s3440 = scalar_lea.hbm %s10, %s3439
          %s3442 = sshll.u32 %s3396, 4
          %s3443 = int_to_ptr.vmem [resolvable:$true] %s3442
          %3445 = dma.vmem_to_hbm [thread:$0]  %s3443, 16, %s3440, %s3394
        $region96: #{up_forward.5} parent=51 // pred_fallthru
          _
      $region52: #{up_forward.5} parent=5 // pred_fallthru
        _
      %p3446 = scmp.le.s32.totalorder 2, %s36
      // Predicated region
      $region97: #{up_forward.5} parent=5 // pred_check
        %p3447 = pneg %p3446
      $region98: #{up_forward.5} parent=5 // pred_check_branch
        %3449 = sbr.rel (%p3447) target = $region100
      $region99: #{up_forward.5} parent=5 // pred_region
        %s3450 = ssub.s32 %s36, 2
        // Predicated region
        $region101: #{up_forward.5} parent=99 // pred_check
          %p3451 = pneg %p321
        $region102: #{up_forward.5} parent=99 // pred_check_branch
          %3453 = sbr.rel (%p3451) target = $region104
        $region103: #{up_forward.5} parent=99 // pred_region
          %s3454 = sand.u32 %s306, 1
          %s3455 = scalar_lea.sflag [#allocation6], %s3454
          %s3456 = sand.u32 %s306, 1
          %s3457 = smul.addr %s3456, 64
          %s3458 = scalar_lea.vmem [#allocation18], %s3457
          %3459 = dma.done %s3455, 1024
        $region104: #{up_forward.5} parent=99 // pred_fallthru
          _
        // Predicated region
        $region105: #{up_forward.5} parent=99 // pred_check
          %p3460 = pneg %p349
        $region106: #{up_forward.5} parent=99 // pred_check_branch
          %3462 = sbr.rel (%p3460) target = $region108
        $region107: #{up_forward.5} parent=99 // pred_region
          %s3463 = sand.u32 %s42, 1
          %s3464 = scalar_lea.sflag [#allocation20], %s3463
          %s3465 = sand.u32 %s334, 1
          %s3466 = scalar_lea.vmem [#allocation19], %s3465
          %3467 = dma.done %s3464, 16
        $region108: #{up_forward.5} parent=99 // pred_fallthru
          _
        // Predicated region
        $region109: #{up_forward.5} parent=99 // pred_check
          %p3468 = pneg %p377
        $region110: #{up_forward.5} parent=99 // pred_check_branch
          %3470 = sbr.rel (%p3468) target = $region112
        $region111: #{up_forward.5} parent=99 // pred_region
          %s3471 = sand.u32 %s42, 1
          %s3472 = scalar_lea.sflag [#allocation20], %s3471
          %s3473 = sand.u32 %s362, 1
          %s3474 = scalar_lea.vmem [#allocation21], %s3473
          %3475 = dma.done %s3472, 16
        $region112: #{up_forward.5} parent=99 // pred_fallthru
          _
      $region100: #{up_forward.5} parent=5 // pred_fallthru
        _
    $region6: #{up_forward.5} parent=1 // loop_footer
      %s40 = sadd.s32 1, %s36
    $region7: #{up_forward.5} parent=1 // loop_footer_branch
      %35 = sbr.rel target = $region3
    $region8: #{up_forward.5} parent=1 // loop_exit
      _
    %3476 = vsyncpa [#allocation5], 1
    %s3477 = scalar_lea.sflag [#allocation5], 1
    %3478 = vsyncpa %s3477, 1
    %3479 = vsyncpa [#allocation8], 1
    %s3480 = scalar_lea.sflag [#allocation8], 1
    %3481 = vsyncpa %s3480, 1
    %3482 = vsyncpa [#allocation11], 1
    %s3483 = scalar_lea.sflag [#allocation11], 1
    %3484 = vsyncpa %s3483, 1
    %3485 = vsyncpa [#allocation14], 1
    %s3486 = scalar_lea.sflag [#allocation14], 1
    %3487 = vsyncpa %s3486, 1
    %3488 = vsyncpa [#allocation17], 1
    %3489 = vsyncpa [#allocation6], 1
    %s3490 = scalar_lea.sflag [#allocation6], 1
    %3491 = vsyncpa %s3490, 1
    %3492 = vsyncpa [#allocation20], 1
    %s3493 = scalar_lea.sflag [#allocation20], 1
    %3494 = vsyncpa %s3493, 1

</llo_original>
